<compile_context>
chip_gen: v5e
topology: v5e:2x2
jax: 0.10.0
libtpu: 0.0.40
codegen_flags: <defaults>
</compile_context>

<pallas_src>
import functools
import math

import jax
import jax.numpy as jnp
import numpy as np
from jax.experimental import pallas as pl
from jax.experimental.pallas import tpu as pltpu


# ---------------------------------------------------------------------------
# helpers shared by the kernel and the pure-JAX reference
# ---------------------------------------------------------------------------
_SQRT_2_OVER_PI = 0.7978845608028654


def _gelu(x):
    # tanh approximation of GELU (see TODO(synk) above)
    return 0.5 * x * (1.0 + jnp.tanh(_SQRT_2_OVER_PI * (x + 0.044715 * (x * x * x))))


def _layernorm(x, g, b, eps=1e-5):
    mu = jnp.mean(x, axis=-1, keepdims=True)
    xc = x - mu
    var = jnp.mean(xc * xc, axis=-1, keepdims=True)
    return xc * jax.lax.rsqrt(var + eps) * g + b


def _round_up(x, m):
    return ((x + m - 1) // m) * m


# ---------------------------------------------------------------------------
# Fused kernel: FeatEncode -> num_layers x MixerBlock -> LayerNorm/mean/head
# One grid step processes a block of Bt graphs (Bt*P activation rows).
# ---------------------------------------------------------------------------
_LAYER_KEYS = ("tln_g", "tln_b", "tw0", "tb0", "tw1", "tb1",
               "cln_g", "cln_b", "cw0", "cb0", "cw1", "cb1")


def _make_mixer_kernel(num_layers, P):
    def kernel(feats_ref, tsm_ref, w_time_ref, w_ef_ref, w_et_ref, b_enc_ref, *rest):
        layer_refs = rest[:12 * num_layers]
        ln_g_ref, ln_b_ref, w_head_ref, b_head_ref, o_ref = rest[12 * num_layers:]
        bf16, f32 = jnp.bfloat16, jnp.float32

        R = feats_ref.shape[0]              # Bt * P activation rows in this block
        Bt = R // P

        # ---- FeatEncode: time_feat = cos(t*w)*mask; Linear as two dots (no concat)
        tsm = tsm_ref[...]                                           # (R, 2) [ts, mask]
        tfeat = jnp.cos(tsm[:, 0:1] * w_time_ref[...]) * tsm[:, 1:2]  # (R, T)
        x = (jnp.dot(feats_ref[...].astype(bf16), w_ef_ref[...],
                     preferred_element_type=f32)
             + jnp.dot(tfeat.astype(bf16), w_et_ref[...],
                       preferred_element_type=f32)
             + b_enc_ref[...])                                       # (R, H) f32
        H = x.shape[1]

        for l in range(num_layers):
            (tln_g, tln_b, tw0, tb0, tw1, tb1,
             cln_g, cln_b, cw0, cb0, cw1, cb1) = layer_refs[12 * l:12 * (l + 1)]
            P2 = tw0.shape[0]

            # -- token mixing: x += W1 @ gelu(W0 @ LN(x) + b0) + b1 per graph,
            #    done as batched matmuls (weight broadcast over Bt) -> no transpose.
            y3 = _layernorm(x, tln_g[...], tln_b[...]).reshape(Bt, P, H).astype(bf16)
            w0b = jnp.broadcast_to(tw0[...].astype(bf16), (Bt, P2, P))
            z = jnp.einsum('bqp,bph->bqh', w0b, y3,
                           preferred_element_type=f32)               # (Bt, P2, H)
            h = _gelu(z + tb0[...][None])
            w1b = jnp.broadcast_to(tw1[...].astype(bf16), (Bt, P, P2))
            t = jnp.einsum('bpq,bqh->bph', w1b, h.astype(bf16),
                           preferred_element_type=f32)               # (Bt, P, H)
            x = x + (t + tb1[...][None]).reshape(R, H)

            # -- channel mixing: x += FF(LN(x))
            y = _layernorm(x, cln_g[...], cln_b[...])
            hc = _gelu(jnp.dot(y.astype(bf16), cw0[...],
                               preferred_element_type=f32) + cb0[...])   # (R, CH)
            x = x + (jnp.dot(hc.astype(bf16), cw1[...],
                             preferred_element_type=f32) + cb1[...])

        # ---- head: LayerNorm -> mean over tokens -> mlp_head (lane-dense, padded O)
        y = _layernorm(x, ln_g_ref[...], ln_b_ref[...])
        m = jnp.mean(y.reshape(Bt, P, H), axis=1)                    # (Bt, H)
        o_ref[...] = (jnp.dot(m.astype(bf16), w_head_ref[...],
                              preferred_element_type=f32) + b_head_ref[...])

    return kernel


def _flatten_weights(params):
    flat = [params["w_time"], params["w_ef"], params["w_et"], params["b_enc"]]
    for lp in params["layers"]:
        flat += [lp[k] for k in _LAYER_KEYS]
    flat += [params["ln_g"], params["ln_b"], params["w_head"], params["b_head"]]
    return flat


def _full_block(arr):
    nd = arr.ndim
    return pl.BlockSpec(arr.shape, lambda i, _nd=nd: (0,) * _nd)


def _pick_graphs_per_step(B, P):
    # Target ~512 activation rows per step: enough to fill the MXU M dim and to
    # amortize the ~0.35us/step overhead, while the largest f32 intermediate
    # (rows, 4H) stays ~1 MB -> comfortable inside 32 MiB scoped VMEM everywhere
    # (incl. v7x's 64 MiB physical VMEM).  Small B collapses to a single step
    # (latency regime).
    bt = max(1, 512 // max(P, 1))
    if bt >= B:
        return B
    bt = max(8, (bt // 8) * 8)      # output-block sublane dim must be a multiple of 8
    return min(bt, B)


@functools.partial(jax.jit, static_argnames=("out_channels", "graphs_per_step"))
def mlp_mixer_forward(edge_feats, edge_ts, non_act_edge_mask, params, *,
                      out_channels, graphs_per_step=None):
    """edge_feats: (..., P, F); edge_ts / non_act_edge_mask: (..., P, 1)."""
    *lead, P, F = edge_feats.shape
    B = int(np.prod(lead)) if lead else 1
    N = B * P
    num_layers = len(params["layers"])
    T = params["w_time"].shape[1]
    H = params["b_enc"].shape[1]
    OP = params["w_head"].shape[1]

    feats2d = edge_feats.reshape(N, F).astype(jnp.float32)
    # pack [timestamp, mask] into one (N, 2) stream (one DMA instead of two
    # lane-sparse (N, 1) streams)
    tsm2d = jnp.concatenate(
        [edge_ts.astype(jnp.float32).reshape(N, 1),
         non_act_edge_mask.astype(jnp.float32).reshape(N, 1)], axis=-1)

    bt = _pick_graphs_per_step(B, P) if graphs_per_step is None else graphs_per_step
    rows = bt * P
    grid = (pl.cdiv(B, bt),)
    flat = _flatten_weights(params)

    if num_layers:
        P2 = params["layers"][0]["tw0"].shape[0]
        CH = params["layers"][0]["cw0"].shape[1]
    else:
        P2 = CH = 0
    flops = (2 * N * (F + T) * H
             + num_layers * B * (4 * P * P2 * H + 4 * P * H * CH)
             + 2 * B * H * OP)
    transc = N * T + num_layers * B * (P2 * H + P * CH)
    bytes_acc = (4 * N * (F + 2) + 4 * B * OP
                 + sum(int(w.size) * w.dtype.itemsize for w in flat))
    cost = pl.CostEstimate(flops=int(flops), transcendentals=int(transc),
                           bytes_accessed=int(bytes_acc))

    out = pl.pallas_call(
        _make_mixer_kernel(num_layers, P),
        out_shape=jax.ShapeDtypeStruct((B, OP), jnp.float32),
        grid_spec=pltpu.PrefetchScalarGridSpec(
            num_scalar_prefetch=0,
            grid=grid,
            in_specs=[pl.BlockSpec((rows, F), lambda i: (i, 0)),     # edge feats
                      pl.BlockSpec((rows, 2), lambda i: (i, 0))]     # packed [ts, mask]
                     + [_full_block(w) for w in flat],               # resident weights
            out_specs=pl.BlockSpec((bt, OP), lambda i: (i, 0)),
        ),
        compiler_params=pltpu.CompilerParams(
            dimension_semantics=("parallel",),
            vmem_limit_bytes=32 * 1024 * 1024,
        ),
        cost_estimate=cost,
    )(feats2d, tsm2d, *flat)

    out = out[:, :out_channels]
    return out.reshape(*lead, out_channels)


# ---------------------------------------------------------------------------
# Parameter construction (PyTorch reset_parameters() conventions)
# ---------------------------------------------------------------------------
def init_params(key, *, per_graph_size, time_channels, input_channels,
                hidden_channels, out_channels, num_layers,
                token_expansion_factor=0.5, channel_expansion_factor=4):
    P, T, F, H, O = (per_graph_size, time_channels, input_channels,
                     hidden_channels, out_channels)
    P2 = int(token_expansion_factor * P)
    CH = int(channel_expansion_factor * H)
    OP = _round_up(max(O, 1), 128)      # pad mlp_head output to a lane-dense width

    def uniform(k, shape, fan_in):
        bnd = 1.0 / math.sqrt(fan_in)
        return jax.random.uniform(k, shape, jnp.float32, minval=-bnd, maxval=bnd)

    keys = iter(jax.random.split(key, 8 + 8 * num_layers))
    bf16 = jnp.bfloat16
    # TimeEncode (fixed): weight = 1/10**linspace(0,9,T), bias = 0 (omitted).
    w_time = jnp.asarray(
        (1.0 / 10.0 ** np.linspace(0, 9, T)).astype(np.float32)).reshape(1, T)
    w_head = jnp.pad(uniform(next(keys), (H, O), H), ((0, 0), (0, OP - O)))
    b_head = jnp.pad(uniform(next(keys), (1, O), H), ((0, 0), (0, OP - O)))
    params = {
        "w_time": w_time,
        # feat_encoder Linear(F+T, H) stored as two pre-transposed halves: rows that
        # multiply edge_feats and rows that multiply the time features (the
        # concat([edge_feats, time_feat]) is never materialized).
        "w_ef": uniform(next(keys), (F, H), F + T).astype(bf16),
        "w_et": uniform(next(keys), (T, H), F + T).astype(bf16),
        "b_enc": uniform(next(keys), (1, H), F + T),
        "ln_g": jnp.ones((1, H), jnp.float32),
        "ln_b": jnp.zeros((1, H), jnp.float32),
        "w_head": w_head.astype(bf16),
        "b_head": b_head,
        "layers": [],
    }
    for _ in range(num_layers):
        params["layers"].append({
            "tln_g": jnp.ones((1, H), jnp.float32),
            "tln_b": jnp.zeros((1, H), jnp.float32),
            # token FeedForward weights in PyTorch (out, in) layout; tiny, kept f32
            # and cast to bf16 at the matmul.
            "tw0": uniform(next(keys), (P2, P), P),
            "tb0": uniform(next(keys), (P2, 1), P),
            "tw1": uniform(next(keys), (P, P2), P2),
            "tb1": uniform(next(keys), (P, 1), P2),
            "cln_g": jnp.ones((1, H), jnp.float32),
            "cln_b": jnp.zeros((1, H), jnp.float32),
            # channel FeedForward weights pre-transposed to (in, out), stored bf16.
            "cw0": uniform(next(keys), (H, CH), H).astype(bf16),
            "cb0": uniform(next(keys), (1, CH), H),
            "cw1": uniform(next(keys), (CH, H), CH).astype(bf16),
            "cb1": uniform(next(keys), (1, H), CH),
        })
    return params


# ---------------------------------------------------------------------------
# Pure-JAX reference mirroring the kernel numerics (bf16 MXU operands, f32
# accumulate, tanh GELU) and the PyTorch op order.
# ---------------------------------------------------------------------------
def reference_mlp_mixer(edge_feats, edge_ts, mask, params, *, out_channels):
    f32, bf16 = jnp.float32, jnp.bfloat16
    tfeat = jnp.cos(edge_ts.astype(f32) * params["w_time"]) * mask          # (...,P,T)
    x = (jnp.matmul(edge_feats.astype(bf16), params["w_ef"],
                    preferred_element_type=f32)
         + jnp.matmul(tfeat.astype(bf16), params["w_et"],
                      preferred_element_type=f32)
         + params["b_enc"])
    for lp in params["layers"]:
        y = _layernorm(x, lp["tln_g"], lp["tln_b"])
        z = jnp.einsum('qp,...ph->...qh', lp["tw0"].astype(bf16), y.astype(bf16),
                       preferred_element_type=f32) + lp["tb0"]
        h = _gelu(z)
        t = jnp.einsum('pq,...qh->...ph', lp["tw1"].astype(bf16), h.astype(bf16),
                       preferred_element_type=f32) + lp["tb1"]
        x = x + t
        y = _layernorm(x, lp["cln_g"], lp["cln_b"])
        hc = _gelu(jnp.matmul(y.astype(bf16), lp["cw0"],
                              preferred_element_type=f32) + lp["cb0"])
        x = x + jnp.matmul(hc.astype(bf16), lp["cw1"],
                           preferred_element_type=f32) + lp["cb1"]
    y = _layernorm(x, params["ln_g"], params["ln_b"])
    m = jnp.mean(y, axis=-2)
    out = jnp.matmul(m.astype(bf16), params["w_head"],
                     preferred_element_type=f32) + params["b_head"]
    return out[..., :out_channels]


if __name__ == "__main__":
    # Small shapes consistent with the module.
    PER_GRAPH = 16        # per_graph_size (tokens per graph)
    TIME_CH = 32          # time_channels
    IN_CH = 32            # input_channels (raw edge-feature dims)
    HID = 128             # hidden_channels
    OUT_CH = 64           # out_channels
    NUM_LAYERS = 2
    LEAD = (2, 3)         # leading batch dims (module uses 4-D activations)

    root = jax.random.PRNGKey(0)
    kp, kf, kt, km, kf2, kt2, km2 = jax.random.split(root, 7)

    params = init_params(kp, per_graph_size=PER_GRAPH, time_channels=TIME_CH,
                         input_channels=IN_CH, hidden_channels=HID,
                         out_channels=OUT_CH, num_layers=NUM_LAYERS)

    edge_feats = jax.random.normal(kf, LEAD + (PER_GRAPH, IN_CH), jnp.float32)
    edge_ts = jax.random.uniform(kt, LEAD + (PER_GRAPH, 1), jnp.float32) * 100.0
    mask = jax.random.bernoulli(km, 0.7, LEAD + (PER_GRAPH, 1)).astype(jnp.float32)

    out = jax.block_until_ready(
        mlp_mixer_forward(edge_feats, edge_ts, mask, params, out_channels=OUT_CH))
    ref = reference_mlp_mixer(edge_feats, edge_ts, mask, params, out_channels=OUT_CH)
    np.testing.assert_allclose(np.asarray(out), np.asarray(ref), rtol=2e-2, atol=2e-2)

    # Second run: flat batch that is NOT a multiple of graphs_per_step, exercising
    # the pl.cdiv grid + masked ragged tail-block path (per-graph computation is
    # independent, so garbage tail rows never contaminate valid outputs).
    B2 = 50
    ef2 = jax.random.normal(kf2, (B2, PER_GRAPH, IN_CH), jnp.float32)
    ts2 = jax.random.uniform(kt2, (B2, PER_GRAPH, 1), jnp.float32) * 100.0
    m2 = jax.random.bernoulli(km2, 0.7, (B2, PER_GRAPH, 1)).astype(jnp.float32)
    out2 = jax.block_until_ready(
        mlp_mixer_forward(ef2, ts2, m2, params, out_channels=OUT_CH,
                          graphs_per_step=16))
    ref2 = reference_mlp_mixer(ef2, ts2, m2, params, out_channels=OUT_CH)
    np.testing.assert_allclose(np.asarray(out2), np.asarray(ref2),
                               rtol=2e-2, atol=2e-2)

    print("KERNEL_OK")
</pallas_src>

<mosaic_0001>
module attributes {stable_mosaic.version = 11 : i64} {
  func.func @kernel(%arg0: i32, %arg1: memref<96x32xf32, #tpu.memory_space<vmem>>, %arg2: memref<96x2xf32, #tpu.memory_space<vmem>>, %arg3: memref<1x32xf32, #tpu.memory_space<vmem>>, %arg4: memref<32x128xbf16, #tpu.memory_space<vmem>>, %arg5: memref<32x128xbf16, #tpu.memory_space<vmem>>, %arg6: memref<1x128xf32, #tpu.memory_space<vmem>>, %arg7: memref<1x128xf32, #tpu.memory_space<vmem>>, %arg8: memref<1x128xf32, #tpu.memory_space<vmem>>, %arg9: memref<8x16xf32, #tpu.memory_space<vmem>>, %arg10: memref<8x1xf32, #tpu.memory_space<vmem>>, %arg11: memref<16x8xf32, #tpu.memory_space<vmem>>, %arg12: memref<16x1xf32, #tpu.memory_space<vmem>>, %arg13: memref<1x128xf32, #tpu.memory_space<vmem>>, %arg14: memref<1x128xf32, #tpu.memory_space<vmem>>, %arg15: memref<128x512xbf16, #tpu.memory_space<vmem>>, %arg16: memref<1x512xf32, #tpu.memory_space<vmem>>, %arg17: memref<512x128xbf16, #tpu.memory_space<vmem>>, %arg18: memref<1x128xf32, #tpu.memory_space<vmem>>, %arg19: memref<1x128xf32, #tpu.memory_space<vmem>>, %arg20: memref<1x128xf32, #tpu.memory_space<vmem>>, %arg21: memref<8x16xf32, #tpu.memory_space<vmem>>, %arg22: memref<8x1xf32, #tpu.memory_space<vmem>>, %arg23: memref<16x8xf32, #tpu.memory_space<vmem>>, %arg24: memref<16x1xf32, #tpu.memory_space<vmem>>, %arg25: memref<1x128xf32, #tpu.memory_space<vmem>>, %arg26: memref<1x128xf32, #tpu.memory_space<vmem>>, %arg27: memref<128x512xbf16, #tpu.memory_space<vmem>>, %arg28: memref<1x512xf32, #tpu.memory_space<vmem>>, %arg29: memref<512x128xbf16, #tpu.memory_space<vmem>>, %arg30: memref<1x128xf32, #tpu.memory_space<vmem>>, %arg31: memref<1x128xf32, #tpu.memory_space<vmem>>, %arg32: memref<1x128xf32, #tpu.memory_space<vmem>>, %arg33: memref<128x128xbf16, #tpu.memory_space<vmem>>, %arg34: memref<1x128xf32, #tpu.memory_space<vmem>>, %arg35: memref<6x128xf32, #tpu.memory_space<vmem>>) attributes {dimension_semantics = [#tpu.dimension_semantics<parallel>], iteration_bounds = array<i64: 1>, scalar_prefetch = 0 : i64, scratch_operands = 0 : i64, tpu.core_type = #tpu.core_type<tc>, window_params = [{transform_indices = @transform_0, window_bounds = array<i64: 96, 32>}, {transform_indices = @transform_1, window_bounds = array<i64: 96, 2>}, {pipeline_mode = #tpu.pipeline_mode<synchronous>, transform_indices = @transform_2, window_bounds = array<i64: 1, 32>}, {pipeline_mode = #tpu.pipeline_mode<synchronous>, transform_indices = @transform_3, window_bounds = array<i64: 32, 128>}, {pipeline_mode = #tpu.pipeline_mode<synchronous>, transform_indices = @transform_4, window_bounds = array<i64: 32, 128>}, {pipeline_mode = #tpu.pipeline_mode<synchronous>, transform_indices = @transform_5, window_bounds = array<i64: 1, 128>}, {pipeline_mode = #tpu.pipeline_mode<synchronous>, transform_indices = @transform_6, window_bounds = array<i64: 1, 128>}, {pipeline_mode = #tpu.pipeline_mode<synchronous>, transform_indices = @transform_7, window_bounds = array<i64: 1, 128>}, {pipeline_mode = #tpu.pipeline_mode<synchronous>, transform_indices = @transform_8, window_bounds = array<i64: 8, 16>}, {pipeline_mode = #tpu.pipeline_mode<synchronous>, transform_indices = @transform_9, window_bounds = array<i64: 8, 1>}, {pipeline_mode = #tpu.pipeline_mode<synchronous>, transform_indices = @transform_10, window_bounds = array<i64: 16, 8>}, {pipeline_mode = #tpu.pipeline_mode<synchronous>, transform_indices = @transform_11, window_bounds = array<i64: 16, 1>}, {pipeline_mode = #tpu.pipeline_mode<synchronous>, transform_indices = @transform_12, window_bounds = array<i64: 1, 128>}, {pipeline_mode = #tpu.pipeline_mode<synchronous>, transform_indices = @transform_13, window_bounds = array<i64: 1, 128>}, {pipeline_mode = #tpu.pipeline_mode<synchronous>, transform_indices = @transform_14, window_bounds = array<i64: 128, 512>}, {pipeline_mode = #tpu.pipeline_mode<synchronous>, transform_indices = @transform_15, window_bounds = array<i64: 1, 512>}, {pipeline_mode = #tpu.pipeline_mode<synchronous>, transform_indices = @transform_16, window_bounds = array<i64: 512, 128>}, {pipeline_mode = #tpu.pipeline_mode<synchronous>, transform_indices = @transform_17, window_bounds = array<i64: 1, 128>}, {pipeline_mode = #tpu.pipeline_mode<synchronous>, transform_indices = @transform_18, window_bounds = array<i64: 1, 128>}, {pipeline_mode = #tpu.pipeline_mode<synchronous>, transform_indices = @transform_19, window_bounds = array<i64: 1, 128>}, {pipeline_mode = #tpu.pipeline_mode<synchronous>, transform_indices = @transform_20, window_bounds = array<i64: 8, 16>}, {pipeline_mode = #tpu.pipeline_mode<synchronous>, transform_indices = @transform_21, window_bounds = array<i64: 8, 1>}, {pipeline_mode = #tpu.pipeline_mode<synchronous>, transform_indices = @transform_22, window_bounds = array<i64: 16, 8>}, {pipeline_mode = #tpu.pipeline_mode<synchronous>, transform_indices = @transform_23, window_bounds = array<i64: 16, 1>}, {pipeline_mode = #tpu.pipeline_mode<synchronous>, transform_indices = @transform_24, window_bounds = array<i64: 1, 128>}, {pipeline_mode = #tpu.pipeline_mode<synchronous>, transform_indices = @transform_25, window_bounds = array<i64: 1, 128>}, {pipeline_mode = #tpu.pipeline_mode<synchronous>, transform_indices = @transform_26, window_bounds = array<i64: 128, 512>}, {pipeline_mode = #tpu.pipeline_mode<synchronous>, transform_indices = @transform_27, window_bounds = array<i64: 1, 512>}, {pipeline_mode = #tpu.pipeline_mode<synchronous>, transform_indices = @transform_28, window_bounds = array<i64: 512, 128>}, {pipeline_mode = #tpu.pipeline_mode<synchronous>, transform_indices = @transform_29, window_bounds = array<i64: 1, 128>}, {pipeline_mode = #tpu.pipeline_mode<synchronous>, transform_indices = @transform_30, window_bounds = array<i64: 1, 128>}, {pipeline_mode = #tpu.pipeline_mode<synchronous>, transform_indices = @transform_31, window_bounds = array<i64: 1, 128>}, {pipeline_mode = #tpu.pipeline_mode<synchronous>, transform_indices = @transform_32, window_bounds = array<i64: 128, 128>}, {pipeline_mode = #tpu.pipeline_mode<synchronous>, transform_indices = @transform_33, window_bounds = array<i64: 1, 128>}, {transform_indices = @transform_34, window_bounds = array<i64: 6, 128>}]} {
    %c0 = arith.constant 0 : index
    %c0_0 = arith.constant 0 : index
    %0 = vector.load %arg2[%c0, %c0_0] : memref<96x2xf32, #tpu.memory_space<vmem>>, vector<96x2xf32>
    %1 = vector.extract_strided_slice %0 {offsets = [0, 0], sizes = [96, 1], strides = [1, 1]} : vector<96x2xf32> to vector<96x1xf32>
    %c0_1 = arith.constant 0 : index
    %c0_2 = arith.constant 0 : index
    %2 = vector.load %arg3[%c0_1, %c0_2] : memref<1x32xf32, #tpu.memory_space<vmem>>, vector<1x32xf32>
    %3 = vector.broadcast %1 : vector<96x1xf32> to vector<96x32xf32>
    %4 = vector.broadcast %2 : vector<1x32xf32> to vector<96x32xf32>
    %5 = arith.mulf %3, %4 : vector<96x32xf32>
    %6 = math.cos %5 : vector<96x32xf32>
    %7 = vector.extract_strided_slice %0 {offsets = [0, 1], sizes = [96, 1], strides = [1, 1]} : vector<96x2xf32> to vector<96x1xf32>
    %8 = vector.broadcast %7 : vector<96x1xf32> to vector<96x32xf32>
    %9 = arith.mulf %6, %8 : vector<96x32xf32>
    %c0_3 = arith.constant 0 : index
    %c0_4 = arith.constant 0 : index
    %10 = vector.load %arg1[%c0_3, %c0_4] : memref<96x32xf32, #tpu.memory_space<vmem>>, vector<96x32xf32>
    %11 = arith.truncf %10 : vector<96x32xf32> to vector<96x32xbf16>
    %c0_5 = arith.constant 0 : index
    %c0_6 = arith.constant 0 : index
    %12 = vector.load %arg4[%c0_5, %c0_6] : memref<32x128xbf16, #tpu.memory_space<vmem>>, vector<32x128xbf16>
    %cst = arith.constant dense<0.000000e+00> : vector<96x128xf32>
    %13 = tpu.matmul %11, %12, %cst {dimension_numbers = #tpu.dot_dimension_numbers<[1], [0], [0], [1], [0, 0, 1, 1], [], []>} : vector<96x32xbf16>, vector<32x128xbf16>, vector<96x128xf32> -> vector<96x128xf32>
    %14 = arith.truncf %9 : vector<96x32xf32> to vector<96x32xbf16>
    %c0_7 = arith.constant 0 : index
    %c0_8 = arith.constant 0 : index
    %15 = vector.load %arg5[%c0_7, %c0_8] : memref<32x128xbf16, #tpu.memory_space<vmem>>, vector<32x128xbf16>
    %cst_9 = arith.constant dense<0.000000e+00> : vector<96x128xf32>
    %16 = tpu.matmul %14, %15, %cst_9 {dimension_numbers = #tpu.dot_dimension_numbers<[1], [0], [0], [1], [0, 0, 1, 1], [], []>} : vector<96x32xbf16>, vector<32x128xbf16>, vector<96x128xf32> -> vector<96x128xf32>
    %17 = arith.addf %13, %16 : vector<96x128xf32>
    %c0_10 = arith.constant 0 : index
    %c0_11 = arith.constant 0 : index
    %18 = vector.load %arg6[%c0_10, %c0_11] : memref<1x128xf32, #tpu.memory_space<vmem>>, vector<1x128xf32>
    %19 = vector.broadcast %18 : vector<1x128xf32> to vector<96x128xf32>
    %20 = arith.addf %17, %19 : vector<96x128xf32>
    %c0_12 = arith.constant 0 : index
    %c0_13 = arith.constant 0 : index
    %21 = vector.load %arg7[%c0_12, %c0_13] : memref<1x128xf32, #tpu.memory_space<vmem>>, vector<1x128xf32>
    %c0_14 = arith.constant 0 : index
    %c0_15 = arith.constant 0 : index
    %22 = vector.load %arg8[%c0_14, %c0_15] : memref<1x128xf32, #tpu.memory_space<vmem>>, vector<1x128xf32>
    %cst_16 = arith.constant dense<0.000000e+00> : vector<96xf32>
    %23 = vector.multi_reduction <add>, %20, %cst_16 [1] : vector<96x128xf32> to vector<96xf32>
    %24 = vector.shape_cast %23 : vector<96xf32> to vector<96x1xf32>
    %cst_17 = arith.constant 1.280000e+02 : f32
    %25 = vector.broadcast %cst_17 : f32 to vector<96x1xf32>
    %26 = arith.divf %24, %25 : vector<96x1xf32>
    %27 = vector.broadcast %26 : vector<96x1xf32> to vector<96x128xf32>
    %28 = arith.subf %20, %27 : vector<96x128xf32>
    %29 = arith.mulf %28, %28 : vector<96x128xf32>
    %cst_18 = arith.constant dense<0.000000e+00> : vector<96xf32>
    %30 = vector.multi_reduction <add>, %29, %cst_18 [1] : vector<96x128xf32> to vector<96xf32>
    %31 = vector.shape_cast %30 : vector<96xf32> to vector<96x1xf32>
    %cst_19 = arith.constant 1.280000e+02 : f32
    %32 = vector.broadcast %cst_19 : f32 to vector<96x1xf32>
    %33 = arith.divf %31, %32 : vector<96x1xf32>
    %cst_20 = arith.constant 9.99999974E-6 : f32
    %34 = vector.broadcast %cst_20 : f32 to vector<96x1xf32>
    %35 = arith.addf %33, %34 : vector<96x1xf32>
    %36 = math.rsqrt %35 : vector<96x1xf32>
    %37 = vector.broadcast %36 : vector<96x1xf32> to vector<96x128xf32>
    %38 = arith.mulf %28, %37 : vector<96x128xf32>
    %39 = vector.broadcast %21 : vector<1x128xf32> to vector<96x128xf32>
    %40 = arith.mulf %38, %39 : vector<96x128xf32>
    %41 = vector.broadcast %22 : vector<1x128xf32> to vector<96x128xf32>
    %42 = arith.addf %40, %41 : vector<96x128xf32>
    %43 = vector.shape_cast %42 : vector<96x128xf32> to vector<6x16x128xf32>
    %44 = arith.truncf %43 : vector<6x16x128xf32> to vector<6x16x128xbf16>
    %c0_21 = arith.constant 0 : index
    %c0_22 = arith.constant 0 : index
    %45 = vector.load %arg9[%c0_21, %c0_22] : memref<8x16xf32, #tpu.memory_space<vmem>>, vector<8x16xf32>
    %46 = arith.truncf %45 : vector<8x16xf32> to vector<8x16xbf16>
    %47 = vector.shape_cast %46 : vector<8x16xbf16> to vector<1x8x16xbf16>
    %48 = vector.broadcast %47 : vector<1x8x16xbf16> to vector<6x8x16xbf16>
    "tpu.trace_start"() <{level = 10 : i32, message = "bqp,bph->bqh"}> : () -> ()
    %cst_23 = arith.constant dense<0.000000e+00> : vector<6x8x128xf32>
    %49 = tpu.matmul %48, %44, %cst_23 {dimension_numbers = #tpu.dot_dimension_numbers<[2], [1], [1], [2], [0, 0, 0, 1, 1, 2], [0], [0]>} : vector<6x8x16xbf16>, vector<6x16x128xbf16>, vector<6x8x128xf32> -> vector<6x8x128xf32>
    "tpu.trace_stop"() : () -> ()
    %c0_24 = arith.constant 0 : index
    %c0_25 = arith.constant 0 : index
    %50 = vector.load %arg10[%c0_24, %c0_25] : memref<8x1xf32, #tpu.memory_space<vmem>>, vector<8x1xf32>
    %51 = vector.shape_cast %50 : vector<8x1xf32> to vector<1x8x1xf32>
    %52 = vector.broadcast %51 : vector<1x8x1xf32> to vector<6x8x128xf32>
    %53 = arith.addf %49, %52 : vector<6x8x128xf32>
    %cst_26 = arith.constant 5.000000e-01 : f32
    %54 = vector.broadcast %cst_26 : f32 to vector<6x8x128xf32>
    %55 = arith.mulf %54, %53 : vector<6x8x128xf32>
    %56 = arith.mulf %53, %53 : vector<6x8x128xf32>
    %57 = arith.mulf %56, %53 : vector<6x8x128xf32>
    %cst_27 = arith.constant 4.471500e-02 : f32
    %58 = vector.broadcast %cst_27 : f32 to vector<6x8x128xf32>
    %59 = arith.mulf %58, %57 : vector<6x8x128xf32>
    %60 = arith.addf %53, %59 : vector<6x8x128xf32>
    %cst_28 = arith.constant 0.797884583 : f32
    %61 = vector.broadcast %cst_28 : f32 to vector<6x8x128xf32>
    %62 = arith.mulf %61, %60 : vector<6x8x128xf32>
    %63 = math.tanh %62 : vector<6x8x128xf32>
    %cst_29 = arith.constant 1.000000e+00 : f32
    %64 = vector.broadcast %cst_29 : f32 to vector<6x8x128xf32>
    %65 = arith.addf %64, %63 : vector<6x8x128xf32>
    %66 = arith.mulf %55, %65 : vector<6x8x128xf32>
    %c0_30 = arith.constant 0 : index
    %c0_31 = arith.constant 0 : index
    %67 = vector.load %arg11[%c0_30, %c0_31] : memref<16x8xf32, #tpu.memory_space<vmem>>, vector<16x8xf32>
    %68 = arith.truncf %67 : vector<16x8xf32> to vector<16x8xbf16>
    %69 = vector.shape_cast %68 : vector<16x8xbf16> to vector<1x16x8xbf16>
    %70 = vector.broadcast %69 : vector<1x16x8xbf16> to vector<6x16x8xbf16>
    %71 = arith.truncf %66 : vector<6x8x128xf32> to vector<6x8x128xbf16>
    "tpu.trace_start"() <{level = 10 : i32, message = "bpq,bqh->bph"}> : () -> ()
    %cst_32 = arith.constant dense<0.000000e+00> : vector<6x16x128xf32>
    %72 = tpu.matmul %70, %71, %cst_32 {dimension_numbers = #tpu.dot_dimension_numbers<[2], [1], [1], [2], [0, 0, 0, 1, 1, 2], [0], [0]>} : vector<6x16x8xbf16>, vector<6x8x128xbf16>, vector<6x16x128xf32> -> vector<6x16x128xf32>
    "tpu.trace_stop"() : () -> ()
    %c0_33 = arith.constant 0 : index
    %c0_34 = arith.constant 0 : index
    %73 = vector.load %arg12[%c0_33, %c0_34] : memref<16x1xf32, #tpu.memory_space<vmem>>, vector<16x1xf32>
    %74 = vector.shape_cast %73 : vector<16x1xf32> to vector<1x16x1xf32>
    %75 = vector.broadcast %74 : vector<1x16x1xf32> to vector<6x16x128xf32>
    %76 = arith.addf %72, %75 : vector<6x16x128xf32>
    %77 = vector.shape_cast %76 : vector<6x16x128xf32> to vector<96x128xf32>
    %78 = arith.addf %20, %77 : vector<96x128xf32>
    %c0_35 = arith.constant 0 : index
    %c0_36 = arith.constant 0 : index
    %79 = vector.load %arg13[%c0_35, %c0_36] : memref<1x128xf32, #tpu.memory_space<vmem>>, vector<1x128xf32>
    %c0_37 = arith.constant 0 : index
    %c0_38 = arith.constant 0 : index
    %80 = vector.load %arg14[%c0_37, %c0_38] : memref<1x128xf32, #tpu.memory_space<vmem>>, vector<1x128xf32>
    %cst_39 = arith.constant dense<0.000000e+00> : vector<96xf32>
    %81 = vector.multi_reduction <add>, %78, %cst_39 [1] : vector<96x128xf32> to vector<96xf32>
    %82 = vector.shape_cast %81 : vector<96xf32> to vector<96x1xf32>
    %cst_40 = arith.constant 1.280000e+02 : f32
    %83 = vector.broadcast %cst_40 : f32 to vector<96x1xf32>
    %84 = arith.divf %82, %83 : vector<96x1xf32>
    %85 = vector.broadcast %84 : vector<96x1xf32> to vector<96x128xf32>
    %86 = arith.subf %78, %85 : vector<96x128xf32>
    %87 = arith.mulf %86, %86 : vector<96x128xf32>
    %cst_41 = arith.constant dense<0.000000e+00> : vector<96xf32>
    %88 = vector.multi_reduction <add>, %87, %cst_41 [1] : vector<96x128xf32> to vector<96xf32>
    %89 = vector.shape_cast %88 : vector<96xf32> to vector<96x1xf32>
    %cst_42 = arith.constant 1.280000e+02 : f32
    %90 = vector.broadcast %cst_42 : f32 to vector<96x1xf32>
    %91 = arith.divf %89, %90 : vector<96x1xf32>
    %cst_43 = arith.constant 9.99999974E-6 : f32
    %92 = vector.broadcast %cst_43 : f32 to vector<96x1xf32>
    %93 = arith.addf %91, %92 : vector<96x1xf32>
    %94 = math.rsqrt %93 : vector<96x1xf32>
    %95 = vector.broadcast %94 : vector<96x1xf32> to vector<96x128xf32>
    %96 = arith.mulf %86, %95 : vector<96x128xf32>
    %97 = vector.broadcast %79 : vector<1x128xf32> to vector<96x128xf32>
    %98 = arith.mulf %96, %97 : vector<96x128xf32>
    %99 = vector.broadcast %80 : vector<1x128xf32> to vector<96x128xf32>
    %100 = arith.addf %98, %99 : vector<96x128xf32>
    %101 = arith.truncf %100 : vector<96x128xf32> to vector<96x128xbf16>
    %c0_44 = arith.constant 0 : index
    %c0_45 = arith.constant 0 : index
    %102 = vector.load %arg15[%c0_44, %c0_45] : memref<128x512xbf16, #tpu.memory_space<vmem>>, vector<128x512xbf16>
    %cst_46 = arith.constant dense<0.000000e+00> : vector<96x512xf32>
    %103 = tpu.matmul %101, %102, %cst_46 {dimension_numbers = #tpu.dot_dimension_numbers<[1], [0], [0], [1], [0, 0, 1, 1], [], []>} : vector<96x128xbf16>, vector<128x512xbf16>, vector<96x512xf32> -> vector<96x512xf32>
    %c0_47 = arith.constant 0 : index
    %c0_48 = arith.constant 0 : index
    %104 = vector.load %arg16[%c0_47, %c0_48] : memref<1x512xf32, #tpu.memory_space<vmem>>, vector<1x512xf32>
    %105 = vector.broadcast %104 : vector<1x512xf32> to vector<96x512xf32>
    %106 = arith.addf %103, %105 : vector<96x512xf32>
    %cst_49 = arith.constant 5.000000e-01 : f32
    %107 = vector.broadcast %cst_49 : f32 to vector<96x512xf32>
    %108 = arith.mulf %107, %106 : vector<96x512xf32>
    %109 = arith.mulf %106, %106 : vector<96x512xf32>
    %110 = arith.mulf %109, %106 : vector<96x512xf32>
    %cst_50 = arith.constant 4.471500e-02 : f32
    %111 = vector.broadcast %cst_50 : f32 to vector<96x512xf32>
    %112 = arith.mulf %111, %110 : vector<96x512xf32>
    %113 = arith.addf %106, %112 : vector<96x512xf32>
    %cst_51 = arith.constant 0.797884583 : f32
    %114 = vector.broadcast %cst_51 : f32 to vector<96x512xf32>
    %115 = arith.mulf %114, %113 : vector<96x512xf32>
    %116 = math.tanh %115 : vector<96x512xf32>
    %cst_52 = arith.constant 1.000000e+00 : f32
    %117 = vector.broadcast %cst_52 : f32 to vector<96x512xf32>
    %118 = arith.addf %117, %116 : vector<96x512xf32>
    %119 = arith.mulf %108, %118 : vector<96x512xf32>
    %120 = arith.truncf %119 : vector<96x512xf32> to vector<96x512xbf16>
    %c0_53 = arith.constant 0 : index
    %c0_54 = arith.constant 0 : index
    %121 = vector.load %arg17[%c0_53, %c0_54] : memref<512x128xbf16, #tpu.memory_space<vmem>>, vector<512x128xbf16>
    %cst_55 = arith.constant dense<0.000000e+00> : vector<96x128xf32>
    %122 = tpu.matmul %120, %121, %cst_55 {dimension_numbers = #tpu.dot_dimension_numbers<[1], [0], [0], [1], [0, 0, 1, 1], [], []>} : vector<96x512xbf16>, vector<512x128xbf16>, vector<96x128xf32> -> vector<96x128xf32>
    %c0_56 = arith.constant 0 : index
    %c0_57 = arith.constant 0 : index
    %123 = vector.load %arg18[%c0_56, %c0_57] : memref<1x128xf32, #tpu.memory_space<vmem>>, vector<1x128xf32>
    %124 = vector.broadcast %123 : vector<1x128xf32> to vector<96x128xf32>
    %125 = arith.addf %122, %124 : vector<96x128xf32>
    %126 = arith.addf %78, %125 : vector<96x128xf32>
    %c0_58 = arith.constant 0 : index
    %c0_59 = arith.constant 0 : index
    %127 = vector.load %arg19[%c0_58, %c0_59] : memref<1x128xf32, #tpu.memory_space<vmem>>, vector<1x128xf32>
    %c0_60 = arith.constant 0 : index
    %c0_61 = arith.constant 0 : index
    %128 = vector.load %arg20[%c0_60, %c0_61] : memref<1x128xf32, #tpu.memory_space<vmem>>, vector<1x128xf32>
    %cst_62 = arith.constant dense<0.000000e+00> : vector<96xf32>
    %129 = vector.multi_reduction <add>, %126, %cst_62 [1] : vector<96x128xf32> to vector<96xf32>
    %130 = vector.shape_cast %129 : vector<96xf32> to vector<96x1xf32>
    %cst_63 = arith.constant 1.280000e+02 : f32
    %131 = vector.broadcast %cst_63 : f32 to vector<96x1xf32>
    %132 = arith.divf %130, %131 : vector<96x1xf32>
    %133 = vector.broadcast %132 : vector<96x1xf32> to vector<96x128xf32>
    %134 = arith.subf %126, %133 : vector<96x128xf32>
    %135 = arith.mulf %134, %134 : vector<96x128xf32>
    %cst_64 = arith.constant dense<0.000000e+00> : vector<96xf32>
    %136 = vector.multi_reduction <add>, %135, %cst_64 [1] : vector<96x128xf32> to vector<96xf32>
    %137 = vector.shape_cast %136 : vector<96xf32> to vector<96x1xf32>
    %cst_65 = arith.constant 1.280000e+02 : f32
    %138 = vector.broadcast %cst_65 : f32 to vector<96x1xf32>
    %139 = arith.divf %137, %138 : vector<96x1xf32>
    %cst_66 = arith.constant 9.99999974E-6 : f32
    %140 = vector.broadcast %cst_66 : f32 to vector<96x1xf32>
    %141 = arith.addf %139, %140 : vector<96x1xf32>
    %142 = math.rsqrt %141 : vector<96x1xf32>
    %143 = vector.broadcast %142 : vector<96x1xf32> to vector<96x128xf32>
    %144 = arith.mulf %134, %143 : vector<96x128xf32>
    %145 = vector.broadcast %127 : vector<1x128xf32> to vector<96x128xf32>
    %146 = arith.mulf %144, %145 : vector<96x128xf32>
    %147 = vector.broadcast %128 : vector<1x128xf32> to vector<96x128xf32>
    %148 = arith.addf %146, %147 : vector<96x128xf32>
    %149 = vector.shape_cast %148 : vector<96x128xf32> to vector<6x16x128xf32>
    %150 = arith.truncf %149 : vector<6x16x128xf32> to vector<6x16x128xbf16>
    %c0_67 = arith.constant 0 : index
    %c0_68 = arith.constant 0 : index
    %151 = vector.load %arg21[%c0_67, %c0_68] : memref<8x16xf32, #tpu.memory_space<vmem>>, vector<8x16xf32>
    %152 = arith.truncf %151 : vector<8x16xf32> to vector<8x16xbf16>
    %153 = vector.shape_cast %152 : vector<8x16xbf16> to vector<1x8x16xbf16>
    %154 = vector.broadcast %153 : vector<1x8x16xbf16> to vector<6x8x16xbf16>
    "tpu.trace_start"() <{level = 10 : i32, message = "bqp,bph->bqh"}> : () -> ()
    %cst_69 = arith.constant dense<0.000000e+00> : vector<6x8x128xf32>
    %155 = tpu.matmul %154, %150, %cst_69 {dimension_numbers = #tpu.dot_dimension_numbers<[2], [1], [1], [2], [0, 0, 0, 1, 1, 2], [0], [0]>} : vector<6x8x16xbf16>, vector<6x16x128xbf16>, vector<6x8x128xf32> -> vector<6x8x128xf32>
    "tpu.trace_stop"() : () -> ()
    %c0_70 = arith.constant 0 : index
    %c0_71 = arith.constant 0 : index
    %156 = vector.load %arg22[%c0_70, %c0_71] : memref<8x1xf32, #tpu.memory_space<vmem>>, vector<8x1xf32>
    %157 = vector.shape_cast %156 : vector<8x1xf32> to vector<1x8x1xf32>
    %158 = vector.broadcast %157 : vector<1x8x1xf32> to vector<6x8x128xf32>
    %159 = arith.addf %155, %158 : vector<6x8x128xf32>
    %cst_72 = arith.constant 5.000000e-01 : f32
    %160 = vector.broadcast %cst_72 : f32 to vector<6x8x128xf32>
    %161 = arith.mulf %160, %159 : vector<6x8x128xf32>
    %162 = arith.mulf %159, %159 : vector<6x8x128xf32>
    %163 = arith.mulf %162, %159 : vector<6x8x128xf32>
    %cst_73 = arith.constant 4.471500e-02 : f32
    %164 = vector.broadcast %cst_73 : f32 to vector<6x8x128xf32>
    %165 = arith.mulf %164, %163 : vector<6x8x128xf32>
    %166 = arith.addf %159, %165 : vector<6x8x128xf32>
    %cst_74 = arith.constant 0.797884583 : f32
    %167 = vector.broadcast %cst_74 : f32 to vector<6x8x128xf32>
    %168 = arith.mulf %167, %166 : vector<6x8x128xf32>
    %169 = math.tanh %168 : vector<6x8x128xf32>
    %cst_75 = arith.constant 1.000000e+00 : f32
    %170 = vector.broadcast %cst_75 : f32 to vector<6x8x128xf32>
    %171 = arith.addf %170, %169 : vector<6x8x128xf32>
    %172 = arith.mulf %161, %171 : vector<6x8x128xf32>
    %c0_76 = arith.constant 0 : index
    %c0_77 = arith.constant 0 : index
    %173 = vector.load %arg23[%c0_76, %c0_77] : memref<16x8xf32, #tpu.memory_space<vmem>>, vector<16x8xf32>
    %174 = arith.truncf %173 : vector<16x8xf32> to vector<16x8xbf16>
    %175 = vector.shape_cast %174 : vector<16x8xbf16> to vector<1x16x8xbf16>
    %176 = vector.broadcast %175 : vector<1x16x8xbf16> to vector<6x16x8xbf16>
    %177 = arith.truncf %172 : vector<6x8x128xf32> to vector<6x8x128xbf16>
    "tpu.trace_start"() <{level = 10 : i32, message = "bpq,bqh->bph"}> : () -> ()
    %cst_78 = arith.constant dense<0.000000e+00> : vector<6x16x128xf32>
    %178 = tpu.matmul %176, %177, %cst_78 {dimension_numbers = #tpu.dot_dimension_numbers<[2], [1], [1], [2], [0, 0, 0, 1, 1, 2], [0], [0]>} : vector<6x16x8xbf16>, vector<6x8x128xbf16>, vector<6x16x128xf32> -> vector<6x16x128xf32>
    "tpu.trace_stop"() : () -> ()
    %c0_79 = arith.constant 0 : index
    %c0_80 = arith.constant 0 : index
    %179 = vector.load %arg24[%c0_79, %c0_80] : memref<16x1xf32, #tpu.memory_space<vmem>>, vector<16x1xf32>
    %180 = vector.shape_cast %179 : vector<16x1xf32> to vector<1x16x1xf32>
    %181 = vector.broadcast %180 : vector<1x16x1xf32> to vector<6x16x128xf32>
    %182 = arith.addf %178, %181 : vector<6x16x128xf32>
    %183 = vector.shape_cast %182 : vector<6x16x128xf32> to vector<96x128xf32>
    %184 = arith.addf %126, %183 : vector<96x128xf32>
    %c0_81 = arith.constant 0 : index
    %c0_82 = arith.constant 0 : index
    %185 = vector.load %arg25[%c0_81, %c0_82] : memref<1x128xf32, #tpu.memory_space<vmem>>, vector<1x128xf32>
    %c0_83 = arith.constant 0 : index
    %c0_84 = arith.constant 0 : index
    %186 = vector.load %arg26[%c0_83, %c0_84] : memref<1x128xf32, #tpu.memory_space<vmem>>, vector<1x128xf32>
    %cst_85 = arith.constant dense<0.000000e+00> : vector<96xf32>
    %187 = vector.multi_reduction <add>, %184, %cst_85 [1] : vector<96x128xf32> to vector<96xf32>
    %188 = vector.shape_cast %187 : vector<96xf32> to vector<96x1xf32>
    %cst_86 = arith.constant 1.280000e+02 : f32
    %189 = vector.broadcast %cst_86 : f32 to vector<96x1xf32>
    %190 = arith.divf %188, %189 : vector<96x1xf32>
    %191 = vector.broadcast %190 : vector<96x1xf32> to vector<96x128xf32>
    %192 = arith.subf %184, %191 : vector<96x128xf32>
    %193 = arith.mulf %192, %192 : vector<96x128xf32>
    %cst_87 = arith.constant dense<0.000000e+00> : vector<96xf32>
    %194 = vector.multi_reduction <add>, %193, %cst_87 [1] : vector<96x128xf32> to vector<96xf32>
    %195 = vector.shape_cast %194 : vector<96xf32> to vector<96x1xf32>
    %cst_88 = arith.constant 1.280000e+02 : f32
    %196 = vector.broadcast %cst_88 : f32 to vector<96x1xf32>
    %197 = arith.divf %195, %196 : vector<96x1xf32>
    %cst_89 = arith.constant 9.99999974E-6 : f32
    %198 = vector.broadcast %cst_89 : f32 to vector<96x1xf32>
    %199 = arith.addf %197, %198 : vector<96x1xf32>
    %200 = math.rsqrt %199 : vector<96x1xf32>
    %201 = vector.broadcast %200 : vector<96x1xf32> to vector<96x128xf32>
    %202 = arith.mulf %192, %201 : vector<96x128xf32>
    %203 = vector.broadcast %185 : vector<1x128xf32> to vector<96x128xf32>
    %204 = arith.mulf %202, %203 : vector<96x128xf32>
    %205 = vector.broadcast %186 : vector<1x128xf32> to vector<96x128xf32>
    %206 = arith.addf %204, %205 : vector<96x128xf32>
    %207 = arith.truncf %206 : vector<96x128xf32> to vector<96x128xbf16>
    %c0_90 = arith.constant 0 : index
    %c0_91 = arith.constant 0 : index
    %208 = vector.load %arg27[%c0_90, %c0_91] : memref<128x512xbf16, #tpu.memory_space<vmem>>, vector<128x512xbf16>
    %cst_92 = arith.constant dense<0.000000e+00> : vector<96x512xf32>
    %209 = tpu.matmul %207, %208, %cst_92 {dimension_numbers = #tpu.dot_dimension_numbers<[1], [0], [0], [1], [0, 0, 1, 1], [], []>} : vector<96x128xbf16>, vector<128x512xbf16>, vector<96x512xf32> -> vector<96x512xf32>
    %c0_93 = arith.constant 0 : index
    %c0_94 = arith.constant 0 : index
    %210 = vector.load %arg28[%c0_93, %c0_94] : memref<1x512xf32, #tpu.memory_space<vmem>>, vector<1x512xf32>
    %211 = vector.broadcast %210 : vector<1x512xf32> to vector<96x512xf32>
    %212 = arith.addf %209, %211 : vector<96x512xf32>
    %cst_95 = arith.constant 5.000000e-01 : f32
    %213 = vector.broadcast %cst_95 : f32 to vector<96x512xf32>
    %214 = arith.mulf %213, %212 : vector<96x512xf32>
    %215 = arith.mulf %212, %212 : vector<96x512xf32>
    %216 = arith.mulf %215, %212 : vector<96x512xf32>
    %cst_96 = arith.constant 4.471500e-02 : f32
    %217 = vector.broadcast %cst_96 : f32 to vector<96x512xf32>
    %218 = arith.mulf %217, %216 : vector<96x512xf32>
    %219 = arith.addf %212, %218 : vector<96x512xf32>
    %cst_97 = arith.constant 0.797884583 : f32
    %220 = vector.broadcast %cst_97 : f32 to vector<96x512xf32>
    %221 = arith.mulf %220, %219 : vector<96x512xf32>
    %222 = math.tanh %221 : vector<96x512xf32>
    %cst_98 = arith.constant 1.000000e+00 : f32
    %223 = vector.broadcast %cst_98 : f32 to vector<96x512xf32>
    %224 = arith.addf %223, %222 : vector<96x512xf32>
    %225 = arith.mulf %214, %224 : vector<96x512xf32>
    %226 = arith.truncf %225 : vector<96x512xf32> to vector<96x512xbf16>
    %c0_99 = arith.constant 0 : index
    %c0_100 = arith.constant 0 : index
    %227 = vector.load %arg29[%c0_99, %c0_100] : memref<512x128xbf16, #tpu.memory_space<vmem>>, vector<512x128xbf16>
    %cst_101 = arith.constant dense<0.000000e+00> : vector<96x128xf32>
    %228 = tpu.matmul %226, %227, %cst_101 {dimension_numbers = #tpu.dot_dimension_numbers<[1], [0], [0], [1], [0, 0, 1, 1], [], []>} : vector<96x512xbf16>, vector<512x128xbf16>, vector<96x128xf32> -> vector<96x128xf32>
    %c0_102 = arith.constant 0 : index
    %c0_103 = arith.constant 0 : index
    %229 = vector.load %arg30[%c0_102, %c0_103] : memref<1x128xf32, #tpu.memory_space<vmem>>, vector<1x128xf32>
    %230 = vector.broadcast %229 : vector<1x128xf32> to vector<96x128xf32>
    %231 = arith.addf %228, %230 : vector<96x128xf32>
    %232 = arith.addf %184, %231 : vector<96x128xf32>
    %c0_104 = arith.constant 0 : index
    %c0_105 = arith.constant 0 : index
    %233 = vector.load %arg31[%c0_104, %c0_105] : memref<1x128xf32, #tpu.memory_space<vmem>>, vector<1x128xf32>
    %c0_106 = arith.constant 0 : index
    %c0_107 = arith.constant 0 : index
    %234 = vector.load %arg32[%c0_106, %c0_107] : memref<1x128xf32, #tpu.memory_space<vmem>>, vector<1x128xf32>
    %cst_108 = arith.constant dense<0.000000e+00> : vector<96xf32>
    %235 = vector.multi_reduction <add>, %232, %cst_108 [1] : vector<96x128xf32> to vector<96xf32>
    %236 = vector.shape_cast %235 : vector<96xf32> to vector<96x1xf32>
    %cst_109 = arith.constant 1.280000e+02 : f32
    %237 = vector.broadcast %cst_109 : f32 to vector<96x1xf32>
    %238 = arith.divf %236, %237 : vector<96x1xf32>
    %239 = vector.broadcast %238 : vector<96x1xf32> to vector<96x128xf32>
    %240 = arith.subf %232, %239 : vector<96x128xf32>
    %241 = arith.mulf %240, %240 : vector<96x128xf32>
    %cst_110 = arith.constant dense<0.000000e+00> : vector<96xf32>
    %242 = vector.multi_reduction <add>, %241, %cst_110 [1] : vector<96x128xf32> to vector<96xf32>
    %243 = vector.shape_cast %242 : vector<96xf32> to vector<96x1xf32>
    %cst_111 = arith.constant 1.280000e+02 : f32
    %244 = vector.broadcast %cst_111 : f32 to vector<96x1xf32>
    %245 = arith.divf %243, %244 : vector<96x1xf32>
    %cst_112 = arith.constant 9.99999974E-6 : f32
    %246 = vector.broadcast %cst_112 : f32 to vector<96x1xf32>
    %247 = arith.addf %245, %246 : vector<96x1xf32>
    %248 = math.rsqrt %247 : vector<96x1xf32>
    %249 = vector.broadcast %248 : vector<96x1xf32> to vector<96x128xf32>
    %250 = arith.mulf %240, %249 : vector<96x128xf32>
    %251 = vector.broadcast %233 : vector<1x128xf32> to vector<96x128xf32>
    %252 = arith.mulf %250, %251 : vector<96x128xf32>
    %253 = vector.broadcast %234 : vector<1x128xf32> to vector<96x128xf32>
    %254 = arith.addf %252, %253 : vector<96x128xf32>
    %255 = vector.shape_cast %254 : vector<96x128xf32> to vector<6x16x128xf32>
    %cst_113 = arith.constant dense<0.000000e+00> : vector<6x128xf32>
    %256 = vector.multi_reduction <add>, %255, %cst_113 [1] : vector<6x16x128xf32> to vector<6x128xf32>
    %cst_114 = arith.constant 1.600000e+01 : f32
    %257 = vector.broadcast %cst_114 : f32 to vector<6x128xf32>
    %258 = arith.divf %256, %257 : vector<6x128xf32>
    %259 = arith.truncf %258 : vector<6x128xf32> to vector<6x128xbf16>
    %c0_115 = arith.constant 0 : index
    %c0_116 = arith.constant 0 : index
    %260 = vector.load %arg33[%c0_115, %c0_116] : memref<128x128xbf16, #tpu.memory_space<vmem>>, vector<128x128xbf16>
    %cst_117 = arith.constant dense<0.000000e+00> : vector<6x128xf32>
    %261 = tpu.matmul %259, %260, %cst_117 {dimension_numbers = #tpu.dot_dimension_numbers<[1], [0], [0], [1], [0, 0, 1, 1], [], []>} : vector<6x128xbf16>, vector<128x128xbf16>, vector<6x128xf32> -> vector<6x128xf32>
    %c0_118 = arith.constant 0 : index
    %c0_119 = arith.constant 0 : index
    %262 = vector.load %arg34[%c0_118, %c0_119] : memref<1x128xf32, #tpu.memory_space<vmem>>, vector<1x128xf32>
    %263 = vector.broadcast %262 : vector<1x128xf32> to vector<6x128xf32>
    %264 = arith.addf %261, %263 : vector<6x128xf32>
    %c0_120 = arith.constant 0 : index
    %c0_121 = arith.constant 0 : index
    %265 = vector.load %arg35[%c0_120, %c0_121] : memref<6x128xf32, #tpu.memory_space<vmem>>, vector<6x128xf32>
    tpu.vector_store %arg35[%c0_120, %c0_121], %264 {strides = array<i32>} : memref<6x128xf32, #tpu.memory_space<vmem>>, vector<6x128xf32>,
    return
  }
  func.func @transform_0(%arg0: i32) -> (i32, i32) {
    %c0_i32 = arith.constant 0 : i32
    %c0_i32_0 = arith.constant 0 : i32
    return %arg0, %c0_i32 : i32, i32
  }
  func.func @transform_1(%arg0: i32) -> (i32, i32) {
    %c0_i32 = arith.constant 0 : i32
    %c0_i32_0 = arith.constant 0 : i32
    return %arg0, %c0_i32 : i32, i32
  }
  func.func @transform_2(%arg0: i32) -> (i32, i32) {
    %c0_i32 = arith.constant 0 : i32
    %c0_i32_0 = arith.constant 0 : i32
    %c0_i32_1 = arith.constant 0 : i32
    return %c0_i32, %c0_i32_0 : i32, i32
  }
  func.func @transform_3(%arg0: i32) -> (i32, i32) {
    %c0_i32 = arith.constant 0 : i32
    %c0_i32_0 = arith.constant 0 : i32
    %c0_i32_1 = arith.constant 0 : i32
    return %c0_i32, %c0_i32_0 : i32, i32
  }
  func.func @transform_4(%arg0: i32) -> (i32, i32) {
    %c0_i32 = arith.constant 0 : i32
    %c0_i32_0 = arith.constant 0 : i32
    %c0_i32_1 = arith.constant 0 : i32
    return %c0_i32, %c0_i32_0 : i32, i32
  }
  func.func @transform_5(%arg0: i32) -> (i32, i32) {
    %c0_i32 = arith.constant 0 : i32
    %c0_i32_0 = arith.constant 0 : i32
    %c0_i32_1 = arith.constant 0 : i32
    return %c0_i32, %c0_i32_0 : i32, i32
  }
  func.func @transform_6(%arg0: i32) -> (i32, i32) {
    %c0_i32 = arith.constant 0 : i32
    %c0_i32_0 = arith.constant 0 : i32
    %c0_i32_1 = arith.constant 0 : i32
    return %c0_i32, %c0_i32_0 : i32, i32
  }
  func.func @transform_7(%arg0: i32) -> (i32, i32) {
    %c0_i32 = arith.constant 0 : i32
    %c0_i32_0 = arith.constant 0 : i32
    %c0_i32_1 = arith.constant 0 : i32
    return %c0_i32, %c0_i32_0 : i32, i32
  }
  func.func @transform_8(%arg0: i32) -> (i32, i32) {
    %c0_i32 = arith.constant 0 : i32
    %c0_i32_0 = arith.constant 0 : i32
    %c0_i32_1 = arith.constant 0 : i32
    return %c0_i32, %c0_i32_0 : i32, i32
  }
  func.func @transform_9(%arg0: i32) -> (i32, i32) {
    %c0_i32 = arith.constant 0 : i32
    %c0_i32_0 = arith.constant 0 : i32
    %c0_i32_1 = arith.constant 0 : i32
    return %c0_i32, %c0_i32_0 : i32, i32
  }
  func.func @transform_10(%arg0: i32) -> (i32, i32) {
    %c0_i32 = arith.constant 0 : i32
    %c0_i32_0 = arith.constant 0 : i32
    %c0_i32_1 = arith.constant 0 : i32
    return %c0_i32, %c0_i32_0 : i32, i32
  }
  func.func @transform_11(%arg0: i32) -> (i32, i32) {
    %c0_i32 = arith.constant 0 : i32
    %c0_i32_0 = arith.constant 0 : i32
    %c0_i32_1 = arith.constant 0 : i32
    return %c0_i32, %c0_i32_0 : i32, i32
  }
  func.func @transform_12(%arg0: i32) -> (i32, i32) {
    %c0_i32 = arith.constant 0 : i32
    %c0_i32_0 = arith.constant 0 : i32
    %c0_i32_1 = arith.constant 0 : i32
    return %c0_i32, %c0_i32_0 : i32, i32
  }
  func.func @transform_13(%arg0: i32) -> (i32, i32) {
    %c0_i32 = arith.constant 0 : i32
    %c0_i32_0 = arith.constant 0 : i32
    %c0_i32_1 = arith.constant 0 : i32
    return %c0_i32, %c0_i32_0 : i32, i32
  }
  func.func @transform_14(%arg0: i32) -> (i32, i32) {
    %c0_i32 = arith.constant 0 : i32
    %c0_i32_0 = arith.constant 0 : i32
    %c0_i32_1 = arith.constant 0 : i32
    return %c0_i32, %c0_i32_0 : i32, i32
  }
  func.func @transform_15(%arg0: i32) -> (i32, i32) {
    %c0_i32 = arith.constant 0 : i32
    %c0_i32_0 = arith.constant 0 : i32
    %c0_i32_1 = arith.constant 0 : i32
    return %c0_i32, %c0_i32_0 : i32, i32
  }
  func.func @transform_16(%arg0: i32) -> (i32, i32) {
    %c0_i32 = arith.constant 0 : i32
    %c0_i32_0 = arith.constant 0 : i32
    %c0_i32_1 = arith.constant 0 : i32
    return %c0_i32, %c0_i32_0 : i32, i32
  }
  func.func @transform_17(%arg0: i32) -> (i32, i32) {
    %c0_i32 = arith.constant 0 : i32
    %c0_i32_0 = arith.constant 0 : i32
    %c0_i32_1 = arith.constant 0 : i32
    return %c0_i32, %c0_i32_0 : i32, i32
  }
  func.func @transform_18(%arg0: i32) -> (i32, i32) {
    %c0_i32 = arith.constant 0 : i32
    %c0_i32_0 = arith.constant 0 : i32
    %c0_i32_1 = arith.constant 0 : i32
    return %c0_i32, %c0_i32_0 : i32, i32
  }
  func.func @transform_19(%arg0: i32) -> (i32, i32) {
    %c0_i32 = arith.constant 0 : i32
    %c0_i32_0 = arith.constant 0 : i32
    %c0_i32_1 = arith.constant 0 : i32
    return %c0_i32, %c0_i32_0 : i32, i32
  }
  func.func @transform_20(%arg0: i32) -> (i32, i32) {
    %c0_i32 = arith.constant 0 : i32
    %c0_i32_0 = arith.constant 0 : i32
    %c0_i32_1 = arith.constant 0 : i32
    return %c0_i32, %c0_i32_0 : i32, i32
  }
  func.func @transform_21(%arg0: i32) -> (i32, i32) {
    %c0_i32 = arith.constant 0 : i32
    %c0_i32_0 = arith.constant 0 : i32
    %c0_i32_1 = arith.constant 0 : i32
    return %c0_i32, %c0_i32_0 : i32, i32
  }
  func.func @transform_22(%arg0: i32) -> (i32, i32) {
    %c0_i32 = arith.constant 0 : i32
    %c0_i32_0 = arith.constant 0 : i32
    %c0_i32_1 = arith.constant 0 : i32
    return %c0_i32, %c0_i32_0 : i32, i32
  }
  func.func @transform_23(%arg0: i32) -> (i32, i32) {
    %c0_i32 = arith.constant 0 : i32
    %c0_i32_0 = arith.constant 0 : i32
    %c0_i32_1 = arith.constant 0 : i32
    return %c0_i32, %c0_i32_0 : i32, i32
  }
  func.func @transform_24(%arg0: i32) -> (i32, i32) {
    %c0_i32 = arith.constant 0 : i32
    %c0_i32_0 = arith.constant 0 : i32
    %c0_i32_1 = arith.constant 0 : i32
    return %c0_i32, %c0_i32_0 : i32, i32
  }
  func.func @transform_25(%arg0: i32) -> (i32, i32) {
    %c0_i32 = arith.constant 0 : i32
    %c0_i32_0 = arith.constant 0 : i32
    %c0_i32_1 = arith.constant 0 : i32
    return %c0_i32, %c0_i32_0 : i32, i32
  }
  func.func @transform_26(%arg0: i32) -> (i32, i32) {
    %c0_i32 = arith.constant 0 : i32
    %c0_i32_0 = arith.constant 0 : i32
    %c0_i32_1 = arith.constant 0 : i32
    return %c0_i32, %c0_i32_0 : i32, i32
  }
  func.func @transform_27(%arg0: i32) -> (i32, i32) {
    %c0_i32 = arith.constant 0 : i32
    %c0_i32_0 = arith.constant 0 : i32
    %c0_i32_1 = arith.constant 0 : i32
    return %c0_i32, %c0_i32_0 : i32, i32
  }
  func.func @transform_28(%arg0: i32) -> (i32, i32) {
    %c0_i32 = arith.constant 0 : i32
    %c0_i32_0 = arith.constant 0 : i32
    %c0_i32_1 = arith.constant 0 : i32
    return %c0_i32, %c0_i32_0 : i32, i32
  }
  func.func @transform_29(%arg0: i32) -> (i32, i32) {
    %c0_i32 = arith.constant 0 : i32
    %c0_i32_0 = arith.constant 0 : i32
    %c0_i32_1 = arith.constant 0 : i32
    return %c0_i32, %c0_i32_0 : i32, i32
  }
  func.func @transform_30(%arg0: i32) -> (i32, i32) {
    %c0_i32 = arith.constant 0 : i32
    %c0_i32_0 = arith.constant 0 : i32
    %c0_i32_1 = arith.constant 0 : i32
    return %c0_i32, %c0_i32_0 : i32, i32
  }
  func.func @transform_31(%arg0: i32) -> (i32, i32) {
    %c0_i32 = arith.constant 0 : i32
    %c0_i32_0 = arith.constant 0 : i32
    %c0_i32_1 = arith.constant 0 : i32
    return %c0_i32, %c0_i32_0 : i32, i32
  }
  func.func @transform_32(%arg0: i32) -> (i32, i32) {
    %c0_i32 = arith.constant 0 : i32
    %c0_i32_0 = arith.constant 0 : i32
    %c0_i32_1 = arith.constant 0 : i32
    return %c0_i32, %c0_i32_0 : i32, i32
  }
  func.func @transform_33(%arg0: i32) -> (i32, i32) {
    %c0_i32 = arith.constant 0 : i32
    %c0_i32_0 = arith.constant 0 : i32
    %c0_i32_1 = arith.constant 0 : i32
    return %c0_i32, %c0_i32_0 : i32, i32
  }
  func.func @transform_34(%arg0: i32) -> (i32, i32) {
    %c0_i32 = arith.constant 0 : i32
    %c0_i32_0 = arith.constant 0 : i32
    return %arg0, %c0_i32 : i32, i32
  }
}

</mosaic_0001>

<llo_original>
// kernel: mlp_mixer_forward.1
$region0: #{mlp_mixer_forward.1}
  #allocation0 [shape = 'u32[]', space=smem, size = 0x4, offset = 0x4, fixed_abs, tag = 'smem constant byte address 0x4 - core index']
  #allocation1 [shape = 'u32[72,128]{1,0:T(1,128)}', space=vmem, size = 0x9000, scoped, tag = 'internal scratch']
  %s0 = inlined_call_operand.smem [shape: u32[35], index: -1, kind: input, shape index: {}]
  %s1 = sld [smem:[%s0]]
  %s2 = scalar_lea.smem %s0, 1
  %s3 = sld [smem:[%s2]]
  %s4 = scalar_lea.smem %s0, 2
  %s5 = sld [smem:[%s4]]
  %s6 = scalar_lea.smem %s0, 3
  %s7 = sld [smem:[%s6]]
  %s8 = scalar_lea.smem %s0, 4
  %s9 = sld [smem:[%s8]]
  %s10 = scalar_lea.smem %s0, 5
  %s11 = sld [smem:[%s10]]
  %s12 = scalar_lea.smem %s0, 6
  %s13 = sld [smem:[%s12]]
  %s14 = scalar_lea.smem %s0, 7
  %s15 = sld [smem:[%s14]]
  %s16 = scalar_lea.smem %s0, 8
  %s17 = sld [smem:[%s16]]
  %s18 = scalar_lea.smem %s0, 9
  %s19 = sld [smem:[%s18]]
  %s20 = scalar_lea.smem %s0, 10
  %s21 = sld [smem:[%s20]]
  %s22 = scalar_lea.smem %s0, 11
  %s23 = sld [smem:[%s22]]
  %s24 = scalar_lea.smem %s0, 12
  %s25 = sld [smem:[%s24]]
  %s26 = scalar_lea.smem %s0, 13
  %s27 = sld [smem:[%s26]]
  %s28 = scalar_lea.smem %s0, 14
  %s29 = sld [smem:[%s28]]
  %s30 = scalar_lea.smem %s0, 15
  %s31 = sld [smem:[%s30]]
  %s32 = scalar_lea.smem %s0, 16
  %s33 = sld [smem:[%s32]]
  %s34 = scalar_lea.smem %s0, 17
  %s35 = sld [smem:[%s34]]
  %s36 = scalar_lea.smem %s0, 18
  %s37 = sld [smem:[%s36]]
  %s38 = scalar_lea.smem %s0, 19
  %s39 = sld [smem:[%s38]]
  %s40 = scalar_lea.smem %s0, 20
  %s41 = sld [smem:[%s40]]
  %s42 = scalar_lea.smem %s0, 21
  %s43 = sld [smem:[%s42]]
  %s44 = scalar_lea.smem %s0, 22
  %s45 = sld [smem:[%s44]]
  %s46 = scalar_lea.smem %s0, 23
  %s47 = sld [smem:[%s46]]
  %s48 = scalar_lea.smem %s0, 24
  %s49 = sld [smem:[%s48]]
  %s50 = scalar_lea.smem %s0, 25
  %s51 = sld [smem:[%s50]]
  %s52 = scalar_lea.smem %s0, 26
  %s53 = sld [smem:[%s52]]
  %s54 = scalar_lea.smem %s0, 27
  %s55 = sld [smem:[%s54]]
  %s56 = scalar_lea.smem %s0, 28
  %s57 = sld [smem:[%s56]]
  %s58 = scalar_lea.smem %s0, 29
  %s59 = sld [smem:[%s58]]
  %s60 = scalar_lea.smem %s0, 30
  %s61 = sld [smem:[%s60]]
  %s62 = scalar_lea.smem %s0, 31
  %s63 = sld [smem:[%s62]]
  %s64 = scalar_lea.smem %s0, 32
  %s65 = sld [smem:[%s64]]
  %s66 = scalar_lea.smem %s0, 33
  %s67 = sld [smem:[%s66]]
  %s68 = scalar_lea.smem %s0, 34
  %s69 = sld [smem:[%s68]]
  %s70 = sld [smem:[#allocation0]]
  $region230: #{mlp_mixer_forward.1} parent=0
    _
  %s72 = ssub.s32 1, %s70
  %s73 = scalar_select 0, %s72, %s70
  $region1: #{mlp_mixer_forward.1} parent=0
    #allocation2 [shape = 'u8[49152]{0}', space=vmem, size = 0xc000, scoped, tag = 'input window, operand 0, single buffered']
    #allocation3 [shape = 's32[1]{0}', space=sflag, size = 0x4, scoped, tag = 'scoped memory for mlp_mixer_forward.1']
    #allocation4 [shape = 'u8[8192]{0}', space=vmem, size = 0x2000, scoped, tag = 'input window, operand 4, single buffered']
    #allocation5 [shape = 's32[1]{0}', space=sflag, size = 0x4, scoped, tag = 'scoped memory for mlp_mixer_forward.1']
    #allocation6 [shape = 'u8[512]{0}', space=vmem, size = 0x400, scoped, tag = 'input window, operand 5, single buffered']
    #allocation7 [shape = 'u8[512]{0}', space=vmem, size = 0x400, scoped, tag = 'input window, operand 6, single buffered']
    #allocation8 [shape = 's32[1]{0}', space=sflag, size = 0x4, scoped, tag = 'scoped memory for mlp_mixer_forward.1']
    #allocation9 [shape = 'u8[512]{0}', space=vmem, size = 0x400, scoped, tag = 'input window, operand 7, single buffered']
    #allocation10 [shape = 'u8[4096]{0}', space=vmem, size = 0x1000, scoped, tag = 'input window, operand 8, single buffered']
    #allocation11 [shape = 's32[1]{0}', space=sflag, size = 0x4, scoped, tag = 'scoped memory for mlp_mixer_forward.1']
    #allocation12 [shape = 'u8[512]{0}', space=vmem, size = 0x400, scoped, tag = 'input window, operand 12, single buffered']
    #allocation13 [shape = 'u8[512]{0}', space=vmem, size = 0x400, scoped, tag = 'input window, operand 13, single buffered']
    #allocation14 [shape = 's32[1]{0}', space=sflag, size = 0x4, scoped, tag = 'scoped memory for mlp_mixer_forward.1']
    #allocation15 [shape = 'u8[2048]{0}', space=vmem, size = 0x800, scoped, tag = 'input window, operand 15, single buffered']
    #allocation16 [shape = 'u8[131072]{0}', space=vmem, size = 0x20000, scoped, tag = 'input window, operand 16, single buffered']
    #allocation17 [shape = 's32[1]{0}', space=sflag, size = 0x4, scoped, tag = 'scoped memory for mlp_mixer_forward.1']
    #allocation18 [shape = 'u8[512]{0}', space=vmem, size = 0x400, scoped, tag = 'input window, operand 17, single buffered']
    #allocation19 [shape = 'u8[512]{0}', space=vmem, size = 0x400, scoped, tag = 'input window, operand 19, single buffered']
    #allocation20 [shape = 's32[1]{0}', space=sflag, size = 0x4, scoped, tag = 'scoped memory for mlp_mixer_forward.1']
    #allocation21 [shape = 'u8[4096]{0}', space=vmem, size = 0x1000, scoped, tag = 'input window, operand 20, single buffered']
    #allocation22 [shape = 'u8[512]{0}', space=vmem, size = 0x400, scoped, tag = 'input window, operand 24, single buffered']
    #allocation23 [shape = 's32[1]{0}', space=sflag, size = 0x4, scoped, tag = 'scoped memory for mlp_mixer_forward.1']
    #allocation24 [shape = 'u8[512]{0}', space=vmem, size = 0x400, scoped, tag = 'input window, operand 25, single buffered']
    #allocation25 [shape = 'u8[131072]{0}', space=vmem, size = 0x20000, scoped, tag = 'input window, operand 26, single buffered']
    #allocation26 [shape = 's32[1]{0}', space=sflag, size = 0x4, scoped, tag = 'scoped memory for mlp_mixer_forward.1']
    #allocation27 [shape = 'u8[2048]{0}', space=vmem, size = 0x800, scoped, tag = 'input window, operand 27, single buffered']
    #allocation28 [shape = 'u8[131072]{0}', space=vmem, size = 0x20000, scoped, tag = 'input window, operand 28, single buffered']
    #allocation29 [shape = 's32[1]{0}', space=sflag, size = 0x4, scoped, tag = 'scoped memory for mlp_mixer_forward.1']
    #allocation30 [shape = 'u8[512]{0}', space=vmem, size = 0x400, scoped, tag = 'input window, operand 29, single buffered']
    #allocation31 [shape = 'u8[32768]{0}', space=vmem, size = 0x8000, scoped, tag = 'input window, operand 32, single buffered']
    #allocation32 [shape = 's32[1]{0}', space=sflag, size = 0x4, scoped, tag = 'scoped memory for mlp_mixer_forward.1']
    #allocation33 [shape = 'u8[512]{0}', space=vmem, size = 0x400, scoped, tag = 'input window, operand 33, single buffered']
    %74 = vsyncpa [#allocation3], 0
    %75 = vsyncpa [#allocation5], 0
    %76 = vsyncpa [#allocation8], 0
    %77 = vsyncpa [#allocation11], 0
    %78 = vsyncpa [#allocation14], 0
    %79 = vsyncpa [#allocation17], 0
    %80 = vsyncpa [#allocation20], 0
    %81 = vsyncpa [#allocation23], 0
    %82 = vsyncpa [#allocation26], 0
    %83 = vsyncpa [#allocation29], 0
    %84 = vsyncpa [#allocation32], 0
    // Predicated region
    $region2: #{mlp_mixer_forward.1} parent=1 // pred_check
      _
    $region3: #{mlp_mixer_forward.1} parent=1 // pred_check_branch
      %86 = sbr.rel (0) target = $region5
    $region4: #{mlp_mixer_forward.1} parent=1 // pred_region
      %88 = vsyncadd [#allocation3], 0
      %s89 = sshll.u32 %s1, 4
      %s90 = int_to_ptr.hbm [resolvable:$true] %s89
      %s91 = sshll.u32 [#allocation2], 4
      %s92 = int_to_ptr.vmem [resolvable:$true] %s91
      %97 = dma.hbm_to_vmem [thread:$0]  %s90, 1536, %s92, [#allocation3], 128, 128, 8
    $region5: #{mlp_mixer_forward.1} parent=1 // pred_fallthru
      _
    // Predicated region
    $region6: #{mlp_mixer_forward.1} parent=1 // pred_check
      _
    $region7: #{mlp_mixer_forward.1} parent=1 // pred_check_branch
      %99 = sbr.rel (0) target = $region9
    $region8: #{mlp_mixer_forward.1} parent=1 // pred_region
      _
    $region9: #{mlp_mixer_forward.1} parent=1 // pred_fallthru
      _
    // Predicated region
    $region10: #{mlp_mixer_forward.1} parent=1 // pred_check
      _
    $region11: #{mlp_mixer_forward.1} parent=1 // pred_check_branch
      %101 = sbr.rel (0) target = $region13
    $region12: #{mlp_mixer_forward.1} parent=1 // pred_region
      _
    $region13: #{mlp_mixer_forward.1} parent=1 // pred_fallthru
      _
    // Predicated region
    $region14: #{mlp_mixer_forward.1} parent=1 // pred_check
      _
    $region15: #{mlp_mixer_forward.1} parent=1 // pred_check_branch
      %103 = sbr.rel (0) target = $region17
    $region16: #{mlp_mixer_forward.1} parent=1 // pred_region
      _
    $region17: #{mlp_mixer_forward.1} parent=1 // pred_fallthru
      _
    // Predicated region
    $region18: #{mlp_mixer_forward.1} parent=1 // pred_check
      _
    $region19: #{mlp_mixer_forward.1} parent=1 // pred_check_branch
      %105 = sbr.rel (0) target = $region21
    $region20: #{mlp_mixer_forward.1} parent=1 // pred_region
      %107 = vsyncadd [#allocation5], 0
      %s108 = sshll.u32 %s9, 4
      %s109 = int_to_ptr.hbm [resolvable:$true] %s108
      %s110 = sshll.u32 [#allocation4], 4
      %s111 = int_to_ptr.vmem [resolvable:$true] %s110
      %116 = dma.hbm_to_vmem [thread:$0]  %s109, 256, %s111, [#allocation5], 64, 64, 4
    $region21: #{mlp_mixer_forward.1} parent=1 // pred_fallthru
      _
    // Predicated region
    $region22: #{mlp_mixer_forward.1} parent=1 // pred_check
      _
    $region23: #{mlp_mixer_forward.1} parent=1 // pred_check_branch
      %118 = sbr.rel (0) target = $region25
    $region24: #{mlp_mixer_forward.1} parent=1 // pred_region
      %120 = vsyncadd [#allocation5], 0
      %s122 = sshll.u32 %s11, 4
      %s123 = int_to_ptr.hbm [resolvable:$true] %s122
      %s124 = sshll.u32 [#allocation6], 4
      %s125 = int_to_ptr.vmem [resolvable:$true] %s124
      %127 = dma.hbm_to_vmem [thread:$0]  %s123, 16, %s125, [#allocation5]
    $region25: #{mlp_mixer_forward.1} parent=1 // pred_fallthru
      _
    // Predicated region
    $region26: #{mlp_mixer_forward.1} parent=1 // pred_check
      _
    $region27: #{mlp_mixer_forward.1} parent=1 // pred_check_branch
      %129 = sbr.rel (0) target = $region29
    $region28: #{mlp_mixer_forward.1} parent=1 // pred_region
      %131 = vsyncadd [#allocation8], 0
      %s133 = sshll.u32 %s13, 4
      %s134 = int_to_ptr.hbm [resolvable:$true] %s133
      %s135 = sshll.u32 [#allocation7], 4
      %s136 = int_to_ptr.vmem [resolvable:$true] %s135
      %138 = dma.hbm_to_vmem [thread:$0]  %s134, 16, %s136, [#allocation8]
    $region29: #{mlp_mixer_forward.1} parent=1 // pred_fallthru
      _
    // Predicated region
    $region30: #{mlp_mixer_forward.1} parent=1 // pred_check
      _
    $region31: #{mlp_mixer_forward.1} parent=1 // pred_check_branch
      %140 = sbr.rel (0) target = $region33
    $region32: #{mlp_mixer_forward.1} parent=1 // pred_region
      %142 = vsyncadd [#allocation8], 0
      %s144 = sshll.u32 %s15, 4
      %s145 = int_to_ptr.hbm [resolvable:$true] %s144
      %s146 = sshll.u32 [#allocation9], 4
      %s147 = int_to_ptr.vmem [resolvable:$true] %s146
      %149 = dma.hbm_to_vmem [thread:$0]  %s145, 16, %s147, [#allocation8]
    $region33: #{mlp_mixer_forward.1} parent=1 // pred_fallthru
      _
    // Predicated region
    $region34: #{mlp_mixer_forward.1} parent=1 // pred_check
      _
    $region35: #{mlp_mixer_forward.1} parent=1 // pred_check_branch
      %151 = sbr.rel (0) target = $region37
    $region36: #{mlp_mixer_forward.1} parent=1 // pred_region
      %153 = vsyncadd [#allocation11], 0
      %s155 = sshll.u32 %s17, 4
      %s156 = int_to_ptr.hbm [resolvable:$true] %s155
      %s157 = sshll.u32 [#allocation10], 4
      %s158 = int_to_ptr.vmem [resolvable:$true] %s157
      %160 = dma.hbm_to_vmem [thread:$0]  %s156, 128, %s158, [#allocation11]
    $region37: #{mlp_mixer_forward.1} parent=1 // pred_fallthru
      _
    // Predicated region
    $region38: #{mlp_mixer_forward.1} parent=1 // pred_check
      _
    $region39: #{mlp_mixer_forward.1} parent=1 // pred_check_branch
      %162 = sbr.rel (0) target = $region41
    $region40: #{mlp_mixer_forward.1} parent=1 // pred_region
      _
    $region41: #{mlp_mixer_forward.1} parent=1 // pred_fallthru
      _
    // Predicated region
    $region42: #{mlp_mixer_forward.1} parent=1 // pred_check
      _
    $region43: #{mlp_mixer_forward.1} parent=1 // pred_check_branch
      %164 = sbr.rel (0) target = $region45
    $region44: #{mlp_mixer_forward.1} parent=1 // pred_region
      _
    $region45: #{mlp_mixer_forward.1} parent=1 // pred_fallthru
      _
    // Predicated region
    $region46: #{mlp_mixer_forward.1} parent=1 // pred_check
      _
    $region47: #{mlp_mixer_forward.1} parent=1 // pred_check_branch
      %166 = sbr.rel (0) target = $region49
    $region48: #{mlp_mixer_forward.1} parent=1 // pred_region
      _
    $region49: #{mlp_mixer_forward.1} parent=1 // pred_fallthru
      _
    // Predicated region
    $region50: #{mlp_mixer_forward.1} parent=1 // pred_check
      _
    $region51: #{mlp_mixer_forward.1} parent=1 // pred_check_branch
      %168 = sbr.rel (0) target = $region53
    $region52: #{mlp_mixer_forward.1} parent=1 // pred_region
      %170 = vsyncadd [#allocation11], 0
      %s172 = sshll.u32 %s25, 4
      %s173 = int_to_ptr.hbm [resolvable:$true] %s172
      %s174 = sshll.u32 [#allocation12], 4
      %s175 = int_to_ptr.vmem [resolvable:$true] %s174
      %177 = dma.hbm_to_vmem [thread:$0]  %s173, 16, %s175, [#allocation11]
    $region53: #{mlp_mixer_forward.1} parent=1 // pred_fallthru
      _
    // Predicated region
    $region54: #{mlp_mixer_forward.1} parent=1 // pred_check
      _
    $region55: #{mlp_mixer_forward.1} parent=1 // pred_check_branch
      %179 = sbr.rel (0) target = $region57
    $region56: #{mlp_mixer_forward.1} parent=1 // pred_region
      %181 = vsyncadd [#allocation14], 0
      %s183 = sshll.u32 %s27, 4
      %s184 = int_to_ptr.hbm [resolvable:$true] %s183
      %s185 = sshll.u32 [#allocation13], 4
      %s186 = int_to_ptr.vmem [resolvable:$true] %s185
      %188 = dma.hbm_to_vmem [thread:$0]  %s184, 16, %s186, [#allocation14]
    $region57: #{mlp_mixer_forward.1} parent=1 // pred_fallthru
      _
    // Predicated region
    $region58: #{mlp_mixer_forward.1} parent=1 // pred_check
      _
    $region59: #{mlp_mixer_forward.1} parent=1 // pred_check_branch
      %190 = sbr.rel (0) target = $region61
    $region60: #{mlp_mixer_forward.1} parent=1 // pred_region
      _
    $region61: #{mlp_mixer_forward.1} parent=1 // pred_fallthru
      _
    // Predicated region
    $region62: #{mlp_mixer_forward.1} parent=1 // pred_check
      _
    $region63: #{mlp_mixer_forward.1} parent=1 // pred_check_branch
      %192 = sbr.rel (0) target = $region65
    $region64: #{mlp_mixer_forward.1} parent=1 // pred_region
      %194 = vsyncadd [#allocation14], 0
      %s196 = sshll.u32 %s31, 4
      %s197 = int_to_ptr.hbm [resolvable:$true] %s196
      %s198 = sshll.u32 [#allocation15], 4
      %s199 = int_to_ptr.vmem [resolvable:$true] %s198
      %201 = dma.hbm_to_vmem [thread:$0]  %s197, 64, %s199, [#allocation14]
    $region65: #{mlp_mixer_forward.1} parent=1 // pred_fallthru
      _
    // Predicated region
    $region66: #{mlp_mixer_forward.1} parent=1 // pred_check
      _
    $region67: #{mlp_mixer_forward.1} parent=1 // pred_check_branch
      %203 = sbr.rel (0) target = $region69
    $region68: #{mlp_mixer_forward.1} parent=1 // pred_region
      %205 = vsyncadd [#allocation17], 0
      %s206 = sshll.u32 %s33, 4
      %s207 = int_to_ptr.hbm [resolvable:$true] %s206
      %s208 = sshll.u32 [#allocation16], 4
      %s209 = int_to_ptr.vmem [resolvable:$true] %s208
      %214 = dma.hbm_to_vmem [thread:$0]  %s207, 4096, %s209, [#allocation17], 64, 64, 4
    $region69: #{mlp_mixer_forward.1} parent=1 // pred_fallthru
      _
    // Predicated region
    $region70: #{mlp_mixer_forward.1} parent=1 // pred_check
      _
    $region71: #{mlp_mixer_forward.1} parent=1 // pred_check_branch
      %216 = sbr.rel (0) target = $region73
    $region72: #{mlp_mixer_forward.1} parent=1 // pred_region
      %218 = vsyncadd [#allocation17], 0
      %s220 = sshll.u32 %s35, 4
      %s221 = int_to_ptr.hbm [resolvable:$true] %s220
      %s222 = sshll.u32 [#allocation18], 4
      %s223 = int_to_ptr.vmem [resolvable:$true] %s222
      %225 = dma.hbm_to_vmem [thread:$0]  %s221, 16, %s223, [#allocation17]
    $region73: #{mlp_mixer_forward.1} parent=1 // pred_fallthru
      _
    // Predicated region
    $region74: #{mlp_mixer_forward.1} parent=1 // pred_check
      _
    $region75: #{mlp_mixer_forward.1} parent=1 // pred_check_branch
      %227 = sbr.rel (0) target = $region77
    $region76: #{mlp_mixer_forward.1} parent=1 // pred_region
      _
    $region77: #{mlp_mixer_forward.1} parent=1 // pred_fallthru
      _
    // Predicated region
    $region78: #{mlp_mixer_forward.1} parent=1 // pred_check
      _
    $region79: #{mlp_mixer_forward.1} parent=1 // pred_check_branch
      %229 = sbr.rel (0) target = $region81
    $region80: #{mlp_mixer_forward.1} parent=1 // pred_region
      %231 = vsyncadd [#allocation20], 0
      %s233 = sshll.u32 %s39, 4
      %s234 = int_to_ptr.hbm [resolvable:$true] %s233
      %s235 = sshll.u32 [#allocation19], 4
      %s236 = int_to_ptr.vmem [resolvable:$true] %s235
      %238 = dma.hbm_to_vmem [thread:$0]  %s234, 16, %s236, [#allocation20]
    $region81: #{mlp_mixer_forward.1} parent=1 // pred_fallthru
      _
    // Predicated region
    $region82: #{mlp_mixer_forward.1} parent=1 // pred_check
      _
    $region83: #{mlp_mixer_forward.1} parent=1 // pred_check_branch
      %240 = sbr.rel (0) target = $region85
    $region84: #{mlp_mixer_forward.1} parent=1 // pred_region
      %242 = vsyncadd [#allocation20], 0
      %s244 = sshll.u32 %s41, 4
      %s245 = int_to_ptr.hbm [resolvable:$true] %s244
      %s246 = sshll.u32 [#allocation21], 4
      %s247 = int_to_ptr.vmem [resolvable:$true] %s246
      %249 = dma.hbm_to_vmem [thread:$0]  %s245, 128, %s247, [#allocation20]
    $region85: #{mlp_mixer_forward.1} parent=1 // pred_fallthru
      _
    // Predicated region
    $region86: #{mlp_mixer_forward.1} parent=1 // pred_check
      _
    $region87: #{mlp_mixer_forward.1} parent=1 // pred_check_branch
      %251 = sbr.rel (0) target = $region89
    $region88: #{mlp_mixer_forward.1} parent=1 // pred_region
      _
    $region89: #{mlp_mixer_forward.1} parent=1 // pred_fallthru
      _
    // Predicated region
    $region90: #{mlp_mixer_forward.1} parent=1 // pred_check
      _
    $region91: #{mlp_mixer_forward.1} parent=1 // pred_check_branch
      %253 = sbr.rel (0) target = $region93
    $region92: #{mlp_mixer_forward.1} parent=1 // pred_region
      _
    $region93: #{mlp_mixer_forward.1} parent=1 // pred_fallthru
      _
    // Predicated region
    $region94: #{mlp_mixer_forward.1} parent=1 // pred_check
      _
    $region95: #{mlp_mixer_forward.1} parent=1 // pred_check_branch
      %255 = sbr.rel (0) target = $region97
    $region96: #{mlp_mixer_forward.1} parent=1 // pred_region
      _
    $region97: #{mlp_mixer_forward.1} parent=1 // pred_fallthru
      _
    // Predicated region
    $region98: #{mlp_mixer_forward.1} parent=1 // pred_check
      _
    $region99: #{mlp_mixer_forward.1} parent=1 // pred_check_branch
      %257 = sbr.rel (0) target = $region101
    $region100: #{mlp_mixer_forward.1} parent=1 // pred_region
      %259 = vsyncadd [#allocation23], 0
      %s261 = sshll.u32 %s49, 4
      %s262 = int_to_ptr.hbm [resolvable:$true] %s261
      %s263 = sshll.u32 [#allocation22], 4
      %s264 = int_to_ptr.vmem [resolvable:$true] %s263
      %266 = dma.hbm_to_vmem [thread:$0]  %s262, 16, %s264, [#allocation23]
    $region101: #{mlp_mixer_forward.1} parent=1 // pred_fallthru
      _
    // Predicated region
    $region102: #{mlp_mixer_forward.1} parent=1 // pred_check
      _
    $region103: #{mlp_mixer_forward.1} parent=1 // pred_check_branch
      %268 = sbr.rel (0) target = $region105
    $region104: #{mlp_mixer_forward.1} parent=1 // pred_region
      %270 = vsyncadd [#allocation23], 0
      %s272 = sshll.u32 %s51, 4
      %s273 = int_to_ptr.hbm [resolvable:$true] %s272
      %s274 = sshll.u32 [#allocation24], 4
      %s275 = int_to_ptr.vmem [resolvable:$true] %s274
      %277 = dma.hbm_to_vmem [thread:$0]  %s273, 16, %s275, [#allocation23]
    $region105: #{mlp_mixer_forward.1} parent=1 // pred_fallthru
      _
    // Predicated region
    $region106: #{mlp_mixer_forward.1} parent=1 // pred_check
      _
    $region107: #{mlp_mixer_forward.1} parent=1 // pred_check_branch
      %279 = sbr.rel (0) target = $region109
    $region108: #{mlp_mixer_forward.1} parent=1 // pred_region
      %281 = vsyncadd [#allocation26], 0
      %s282 = sshll.u32 %s53, 4
      %s283 = int_to_ptr.hbm [resolvable:$true] %s282
      %s284 = sshll.u32 [#allocation25], 4
      %s285 = int_to_ptr.vmem [resolvable:$true] %s284
      %290 = dma.hbm_to_vmem [thread:$0]  %s283, 4096, %s285, [#allocation26], 256, 256, 16
    $region109: #{mlp_mixer_forward.1} parent=1 // pred_fallthru
      _
    // Predicated region
    $region110: #{mlp_mixer_forward.1} parent=1 // pred_check
      _
    $region111: #{mlp_mixer_forward.1} parent=1 // pred_check_branch
      %292 = sbr.rel (0) target = $region113
    $region112: #{mlp_mixer_forward.1} parent=1 // pred_region
      %294 = vsyncadd [#allocation26], 0
      %s296 = sshll.u32 %s55, 4
      %s297 = int_to_ptr.hbm [resolvable:$true] %s296
      %s298 = sshll.u32 [#allocation27], 4
      %s299 = int_to_ptr.vmem [resolvable:$true] %s298
      %301 = dma.hbm_to_vmem [thread:$0]  %s297, 64, %s299, [#allocation26]
    $region113: #{mlp_mixer_forward.1} parent=1 // pred_fallthru
      _
    // Predicated region
    $region114: #{mlp_mixer_forward.1} parent=1 // pred_check
      _
    $region115: #{mlp_mixer_forward.1} parent=1 // pred_check_branch
      %303 = sbr.rel (0) target = $region117
    $region116: #{mlp_mixer_forward.1} parent=1 // pred_region
      %305 = vsyncadd [#allocation29], 0
      %s306 = sshll.u32 %s57, 4
      %s307 = int_to_ptr.hbm [resolvable:$true] %s306
      %s308 = sshll.u32 [#allocation28], 4
      %s309 = int_to_ptr.vmem [resolvable:$true] %s308
      %314 = dma.hbm_to_vmem [thread:$0]  %s307, 4096, %s309, [#allocation29], 64, 64, 4
    $region117: #{mlp_mixer_forward.1} parent=1 // pred_fallthru
      _
    // Predicated region
    $region118: #{mlp_mixer_forward.1} parent=1 // pred_check
      _
    $region119: #{mlp_mixer_forward.1} parent=1 // pred_check_branch
      %316 = sbr.rel (0) target = $region121
    $region120: #{mlp_mixer_forward.1} parent=1 // pred_region
      %318 = vsyncadd [#allocation29], 0
      %s320 = sshll.u32 %s59, 4
      %s321 = int_to_ptr.hbm [resolvable:$true] %s320
      %s322 = sshll.u32 [#allocation30], 4
      %s323 = int_to_ptr.vmem [resolvable:$true] %s322
      %325 = dma.hbm_to_vmem [thread:$0]  %s321, 16, %s323, [#allocation29]
    $region121: #{mlp_mixer_forward.1} parent=1 // pred_fallthru
      _
    // Predicated region
    $region122: #{mlp_mixer_forward.1} parent=1 // pred_check
      _
    $region123: #{mlp_mixer_forward.1} parent=1 // pred_check_branch
      %327 = sbr.rel (0) target = $region125
    $region124: #{mlp_mixer_forward.1} parent=1 // pred_region
      _
    $region125: #{mlp_mixer_forward.1} parent=1 // pred_fallthru
      _
    // Predicated region
    $region126: #{mlp_mixer_forward.1} parent=1 // pred_check
      _
    $region127: #{mlp_mixer_forward.1} parent=1 // pred_check_branch
      %329 = sbr.rel (0) target = $region129
    $region128: #{mlp_mixer_forward.1} parent=1 // pred_region
      _
    $region129: #{mlp_mixer_forward.1} parent=1 // pred_fallthru
      _
    // Predicated region
    $region130: #{mlp_mixer_forward.1} parent=1 // pred_check
      _
    $region131: #{mlp_mixer_forward.1} parent=1 // pred_check_branch
      %331 = sbr.rel (0) target = $region133
    $region132: #{mlp_mixer_forward.1} parent=1 // pred_region
      %333 = vsyncadd [#allocation32], 0
      %s334 = sshll.u32 %s65, 4
      %s335 = int_to_ptr.hbm [resolvable:$true] %s334
      %s336 = sshll.u32 [#allocation31], 4
      %s337 = int_to_ptr.vmem [resolvable:$true] %s336
      %342 = dma.hbm_to_vmem [thread:$0]  %s335, 1024, %s337, [#allocation32], 64, 64, 4
    $region133: #{mlp_mixer_forward.1} parent=1 // pred_fallthru
      _
    // Predicated region
    $region134: #{mlp_mixer_forward.1} parent=1 // pred_check
      _
    $region135: #{mlp_mixer_forward.1} parent=1 // pred_check_branch
      %344 = sbr.rel (0) target = $region137
    $region136: #{mlp_mixer_forward.1} parent=1 // pred_region
      %346 = vsyncadd [#allocation32], 0
      %s348 = sshll.u32 %s67, 4
      %s349 = int_to_ptr.hbm [resolvable:$true] %s348
      %s350 = sshll.u32 [#allocation33], 4
      %s351 = int_to_ptr.vmem [resolvable:$true] %s350
      %353 = dma.hbm_to_vmem [thread:$0]  %s349, 16, %s351, [#allocation32]
    $region137: #{mlp_mixer_forward.1} parent=1 // pred_fallthru
      _
    // Predicated region
    $region138: #{mlp_mixer_forward.1} parent=1 // pred_check
      _
    $region139: #{mlp_mixer_forward.1} parent=1 // pred_check_branch
      %355 = sbr.rel (0) target = $region141
    $region140: #{mlp_mixer_forward.1} parent=1 // pred_region
      %357 = dma.done [#allocation3], 1536
    $region141: #{mlp_mixer_forward.1} parent=1 // pred_fallthru
      _
    // Predicated region
    $region142: #{mlp_mixer_forward.1} parent=1 // pred_check
      _
    $region143: #{mlp_mixer_forward.1} parent=1 // pred_check_branch
      %359 = sbr.rel (0) target = $region145
    $region144: #{mlp_mixer_forward.1} parent=1 // pred_region
      %361 = dma.done [#allocation5], 256
    $region145: #{mlp_mixer_forward.1} parent=1 // pred_fallthru
      _
    // Predicated region
    $region146: #{mlp_mixer_forward.1} parent=1 // pred_check
      _
    $region147: #{mlp_mixer_forward.1} parent=1 // pred_check_branch
      %363 = sbr.rel (0) target = $region149
    $region148: #{mlp_mixer_forward.1} parent=1 // pred_region
      %365 = dma.done [#allocation5], 16
    $region149: #{mlp_mixer_forward.1} parent=1 // pred_fallthru
      _
    // Predicated region
    $region150: #{mlp_mixer_forward.1} parent=1 // pred_check
      _
    $region151: #{mlp_mixer_forward.1} parent=1 // pred_check_branch
      %367 = sbr.rel (0) target = $region153
    $region152: #{mlp_mixer_forward.1} parent=1 // pred_region
      %369 = dma.done [#allocation8], 16
    $region153: #{mlp_mixer_forward.1} parent=1 // pred_fallthru
      _
    // Predicated region
    $region154: #{mlp_mixer_forward.1} parent=1 // pred_check
      _
    $region155: #{mlp_mixer_forward.1} parent=1 // pred_check_branch
      %371 = sbr.rel (0) target = $region157
    $region156: #{mlp_mixer_forward.1} parent=1 // pred_region
      %373 = dma.done [#allocation8], 16
    $region157: #{mlp_mixer_forward.1} parent=1 // pred_fallthru
      _
    // Predicated region
    $region158: #{mlp_mixer_forward.1} parent=1 // pred_check
      _
    $region159: #{mlp_mixer_forward.1} parent=1 // pred_check_branch
      %375 = sbr.rel (0) target = $region161
    $region160: #{mlp_mixer_forward.1} parent=1 // pred_region
      %377 = dma.done [#allocation11], 128
    $region161: #{mlp_mixer_forward.1} parent=1 // pred_fallthru
      _
    // Predicated region
    $region162: #{mlp_mixer_forward.1} parent=1 // pred_check
      _
    $region163: #{mlp_mixer_forward.1} parent=1 // pred_check_branch
      %379 = sbr.rel (0) target = $region165
    $region164: #{mlp_mixer_forward.1} parent=1 // pred_region
      %381 = dma.done [#allocation11], 16
    $region165: #{mlp_mixer_forward.1} parent=1 // pred_fallthru
      _
    // Predicated region
    $region166: #{mlp_mixer_forward.1} parent=1 // pred_check
      _
    $region167: #{mlp_mixer_forward.1} parent=1 // pred_check_branch
      %383 = sbr.rel (0) target = $region169
    $region168: #{mlp_mixer_forward.1} parent=1 // pred_region
      %385 = dma.done [#allocation14], 16
    $region169: #{mlp_mixer_forward.1} parent=1 // pred_fallthru
      _
    // Predicated region
    $region170: #{mlp_mixer_forward.1} parent=1 // pred_check
      _
    $region171: #{mlp_mixer_forward.1} parent=1 // pred_check_branch
      %387 = sbr.rel (0) target = $region173
    $region172: #{mlp_mixer_forward.1} parent=1 // pred_region
      %389 = dma.done [#allocation14], 64
    $region173: #{mlp_mixer_forward.1} parent=1 // pred_fallthru
      _
    // Predicated region
    $region174: #{mlp_mixer_forward.1} parent=1 // pred_check
      _
    $region175: #{mlp_mixer_forward.1} parent=1 // pred_check_branch
      %391 = sbr.rel (0) target = $region177
    $region176: #{mlp_mixer_forward.1} parent=1 // pred_region
      %393 = dma.done [#allocation17], 4096
    $region177: #{mlp_mixer_forward.1} parent=1 // pred_fallthru
      _
    // Predicated region
    $region178: #{mlp_mixer_forward.1} parent=1 // pred_check
      _
    $region179: #{mlp_mixer_forward.1} parent=1 // pred_check_branch
      %395 = sbr.rel (0) target = $region181
    $region180: #{mlp_mixer_forward.1} parent=1 // pred_region
      %397 = dma.done [#allocation17], 16
    $region181: #{mlp_mixer_forward.1} parent=1 // pred_fallthru
      _
    // Predicated region
    $region182: #{mlp_mixer_forward.1} parent=1 // pred_check
      _
    $region183: #{mlp_mixer_forward.1} parent=1 // pred_check_branch
      %399 = sbr.rel (0) target = $region185
    $region184: #{mlp_mixer_forward.1} parent=1 // pred_region
      %401 = dma.done [#allocation20], 16
    $region185: #{mlp_mixer_forward.1} parent=1 // pred_fallthru
      _
    // Predicated region
    $region186: #{mlp_mixer_forward.1} parent=1 // pred_check
      _
    $region187: #{mlp_mixer_forward.1} parent=1 // pred_check_branch
      %403 = sbr.rel (0) target = $region189
    $region188: #{mlp_mixer_forward.1} parent=1 // pred_region
      %405 = dma.done [#allocation20], 128
    $region189: #{mlp_mixer_forward.1} parent=1 // pred_fallthru
      _
    // Predicated region
    $region190: #{mlp_mixer_forward.1} parent=1 // pred_check
      _
    $region191: #{mlp_mixer_forward.1} parent=1 // pred_check_branch
      %407 = sbr.rel (0) target = $region193
    $region192: #{mlp_mixer_forward.1} parent=1 // pred_region
      %409 = dma.done [#allocation23], 16
    $region193: #{mlp_mixer_forward.1} parent=1 // pred_fallthru
      _
    // Predicated region
    $region194: #{mlp_mixer_forward.1} parent=1 // pred_check
      _
    $region195: #{mlp_mixer_forward.1} parent=1 // pred_check_branch
      %411 = sbr.rel (0) target = $region197
    $region196: #{mlp_mixer_forward.1} parent=1 // pred_region
      %413 = dma.done [#allocation23], 16
    $region197: #{mlp_mixer_forward.1} parent=1 // pred_fallthru
      _
    // Predicated region
    $region198: #{mlp_mixer_forward.1} parent=1 // pred_check
      _
    $region199: #{mlp_mixer_forward.1} parent=1 // pred_check_branch
      %415 = sbr.rel (0) target = $region201
    $region200: #{mlp_mixer_forward.1} parent=1 // pred_region
      %417 = dma.done [#allocation26], 4096
    $region201: #{mlp_mixer_forward.1} parent=1 // pred_fallthru
      _
    // Predicated region
    $region202: #{mlp_mixer_forward.1} parent=1 // pred_check
      _
    $region203: #{mlp_mixer_forward.1} parent=1 // pred_check_branch
      %419 = sbr.rel (0) target = $region205
    $region204: #{mlp_mixer_forward.1} parent=1 // pred_region
      %421 = dma.done [#allocation26], 64
    $region205: #{mlp_mixer_forward.1} parent=1 // pred_fallthru
      _
    // Predicated region
    $region206: #{mlp_mixer_forward.1} parent=1 // pred_check
      _
    $region207: #{mlp_mixer_forward.1} parent=1 // pred_check_branch
      %423 = sbr.rel (0) target = $region209
    $region208: #{mlp_mixer_forward.1} parent=1 // pred_region
      %425 = dma.done [#allocation29], 4096
    $region209: #{mlp_mixer_forward.1} parent=1 // pred_fallthru
      _
    // Predicated region
    $region210: #{mlp_mixer_forward.1} parent=1 // pred_check
      _
    $region211: #{mlp_mixer_forward.1} parent=1 // pred_check_branch
      %427 = sbr.rel (0) target = $region213
    $region212: #{mlp_mixer_forward.1} parent=1 // pred_region
      %429 = dma.done [#allocation29], 16
    $region213: #{mlp_mixer_forward.1} parent=1 // pred_fallthru
      _
    // Predicated region
    $region214: #{mlp_mixer_forward.1} parent=1 // pred_check
      _
    $region215: #{mlp_mixer_forward.1} parent=1 // pred_check_branch
      %431 = sbr.rel (0) target = $region217
    $region216: #{mlp_mixer_forward.1} parent=1 // pred_region
      %433 = dma.done [#allocation32], 1024
    $region217: #{mlp_mixer_forward.1} parent=1 // pred_fallthru
      _
    // Predicated region
    $region218: #{mlp_mixer_forward.1} parent=1 // pred_check
      _
    $region219: #{mlp_mixer_forward.1} parent=1 // pred_check_branch
      %435 = sbr.rel (0) target = $region221
    $region220: #{mlp_mixer_forward.1} parent=1 // pred_region
      %437 = dma.done [#allocation32], 16
    $region221: #{mlp_mixer_forward.1} parent=1 // pred_fallthru
      _
    %v439 = vld [vmem:[%s3] sm:$0xff]
    %v440 = vld [vmem:[%s3 + $0x8] sm:$0xff]
    %v441 = vld [vmem:[%s3 + $0x10] sm:$0xff]
    %v442 = vld [vmem:[%s3 + $0x18] sm:$0xff]
    %v443 = vld [vmem:[%s3 + $0x20] sm:$0xff]
    %v444 = vld [vmem:[%s3 + $0x28] sm:$0xff]
    %v445 = vld [vmem:[%s3 + $0x30] sm:$0xff]
    %v446 = vld [vmem:[%s3 + $0x38] sm:$0xff]
    %v447 = vld [vmem:[%s3 + $0x40] sm:$0xff]
    %v448 = vld [vmem:[%s3 + $0x48] sm:$0xff]
    %v449 = vld [vmem:[%s3 + $0x50] sm:$0xff]
    %v450 = vld [vmem:[%s3 + $0x58] sm:$0xff]
    %v451 = vld [vmem:[%s5] sm:$0x1]
    %453 = vset.pattern.permute.xlu0 0
    %454 = vperm.xlu0 %453, %v439
    %v455 = vpop.permute.xlu0 %454
    %458 = vset.pattern.permute.xlu0 0
    %459 = vperm.xlu0 %458, %v440
    %v460 = vpop.permute.xlu0 %459
    %463 = vset.pattern.permute.xlu0 0
    %464 = vperm.xlu0 %463, %v441
    %v465 = vpop.permute.xlu0 %464
    %468 = vset.pattern.permute.xlu0 0
    %469 = vperm.xlu0 %468, %v442
    %v470 = vpop.permute.xlu0 %469
    %473 = vset.pattern.permute.xlu0 0
    %474 = vperm.xlu0 %473, %v443
    %v475 = vpop.permute.xlu0 %474
    %478 = vset.pattern.permute.xlu0 0
    %479 = vperm.xlu0 %478, %v444
    %v480 = vpop.permute.xlu0 %479
    %483 = vset.pattern.permute.xlu0 0
    %484 = vperm.xlu0 %483, %v445
    %v485 = vpop.permute.xlu0 %484
    %488 = vset.pattern.permute.xlu0 0
    %489 = vperm.xlu0 %488, %v446
    %v490 = vpop.permute.xlu0 %489
    %493 = vset.pattern.permute.xlu0 0
    %494 = vperm.xlu0 %493, %v447
    %v495 = vpop.permute.xlu0 %494
    %498 = vset.pattern.permute.xlu0 0
    %499 = vperm.xlu0 %498, %v448
    %v500 = vpop.permute.xlu0 %499
    %503 = vset.pattern.permute.xlu0 0
    %504 = vperm.xlu0 %503, %v449
    %v505 = vpop.permute.xlu0 %504
    %508 = vset.pattern.permute.xlu0 0
    %509 = vperm.xlu0 %508, %v450
    %v510 = vpop.permute.xlu0 %509
    %v513 = vperm.slane %v451, 0
    %v515 = vmul.f32 %v455, %v513
    %v516 = vmul.f32 %v460, %v513
    %v517 = vmul.f32 %v465, %v513
    %v518 = vmul.f32 %v470, %v513
    %v519 = vmul.f32 %v475, %v513
    %v520 = vmul.f32 %v480, %v513
    %v521 = vmul.f32 %v485, %v513
    %v522 = vmul.f32 %v490, %v513
    %v523 = vmul.f32 %v495, %v513
    %v524 = vmul.f32 %v500, %v513
    %v525 = vmul.f32 %v505, %v513
    %v526 = vmul.f32 %v510, %v513
    %v527 = vand.u32 2147483647, %v515
    %vm528 = vcmp.le.f32.partialorder %v527, 0.7853982
    %vm529 = vcmp.lt.s32.totalorder %v515, 0
    %v530 = vand.u32 %v515, 2139095040
    %v531 = vshrl.u32 %v530, 23
    %v532 = vsub.s32 %v531, 127
    %v533 = vand.u32 2147483647, %v515
    %v534 = vand.u32 %v533, 8388607
    %v535 = vor.u32 %v534, 8388608
    %v536 = vsub.s32 0, %v535
    %v537 = vadd.s32 %v532, 1
    %vm538 = vcmp.gt.s32.totalorder %v537, 0
    %v539 = vsel %vm538, %v537, 0
    %v540 = vshrl.u32 %v539, 5
    %v541 = vand.u32 %v539, 31
    %v542 = vsub.s32 32, %v541
    %v543 = vshrl.u32 683565275, %v542
    %v544 = vshll.u32 683565275, %v541
    %v545 = vshrl.u32 2475754826, %v542
    %v546 = vor.u32 %v544, %v545
    %v547 = vshll.u32 2475754826, %v541
    %v548 = vshrl.u32 2131351028, %v542
    %v549 = vor.u32 %v547, %v548
    %v550 = vshll.u32 2131351028, %v541
    %v551 = vshrl.u32 2102212464, %v542
    %v552 = vor.u32 %v550, %v551
    %v553 = vshll.u32 2102212464, %v541
    %v554 = vshrl.u32 920167782, %v542
    %v555 = vor.u32 %v553, %v554
    %v556 = vshll.u32 920167782, %v541
    %v557 = vshrl.u32 1326507024, %v542
    %v558 = vor.u32 %v556, %v557
    %vm559 = vcmp.lt.s32.totalorder %v540, 1
    %vm560 = vcmp.lt.s32.totalorder %v540, 2
    %vm561 = vcmp.lt.s32.totalorder %v540, 3
    %vm562 = vcmp.lt.s32.totalorder %v540, 4
    %v563 = vsel %vm559, %v543, %v546
    %v564 = vsel %vm562, %v552, 2102212464
    %v565 = vsel %vm561, %v549, %v564
    %v566 = vsel %vm560, %v563, %v565
    %v567 = vsel %vm559, %v546, %v549
    %v568 = vsel %vm562, %v555, 920167782
    %v569 = vsel %vm561, %v552, %v568
    %v570 = vsel %vm560, %v567, %v569
    %v571 = vsel %vm559, %v549, %v552
    %v572 = vsel %vm562, %v558, 1326507024
    %v573 = vsel %vm561, %v555, %v572
    %v574 = vsel %vm560, %v571, %v573
    %v575 = vshll.u32 %v535, 8
    %v576 = vand.u32 %v575, 65535
    %v577 = vshrl.u32 %v575, 16
    %v578 = vand.u32 %v574, 65535
    %v579 = vshrl.u32 %v574, 16
    %v580 = vmul.u32 %v576, %v578
    %v581 = vmul.u32 %v576, %v579
    %v582 = vmul.u32 %v577, %v578
    %v583 = vmul.u32 %v577, %v579
    %v584 = vshll.u32 %v581, 16
    %v585 = vshrl.u32 %v581, 16
    %v586 = vshll.u32 %v582, 16
    %v587 = vshrl.u32 %v582, 16
    %vm588 = vc.u32 %v580, %v584
    %v589 = vsel %vm588, 1, 0
    %v590 = vadd.s32 %v580, %v584
    %v591 = vadd.s32 %v583, %v589
    %vm592 = vc.u32 %v590, %v586
    %v593 = vsel %vm592, 1, 0
    %v594 = vadd.s32 %v590, %v586
    %v595 = vadd.s32 %v591, %v593
    %v596 = vadd.s32 %v595, %v585
    %v597 = vadd.s32 %v596, %v587
    %v598 = vand.u32 %v575, 65535
    %v599 = vshrl.u32 %v575, 16
    %v600 = vand.u32 %v570, 65535
    %v601 = vshrl.u32 %v570, 16
    %v602 = vmul.u32 %v598, %v600
    %v603 = vmul.u32 %v598, %v601
    %v604 = vmul.u32 %v599, %v600
    %v605 = vmul.u32 %v599, %v601
    %v606 = vshll.u32 %v603, 16
    %v607 = vshrl.u32 %v603, 16
    %v608 = vshll.u32 %v604, 16
    %v609 = vshrl.u32 %v604, 16
    %vm610 = vc.u32 %v602, %v606
    %v611 = vsel %vm610, 1, 0
    %v612 = vadd.s32 %v602, %v606
    %v613 = vadd.s32 %v605, %v611
    %vm614 = vc.u32 %v612, %v608
    %v615 = vsel %vm614, 1, 0
    %v616 = vadd.s32 %v612, %v608
    %v617 = vadd.s32 %v613, %v615
    %v618 = vadd.s32 %v617, %v607
    %v619 = vadd.s32 %v618, %v609
    %v620 = vmul.u32 %v575, %v566
    %v621 = vadd.s32 %v597, %v616
    %vm622 = vc.u32 %v597, %v616
    %v623 = vadd.s32 %v619, 1
    %v624 = vsel %vm622, %v623, %v619
    %v625 = vadd.s32 %v620, %v624
    %v626 = vadd.s32 %v625, 536870912
    %v627 = vshrl.u32 %v626, 30
    %v628 = vshll.u32 %v627, 30
    %v629 = vsub.s32 %v625, %v628
    %vm630 = vcmp.lt.s32.totalorder %v629, 0
    %v631 = vsub.s32 0, %v629
    %v632 = vsel %vm630, %v631, %v629
    %v633 = vclz %v632
    %v634 = vsub.s32 %v633, 2
    %vm635 = vcmp.gt.s32.totalorder 0, %v634
    %v636 = vsel %vm635, 0, %v634
    %v637 = vsub.s32 32, %v636
    %v638 = vshll.u32 %v629, %v636
    %v639 = vshrl.u32 %v621, %v637
    %v640 = vor.u32 %v638, %v639
    %v641 = vsub.s32 4294967266, %v636
    %v642 = vadd.s32 %v641, 127
    %v643 = vshll.u32 %v642, 23
    %v644 = vor.u32 4788187, %v643
    %v645 = vand.u32 2147483647, %v644
    %v647 = vcvt.s32.f32 %v640
    %v648 = vmul.f32 %v647, %v645
    %v649 = vxor.u32 %v648, 2147483648
    %v650 = vsel %vm529, %v649, %v648
    %v651 = vsub.s32 4, %v627
    %v652 = vsel %vm529, %v651, %v627
    %v653 = vsel %vm528, %v515, %v650
    %v654 = vsel %vm528, 0, %v652
    %v655 = vmul.f32 %v653, %v653
    %v656 = vmul.f32 %v655, -0.001358992
    %v657 = vadd.f32 %v656, 0.041655596
    %v658 = vmul.f32 %v655, %v657
    %v659 = vadd.f32 %v658, -0.4999988
    %v660 = vmul.f32 %v655, %v659
    %v661 = vadd.f32 1.0, %v660
    %v662 = vmul.f32 %v653, %v653
    %v663 = vmul.f32 %v662, -0.00019511016
    %v664 = vadd.f32 %v663, 0.008332121
    %v665 = vmul.f32 %v662, %v664
    %v666 = vadd.f32 %v665, -0.16666654
    %v667 = vmul.f32 %v662, %v666
    %v668 = vadd.f32 %v667, 1.0
    %v669 = vmul.f32 %v668, %v653
    %vm670 = vweird.f32 %v515
    %v671 = vand.u32 %v654, 3
    %vm672 = vcmp.lt.s32.totalorder %v671, 2
    %vm673 = vcmp.eq.s32.totalorder %v671, 0
    %v674 = vxor.u32 %v669, 2147483648
    %v675 = vsel %vm673, %v661, %v674
    %vm676 = vcmp.eq.s32.totalorder %v671, 2
    %v677 = vxor.u32 %v661, 2147483648
    %v678 = vsel %vm676, %v677, %v669
    %v679 = vsel %vm672, %v675, %v678
    %v680 = vsel %vm670, nan, %v679
    %v681 = vand.u32 2147483647, %v516
    %vm682 = vcmp.le.f32.partialorder %v681, 0.7853982
    %vm683 = vcmp.lt.s32.totalorder %v516, 0
    %v684 = vand.u32 %v516, 2139095040
    %v685 = vshrl.u32 %v684, 23
    %v686 = vsub.s32 %v685, 127
    %v687 = vand.u32 2147483647, %v516
    %v688 = vand.u32 %v687, 8388607
    %v689 = vor.u32 %v688, 8388608
    %v690 = vsub.s32 0, %v689
    %v691 = vadd.s32 %v686, 1
    %vm692 = vcmp.gt.s32.totalorder %v691, 0
    %v693 = vsel %vm692, %v691, 0
    %v694 = vshrl.u32 %v693, 5
    %v695 = vand.u32 %v693, 31
    %v696 = vsub.s32 32, %v695
    %v697 = vshrl.u32 683565275, %v696
    %v698 = vshll.u32 683565275, %v695
    %v699 = vshrl.u32 2475754826, %v696
    %v700 = vor.u32 %v698, %v699
    %v701 = vshll.u32 2475754826, %v695
    %v702 = vshrl.u32 2131351028, %v696
    %v703 = vor.u32 %v701, %v702
    %v704 = vshll.u32 2131351028, %v695
    %v705 = vshrl.u32 2102212464, %v696
    %v706 = vor.u32 %v704, %v705
    %v707 = vshll.u32 2102212464, %v695
    %v708 = vshrl.u32 920167782, %v696
    %v709 = vor.u32 %v707, %v708
    %v710 = vshll.u32 920167782, %v695
    %v711 = vshrl.u32 1326507024, %v696
    %v712 = vor.u32 %v710, %v711
    %vm713 = vcmp.lt.s32.totalorder %v694, 1
    %vm714 = vcmp.lt.s32.totalorder %v694, 2
    %vm715 = vcmp.lt.s32.totalorder %v694, 3
    %vm716 = vcmp.lt.s32.totalorder %v694, 4
    %v717 = vsel %vm713, %v697, %v700
    %v718 = vsel %vm716, %v706, 2102212464
    %v719 = vsel %vm715, %v703, %v718
    %v720 = vsel %vm714, %v717, %v719
    %v721 = vsel %vm713, %v700, %v703
    %v722 = vsel %vm716, %v709, 920167782
    %v723 = vsel %vm715, %v706, %v722
    %v724 = vsel %vm714, %v721, %v723
    %v725 = vsel %vm713, %v703, %v706
    %v726 = vsel %vm716, %v712, 1326507024
    %v727 = vsel %vm715, %v709, %v726
    %v728 = vsel %vm714, %v725, %v727
    %v729 = vshll.u32 %v689, 8
    %v730 = vand.u32 %v729, 65535
    %v731 = vshrl.u32 %v729, 16
    %v732 = vand.u32 %v728, 65535
    %v733 = vshrl.u32 %v728, 16
    %v734 = vmul.u32 %v730, %v732
    %v735 = vmul.u32 %v730, %v733
    %v736 = vmul.u32 %v731, %v732
    %v737 = vmul.u32 %v731, %v733
    %v738 = vshll.u32 %v735, 16
    %v739 = vshrl.u32 %v735, 16
    %v740 = vshll.u32 %v736, 16
    %v741 = vshrl.u32 %v736, 16
    %vm742 = vc.u32 %v734, %v738
    %v743 = vsel %vm742, 1, 0
    %v744 = vadd.s32 %v734, %v738
    %v745 = vadd.s32 %v737, %v743
    %vm746 = vc.u32 %v744, %v740
    %v747 = vsel %vm746, 1, 0
    %v748 = vadd.s32 %v744, %v740
    %v749 = vadd.s32 %v745, %v747
    %v750 = vadd.s32 %v749, %v739
    %v751 = vadd.s32 %v750, %v741
    %v752 = vand.u32 %v729, 65535
    %v753 = vshrl.u32 %v729, 16
    %v754 = vand.u32 %v724, 65535
    %v755 = vshrl.u32 %v724, 16
    %v756 = vmul.u32 %v752, %v754
    %v757 = vmul.u32 %v752, %v755
    %v758 = vmul.u32 %v753, %v754
    %v759 = vmul.u32 %v753, %v755
    %v760 = vshll.u32 %v757, 16
    %v761 = vshrl.u32 %v757, 16
    %v762 = vshll.u32 %v758, 16
    %v763 = vshrl.u32 %v758, 16
    %vm764 = vc.u32 %v756, %v760
    %v765 = vsel %vm764, 1, 0
    %v766 = vadd.s32 %v756, %v760
    %v767 = vadd.s32 %v759, %v765
    %vm768 = vc.u32 %v766, %v762
    %v769 = vsel %vm768, 1, 0
    %v770 = vadd.s32 %v766, %v762
    %v771 = vadd.s32 %v767, %v769
    %v772 = vadd.s32 %v771, %v761
    %v773 = vadd.s32 %v772, %v763
    %v774 = vmul.u32 %v729, %v720
    %v775 = vadd.s32 %v751, %v770
    %vm776 = vc.u32 %v751, %v770
    %v777 = vadd.s32 %v773, 1
    %v778 = vsel %vm776, %v777, %v773
    %v779 = vadd.s32 %v774, %v778
    %v780 = vadd.s32 %v779, 536870912
    %v781 = vshrl.u32 %v780, 30
    %v782 = vshll.u32 %v781, 30
    %v783 = vsub.s32 %v779, %v782
    %vm784 = vcmp.lt.s32.totalorder %v783, 0
    %v785 = vsub.s32 0, %v783
    %v786 = vsel %vm784, %v785, %v783
    %v787 = vclz %v786
    %v788 = vsub.s32 %v787, 2
    %vm789 = vcmp.gt.s32.totalorder 0, %v788
    %v790 = vsel %vm789, 0, %v788
    %v791 = vsub.s32 32, %v790
    %v792 = vshll.u32 %v783, %v790
    %v793 = vshrl.u32 %v775, %v791
    %v794 = vor.u32 %v792, %v793
    %v795 = vsub.s32 4294967266, %v790
    %v796 = vadd.s32 %v795, 127
    %v797 = vshll.u32 %v796, 23
    %v798 = vor.u32 4788187, %v797
    %v799 = vand.u32 2147483647, %v798
    %v801 = vcvt.s32.f32 %v794
    %v802 = vmul.f32 %v801, %v799
    %v803 = vxor.u32 %v802, 2147483648
    %v804 = vsel %vm683, %v803, %v802
    %v805 = vsub.s32 4, %v781
    %v806 = vsel %vm683, %v805, %v781
    %v807 = vsel %vm682, %v516, %v804
    %v808 = vsel %vm682, 0, %v806
    %v809 = vmul.f32 %v807, %v807
    %v810 = vmul.f32 %v809, -0.001358992
    %v811 = vadd.f32 %v810, 0.041655596
    %v812 = vmul.f32 %v809, %v811
    %v813 = vadd.f32 %v812, -0.4999988
    %v814 = vmul.f32 %v809, %v813
    %v815 = vadd.f32 1.0, %v814
    %v816 = vmul.f32 %v807, %v807
    %v817 = vmul.f32 %v816, -0.00019511016
    %v818 = vadd.f32 %v817, 0.008332121
    %v819 = vmul.f32 %v816, %v818
    %v820 = vadd.f32 %v819, -0.16666654
    %v821 = vmul.f32 %v816, %v820
    %v822 = vadd.f32 %v821, 1.0
    %v823 = vmul.f32 %v822, %v807
    %vm824 = vweird.f32 %v516
    %v825 = vand.u32 %v808, 3
    %vm826 = vcmp.lt.s32.totalorder %v825, 2
    %vm827 = vcmp.eq.s32.totalorder %v825, 0
    %v828 = vxor.u32 %v823, 2147483648
    %v829 = vsel %vm827, %v815, %v828
    %vm830 = vcmp.eq.s32.totalorder %v825, 2
    %v831 = vxor.u32 %v815, 2147483648
    %v832 = vsel %vm830, %v831, %v823
    %v833 = vsel %vm826, %v829, %v832
    %v834 = vsel %vm824, nan, %v833
    %v835 = vand.u32 2147483647, %v517
    %vm836 = vcmp.le.f32.partialorder %v835, 0.7853982
    %vm837 = vcmp.lt.s32.totalorder %v517, 0
    %v838 = vand.u32 %v517, 2139095040
    %v839 = vshrl.u32 %v838, 23
    %v840 = vsub.s32 %v839, 127
    %v841 = vand.u32 2147483647, %v517
    %v842 = vand.u32 %v841, 8388607
    %v843 = vor.u32 %v842, 8388608
    %v844 = vsub.s32 0, %v843
    %v845 = vadd.s32 %v840, 1
    %vm846 = vcmp.gt.s32.totalorder %v845, 0
    %v847 = vsel %vm846, %v845, 0
    %v848 = vshrl.u32 %v847, 5
    %v849 = vand.u32 %v847, 31
    %v850 = vsub.s32 32, %v849
    %v851 = vshrl.u32 683565275, %v850
    %v852 = vshll.u32 683565275, %v849
    %v853 = vshrl.u32 2475754826, %v850
    %v854 = vor.u32 %v852, %v853
    %v855 = vshll.u32 2475754826, %v849
    %v856 = vshrl.u32 2131351028, %v850
    %v857 = vor.u32 %v855, %v856
    %v858 = vshll.u32 2131351028, %v849
    %v859 = vshrl.u32 2102212464, %v850
    %v860 = vor.u32 %v858, %v859
    %v861 = vshll.u32 2102212464, %v849
    %v862 = vshrl.u32 920167782, %v850
    %v863 = vor.u32 %v861, %v862
    %v864 = vshll.u32 920167782, %v849
    %v865 = vshrl.u32 1326507024, %v850
    %v866 = vor.u32 %v864, %v865
    %vm867 = vcmp.lt.s32.totalorder %v848, 1
    %vm868 = vcmp.lt.s32.totalorder %v848, 2
    %vm869 = vcmp.lt.s32.totalorder %v848, 3
    %vm870 = vcmp.lt.s32.totalorder %v848, 4
    %v871 = vsel %vm867, %v851, %v854
    %v872 = vsel %vm870, %v860, 2102212464
    %v873 = vsel %vm869, %v857, %v872
    %v874 = vsel %vm868, %v871, %v873
    %v875 = vsel %vm867, %v854, %v857
    %v876 = vsel %vm870, %v863, 920167782
    %v877 = vsel %vm869, %v860, %v876
    %v878 = vsel %vm868, %v875, %v877
    %v879 = vsel %vm867, %v857, %v860
    %v880 = vsel %vm870, %v866, 1326507024
    %v881 = vsel %vm869, %v863, %v880
    %v882 = vsel %vm868, %v879, %v881
    %v883 = vshll.u32 %v843, 8
    %v884 = vand.u32 %v883, 65535
    %v885 = vshrl.u32 %v883, 16
    %v886 = vand.u32 %v882, 65535
    %v887 = vshrl.u32 %v882, 16
    %v888 = vmul.u32 %v884, %v886
    %v889 = vmul.u32 %v884, %v887
    %v890 = vmul.u32 %v885, %v886
    %v891 = vmul.u32 %v885, %v887
    %v892 = vshll.u32 %v889, 16
    %v893 = vshrl.u32 %v889, 16
    %v894 = vshll.u32 %v890, 16
    %v895 = vshrl.u32 %v890, 16
    %vm896 = vc.u32 %v888, %v892
    %v897 = vsel %vm896, 1, 0
    %v898 = vadd.s32 %v888, %v892
    %v899 = vadd.s32 %v891, %v897
    %vm900 = vc.u32 %v898, %v894
    %v901 = vsel %vm900, 1, 0
    %v902 = vadd.s32 %v898, %v894
    %v903 = vadd.s32 %v899, %v901
    %v904 = vadd.s32 %v903, %v893
    %v905 = vadd.s32 %v904, %v895
    %v906 = vand.u32 %v883, 65535
    %v907 = vshrl.u32 %v883, 16
    %v908 = vand.u32 %v878, 65535
    %v909 = vshrl.u32 %v878, 16
    %v910 = vmul.u32 %v906, %v908
    %v911 = vmul.u32 %v906, %v909
    %v912 = vmul.u32 %v907, %v908
    %v913 = vmul.u32 %v907, %v909
    %v914 = vshll.u32 %v911, 16
    %v915 = vshrl.u32 %v911, 16
    %v916 = vshll.u32 %v912, 16
    %v917 = vshrl.u32 %v912, 16
    %vm918 = vc.u32 %v910, %v914
    %v919 = vsel %vm918, 1, 0
    %v920 = vadd.s32 %v910, %v914
    %v921 = vadd.s32 %v913, %v919
    %vm922 = vc.u32 %v920, %v916
    %v923 = vsel %vm922, 1, 0
    %v924 = vadd.s32 %v920, %v916
    %v925 = vadd.s32 %v921, %v923
    %v926 = vadd.s32 %v925, %v915
    %v927 = vadd.s32 %v926, %v917
    %v928 = vmul.u32 %v883, %v874
    %v929 = vadd.s32 %v905, %v924
    %vm930 = vc.u32 %v905, %v924
    %v931 = vadd.s32 %v927, 1
    %v932 = vsel %vm930, %v931, %v927
    %v933 = vadd.s32 %v928, %v932
    %v934 = vadd.s32 %v933, 536870912
    %v935 = vshrl.u32 %v934, 30
    %v936 = vshll.u32 %v935, 30
    %v937 = vsub.s32 %v933, %v936
    %vm938 = vcmp.lt.s32.totalorder %v937, 0
    %v939 = vsub.s32 0, %v937
    %v940 = vsel %vm938, %v939, %v937
    %v941 = vclz %v940
    %v942 = vsub.s32 %v941, 2
    %vm943 = vcmp.gt.s32.totalorder 0, %v942
    %v944 = vsel %vm943, 0, %v942
    %v945 = vsub.s32 32, %v944
    %v946 = vshll.u32 %v937, %v944
    %v947 = vshrl.u32 %v929, %v945
    %v948 = vor.u32 %v946, %v947
    %v949 = vsub.s32 4294967266, %v944
    %v950 = vadd.s32 %v949, 127
    %v951 = vshll.u32 %v950, 23
    %v952 = vor.u32 4788187, %v951
    %v953 = vand.u32 2147483647, %v952
    %v955 = vcvt.s32.f32 %v948
    %v956 = vmul.f32 %v955, %v953
    %v957 = vxor.u32 %v956, 2147483648
    %v958 = vsel %vm837, %v957, %v956
    %v959 = vsub.s32 4, %v935
    %v960 = vsel %vm837, %v959, %v935
    %v961 = vsel %vm836, %v517, %v958
    %v962 = vsel %vm836, 0, %v960
    %v963 = vmul.f32 %v961, %v961
    %v964 = vmul.f32 %v963, -0.001358992
    %v965 = vadd.f32 %v964, 0.041655596
    %v966 = vmul.f32 %v963, %v965
    %v967 = vadd.f32 %v966, -0.4999988
    %v968 = vmul.f32 %v963, %v967
    %v969 = vadd.f32 1.0, %v968
    %v970 = vmul.f32 %v961, %v961
    %v971 = vmul.f32 %v970, -0.00019511016
    %v972 = vadd.f32 %v971, 0.008332121
    %v973 = vmul.f32 %v970, %v972
    %v974 = vadd.f32 %v973, -0.16666654
    %v975 = vmul.f32 %v970, %v974
    %v976 = vadd.f32 %v975, 1.0
    %v977 = vmul.f32 %v976, %v961
    %vm978 = vweird.f32 %v517
    %v979 = vand.u32 %v962, 3
    %vm980 = vcmp.lt.s32.totalorder %v979, 2
    %vm981 = vcmp.eq.s32.totalorder %v979, 0
    %v982 = vxor.u32 %v977, 2147483648
    %v983 = vsel %vm981, %v969, %v982
    %vm984 = vcmp.eq.s32.totalorder %v979, 2
    %v985 = vxor.u32 %v969, 2147483648
    %v986 = vsel %vm984, %v985, %v977
    %v987 = vsel %vm980, %v983, %v986
    %v988 = vsel %vm978, nan, %v987
    %v989 = vand.u32 2147483647, %v518
    %vm990 = vcmp.le.f32.partialorder %v989, 0.7853982
    %vm991 = vcmp.lt.s32.totalorder %v518, 0
    %v992 = vand.u32 %v518, 2139095040
    %v993 = vshrl.u32 %v992, 23
    %v994 = vsub.s32 %v993, 127
    %v995 = vand.u32 2147483647, %v518
    %v996 = vand.u32 %v995, 8388607
    %v997 = vor.u32 %v996, 8388608
    %v998 = vsub.s32 0, %v997
    %v999 = vadd.s32 %v994, 1
    %vm1000 = vcmp.gt.s32.totalorder %v999, 0
    %v1001 = vsel %vm1000, %v999, 0
    %v1002 = vshrl.u32 %v1001, 5
    %v1003 = vand.u32 %v1001, 31
    %v1004 = vsub.s32 32, %v1003
    %v1005 = vshrl.u32 683565275, %v1004
    %v1006 = vshll.u32 683565275, %v1003
    %v1007 = vshrl.u32 2475754826, %v1004
    %v1008 = vor.u32 %v1006, %v1007
    %v1009 = vshll.u32 2475754826, %v1003
    %v1010 = vshrl.u32 2131351028, %v1004
    %v1011 = vor.u32 %v1009, %v1010
    %v1012 = vshll.u32 2131351028, %v1003
    %v1013 = vshrl.u32 2102212464, %v1004
    %v1014 = vor.u32 %v1012, %v1013
    %v1015 = vshll.u32 2102212464, %v1003
    %v1016 = vshrl.u32 920167782, %v1004
    %v1017 = vor.u32 %v1015, %v1016
    %v1018 = vshll.u32 920167782, %v1003
    %v1019 = vshrl.u32 1326507024, %v1004
    %v1020 = vor.u32 %v1018, %v1019
    %vm1021 = vcmp.lt.s32.totalorder %v1002, 1
    %vm1022 = vcmp.lt.s32.totalorder %v1002, 2
    %vm1023 = vcmp.lt.s32.totalorder %v1002, 3
    %vm1024 = vcmp.lt.s32.totalorder %v1002, 4
    %v1025 = vsel %vm1021, %v1005, %v1008
    %v1026 = vsel %vm1024, %v1014, 2102212464
    %v1027 = vsel %vm1023, %v1011, %v1026
    %v1028 = vsel %vm1022, %v1025, %v1027
    %v1029 = vsel %vm1021, %v1008, %v1011
    %v1030 = vsel %vm1024, %v1017, 920167782
    %v1031 = vsel %vm1023, %v1014, %v1030
    %v1032 = vsel %vm1022, %v1029, %v1031
    %v1033 = vsel %vm1021, %v1011, %v1014
    %v1034 = vsel %vm1024, %v1020, 1326507024
    %v1035 = vsel %vm1023, %v1017, %v1034
    %v1036 = vsel %vm1022, %v1033, %v1035
    %v1037 = vshll.u32 %v997, 8
    %v1038 = vand.u32 %v1037, 65535
    %v1039 = vshrl.u32 %v1037, 16
    %v1040 = vand.u32 %v1036, 65535
    %v1041 = vshrl.u32 %v1036, 16
    %v1042 = vmul.u32 %v1038, %v1040
    %v1043 = vmul.u32 %v1038, %v1041
    %v1044 = vmul.u32 %v1039, %v1040
    %v1045 = vmul.u32 %v1039, %v1041
    %v1046 = vshll.u32 %v1043, 16
    %v1047 = vshrl.u32 %v1043, 16
    %v1048 = vshll.u32 %v1044, 16
    %v1049 = vshrl.u32 %v1044, 16
    %vm1050 = vc.u32 %v1042, %v1046
    %v1051 = vsel %vm1050, 1, 0
    %v1052 = vadd.s32 %v1042, %v1046
    %v1053 = vadd.s32 %v1045, %v1051
    %vm1054 = vc.u32 %v1052, %v1048
    %v1055 = vsel %vm1054, 1, 0
    %v1056 = vadd.s32 %v1052, %v1048
    %v1057 = vadd.s32 %v1053, %v1055
    %v1058 = vadd.s32 %v1057, %v1047
    %v1059 = vadd.s32 %v1058, %v1049
    %v1060 = vand.u32 %v1037, 65535
    %v1061 = vshrl.u32 %v1037, 16
    %v1062 = vand.u32 %v1032, 65535
    %v1063 = vshrl.u32 %v1032, 16
    %v1064 = vmul.u32 %v1060, %v1062
    %v1065 = vmul.u32 %v1060, %v1063
    %v1066 = vmul.u32 %v1061, %v1062
    %v1067 = vmul.u32 %v1061, %v1063
    %v1068 = vshll.u32 %v1065, 16
    %v1069 = vshrl.u32 %v1065, 16
    %v1070 = vshll.u32 %v1066, 16
    %v1071 = vshrl.u32 %v1066, 16
    %vm1072 = vc.u32 %v1064, %v1068
    %v1073 = vsel %vm1072, 1, 0
    %v1074 = vadd.s32 %v1064, %v1068
    %v1075 = vadd.s32 %v1067, %v1073
    %vm1076 = vc.u32 %v1074, %v1070
    %v1077 = vsel %vm1076, 1, 0
    %v1078 = vadd.s32 %v1074, %v1070
    %v1079 = vadd.s32 %v1075, %v1077
    %v1080 = vadd.s32 %v1079, %v1069
    %v1081 = vadd.s32 %v1080, %v1071
    %v1082 = vmul.u32 %v1037, %v1028
    %v1083 = vadd.s32 %v1059, %v1078
    %vm1084 = vc.u32 %v1059, %v1078
    %v1085 = vadd.s32 %v1081, 1
    %v1086 = vsel %vm1084, %v1085, %v1081
    %v1087 = vadd.s32 %v1082, %v1086
    %v1088 = vadd.s32 %v1087, 536870912
    %v1089 = vshrl.u32 %v1088, 30
    %v1090 = vshll.u32 %v1089, 30
    %v1091 = vsub.s32 %v1087, %v1090
    %vm1092 = vcmp.lt.s32.totalorder %v1091, 0
    %v1093 = vsub.s32 0, %v1091
    %v1094 = vsel %vm1092, %v1093, %v1091
    %v1095 = vclz %v1094
    %v1096 = vsub.s32 %v1095, 2
    %vm1097 = vcmp.gt.s32.totalorder 0, %v1096
    %v1098 = vsel %vm1097, 0, %v1096
    %v1099 = vsub.s32 32, %v1098
    %v1100 = vshll.u32 %v1091, %v1098
    %v1101 = vshrl.u32 %v1083, %v1099
    %v1102 = vor.u32 %v1100, %v1101
    %v1103 = vsub.s32 4294967266, %v1098
    %v1104 = vadd.s32 %v1103, 127
    %v1105 = vshll.u32 %v1104, 23
    %v1106 = vor.u32 4788187, %v1105
    %v1107 = vand.u32 2147483647, %v1106
    %v1109 = vcvt.s32.f32 %v1102
    %v1110 = vmul.f32 %v1109, %v1107
    %v1111 = vxor.u32 %v1110, 2147483648
    %v1112 = vsel %vm991, %v1111, %v1110
    %v1113 = vsub.s32 4, %v1089
    %v1114 = vsel %vm991, %v1113, %v1089
    %v1115 = vsel %vm990, %v518, %v1112
    %v1116 = vsel %vm990, 0, %v1114
    %v1117 = vmul.f32 %v1115, %v1115
    %v1118 = vmul.f32 %v1117, -0.001358992
    %v1119 = vadd.f32 %v1118, 0.041655596
    %v1120 = vmul.f32 %v1117, %v1119
    %v1121 = vadd.f32 %v1120, -0.4999988
    %v1122 = vmul.f32 %v1117, %v1121
    %v1123 = vadd.f32 1.0, %v1122
    %v1124 = vmul.f32 %v1115, %v1115
    %v1125 = vmul.f32 %v1124, -0.00019511016
    %v1126 = vadd.f32 %v1125, 0.008332121
    %v1127 = vmul.f32 %v1124, %v1126
    %v1128 = vadd.f32 %v1127, -0.16666654
    %v1129 = vmul.f32 %v1124, %v1128
    %v1130 = vadd.f32 %v1129, 1.0
    %v1131 = vmul.f32 %v1130, %v1115
    %vm1132 = vweird.f32 %v518
    %v1133 = vand.u32 %v1116, 3
    %vm1134 = vcmp.lt.s32.totalorder %v1133, 2
    %vm1135 = vcmp.eq.s32.totalorder %v1133, 0
    %v1136 = vxor.u32 %v1131, 2147483648
    %v1137 = vsel %vm1135, %v1123, %v1136
    %vm1138 = vcmp.eq.s32.totalorder %v1133, 2
    %v1139 = vxor.u32 %v1123, 2147483648
    %v1140 = vsel %vm1138, %v1139, %v1131
    %v1141 = vsel %vm1134, %v1137, %v1140
    %v1142 = vsel %vm1132, nan, %v1141
    %v1143 = vand.u32 2147483647, %v519
    %vm1144 = vcmp.le.f32.partialorder %v1143, 0.7853982
    %vm1145 = vcmp.lt.s32.totalorder %v519, 0
    %v1146 = vand.u32 %v519, 2139095040
    %v1147 = vshrl.u32 %v1146, 23
    %v1148 = vsub.s32 %v1147, 127
    %v1149 = vand.u32 2147483647, %v519
    %v1150 = vand.u32 %v1149, 8388607
    %v1151 = vor.u32 %v1150, 8388608
    %v1152 = vsub.s32 0, %v1151
    %v1153 = vadd.s32 %v1148, 1
    %vm1154 = vcmp.gt.s32.totalorder %v1153, 0
    %v1155 = vsel %vm1154, %v1153, 0
    %v1156 = vshrl.u32 %v1155, 5
    %v1157 = vand.u32 %v1155, 31
    %v1158 = vsub.s32 32, %v1157
    %v1159 = vshrl.u32 683565275, %v1158
    %v1160 = vshll.u32 683565275, %v1157
    %v1161 = vshrl.u32 2475754826, %v1158
    %v1162 = vor.u32 %v1160, %v1161
    %v1163 = vshll.u32 2475754826, %v1157
    %v1164 = vshrl.u32 2131351028, %v1158
    %v1165 = vor.u32 %v1163, %v1164
    %v1166 = vshll.u32 2131351028, %v1157
    %v1167 = vshrl.u32 2102212464, %v1158
    %v1168 = vor.u32 %v1166, %v1167
    %v1169 = vshll.u32 2102212464, %v1157
    %v1170 = vshrl.u32 920167782, %v1158
    %v1171 = vor.u32 %v1169, %v1170
    %v1172 = vshll.u32 920167782, %v1157
    %v1173 = vshrl.u32 1326507024, %v1158
    %v1174 = vor.u32 %v1172, %v1173
    %vm1175 = vcmp.lt.s32.totalorder %v1156, 1
    %vm1176 = vcmp.lt.s32.totalorder %v1156, 2
    %vm1177 = vcmp.lt.s32.totalorder %v1156, 3
    %vm1178 = vcmp.lt.s32.totalorder %v1156, 4
    %v1179 = vsel %vm1175, %v1159, %v1162
    %v1180 = vsel %vm1178, %v1168, 2102212464
    %v1181 = vsel %vm1177, %v1165, %v1180
    %v1182 = vsel %vm1176, %v1179, %v1181
    %v1183 = vsel %vm1175, %v1162, %v1165
    %v1184 = vsel %vm1178, %v1171, 920167782
    %v1185 = vsel %vm1177, %v1168, %v1184
    %v1186 = vsel %vm1176, %v1183, %v1185
    %v1187 = vsel %vm1175, %v1165, %v1168
    %v1188 = vsel %vm1178, %v1174, 1326507024
    %v1189 = vsel %vm1177, %v1171, %v1188
    %v1190 = vsel %vm1176, %v1187, %v1189
    %v1191 = vshll.u32 %v1151, 8
    %v1192 = vand.u32 %v1191, 65535
    %v1193 = vshrl.u32 %v1191, 16
    %v1194 = vand.u32 %v1190, 65535
    %v1195 = vshrl.u32 %v1190, 16
    %v1196 = vmul.u32 %v1192, %v1194
    %v1197 = vmul.u32 %v1192, %v1195
    %v1198 = vmul.u32 %v1193, %v1194
    %v1199 = vmul.u32 %v1193, %v1195
    %v1200 = vshll.u32 %v1197, 16
    %v1201 = vshrl.u32 %v1197, 16
    %v1202 = vshll.u32 %v1198, 16
    %v1203 = vshrl.u32 %v1198, 16
    %vm1204 = vc.u32 %v1196, %v1200
    %v1205 = vsel %vm1204, 1, 0
    %v1206 = vadd.s32 %v1196, %v1200
    %v1207 = vadd.s32 %v1199, %v1205
    %vm1208 = vc.u32 %v1206, %v1202
    %v1209 = vsel %vm1208, 1, 0
    %v1210 = vadd.s32 %v1206, %v1202
    %v1211 = vadd.s32 %v1207, %v1209
    %v1212 = vadd.s32 %v1211, %v1201
    %v1213 = vadd.s32 %v1212, %v1203
    %v1214 = vand.u32 %v1191, 65535
    %v1215 = vshrl.u32 %v1191, 16
    %v1216 = vand.u32 %v1186, 65535
    %v1217 = vshrl.u32 %v1186, 16
    %v1218 = vmul.u32 %v1214, %v1216
    %v1219 = vmul.u32 %v1214, %v1217
    %v1220 = vmul.u32 %v1215, %v1216
    %v1221 = vmul.u32 %v1215, %v1217
    %v1222 = vshll.u32 %v1219, 16
    %v1223 = vshrl.u32 %v1219, 16
    %v1224 = vshll.u32 %v1220, 16
    %v1225 = vshrl.u32 %v1220, 16
    %vm1226 = vc.u32 %v1218, %v1222
    %v1227 = vsel %vm1226, 1, 0
    %v1228 = vadd.s32 %v1218, %v1222
    %v1229 = vadd.s32 %v1221, %v1227
    %vm1230 = vc.u32 %v1228, %v1224
    %v1231 = vsel %vm1230, 1, 0
    %v1232 = vadd.s32 %v1228, %v1224
    %v1233 = vadd.s32 %v1229, %v1231
    %v1234 = vadd.s32 %v1233, %v1223
    %v1235 = vadd.s32 %v1234, %v1225
    %v1236 = vmul.u32 %v1191, %v1182
    %v1237 = vadd.s32 %v1213, %v1232
    %vm1238 = vc.u32 %v1213, %v1232
    %v1239 = vadd.s32 %v1235, 1
    %v1240 = vsel %vm1238, %v1239, %v1235
    %v1241 = vadd.s32 %v1236, %v1240
    %v1242 = vadd.s32 %v1241, 536870912
    %v1243 = vshrl.u32 %v1242, 30
    %v1244 = vshll.u32 %v1243, 30
    %v1245 = vsub.s32 %v1241, %v1244
    %vm1246 = vcmp.lt.s32.totalorder %v1245, 0
    %v1247 = vsub.s32 0, %v1245
    %v1248 = vsel %vm1246, %v1247, %v1245
    %v1249 = vclz %v1248
    %v1250 = vsub.s32 %v1249, 2
    %vm1251 = vcmp.gt.s32.totalorder 0, %v1250
    %v1252 = vsel %vm1251, 0, %v1250
    %v1253 = vsub.s32 32, %v1252
    %v1254 = vshll.u32 %v1245, %v1252
    %v1255 = vshrl.u32 %v1237, %v1253
    %v1256 = vor.u32 %v1254, %v1255
    %v1257 = vsub.s32 4294967266, %v1252
    %v1258 = vadd.s32 %v1257, 127
    %v1259 = vshll.u32 %v1258, 23
    %v1260 = vor.u32 4788187, %v1259
    %v1261 = vand.u32 2147483647, %v1260
    %v1263 = vcvt.s32.f32 %v1256
    %v1264 = vmul.f32 %v1263, %v1261
    %v1265 = vxor.u32 %v1264, 2147483648
    %v1266 = vsel %vm1145, %v1265, %v1264
    %v1267 = vsub.s32 4, %v1243
    %v1268 = vsel %vm1145, %v1267, %v1243
    %v1269 = vsel %vm1144, %v519, %v1266
    %v1270 = vsel %vm1144, 0, %v1268
    %v1271 = vmul.f32 %v1269, %v1269
    %v1272 = vmul.f32 %v1271, -0.001358992
    %v1273 = vadd.f32 %v1272, 0.041655596
    %v1274 = vmul.f32 %v1271, %v1273
    %v1275 = vadd.f32 %v1274, -0.4999988
    %v1276 = vmul.f32 %v1271, %v1275
    %v1277 = vadd.f32 1.0, %v1276
    %v1278 = vmul.f32 %v1269, %v1269
    %v1279 = vmul.f32 %v1278, -0.00019511016
    %v1280 = vadd.f32 %v1279, 0.008332121
    %v1281 = vmul.f32 %v1278, %v1280
    %v1282 = vadd.f32 %v1281, -0.16666654
    %v1283 = vmul.f32 %v1278, %v1282
    %v1284 = vadd.f32 %v1283, 1.0
    %v1285 = vmul.f32 %v1284, %v1269
    %vm1286 = vweird.f32 %v519
    %v1287 = vand.u32 %v1270, 3
    %vm1288 = vcmp.lt.s32.totalorder %v1287, 2
    %vm1289 = vcmp.eq.s32.totalorder %v1287, 0
    %v1290 = vxor.u32 %v1285, 2147483648
    %v1291 = vsel %vm1289, %v1277, %v1290
    %vm1292 = vcmp.eq.s32.totalorder %v1287, 2
    %v1293 = vxor.u32 %v1277, 2147483648
    %v1294 = vsel %vm1292, %v1293, %v1285
    %v1295 = vsel %vm1288, %v1291, %v1294
    %v1296 = vsel %vm1286, nan, %v1295
    %v1297 = vand.u32 2147483647, %v520
    %vm1298 = vcmp.le.f32.partialorder %v1297, 0.7853982
    %vm1299 = vcmp.lt.s32.totalorder %v520, 0
    %v1300 = vand.u32 %v520, 2139095040
    %v1301 = vshrl.u32 %v1300, 23
    %v1302 = vsub.s32 %v1301, 127
    %v1303 = vand.u32 2147483647, %v520
    %v1304 = vand.u32 %v1303, 8388607
    %v1305 = vor.u32 %v1304, 8388608
    %v1306 = vsub.s32 0, %v1305
    %v1307 = vadd.s32 %v1302, 1
    %vm1308 = vcmp.gt.s32.totalorder %v1307, 0
    %v1309 = vsel %vm1308, %v1307, 0
    %v1310 = vshrl.u32 %v1309, 5
    %v1311 = vand.u32 %v1309, 31
    %v1312 = vsub.s32 32, %v1311
    %v1313 = vshrl.u32 683565275, %v1312
    %v1314 = vshll.u32 683565275, %v1311
    %v1315 = vshrl.u32 2475754826, %v1312
    %v1316 = vor.u32 %v1314, %v1315
    %v1317 = vshll.u32 2475754826, %v1311
    %v1318 = vshrl.u32 2131351028, %v1312
    %v1319 = vor.u32 %v1317, %v1318
    %v1320 = vshll.u32 2131351028, %v1311
    %v1321 = vshrl.u32 2102212464, %v1312
    %v1322 = vor.u32 %v1320, %v1321
    %v1323 = vshll.u32 2102212464, %v1311
    %v1324 = vshrl.u32 920167782, %v1312
    %v1325 = vor.u32 %v1323, %v1324
    %v1326 = vshll.u32 920167782, %v1311
    %v1327 = vshrl.u32 1326507024, %v1312
    %v1328 = vor.u32 %v1326, %v1327
    %vm1329 = vcmp.lt.s32.totalorder %v1310, 1
    %vm1330 = vcmp.lt.s32.totalorder %v1310, 2
    %vm1331 = vcmp.lt.s32.totalorder %v1310, 3
    %vm1332 = vcmp.lt.s32.totalorder %v1310, 4
    %v1333 = vsel %vm1329, %v1313, %v1316
    %v1334 = vsel %vm1332, %v1322, 2102212464
    %v1335 = vsel %vm1331, %v1319, %v1334
    %v1336 = vsel %vm1330, %v1333, %v1335
    %v1337 = vsel %vm1329, %v1316, %v1319
    %v1338 = vsel %vm1332, %v1325, 920167782
    %v1339 = vsel %vm1331, %v1322, %v1338
    %v1340 = vsel %vm1330, %v1337, %v1339
    %v1341 = vsel %vm1329, %v1319, %v1322
    %v1342 = vsel %vm1332, %v1328, 1326507024
    %v1343 = vsel %vm1331, %v1325, %v1342
    %v1344 = vsel %vm1330, %v1341, %v1343
    %v1345 = vshll.u32 %v1305, 8
    %v1346 = vand.u32 %v1345, 65535
    %v1347 = vshrl.u32 %v1345, 16
    %v1348 = vand.u32 %v1344, 65535
    %v1349 = vshrl.u32 %v1344, 16
    %v1350 = vmul.u32 %v1346, %v1348
    %v1351 = vmul.u32 %v1346, %v1349
    %v1352 = vmul.u32 %v1347, %v1348
    %v1353 = vmul.u32 %v1347, %v1349
    %v1354 = vshll.u32 %v1351, 16
    %v1355 = vshrl.u32 %v1351, 16
    %v1356 = vshll.u32 %v1352, 16
    %v1357 = vshrl.u32 %v1352, 16
    %vm1358 = vc.u32 %v1350, %v1354
    %v1359 = vsel %vm1358, 1, 0
    %v1360 = vadd.s32 %v1350, %v1354
    %v1361 = vadd.s32 %v1353, %v1359
    %vm1362 = vc.u32 %v1360, %v1356
    %v1363 = vsel %vm1362, 1, 0
    %v1364 = vadd.s32 %v1360, %v1356
    %v1365 = vadd.s32 %v1361, %v1363
    %v1366 = vadd.s32 %v1365, %v1355
    %v1367 = vadd.s32 %v1366, %v1357
    %v1368 = vand.u32 %v1345, 65535
    %v1369 = vshrl.u32 %v1345, 16
    %v1370 = vand.u32 %v1340, 65535
    %v1371 = vshrl.u32 %v1340, 16
    %v1372 = vmul.u32 %v1368, %v1370
    %v1373 = vmul.u32 %v1368, %v1371
    %v1374 = vmul.u32 %v1369, %v1370
    %v1375 = vmul.u32 %v1369, %v1371
    %v1376 = vshll.u32 %v1373, 16
    %v1377 = vshrl.u32 %v1373, 16
    %v1378 = vshll.u32 %v1374, 16
    %v1379 = vshrl.u32 %v1374, 16
    %vm1380 = vc.u32 %v1372, %v1376
    %v1381 = vsel %vm1380, 1, 0
    %v1382 = vadd.s32 %v1372, %v1376
    %v1383 = vadd.s32 %v1375, %v1381
    %vm1384 = vc.u32 %v1382, %v1378
    %v1385 = vsel %vm1384, 1, 0
    %v1386 = vadd.s32 %v1382, %v1378
    %v1387 = vadd.s32 %v1383, %v1385
    %v1388 = vadd.s32 %v1387, %v1377
    %v1389 = vadd.s32 %v1388, %v1379
    %v1390 = vmul.u32 %v1345, %v1336
    %v1391 = vadd.s32 %v1367, %v1386
    %vm1392 = vc.u32 %v1367, %v1386
    %v1393 = vadd.s32 %v1389, 1
    %v1394 = vsel %vm1392, %v1393, %v1389
    %v1395 = vadd.s32 %v1390, %v1394
    %v1396 = vadd.s32 %v1395, 536870912
    %v1397 = vshrl.u32 %v1396, 30
    %v1398 = vshll.u32 %v1397, 30
    %v1399 = vsub.s32 %v1395, %v1398
    %vm1400 = vcmp.lt.s32.totalorder %v1399, 0
    %v1401 = vsub.s32 0, %v1399
    %v1402 = vsel %vm1400, %v1401, %v1399
    %v1403 = vclz %v1402
    %v1404 = vsub.s32 %v1403, 2
    %vm1405 = vcmp.gt.s32.totalorder 0, %v1404
    %v1406 = vsel %vm1405, 0, %v1404
    %v1407 = vsub.s32 32, %v1406
    %v1408 = vshll.u32 %v1399, %v1406
    %v1409 = vshrl.u32 %v1391, %v1407
    %v1410 = vor.u32 %v1408, %v1409
    %v1411 = vsub.s32 4294967266, %v1406
    %v1412 = vadd.s32 %v1411, 127
    %v1413 = vshll.u32 %v1412, 23
    %v1414 = vor.u32 4788187, %v1413
    %v1415 = vand.u32 2147483647, %v1414
    %v1417 = vcvt.s32.f32 %v1410
    %v1418 = vmul.f32 %v1417, %v1415
    %v1419 = vxor.u32 %v1418, 2147483648
    %v1420 = vsel %vm1299, %v1419, %v1418
    %v1421 = vsub.s32 4, %v1397
    %v1422 = vsel %vm1299, %v1421, %v1397
    %v1423 = vsel %vm1298, %v520, %v1420
    %v1424 = vsel %vm1298, 0, %v1422
    %v1425 = vmul.f32 %v1423, %v1423
    %v1426 = vmul.f32 %v1425, -0.001358992
    %v1427 = vadd.f32 %v1426, 0.041655596
    %v1428 = vmul.f32 %v1425, %v1427
    %v1429 = vadd.f32 %v1428, -0.4999988
    %v1430 = vmul.f32 %v1425, %v1429
    %v1431 = vadd.f32 1.0, %v1430
    %v1432 = vmul.f32 %v1423, %v1423
    %v1433 = vmul.f32 %v1432, -0.00019511016
    %v1434 = vadd.f32 %v1433, 0.008332121
    %v1435 = vmul.f32 %v1432, %v1434
    %v1436 = vadd.f32 %v1435, -0.16666654
    %v1437 = vmul.f32 %v1432, %v1436
    %v1438 = vadd.f32 %v1437, 1.0
    %v1439 = vmul.f32 %v1438, %v1423
    %vm1440 = vweird.f32 %v520
    %v1441 = vand.u32 %v1424, 3
    %vm1442 = vcmp.lt.s32.totalorder %v1441, 2
    %vm1443 = vcmp.eq.s32.totalorder %v1441, 0
    %v1444 = vxor.u32 %v1439, 2147483648
    %v1445 = vsel %vm1443, %v1431, %v1444
    %vm1446 = vcmp.eq.s32.totalorder %v1441, 2
    %v1447 = vxor.u32 %v1431, 2147483648
    %v1448 = vsel %vm1446, %v1447, %v1439
    %v1449 = vsel %vm1442, %v1445, %v1448
    %v1450 = vsel %vm1440, nan, %v1449
    %v1451 = vand.u32 2147483647, %v521
    %vm1452 = vcmp.le.f32.partialorder %v1451, 0.7853982
    %vm1453 = vcmp.lt.s32.totalorder %v521, 0
    %v1454 = vand.u32 %v521, 2139095040
    %v1455 = vshrl.u32 %v1454, 23
    %v1456 = vsub.s32 %v1455, 127
    %v1457 = vand.u32 2147483647, %v521
    %v1458 = vand.u32 %v1457, 8388607
    %v1459 = vor.u32 %v1458, 8388608
    %v1460 = vsub.s32 0, %v1459
    %v1461 = vadd.s32 %v1456, 1
    %vm1462 = vcmp.gt.s32.totalorder %v1461, 0
    %v1463 = vsel %vm1462, %v1461, 0
    %v1464 = vshrl.u32 %v1463, 5
    %v1465 = vand.u32 %v1463, 31
    %v1466 = vsub.s32 32, %v1465
    %v1467 = vshrl.u32 683565275, %v1466
    %v1468 = vshll.u32 683565275, %v1465
    %v1469 = vshrl.u32 2475754826, %v1466
    %v1470 = vor.u32 %v1468, %v1469
    %v1471 = vshll.u32 2475754826, %v1465
    %v1472 = vshrl.u32 2131351028, %v1466
    %v1473 = vor.u32 %v1471, %v1472
    %v1474 = vshll.u32 2131351028, %v1465
    %v1475 = vshrl.u32 2102212464, %v1466
    %v1476 = vor.u32 %v1474, %v1475
    %v1477 = vshll.u32 2102212464, %v1465
    %v1478 = vshrl.u32 920167782, %v1466
    %v1479 = vor.u32 %v1477, %v1478
    %v1480 = vshll.u32 920167782, %v1465
    %v1481 = vshrl.u32 1326507024, %v1466
    %v1482 = vor.u32 %v1480, %v1481
    %vm1483 = vcmp.lt.s32.totalorder %v1464, 1
    %vm1484 = vcmp.lt.s32.totalorder %v1464, 2
    %vm1485 = vcmp.lt.s32.totalorder %v1464, 3
    %vm1486 = vcmp.lt.s32.totalorder %v1464, 4
    %v1487 = vsel %vm1483, %v1467, %v1470
    %v1488 = vsel %vm1486, %v1476, 2102212464
    %v1489 = vsel %vm1485, %v1473, %v1488
    %v1490 = vsel %vm1484, %v1487, %v1489
    %v1491 = vsel %vm1483, %v1470, %v1473
    %v1492 = vsel %vm1486, %v1479, 920167782
    %v1493 = vsel %vm1485, %v1476, %v1492
    %v1494 = vsel %vm1484, %v1491, %v1493
    %v1495 = vsel %vm1483, %v1473, %v1476
    %v1496 = vsel %vm1486, %v1482, 1326507024
    %v1497 = vsel %vm1485, %v1479, %v1496
    %v1498 = vsel %vm1484, %v1495, %v1497
    %v1499 = vshll.u32 %v1459, 8
    %v1500 = vand.u32 %v1499, 65535
    %v1501 = vshrl.u32 %v1499, 16
    %v1502 = vand.u32 %v1498, 65535
    %v1503 = vshrl.u32 %v1498, 16
    %v1504 = vmul.u32 %v1500, %v1502
    %v1505 = vmul.u32 %v1500, %v1503
    %v1506 = vmul.u32 %v1501, %v1502
    %v1507 = vmul.u32 %v1501, %v1503
    %v1508 = vshll.u32 %v1505, 16
    %v1509 = vshrl.u32 %v1505, 16
    %v1510 = vshll.u32 %v1506, 16
    %v1511 = vshrl.u32 %v1506, 16
    %vm1512 = vc.u32 %v1504, %v1508
    %v1513 = vsel %vm1512, 1, 0
    %v1514 = vadd.s32 %v1504, %v1508
    %v1515 = vadd.s32 %v1507, %v1513
    %vm1516 = vc.u32 %v1514, %v1510
    %v1517 = vsel %vm1516, 1, 0
    %v1518 = vadd.s32 %v1514, %v1510
    %v1519 = vadd.s32 %v1515, %v1517
    %v1520 = vadd.s32 %v1519, %v1509
    %v1521 = vadd.s32 %v1520, %v1511
    %v1522 = vand.u32 %v1499, 65535
    %v1523 = vshrl.u32 %v1499, 16
    %v1524 = vand.u32 %v1494, 65535
    %v1525 = vshrl.u32 %v1494, 16
    %v1526 = vmul.u32 %v1522, %v1524
    %v1527 = vmul.u32 %v1522, %v1525
    %v1528 = vmul.u32 %v1523, %v1524
    %v1529 = vmul.u32 %v1523, %v1525
    %v1530 = vshll.u32 %v1527, 16
    %v1531 = vshrl.u32 %v1527, 16
    %v1532 = vshll.u32 %v1528, 16
    %v1533 = vshrl.u32 %v1528, 16
    %vm1534 = vc.u32 %v1526, %v1530
    %v1535 = vsel %vm1534, 1, 0
    %v1536 = vadd.s32 %v1526, %v1530
    %v1537 = vadd.s32 %v1529, %v1535
    %vm1538 = vc.u32 %v1536, %v1532
    %v1539 = vsel %vm1538, 1, 0
    %v1540 = vadd.s32 %v1536, %v1532
    %v1541 = vadd.s32 %v1537, %v1539
    %v1542 = vadd.s32 %v1541, %v1531
    %v1543 = vadd.s32 %v1542, %v1533
    %v1544 = vmul.u32 %v1499, %v1490
    %v1545 = vadd.s32 %v1521, %v1540
    %vm1546 = vc.u32 %v1521, %v1540
    %v1547 = vadd.s32 %v1543, 1
    %v1548 = vsel %vm1546, %v1547, %v1543
    %v1549 = vadd.s32 %v1544, %v1548
    %v1550 = vadd.s32 %v1549, 536870912
    %v1551 = vshrl.u32 %v1550, 30
    %v1552 = vshll.u32 %v1551, 30
    %v1553 = vsub.s32 %v1549, %v1552
    %vm1554 = vcmp.lt.s32.totalorder %v1553, 0
    %v1555 = vsub.s32 0, %v1553
    %v1556 = vsel %vm1554, %v1555, %v1553
    %v1557 = vclz %v1556
    %v1558 = vsub.s32 %v1557, 2
    %vm1559 = vcmp.gt.s32.totalorder 0, %v1558
    %v1560 = vsel %vm1559, 0, %v1558
    %v1561 = vsub.s32 32, %v1560
    %v1562 = vshll.u32 %v1553, %v1560
    %v1563 = vshrl.u32 %v1545, %v1561
    %v1564 = vor.u32 %v1562, %v1563
    %v1565 = vsub.s32 4294967266, %v1560
    %v1566 = vadd.s32 %v1565, 127
    %v1567 = vshll.u32 %v1566, 23
    %v1568 = vor.u32 4788187, %v1567
    %v1569 = vand.u32 2147483647, %v1568
    %v1571 = vcvt.s32.f32 %v1564
    %v1572 = vmul.f32 %v1571, %v1569
    %v1573 = vxor.u32 %v1572, 2147483648
    %v1574 = vsel %vm1453, %v1573, %v1572
    %v1575 = vsub.s32 4, %v1551
    %v1576 = vsel %vm1453, %v1575, %v1551
    %v1577 = vsel %vm1452, %v521, %v1574
    %v1578 = vsel %vm1452, 0, %v1576
    %v1579 = vmul.f32 %v1577, %v1577
    %v1580 = vmul.f32 %v1579, -0.001358992
    %v1581 = vadd.f32 %v1580, 0.041655596
    %v1582 = vmul.f32 %v1579, %v1581
    %v1583 = vadd.f32 %v1582, -0.4999988
    %v1584 = vmul.f32 %v1579, %v1583
    %v1585 = vadd.f32 1.0, %v1584
    %v1586 = vmul.f32 %v1577, %v1577
    %v1587 = vmul.f32 %v1586, -0.00019511016
    %v1588 = vadd.f32 %v1587, 0.008332121
    %v1589 = vmul.f32 %v1586, %v1588
    %v1590 = vadd.f32 %v1589, -0.16666654
    %v1591 = vmul.f32 %v1586, %v1590
    %v1592 = vadd.f32 %v1591, 1.0
    %v1593 = vmul.f32 %v1592, %v1577
    %vm1594 = vweird.f32 %v521
    %v1595 = vand.u32 %v1578, 3
    %vm1596 = vcmp.lt.s32.totalorder %v1595, 2
    %vm1597 = vcmp.eq.s32.totalorder %v1595, 0
    %v1598 = vxor.u32 %v1593, 2147483648
    %v1599 = vsel %vm1597, %v1585, %v1598
    %vm1600 = vcmp.eq.s32.totalorder %v1595, 2
    %v1601 = vxor.u32 %v1585, 2147483648
    %v1602 = vsel %vm1600, %v1601, %v1593
    %v1603 = vsel %vm1596, %v1599, %v1602
    %v1604 = vsel %vm1594, nan, %v1603
    %v1605 = vand.u32 2147483647, %v522
    %vm1606 = vcmp.le.f32.partialorder %v1605, 0.7853982
    %vm1607 = vcmp.lt.s32.totalorder %v522, 0
    %v1608 = vand.u32 %v522, 2139095040
    %v1609 = vshrl.u32 %v1608, 23
    %v1610 = vsub.s32 %v1609, 127
    %v1611 = vand.u32 2147483647, %v522
    %v1612 = vand.u32 %v1611, 8388607
    %v1613 = vor.u32 %v1612, 8388608
    %v1614 = vsub.s32 0, %v1613
    %v1615 = vadd.s32 %v1610, 1
    %vm1616 = vcmp.gt.s32.totalorder %v1615, 0
    %v1617 = vsel %vm1616, %v1615, 0
    %v1618 = vshrl.u32 %v1617, 5
    %v1619 = vand.u32 %v1617, 31
    %v1620 = vsub.s32 32, %v1619
    %v1621 = vshrl.u32 683565275, %v1620
    %v1622 = vshll.u32 683565275, %v1619
    %v1623 = vshrl.u32 2475754826, %v1620
    %v1624 = vor.u32 %v1622, %v1623
    %v1625 = vshll.u32 2475754826, %v1619
    %v1626 = vshrl.u32 2131351028, %v1620
    %v1627 = vor.u32 %v1625, %v1626
    %v1628 = vshll.u32 2131351028, %v1619
    %v1629 = vshrl.u32 2102212464, %v1620
    %v1630 = vor.u32 %v1628, %v1629
    %v1631 = vshll.u32 2102212464, %v1619
    %v1632 = vshrl.u32 920167782, %v1620
    %v1633 = vor.u32 %v1631, %v1632
    %v1634 = vshll.u32 920167782, %v1619
    %v1635 = vshrl.u32 1326507024, %v1620
    %v1636 = vor.u32 %v1634, %v1635
    %vm1637 = vcmp.lt.s32.totalorder %v1618, 1
    %vm1638 = vcmp.lt.s32.totalorder %v1618, 2
    %vm1639 = vcmp.lt.s32.totalorder %v1618, 3
    %vm1640 = vcmp.lt.s32.totalorder %v1618, 4
    %v1641 = vsel %vm1637, %v1621, %v1624
    %v1642 = vsel %vm1640, %v1630, 2102212464
    %v1643 = vsel %vm1639, %v1627, %v1642
    %v1644 = vsel %vm1638, %v1641, %v1643
    %v1645 = vsel %vm1637, %v1624, %v1627
    %v1646 = vsel %vm1640, %v1633, 920167782
    %v1647 = vsel %vm1639, %v1630, %v1646
    %v1648 = vsel %vm1638, %v1645, %v1647
    %v1649 = vsel %vm1637, %v1627, %v1630
    %v1650 = vsel %vm1640, %v1636, 1326507024
    %v1651 = vsel %vm1639, %v1633, %v1650
    %v1652 = vsel %vm1638, %v1649, %v1651
    %v1653 = vshll.u32 %v1613, 8
    %v1654 = vand.u32 %v1653, 65535
    %v1655 = vshrl.u32 %v1653, 16
    %v1656 = vand.u32 %v1652, 65535
    %v1657 = vshrl.u32 %v1652, 16
    %v1658 = vmul.u32 %v1654, %v1656
    %v1659 = vmul.u32 %v1654, %v1657
    %v1660 = vmul.u32 %v1655, %v1656
    %v1661 = vmul.u32 %v1655, %v1657
    %v1662 = vshll.u32 %v1659, 16
    %v1663 = vshrl.u32 %v1659, 16
    %v1664 = vshll.u32 %v1660, 16
    %v1665 = vshrl.u32 %v1660, 16
    %vm1666 = vc.u32 %v1658, %v1662
    %v1667 = vsel %vm1666, 1, 0
    %v1668 = vadd.s32 %v1658, %v1662
    %v1669 = vadd.s32 %v1661, %v1667
    %vm1670 = vc.u32 %v1668, %v1664
    %v1671 = vsel %vm1670, 1, 0
    %v1672 = vadd.s32 %v1668, %v1664
    %v1673 = vadd.s32 %v1669, %v1671
    %v1674 = vadd.s32 %v1673, %v1663
    %v1675 = vadd.s32 %v1674, %v1665
    %v1676 = vand.u32 %v1653, 65535
    %v1677 = vshrl.u32 %v1653, 16
    %v1678 = vand.u32 %v1648, 65535
    %v1679 = vshrl.u32 %v1648, 16
    %v1680 = vmul.u32 %v1676, %v1678
    %v1681 = vmul.u32 %v1676, %v1679
    %v1682 = vmul.u32 %v1677, %v1678
    %v1683 = vmul.u32 %v1677, %v1679
    %v1684 = vshll.u32 %v1681, 16
    %v1685 = vshrl.u32 %v1681, 16
    %v1686 = vshll.u32 %v1682, 16
    %v1687 = vshrl.u32 %v1682, 16
    %vm1688 = vc.u32 %v1680, %v1684
    %v1689 = vsel %vm1688, 1, 0
    %v1690 = vadd.s32 %v1680, %v1684
    %v1691 = vadd.s32 %v1683, %v1689
    %vm1692 = vc.u32 %v1690, %v1686
    %v1693 = vsel %vm1692, 1, 0
    %v1694 = vadd.s32 %v1690, %v1686
    %v1695 = vadd.s32 %v1691, %v1693
    %v1696 = vadd.s32 %v1695, %v1685
    %v1697 = vadd.s32 %v1696, %v1687
    %v1698 = vmul.u32 %v1653, %v1644
    %v1699 = vadd.s32 %v1675, %v1694
    %vm1700 = vc.u32 %v1675, %v1694
    %v1701 = vadd.s32 %v1697, 1
    %v1702 = vsel %vm1700, %v1701, %v1697
    %v1703 = vadd.s32 %v1698, %v1702
    %v1704 = vadd.s32 %v1703, 536870912
    %v1705 = vshrl.u32 %v1704, 30
    %v1706 = vshll.u32 %v1705, 30
    %v1707 = vsub.s32 %v1703, %v1706
    %vm1708 = vcmp.lt.s32.totalorder %v1707, 0
    %v1709 = vsub.s32 0, %v1707
    %v1710 = vsel %vm1708, %v1709, %v1707
    %v1711 = vclz %v1710
    %v1712 = vsub.s32 %v1711, 2
    %vm1713 = vcmp.gt.s32.totalorder 0, %v1712
    %v1714 = vsel %vm1713, 0, %v1712
    %v1715 = vsub.s32 32, %v1714
    %v1716 = vshll.u32 %v1707, %v1714
    %v1717 = vshrl.u32 %v1699, %v1715
    %v1718 = vor.u32 %v1716, %v1717
    %v1719 = vsub.s32 4294967266, %v1714
    %v1720 = vadd.s32 %v1719, 127
    %v1721 = vshll.u32 %v1720, 23
    %v1722 = vor.u32 4788187, %v1721
    %v1723 = vand.u32 2147483647, %v1722
    %v1725 = vcvt.s32.f32 %v1718
    %v1726 = vmul.f32 %v1725, %v1723
    %v1727 = vxor.u32 %v1726, 2147483648
    %v1728 = vsel %vm1607, %v1727, %v1726
    %v1729 = vsub.s32 4, %v1705
    %v1730 = vsel %vm1607, %v1729, %v1705
    %v1731 = vsel %vm1606, %v522, %v1728
    %v1732 = vsel %vm1606, 0, %v1730
    %v1733 = vmul.f32 %v1731, %v1731
    %v1734 = vmul.f32 %v1733, -0.001358992
    %v1735 = vadd.f32 %v1734, 0.041655596
    %v1736 = vmul.f32 %v1733, %v1735
    %v1737 = vadd.f32 %v1736, -0.4999988
    %v1738 = vmul.f32 %v1733, %v1737
    %v1739 = vadd.f32 1.0, %v1738
    %v1740 = vmul.f32 %v1731, %v1731
    %v1741 = vmul.f32 %v1740, -0.00019511016
    %v1742 = vadd.f32 %v1741, 0.008332121
    %v1743 = vmul.f32 %v1740, %v1742
    %v1744 = vadd.f32 %v1743, -0.16666654
    %v1745 = vmul.f32 %v1740, %v1744
    %v1746 = vadd.f32 %v1745, 1.0
    %v1747 = vmul.f32 %v1746, %v1731
    %vm1748 = vweird.f32 %v522
    %v1749 = vand.u32 %v1732, 3
    %vm1750 = vcmp.lt.s32.totalorder %v1749, 2
    %vm1751 = vcmp.eq.s32.totalorder %v1749, 0
    %v1752 = vxor.u32 %v1747, 2147483648
    %v1753 = vsel %vm1751, %v1739, %v1752
    %vm1754 = vcmp.eq.s32.totalorder %v1749, 2
    %v1755 = vxor.u32 %v1739, 2147483648
    %v1756 = vsel %vm1754, %v1755, %v1747
    %v1757 = vsel %vm1750, %v1753, %v1756
    %v1758 = vsel %vm1748, nan, %v1757
    %v1759 = vand.u32 2147483647, %v523
    %vm1760 = vcmp.le.f32.partialorder %v1759, 0.7853982
    %vm1761 = vcmp.lt.s32.totalorder %v523, 0
    %v1762 = vand.u32 %v523, 2139095040
    %v1763 = vshrl.u32 %v1762, 23
    %v1764 = vsub.s32 %v1763, 127
    %v1765 = vand.u32 2147483647, %v523
    %v1766 = vand.u32 %v1765, 8388607
    %v1767 = vor.u32 %v1766, 8388608
    %v1768 = vsub.s32 0, %v1767
    %v1769 = vadd.s32 %v1764, 1
    %vm1770 = vcmp.gt.s32.totalorder %v1769, 0
    %v1771 = vsel %vm1770, %v1769, 0
    %v1772 = vshrl.u32 %v1771, 5
    %v1773 = vand.u32 %v1771, 31
    %v1774 = vsub.s32 32, %v1773
    %v1775 = vshrl.u32 683565275, %v1774
    %v1776 = vshll.u32 683565275, %v1773
    %v1777 = vshrl.u32 2475754826, %v1774
    %v1778 = vor.u32 %v1776, %v1777
    %v1779 = vshll.u32 2475754826, %v1773
    %v1780 = vshrl.u32 2131351028, %v1774
    %v1781 = vor.u32 %v1779, %v1780
    %v1782 = vshll.u32 2131351028, %v1773
    %v1783 = vshrl.u32 2102212464, %v1774
    %v1784 = vor.u32 %v1782, %v1783
    %v1785 = vshll.u32 2102212464, %v1773
    %v1786 = vshrl.u32 920167782, %v1774
    %v1787 = vor.u32 %v1785, %v1786
    %v1788 = vshll.u32 920167782, %v1773
    %v1789 = vshrl.u32 1326507024, %v1774
    %v1790 = vor.u32 %v1788, %v1789
    %vm1791 = vcmp.lt.s32.totalorder %v1772, 1
    %vm1792 = vcmp.lt.s32.totalorder %v1772, 2
    %vm1793 = vcmp.lt.s32.totalorder %v1772, 3
    %vm1794 = vcmp.lt.s32.totalorder %v1772, 4
    %v1795 = vsel %vm1791, %v1775, %v1778
    %v1796 = vsel %vm1794, %v1784, 2102212464
    %v1797 = vsel %vm1793, %v1781, %v1796
    %v1798 = vsel %vm1792, %v1795, %v1797
    %v1799 = vsel %vm1791, %v1778, %v1781
    %v1800 = vsel %vm1794, %v1787, 920167782
    %v1801 = vsel %vm1793, %v1784, %v1800
    %v1802 = vsel %vm1792, %v1799, %v1801
    %v1803 = vsel %vm1791, %v1781, %v1784
    %v1804 = vsel %vm1794, %v1790, 1326507024
    %v1805 = vsel %vm1793, %v1787, %v1804
    %v1806 = vsel %vm1792, %v1803, %v1805
    %v1807 = vshll.u32 %v1767, 8
    %v1808 = vand.u32 %v1807, 65535
    %v1809 = vshrl.u32 %v1807, 16
    %v1810 = vand.u32 %v1806, 65535
    %v1811 = vshrl.u32 %v1806, 16
    %v1812 = vmul.u32 %v1808, %v1810
    %v1813 = vmul.u32 %v1808, %v1811
    %v1814 = vmul.u32 %v1809, %v1810
    %v1815 = vmul.u32 %v1809, %v1811
    %v1816 = vshll.u32 %v1813, 16
    %v1817 = vshrl.u32 %v1813, 16
    %v1818 = vshll.u32 %v1814, 16
    %v1819 = vshrl.u32 %v1814, 16
    %vm1820 = vc.u32 %v1812, %v1816
    %v1821 = vsel %vm1820, 1, 0
    %v1822 = vadd.s32 %v1812, %v1816
    %v1823 = vadd.s32 %v1815, %v1821
    %vm1824 = vc.u32 %v1822, %v1818
    %v1825 = vsel %vm1824, 1, 0
    %v1826 = vadd.s32 %v1822, %v1818
    %v1827 = vadd.s32 %v1823, %v1825
    %v1828 = vadd.s32 %v1827, %v1817
    %v1829 = vadd.s32 %v1828, %v1819
    %v1830 = vand.u32 %v1807, 65535
    %v1831 = vshrl.u32 %v1807, 16
    %v1832 = vand.u32 %v1802, 65535
    %v1833 = vshrl.u32 %v1802, 16
    %v1834 = vmul.u32 %v1830, %v1832
    %v1835 = vmul.u32 %v1830, %v1833
    %v1836 = vmul.u32 %v1831, %v1832
    %v1837 = vmul.u32 %v1831, %v1833
    %v1838 = vshll.u32 %v1835, 16
    %v1839 = vshrl.u32 %v1835, 16
    %v1840 = vshll.u32 %v1836, 16
    %v1841 = vshrl.u32 %v1836, 16
    %vm1842 = vc.u32 %v1834, %v1838
    %v1843 = vsel %vm1842, 1, 0
    %v1844 = vadd.s32 %v1834, %v1838
    %v1845 = vadd.s32 %v1837, %v1843
    %vm1846 = vc.u32 %v1844, %v1840
    %v1847 = vsel %vm1846, 1, 0
    %v1848 = vadd.s32 %v1844, %v1840
    %v1849 = vadd.s32 %v1845, %v1847
    %v1850 = vadd.s32 %v1849, %v1839
    %v1851 = vadd.s32 %v1850, %v1841
    %v1852 = vmul.u32 %v1807, %v1798
    %v1853 = vadd.s32 %v1829, %v1848
    %vm1854 = vc.u32 %v1829, %v1848
    %v1855 = vadd.s32 %v1851, 1
    %v1856 = vsel %vm1854, %v1855, %v1851
    %v1857 = vadd.s32 %v1852, %v1856
    %v1858 = vadd.s32 %v1857, 536870912
    %v1859 = vshrl.u32 %v1858, 30
    %v1860 = vshll.u32 %v1859, 30
    %v1861 = vsub.s32 %v1857, %v1860
    %vm1862 = vcmp.lt.s32.totalorder %v1861, 0
    %v1863 = vsub.s32 0, %v1861
    %v1864 = vsel %vm1862, %v1863, %v1861
    %v1865 = vclz %v1864
    %v1866 = vsub.s32 %v1865, 2
    %vm1867 = vcmp.gt.s32.totalorder 0, %v1866
    %v1868 = vsel %vm1867, 0, %v1866
    %v1869 = vsub.s32 32, %v1868
    %v1870 = vshll.u32 %v1861, %v1868
    %v1871 = vshrl.u32 %v1853, %v1869
    %v1872 = vor.u32 %v1870, %v1871
    %v1873 = vsub.s32 4294967266, %v1868
    %v1874 = vadd.s32 %v1873, 127
    %v1875 = vshll.u32 %v1874, 23
    %v1876 = vor.u32 4788187, %v1875
    %v1877 = vand.u32 2147483647, %v1876
    %v1879 = vcvt.s32.f32 %v1872
    %v1880 = vmul.f32 %v1879, %v1877
    %v1881 = vxor.u32 %v1880, 2147483648
    %v1882 = vsel %vm1761, %v1881, %v1880
    %v1883 = vsub.s32 4, %v1859
    %v1884 = vsel %vm1761, %v1883, %v1859
    %v1885 = vsel %vm1760, %v523, %v1882
    %v1886 = vsel %vm1760, 0, %v1884
    %v1887 = vmul.f32 %v1885, %v1885
    %v1888 = vmul.f32 %v1887, -0.001358992
    %v1889 = vadd.f32 %v1888, 0.041655596
    %v1890 = vmul.f32 %v1887, %v1889
    %v1891 = vadd.f32 %v1890, -0.4999988
    %v1892 = vmul.f32 %v1887, %v1891
    %v1893 = vadd.f32 1.0, %v1892
    %v1894 = vmul.f32 %v1885, %v1885
    %v1895 = vmul.f32 %v1894, -0.00019511016
    %v1896 = vadd.f32 %v1895, 0.008332121
    %v1897 = vmul.f32 %v1894, %v1896
    %v1898 = vadd.f32 %v1897, -0.16666654
    %v1899 = vmul.f32 %v1894, %v1898
    %v1900 = vadd.f32 %v1899, 1.0
    %v1901 = vmul.f32 %v1900, %v1885
    %vm1902 = vweird.f32 %v523
    %v1903 = vand.u32 %v1886, 3
    %vm1904 = vcmp.lt.s32.totalorder %v1903, 2
    %vm1905 = vcmp.eq.s32.totalorder %v1903, 0
    %v1906 = vxor.u32 %v1901, 2147483648
    %v1907 = vsel %vm1905, %v1893, %v1906
    %vm1908 = vcmp.eq.s32.totalorder %v1903, 2
    %v1909 = vxor.u32 %v1893, 2147483648
    %v1910 = vsel %vm1908, %v1909, %v1901
    %v1911 = vsel %vm1904, %v1907, %v1910
    %v1912 = vsel %vm1902, nan, %v1911
    %v1913 = vand.u32 2147483647, %v524
    %vm1914 = vcmp.le.f32.partialorder %v1913, 0.7853982
    %vm1915 = vcmp.lt.s32.totalorder %v524, 0
    %v1916 = vand.u32 %v524, 2139095040
    %v1917 = vshrl.u32 %v1916, 23
    %v1918 = vsub.s32 %v1917, 127
    %v1919 = vand.u32 2147483647, %v524
    %v1920 = vand.u32 %v1919, 8388607
    %v1921 = vor.u32 %v1920, 8388608
    %v1922 = vsub.s32 0, %v1921
    %v1923 = vadd.s32 %v1918, 1
    %vm1924 = vcmp.gt.s32.totalorder %v1923, 0
    %v1925 = vsel %vm1924, %v1923, 0
    %v1926 = vshrl.u32 %v1925, 5
    %v1927 = vand.u32 %v1925, 31
    %v1928 = vsub.s32 32, %v1927
    %v1929 = vshrl.u32 683565275, %v1928
    %v1930 = vshll.u32 683565275, %v1927
    %v1931 = vshrl.u32 2475754826, %v1928
    %v1932 = vor.u32 %v1930, %v1931
    %v1933 = vshll.u32 2475754826, %v1927
    %v1934 = vshrl.u32 2131351028, %v1928
    %v1935 = vor.u32 %v1933, %v1934
    %v1936 = vshll.u32 2131351028, %v1927
    %v1937 = vshrl.u32 2102212464, %v1928
    %v1938 = vor.u32 %v1936, %v1937
    %v1939 = vshll.u32 2102212464, %v1927
    %v1940 = vshrl.u32 920167782, %v1928
    %v1941 = vor.u32 %v1939, %v1940
    %v1942 = vshll.u32 920167782, %v1927
    %v1943 = vshrl.u32 1326507024, %v1928
    %v1944 = vor.u32 %v1942, %v1943
    %vm1945 = vcmp.lt.s32.totalorder %v1926, 1
    %vm1946 = vcmp.lt.s32.totalorder %v1926, 2
    %vm1947 = vcmp.lt.s32.totalorder %v1926, 3
    %vm1948 = vcmp.lt.s32.totalorder %v1926, 4
    %v1949 = vsel %vm1945, %v1929, %v1932
    %v1950 = vsel %vm1948, %v1938, 2102212464
    %v1951 = vsel %vm1947, %v1935, %v1950
    %v1952 = vsel %vm1946, %v1949, %v1951
    %v1953 = vsel %vm1945, %v1932, %v1935
    %v1954 = vsel %vm1948, %v1941, 920167782
    %v1955 = vsel %vm1947, %v1938, %v1954
    %v1956 = vsel %vm1946, %v1953, %v1955
    %v1957 = vsel %vm1945, %v1935, %v1938
    %v1958 = vsel %vm1948, %v1944, 1326507024
    %v1959 = vsel %vm1947, %v1941, %v1958
    %v1960 = vsel %vm1946, %v1957, %v1959
    %v1961 = vshll.u32 %v1921, 8
    %v1962 = vand.u32 %v1961, 65535
    %v1963 = vshrl.u32 %v1961, 16
    %v1964 = vand.u32 %v1960, 65535
    %v1965 = vshrl.u32 %v1960, 16
    %v1966 = vmul.u32 %v1962, %v1964
    %v1967 = vmul.u32 %v1962, %v1965
    %v1968 = vmul.u32 %v1963, %v1964
    %v1969 = vmul.u32 %v1963, %v1965
    %v1970 = vshll.u32 %v1967, 16
    %v1971 = vshrl.u32 %v1967, 16
    %v1972 = vshll.u32 %v1968, 16
    %v1973 = vshrl.u32 %v1968, 16
    %vm1974 = vc.u32 %v1966, %v1970
    %v1975 = vsel %vm1974, 1, 0
    %v1976 = vadd.s32 %v1966, %v1970
    %v1977 = vadd.s32 %v1969, %v1975
    %vm1978 = vc.u32 %v1976, %v1972
    %v1979 = vsel %vm1978, 1, 0
    %v1980 = vadd.s32 %v1976, %v1972
    %v1981 = vadd.s32 %v1977, %v1979
    %v1982 = vadd.s32 %v1981, %v1971
    %v1983 = vadd.s32 %v1982, %v1973
    %v1984 = vand.u32 %v1961, 65535
    %v1985 = vshrl.u32 %v1961, 16
    %v1986 = vand.u32 %v1956, 65535
    %v1987 = vshrl.u32 %v1956, 16
    %v1988 = vmul.u32 %v1984, %v1986
    %v1989 = vmul.u32 %v1984, %v1987
    %v1990 = vmul.u32 %v1985, %v1986
    %v1991 = vmul.u32 %v1985, %v1987
    %v1992 = vshll.u32 %v1989, 16
    %v1993 = vshrl.u32 %v1989, 16
    %v1994 = vshll.u32 %v1990, 16
    %v1995 = vshrl.u32 %v1990, 16
    %vm1996 = vc.u32 %v1988, %v1992
    %v1997 = vsel %vm1996, 1, 0
    %v1998 = vadd.s32 %v1988, %v1992
    %v1999 = vadd.s32 %v1991, %v1997
    %vm2000 = vc.u32 %v1998, %v1994
    %v2001 = vsel %vm2000, 1, 0
    %v2002 = vadd.s32 %v1998, %v1994
    %v2003 = vadd.s32 %v1999, %v2001
    %v2004 = vadd.s32 %v2003, %v1993
    %v2005 = vadd.s32 %v2004, %v1995
    %v2006 = vmul.u32 %v1961, %v1952
    %v2007 = vadd.s32 %v1983, %v2002
    %vm2008 = vc.u32 %v1983, %v2002
    %v2009 = vadd.s32 %v2005, 1
    %v2010 = vsel %vm2008, %v2009, %v2005
    %v2011 = vadd.s32 %v2006, %v2010
    %v2012 = vadd.s32 %v2011, 536870912
    %v2013 = vshrl.u32 %v2012, 30
    %v2014 = vshll.u32 %v2013, 30
    %v2015 = vsub.s32 %v2011, %v2014
    %vm2016 = vcmp.lt.s32.totalorder %v2015, 0
    %v2017 = vsub.s32 0, %v2015
    %v2018 = vsel %vm2016, %v2017, %v2015
    %v2019 = vclz %v2018
    %v2020 = vsub.s32 %v2019, 2
    %vm2021 = vcmp.gt.s32.totalorder 0, %v2020
    %v2022 = vsel %vm2021, 0, %v2020
    %v2023 = vsub.s32 32, %v2022
    %v2024 = vshll.u32 %v2015, %v2022
    %v2025 = vshrl.u32 %v2007, %v2023
    %v2026 = vor.u32 %v2024, %v2025
    %v2027 = vsub.s32 4294967266, %v2022
    %v2028 = vadd.s32 %v2027, 127
    %v2029 = vshll.u32 %v2028, 23
    %v2030 = vor.u32 4788187, %v2029
    %v2031 = vand.u32 2147483647, %v2030
    %v2033 = vcvt.s32.f32 %v2026
    %v2034 = vmul.f32 %v2033, %v2031
    %v2035 = vxor.u32 %v2034, 2147483648
    %v2036 = vsel %vm1915, %v2035, %v2034
    %v2037 = vsub.s32 4, %v2013
    %v2038 = vsel %vm1915, %v2037, %v2013
    %v2039 = vsel %vm1914, %v524, %v2036
    %v2040 = vsel %vm1914, 0, %v2038
    %v2041 = vmul.f32 %v2039, %v2039
    %v2042 = vmul.f32 %v2041, -0.001358992
    %v2043 = vadd.f32 %v2042, 0.041655596
    %v2044 = vmul.f32 %v2041, %v2043
    %v2045 = vadd.f32 %v2044, -0.4999988
    %v2046 = vmul.f32 %v2041, %v2045
    %v2047 = vadd.f32 1.0, %v2046
    %v2048 = vmul.f32 %v2039, %v2039
    %v2049 = vmul.f32 %v2048, -0.00019511016
    %v2050 = vadd.f32 %v2049, 0.008332121
    %v2051 = vmul.f32 %v2048, %v2050
    %v2052 = vadd.f32 %v2051, -0.16666654
    %v2053 = vmul.f32 %v2048, %v2052
    %v2054 = vadd.f32 %v2053, 1.0
    %v2055 = vmul.f32 %v2054, %v2039
    %vm2056 = vweird.f32 %v524
    %v2057 = vand.u32 %v2040, 3
    %vm2058 = vcmp.lt.s32.totalorder %v2057, 2
    %vm2059 = vcmp.eq.s32.totalorder %v2057, 0
    %v2060 = vxor.u32 %v2055, 2147483648
    %v2061 = vsel %vm2059, %v2047, %v2060
    %vm2062 = vcmp.eq.s32.totalorder %v2057, 2
    %v2063 = vxor.u32 %v2047, 2147483648
    %v2064 = vsel %vm2062, %v2063, %v2055
    %v2065 = vsel %vm2058, %v2061, %v2064
    %v2066 = vsel %vm2056, nan, %v2065
    %v2067 = vand.u32 2147483647, %v525
    %vm2068 = vcmp.le.f32.partialorder %v2067, 0.7853982
    %vm2069 = vcmp.lt.s32.totalorder %v525, 0
    %v2070 = vand.u32 %v525, 2139095040
    %v2071 = vshrl.u32 %v2070, 23
    %v2072 = vsub.s32 %v2071, 127
    %v2073 = vand.u32 2147483647, %v525
    %v2074 = vand.u32 %v2073, 8388607
    %v2075 = vor.u32 %v2074, 8388608
    %v2076 = vsub.s32 0, %v2075
    %v2077 = vadd.s32 %v2072, 1
    %vm2078 = vcmp.gt.s32.totalorder %v2077, 0
    %v2079 = vsel %vm2078, %v2077, 0
    %v2080 = vshrl.u32 %v2079, 5
    %v2081 = vand.u32 %v2079, 31
    %v2082 = vsub.s32 32, %v2081
    %v2083 = vshrl.u32 683565275, %v2082
    %v2084 = vshll.u32 683565275, %v2081
    %v2085 = vshrl.u32 2475754826, %v2082
    %v2086 = vor.u32 %v2084, %v2085
    %v2087 = vshll.u32 2475754826, %v2081
    %v2088 = vshrl.u32 2131351028, %v2082
    %v2089 = vor.u32 %v2087, %v2088
    %v2090 = vshll.u32 2131351028, %v2081
    %v2091 = vshrl.u32 2102212464, %v2082
    %v2092 = vor.u32 %v2090, %v2091
    %v2093 = vshll.u32 2102212464, %v2081
    %v2094 = vshrl.u32 920167782, %v2082
    %v2095 = vor.u32 %v2093, %v2094
    %v2096 = vshll.u32 920167782, %v2081
    %v2097 = vshrl.u32 1326507024, %v2082
    %v2098 = vor.u32 %v2096, %v2097
    %vm2099 = vcmp.lt.s32.totalorder %v2080, 1
    %vm2100 = vcmp.lt.s32.totalorder %v2080, 2
    %vm2101 = vcmp.lt.s32.totalorder %v2080, 3
    %vm2102 = vcmp.lt.s32.totalorder %v2080, 4
    %v2103 = vsel %vm2099, %v2083, %v2086
    %v2104 = vsel %vm2102, %v2092, 2102212464
    %v2105 = vsel %vm2101, %v2089, %v2104
    %v2106 = vsel %vm2100, %v2103, %v2105
    %v2107 = vsel %vm2099, %v2086, %v2089
    %v2108 = vsel %vm2102, %v2095, 920167782
    %v2109 = vsel %vm2101, %v2092, %v2108
    %v2110 = vsel %vm2100, %v2107, %v2109
    %v2111 = vsel %vm2099, %v2089, %v2092
    %v2112 = vsel %vm2102, %v2098, 1326507024
    %v2113 = vsel %vm2101, %v2095, %v2112
    %v2114 = vsel %vm2100, %v2111, %v2113
    %v2115 = vshll.u32 %v2075, 8
    %v2116 = vand.u32 %v2115, 65535
    %v2117 = vshrl.u32 %v2115, 16
    %v2118 = vand.u32 %v2114, 65535
    %v2119 = vshrl.u32 %v2114, 16
    %v2120 = vmul.u32 %v2116, %v2118
    %v2121 = vmul.u32 %v2116, %v2119
    %v2122 = vmul.u32 %v2117, %v2118
    %v2123 = vmul.u32 %v2117, %v2119
    %v2124 = vshll.u32 %v2121, 16
    %v2125 = vshrl.u32 %v2121, 16
    %v2126 = vshll.u32 %v2122, 16
    %v2127 = vshrl.u32 %v2122, 16
    %vm2128 = vc.u32 %v2120, %v2124
    %v2129 = vsel %vm2128, 1, 0
    %v2130 = vadd.s32 %v2120, %v2124
    %v2131 = vadd.s32 %v2123, %v2129
    %vm2132 = vc.u32 %v2130, %v2126
    %v2133 = vsel %vm2132, 1, 0
    %v2134 = vadd.s32 %v2130, %v2126
    %v2135 = vadd.s32 %v2131, %v2133
    %v2136 = vadd.s32 %v2135, %v2125
    %v2137 = vadd.s32 %v2136, %v2127
    %v2138 = vand.u32 %v2115, 65535
    %v2139 = vshrl.u32 %v2115, 16
    %v2140 = vand.u32 %v2110, 65535
    %v2141 = vshrl.u32 %v2110, 16
    %v2142 = vmul.u32 %v2138, %v2140
    %v2143 = vmul.u32 %v2138, %v2141
    %v2144 = vmul.u32 %v2139, %v2140
    %v2145 = vmul.u32 %v2139, %v2141
    %v2146 = vshll.u32 %v2143, 16
    %v2147 = vshrl.u32 %v2143, 16
    %v2148 = vshll.u32 %v2144, 16
    %v2149 = vshrl.u32 %v2144, 16
    %vm2150 = vc.u32 %v2142, %v2146
    %v2151 = vsel %vm2150, 1, 0
    %v2152 = vadd.s32 %v2142, %v2146
    %v2153 = vadd.s32 %v2145, %v2151
    %vm2154 = vc.u32 %v2152, %v2148
    %v2155 = vsel %vm2154, 1, 0
    %v2156 = vadd.s32 %v2152, %v2148
    %v2157 = vadd.s32 %v2153, %v2155
    %v2158 = vadd.s32 %v2157, %v2147
    %v2159 = vadd.s32 %v2158, %v2149
    %v2160 = vmul.u32 %v2115, %v2106
    %v2161 = vadd.s32 %v2137, %v2156
    %vm2162 = vc.u32 %v2137, %v2156
    %v2163 = vadd.s32 %v2159, 1
    %v2164 = vsel %vm2162, %v2163, %v2159
    %v2165 = vadd.s32 %v2160, %v2164
    %v2166 = vadd.s32 %v2165, 536870912
    %v2167 = vshrl.u32 %v2166, 30
    %v2168 = vshll.u32 %v2167, 30
    %v2169 = vsub.s32 %v2165, %v2168
    %vm2170 = vcmp.lt.s32.totalorder %v2169, 0
    %v2171 = vsub.s32 0, %v2169
    %v2172 = vsel %vm2170, %v2171, %v2169
    %v2173 = vclz %v2172
    %v2174 = vsub.s32 %v2173, 2
    %vm2175 = vcmp.gt.s32.totalorder 0, %v2174
    %v2176 = vsel %vm2175, 0, %v2174
    %v2177 = vsub.s32 32, %v2176
    %v2178 = vshll.u32 %v2169, %v2176
    %v2179 = vshrl.u32 %v2161, %v2177
    %v2180 = vor.u32 %v2178, %v2179
    %v2181 = vsub.s32 4294967266, %v2176
    %v2182 = vadd.s32 %v2181, 127
    %v2183 = vshll.u32 %v2182, 23
    %v2184 = vor.u32 4788187, %v2183
    %v2185 = vand.u32 2147483647, %v2184
    %v2187 = vcvt.s32.f32 %v2180
    %v2188 = vmul.f32 %v2187, %v2185
    %v2189 = vxor.u32 %v2188, 2147483648
    %v2190 = vsel %vm2069, %v2189, %v2188
    %v2191 = vsub.s32 4, %v2167
    %v2192 = vsel %vm2069, %v2191, %v2167
    %v2193 = vsel %vm2068, %v525, %v2190
    %v2194 = vsel %vm2068, 0, %v2192
    %v2195 = vmul.f32 %v2193, %v2193
    %v2196 = vmul.f32 %v2195, -0.001358992
    %v2197 = vadd.f32 %v2196, 0.041655596
    %v2198 = vmul.f32 %v2195, %v2197
    %v2199 = vadd.f32 %v2198, -0.4999988
    %v2200 = vmul.f32 %v2195, %v2199
    %v2201 = vadd.f32 1.0, %v2200
    %v2202 = vmul.f32 %v2193, %v2193
    %v2203 = vmul.f32 %v2202, -0.00019511016
    %v2204 = vadd.f32 %v2203, 0.008332121
    %v2205 = vmul.f32 %v2202, %v2204
    %v2206 = vadd.f32 %v2205, -0.16666654
    %v2207 = vmul.f32 %v2202, %v2206
    %v2208 = vadd.f32 %v2207, 1.0
    %v2209 = vmul.f32 %v2208, %v2193
    %vm2210 = vweird.f32 %v525
    %v2211 = vand.u32 %v2194, 3
    %vm2212 = vcmp.lt.s32.totalorder %v2211, 2
    %vm2213 = vcmp.eq.s32.totalorder %v2211, 0
    %v2214 = vxor.u32 %v2209, 2147483648
    %v2215 = vsel %vm2213, %v2201, %v2214
    %vm2216 = vcmp.eq.s32.totalorder %v2211, 2
    %v2217 = vxor.u32 %v2201, 2147483648
    %v2218 = vsel %vm2216, %v2217, %v2209
    %v2219 = vsel %vm2212, %v2215, %v2218
    %v2220 = vsel %vm2210, nan, %v2219
    %v2221 = vand.u32 2147483647, %v526
    %vm2222 = vcmp.le.f32.partialorder %v2221, 0.7853982
    %vm2223 = vcmp.lt.s32.totalorder %v526, 0
    %v2224 = vand.u32 %v526, 2139095040
    %v2225 = vshrl.u32 %v2224, 23
    %v2226 = vsub.s32 %v2225, 127
    %v2227 = vand.u32 2147483647, %v526
    %v2228 = vand.u32 %v2227, 8388607
    %v2229 = vor.u32 %v2228, 8388608
    %v2230 = vsub.s32 0, %v2229
    %v2231 = vadd.s32 %v2226, 1
    %vm2232 = vcmp.gt.s32.totalorder %v2231, 0
    %v2233 = vsel %vm2232, %v2231, 0
    %v2234 = vshrl.u32 %v2233, 5
    %v2235 = vand.u32 %v2233, 31
    %v2236 = vsub.s32 32, %v2235
    %v2237 = vshrl.u32 683565275, %v2236
    %v2238 = vshll.u32 683565275, %v2235
    %v2239 = vshrl.u32 2475754826, %v2236
    %v2240 = vor.u32 %v2238, %v2239
    %v2241 = vshll.u32 2475754826, %v2235
    %v2242 = vshrl.u32 2131351028, %v2236
    %v2243 = vor.u32 %v2241, %v2242
    %v2244 = vshll.u32 2131351028, %v2235
    %v2245 = vshrl.u32 2102212464, %v2236
    %v2246 = vor.u32 %v2244, %v2245
    %v2247 = vshll.u32 2102212464, %v2235
    %v2248 = vshrl.u32 920167782, %v2236
    %v2249 = vor.u32 %v2247, %v2248
    %v2250 = vshll.u32 920167782, %v2235
    %v2251 = vshrl.u32 1326507024, %v2236
    %v2252 = vor.u32 %v2250, %v2251
    %vm2253 = vcmp.lt.s32.totalorder %v2234, 1
    %vm2254 = vcmp.lt.s32.totalorder %v2234, 2
    %vm2255 = vcmp.lt.s32.totalorder %v2234, 3
    %vm2256 = vcmp.lt.s32.totalorder %v2234, 4
    %v2257 = vsel %vm2253, %v2237, %v2240
    %v2258 = vsel %vm2256, %v2246, 2102212464
    %v2259 = vsel %vm2255, %v2243, %v2258
    %v2260 = vsel %vm2254, %v2257, %v2259
    %v2261 = vsel %vm2253, %v2240, %v2243
    %v2262 = vsel %vm2256, %v2249, 920167782
    %v2263 = vsel %vm2255, %v2246, %v2262
    %v2264 = vsel %vm2254, %v2261, %v2263
    %v2265 = vsel %vm2253, %v2243, %v2246
    %v2266 = vsel %vm2256, %v2252, 1326507024
    %v2267 = vsel %vm2255, %v2249, %v2266
    %v2268 = vsel %vm2254, %v2265, %v2267
    %v2269 = vshll.u32 %v2229, 8
    %v2270 = vand.u32 %v2269, 65535
    %v2271 = vshrl.u32 %v2269, 16
    %v2272 = vand.u32 %v2268, 65535
    %v2273 = vshrl.u32 %v2268, 16
    %v2274 = vmul.u32 %v2270, %v2272
    %v2275 = vmul.u32 %v2270, %v2273
    %v2276 = vmul.u32 %v2271, %v2272
    %v2277 = vmul.u32 %v2271, %v2273
    %v2278 = vshll.u32 %v2275, 16
    %v2279 = vshrl.u32 %v2275, 16
    %v2280 = vshll.u32 %v2276, 16
    %v2281 = vshrl.u32 %v2276, 16
    %vm2282 = vc.u32 %v2274, %v2278
    %v2283 = vsel %vm2282, 1, 0
    %v2284 = vadd.s32 %v2274, %v2278
    %v2285 = vadd.s32 %v2277, %v2283
    %vm2286 = vc.u32 %v2284, %v2280
    %v2287 = vsel %vm2286, 1, 0
    %v2288 = vadd.s32 %v2284, %v2280
    %v2289 = vadd.s32 %v2285, %v2287
    %v2290 = vadd.s32 %v2289, %v2279
    %v2291 = vadd.s32 %v2290, %v2281
    %v2292 = vand.u32 %v2269, 65535
    %v2293 = vshrl.u32 %v2269, 16
    %v2294 = vand.u32 %v2264, 65535
    %v2295 = vshrl.u32 %v2264, 16
    %v2296 = vmul.u32 %v2292, %v2294
    %v2297 = vmul.u32 %v2292, %v2295
    %v2298 = vmul.u32 %v2293, %v2294
    %v2299 = vmul.u32 %v2293, %v2295
    %v2300 = vshll.u32 %v2297, 16
    %v2301 = vshrl.u32 %v2297, 16
    %v2302 = vshll.u32 %v2298, 16
    %v2303 = vshrl.u32 %v2298, 16
    %vm2304 = vc.u32 %v2296, %v2300
    %v2305 = vsel %vm2304, 1, 0
    %v2306 = vadd.s32 %v2296, %v2300
    %v2307 = vadd.s32 %v2299, %v2305
    %vm2308 = vc.u32 %v2306, %v2302
    %v2309 = vsel %vm2308, 1, 0
    %v2310 = vadd.s32 %v2306, %v2302
    %v2311 = vadd.s32 %v2307, %v2309
    %v2312 = vadd.s32 %v2311, %v2301
    %v2313 = vadd.s32 %v2312, %v2303
    %v2314 = vmul.u32 %v2269, %v2260
    %v2315 = vadd.s32 %v2291, %v2310
    %vm2316 = vc.u32 %v2291, %v2310
    %v2317 = vadd.s32 %v2313, 1
    %v2318 = vsel %vm2316, %v2317, %v2313
    %v2319 = vadd.s32 %v2314, %v2318
    %v2320 = vadd.s32 %v2319, 536870912
    %v2321 = vshrl.u32 %v2320, 30
    %v2322 = vshll.u32 %v2321, 30
    %v2323 = vsub.s32 %v2319, %v2322
    %vm2324 = vcmp.lt.s32.totalorder %v2323, 0
    %v2325 = vsub.s32 0, %v2323
    %v2326 = vsel %vm2324, %v2325, %v2323
    %v2327 = vclz %v2326
    %v2328 = vsub.s32 %v2327, 2
    %vm2329 = vcmp.gt.s32.totalorder 0, %v2328
    %v2330 = vsel %vm2329, 0, %v2328
    %v2331 = vsub.s32 32, %v2330
    %v2332 = vshll.u32 %v2323, %v2330
    %v2333 = vshrl.u32 %v2315, %v2331
    %v2334 = vor.u32 %v2332, %v2333
    %v2335 = vsub.s32 4294967266, %v2330
    %v2336 = vadd.s32 %v2335, 127
    %v2337 = vshll.u32 %v2336, 23
    %v2338 = vor.u32 4788187, %v2337
    %v2339 = vand.u32 2147483647, %v2338
    %v2341 = vcvt.s32.f32 %v2334
    %v2342 = vmul.f32 %v2341, %v2339
    %v2343 = vxor.u32 %v2342, 2147483648
    %v2344 = vsel %vm2223, %v2343, %v2342
    %v2345 = vsub.s32 4, %v2321
    %v2346 = vsel %vm2223, %v2345, %v2321
    %v2347 = vsel %vm2222, %v526, %v2344
    %v2348 = vsel %vm2222, 0, %v2346
    %v2349 = vmul.f32 %v2347, %v2347
    %v2350 = vmul.f32 %v2349, -0.001358992
    %v2351 = vadd.f32 %v2350, 0.041655596
    %v2352 = vmul.f32 %v2349, %v2351
    %v2353 = vadd.f32 %v2352, -0.4999988
    %v2354 = vmul.f32 %v2349, %v2353
    %v2355 = vadd.f32 1.0, %v2354
    %v2356 = vmul.f32 %v2347, %v2347
    %v2357 = vmul.f32 %v2356, -0.00019511016
    %v2358 = vadd.f32 %v2357, 0.008332121
    %v2359 = vmul.f32 %v2356, %v2358
    %v2360 = vadd.f32 %v2359, -0.16666654
    %v2361 = vmul.f32 %v2356, %v2360
    %v2362 = vadd.f32 %v2361, 1.0
    %v2363 = vmul.f32 %v2362, %v2347
    %vm2364 = vweird.f32 %v526
    %v2365 = vand.u32 %v2348, 3
    %vm2366 = vcmp.lt.s32.totalorder %v2365, 2
    %vm2367 = vcmp.eq.s32.totalorder %v2365, 0
    %v2368 = vxor.u32 %v2363, 2147483648
    %v2369 = vsel %vm2367, %v2355, %v2368
    %vm2370 = vcmp.eq.s32.totalorder %v2365, 2
    %v2371 = vxor.u32 %v2355, 2147483648
    %v2372 = vsel %vm2370, %v2371, %v2363
    %v2373 = vsel %vm2366, %v2369, %v2372
    %v2374 = vsel %vm2364, nan, %v2373
    %2375 = vset.pattern.permute.xlu0 1
    %2376 = vperm.xlu0 %2375, %v439
    %v2377 = vpop.permute.xlu0 %2376
    %2379 = vset.pattern.permute.xlu0 1
    %2380 = vperm.xlu0 %2379, %v440
    %v2381 = vpop.permute.xlu0 %2380
    %2383 = vset.pattern.permute.xlu0 1
    %2384 = vperm.xlu0 %2383, %v441
    %v2385 = vpop.permute.xlu0 %2384
    %2387 = vset.pattern.permute.xlu0 1
    %2388 = vperm.xlu0 %2387, %v442
    %v2389 = vpop.permute.xlu0 %2388
    %2391 = vset.pattern.permute.xlu0 1
    %2392 = vperm.xlu0 %2391, %v443
    %v2393 = vpop.permute.xlu0 %2392
    %2395 = vset.pattern.permute.xlu0 1
    %2396 = vperm.xlu0 %2395, %v444
    %v2397 = vpop.permute.xlu0 %2396
    %2399 = vset.pattern.permute.xlu0 1
    %2400 = vperm.xlu0 %2399, %v445
    %v2401 = vpop.permute.xlu0 %2400
    %2403 = vset.pattern.permute.xlu0 1
    %2404 = vperm.xlu0 %2403, %v446
    %v2405 = vpop.permute.xlu0 %2404
    %2407 = vset.pattern.permute.xlu0 1
    %2408 = vperm.xlu0 %2407, %v447
    %v2409 = vpop.permute.xlu0 %2408
    %2411 = vset.pattern.permute.xlu0 1
    %2412 = vperm.xlu0 %2411, %v448
    %v2413 = vpop.permute.xlu0 %2412
    %2415 = vset.pattern.permute.xlu0 1
    %2416 = vperm.xlu0 %2415, %v449
    %v2417 = vpop.permute.xlu0 %2416
    %2419 = vset.pattern.permute.xlu0 1
    %2420 = vperm.xlu0 %2419, %v450
    %v2421 = vpop.permute.xlu0 %2420
    %v2423 = vmul.f32 %v680, %v2377
    %v2424 = vmul.f32 %v834, %v2381
    %v2425 = vmul.f32 %v988, %v2385
    %v2426 = vmul.f32 %v1142, %v2389
    %v2427 = vmul.f32 %v1296, %v2393
    %v2428 = vmul.f32 %v1450, %v2397
    %v2429 = vmul.f32 %v1604, %v2401
    %v2430 = vmul.f32 %v1758, %v2405
    %v2431 = vmul.f32 %v1912, %v2409
    %v2432 = vmul.f32 %v2066, %v2413
    %v2433 = vmul.f32 %v2220, %v2417
    %v2434 = vmul.f32 %v2374, %v2421
    %v2435 = vld [vmem:[#allocation2] sm:$0xff]
    %v2436 = vld [vmem:[#allocation2 + $0x8] sm:$0xff]
    %v2437 = vld [vmem:[#allocation2 + $0x10] sm:$0xff]
    %v2438 = vld [vmem:[#allocation2 + $0x18] sm:$0xff]
    %v2439 = vld [vmem:[#allocation2 + $0x20] sm:$0xff]
    %v2440 = vld [vmem:[#allocation2 + $0x28] sm:$0xff]
    %v2441 = vld [vmem:[#allocation2 + $0x30] sm:$0xff]
    %v2442 = vld [vmem:[#allocation2 + $0x38] sm:$0xff]
    %v2443 = vld [vmem:[#allocation2 + $0x40] sm:$0xff]
    %v2444 = vld [vmem:[#allocation2 + $0x48] sm:$0xff]
    %v2445 = vld [vmem:[#allocation2 + $0x50] sm:$0xff]
    %v2446 = vld [vmem:[#allocation2 + $0x58] sm:$0xff]
    %v2447 = vpack.c.bf16 %v2436, %v2435
    %v2448 = vpack.c.bf16 %v2438, %v2437
    %v2449 = vpack.c.bf16 %v2440, %v2439
    %v2450 = vpack.c.bf16 %v2442, %v2441
    %v2451 = vpack.c.bf16 %v2444, %v2443
    %v2452 = vpack.c.bf16 %v2446, %v2445
    %v2453 = vld [vmem:[%s7] sm:$0xf]
    %v2454 = vld [vmem:[%s7 + $0x4] sm:$0xf]
    %v2455 = vld [vmem:[%s7 + $0x8] sm:$0xf]
    %v2456 = vld [vmem:[%s7 + $0xc] sm:$0xf]
    %v2457 = vpack.c.bf16 %v2424, %v2423
    %v2458 = vpack.c.bf16 %v2426, %v2425
    %v2459 = vpack.c.bf16 %v2428, %v2427
    %v2460 = vpack.c.bf16 %v2430, %v2429
    %v2461 = vpack.c.bf16 %v2432, %v2431
    %v2462 = vpack.c.bf16 %v2434, %v2433
    %v2463 = vld [vmem:[#allocation4] sm:$0xf]
    %v2464 = vld [vmem:[#allocation4 + $0x4] sm:$0xf]
    %v2465 = vld [vmem:[#allocation4 + $0x8] sm:$0xf]
    %v2466 = vld [vmem:[#allocation4 + $0xc] sm:$0xf]
    %v2471 = vunpack.c.l.b16 %v2463
    %v2472 = vunpack.c.l.b16 %v2464
    %v2473 = vunpack.c.l.b16 %v2465
    %v2474 = vunpack.c.l.b16 %v2466
    %v2475 = vpack.c.b16 %v2472, %v2471
    %v2476 = vpack.c.b16 %v2474, %v2473
    %vm2479 = vcmask 261120
    %v2481 = vsel %vm2479, %v2457, 0
    %v2484 = vsel %vm2479, %v2458, 0
    %v2487 = vsel %vm2479, %v2459, 0
    %v2490 = vsel %vm2479, %v2460, 0
    %v2493 = vsel %vm2479, %v2461, 0
    %v2496 = vsel %vm2479, %v2462, 0
    %2498 = vmatpush.bf16.msra.mxu0 0
    %2499 = vmatpush.bf16.msra.mxu0 0
    %2500 = vmatpush.bf16.msra.mxu0 0
    %2501 = vmatpush.bf16.msra.mxu0 0
    %2502 = vmatpush.bf16.msra.mxu0 0
    %2503 = vmatpush.bf16.msra.mxu0 0
    %2504 = vmatpush.bf16.msra.mxu0 %v2476
    %2505 = vmatpush.bf16.msra.mxu0 %v2475
    %2506 = vmatmul.bf16.gmra.mxu0 %v2481
    %v2507 = vpop.f32.mrf.mxu0
    %v2508 = vadd.f32 0.0, %v2507
    %v2509 = vpop.f32.mrf.mxu0
    %v2510 = vadd.f32 0.0, %v2509
    %2511 = vmatmul.bf16.gmra.mxu0 %v2484
    %v2512 = vpop.f32.mrf.mxu0
    %v2513 = vadd.f32 0.0, %v2512
    %v2514 = vpop.f32.mrf.mxu0
    %v2515 = vadd.f32 0.0, %v2514
    %2516 = vmatmul.bf16.gmra.mxu0 %v2487
    %v2517 = vpop.f32.mrf.mxu0
    %v2518 = vadd.f32 0.0, %v2517
    %v2519 = vpop.f32.mrf.mxu0
    %v2520 = vadd.f32 0.0, %v2519
    %2521 = vmatmul.bf16.gmra.mxu0 %v2490
    %v2522 = vpop.f32.mrf.mxu0
    %v2523 = vadd.f32 0.0, %v2522
    %v2524 = vpop.f32.mrf.mxu0
    %v2525 = vadd.f32 0.0, %v2524
    %2526 = vmatmul.bf16.gmra.mxu0 %v2493
    %v2527 = vpop.f32.mrf.mxu0
    %v2528 = vadd.f32 0.0, %v2527
    %v2529 = vpop.f32.mrf.mxu0
    %v2530 = vadd.f32 0.0, %v2529
    %2531 = vmatmul.bf16.gmra.mxu0 %v2496
    %v2532 = vpop.f32.mrf.mxu0
    %v2533 = vadd.f32 0.0, %v2532
    %v2534 = vpop.f32.mrf.mxu0
    %v2535 = vadd.f32 0.0, %v2534
    %2536 = vdwg.mxu0
    %v2541 = vunpack.c.l.b16 %v2453
    %v2542 = vunpack.c.l.b16 %v2454
    %v2543 = vunpack.c.l.b16 %v2455
    %v2544 = vunpack.c.l.b16 %v2456
    %v2545 = vpack.c.b16 %v2542, %v2541
    %v2546 = vpack.c.b16 %v2544, %v2543
    %v2550 = vsel %vm2479, %v2447, 0
    %v2553 = vsel %vm2479, %v2448, 0
    %v2556 = vsel %vm2479, %v2449, 0
    %v2559 = vsel %vm2479, %v2450, 0
    %v2562 = vsel %vm2479, %v2451, 0
    %v2565 = vsel %vm2479, %v2452, 0
    %2567 = vmatpush.bf16.msra.mxu0 0
    %2568 = vmatpush.bf16.msra.mxu0 0
    %2569 = vmatpush.bf16.msra.mxu0 0
    %2570 = vmatpush.bf16.msra.mxu0 0
    %2571 = vmatpush.bf16.msra.mxu0 0
    %2572 = vmatpush.bf16.msra.mxu0 0
    %2573 = vmatpush.bf16.msra.mxu0 %v2546
    %2574 = vmatpush.bf16.msra.mxu0 %v2545
    %2575 = vmatmul.bf16.gmra.mxu0 %v2550
    %v2576 = vpop.f32.mrf.mxu0
    %v2577 = vadd.f32 %v2508, %v2576
    %v2578 = vpop.f32.mrf.mxu0
    %v2579 = vadd.f32 %v2510, %v2578
    %2580 = vmatmul.bf16.gmra.mxu0 %v2553
    %v2581 = vpop.f32.mrf.mxu0
    %v2582 = vadd.f32 %v2513, %v2581
    %v2583 = vpop.f32.mrf.mxu0
    %v2584 = vadd.f32 %v2515, %v2583
    %2585 = vmatmul.bf16.gmra.mxu0 %v2556
    %v2586 = vpop.f32.mrf.mxu0
    %v2587 = vadd.f32 %v2518, %v2586
    %v2588 = vpop.f32.mrf.mxu0
    %v2589 = vadd.f32 %v2520, %v2588
    %2590 = vmatmul.bf16.gmra.mxu0 %v2559
    %v2591 = vpop.f32.mrf.mxu0
    %v2592 = vadd.f32 %v2523, %v2591
    %v2593 = vpop.f32.mrf.mxu0
    %v2594 = vadd.f32 %v2525, %v2593
    %2595 = vmatmul.bf16.gmra.mxu0 %v2562
    %v2596 = vpop.f32.mrf.mxu0
    %v2597 = vadd.f32 %v2528, %v2596
    %v2598 = vpop.f32.mrf.mxu0
    %v2599 = vadd.f32 %v2530, %v2598
    %2600 = vmatmul.bf16.gmra.mxu0 %v2565
    %v2601 = vpop.f32.mrf.mxu0
    %v2602 = vadd.f32 %v2533, %v2601
    %v2603 = vpop.f32.mrf.mxu0
    %v2604 = vadd.f32 %v2535, %v2603
    %2605 = vdwg.mxu0
    %v2606 = vld [vmem:[#allocation6] sm:$0x1]
    %v2608 = vperm.slane %v2606, 0
    %v2610 = vadd.f32 %v2577, %v2608
    %v2611 = vadd.f32 %v2579, %v2608
    %v2612 = vadd.f32 %v2582, %v2608
    %v2613 = vadd.f32 %v2584, %v2608
    %v2614 = vadd.f32 %v2587, %v2608
    %v2615 = vadd.f32 %v2589, %v2608
    %v2616 = vadd.f32 %v2592, %v2608
    %v2617 = vadd.f32 %v2594, %v2608
    %v2618 = vadd.f32 %v2597, %v2608
    %v2619 = vadd.f32 %v2599, %v2608
    %v2620 = vadd.f32 %v2602, %v2608
    %v2621 = vadd.f32 %v2604, %v2608
    %v2622 = vld [vmem:[#allocation7] sm:$0x1]
    %v2623 = vld [vmem:[#allocation9] sm:$0x1]
    %2624 = vadd.xlane.f32.xlu0 %v2610
    %v2625 = vpop.xlane.xlu0 %2624
    %2626 = vadd.xlane.f32.xlu0 %v2611
    %v2627 = vpop.xlane.xlu0 %2626
    %2628 = vadd.xlane.f32.xlu0 %v2612
    %v2629 = vpop.xlane.xlu0 %2628
    %2630 = vadd.xlane.f32.xlu0 %v2613
    %v2631 = vpop.xlane.xlu0 %2630
    %2632 = vadd.xlane.f32.xlu0 %v2614
    %v2633 = vpop.xlane.xlu0 %2632
    %2634 = vadd.xlane.f32.xlu0 %v2615
    %v2635 = vpop.xlane.xlu0 %2634
    %2636 = vadd.xlane.f32.xlu0 %v2616
    %v2637 = vpop.xlane.xlu0 %2636
    %2638 = vadd.xlane.f32.xlu0 %v2617
    %v2639 = vpop.xlane.xlu0 %2638
    %2640 = vadd.xlane.f32.xlu0 %v2618
    %v2641 = vpop.xlane.xlu0 %2640
    %2642 = vadd.xlane.f32.xlu0 %v2619
    %v2643 = vpop.xlane.xlu0 %2642
    %2644 = vadd.xlane.f32.xlu0 %v2620
    %v2645 = vpop.xlane.xlu0 %2644
    %2646 = vadd.xlane.f32.xlu0 %v2621
    %v2647 = vpop.xlane.xlu0 %2646
    %v2648 = vrcp.pop 128.0
    %v2649 = vmul.f32 128.0, %v2648
    %v2650 = vsub.f32 1.0, %v2649
    %v2651 = vmul.f32 %v2648, %v2650
    %v2652 = vadd.f32 %v2648, %v2651
    %vm2653 = vweird.f32 %v2648
    %v2654 = vsel %vm2653, %v2648, %v2652
    %v2655 = vmul.f32 %v2625, %v2654
    %v2656 = vmul.f32 %v2627, %v2654
    %v2657 = vmul.f32 %v2629, %v2654
    %v2658 = vmul.f32 %v2631, %v2654
    %v2659 = vmul.f32 %v2633, %v2654
    %v2660 = vmul.f32 %v2635, %v2654
    %v2661 = vmul.f32 %v2637, %v2654
    %v2662 = vmul.f32 %v2639, %v2654
    %v2663 = vmul.f32 %v2641, %v2654
    %v2664 = vmul.f32 %v2643, %v2654
    %v2665 = vmul.f32 %v2645, %v2654
    %v2666 = vmul.f32 %v2647, %v2654
    %v2667 = vsub.f32 %v2610, %v2655
    %v2668 = vsub.f32 %v2611, %v2656
    %v2669 = vsub.f32 %v2612, %v2657
    %v2670 = vsub.f32 %v2613, %v2658
    %v2671 = vsub.f32 %v2614, %v2659
    %v2672 = vsub.f32 %v2615, %v2660
    %v2673 = vsub.f32 %v2616, %v2661
    %v2674 = vsub.f32 %v2617, %v2662
    %v2675 = vsub.f32 %v2618, %v2663
    %v2676 = vsub.f32 %v2619, %v2664
    %v2677 = vsub.f32 %v2620, %v2665
    %v2678 = vsub.f32 %v2621, %v2666
    %v2679 = vmul.f32 %v2667, %v2667
    %v2680 = vmul.f32 %v2668, %v2668
    %v2681 = vmul.f32 %v2669, %v2669
    %v2682 = vmul.f32 %v2670, %v2670
    %v2683 = vmul.f32 %v2671, %v2671
    %v2684 = vmul.f32 %v2672, %v2672
    %v2685 = vmul.f32 %v2673, %v2673
    %v2686 = vmul.f32 %v2674, %v2674
    %v2687 = vmul.f32 %v2675, %v2675
    %v2688 = vmul.f32 %v2676, %v2676
    %v2689 = vmul.f32 %v2677, %v2677
    %v2690 = vmul.f32 %v2678, %v2678
    %2691 = vadd.xlane.f32.xlu0 %v2679
    %v2692 = vpop.xlane.xlu0 %2691
    %2693 = vadd.xlane.f32.xlu0 %v2680
    %v2694 = vpop.xlane.xlu0 %2693
    %2695 = vadd.xlane.f32.xlu0 %v2681
    %v2696 = vpop.xlane.xlu0 %2695
    %2697 = vadd.xlane.f32.xlu0 %v2682
    %v2698 = vpop.xlane.xlu0 %2697
    %2699 = vadd.xlane.f32.xlu0 %v2683
    %v2700 = vpop.xlane.xlu0 %2699
    %2701 = vadd.xlane.f32.xlu0 %v2684
    %v2702 = vpop.xlane.xlu0 %2701
    %2703 = vadd.xlane.f32.xlu0 %v2685
    %v2704 = vpop.xlane.xlu0 %2703
    %2705 = vadd.xlane.f32.xlu0 %v2686
    %v2706 = vpop.xlane.xlu0 %2705
    %2707 = vadd.xlane.f32.xlu0 %v2687
    %v2708 = vpop.xlane.xlu0 %2707
    %2709 = vadd.xlane.f32.xlu0 %v2688
    %v2710 = vpop.xlane.xlu0 %2709
    %2711 = vadd.xlane.f32.xlu0 %v2689
    %v2712 = vpop.xlane.xlu0 %2711
    %2713 = vadd.xlane.f32.xlu0 %v2690
    %v2714 = vpop.xlane.xlu0 %2713
    %v2715 = vmul.f32 %v2692, %v2654
    %v2716 = vmul.f32 %v2694, %v2654
    %v2717 = vmul.f32 %v2696, %v2654
    %v2718 = vmul.f32 %v2698, %v2654
    %v2719 = vmul.f32 %v2700, %v2654
    %v2720 = vmul.f32 %v2702, %v2654
    %v2721 = vmul.f32 %v2704, %v2654
    %v2722 = vmul.f32 %v2706, %v2654
    %v2723 = vmul.f32 %v2708, %v2654
    %v2724 = vmul.f32 %v2710, %v2654
    %v2725 = vmul.f32 %v2712, %v2654
    %v2726 = vmul.f32 %v2714, %v2654
    %v2727 = vadd.f32 %v2715, 1e-05
    %v2728 = vadd.f32 %v2716, 1e-05
    %v2729 = vadd.f32 %v2717, 1e-05
    %v2730 = vadd.f32 %v2718, 1e-05
    %v2731 = vadd.f32 %v2719, 1e-05
    %v2732 = vadd.f32 %v2720, 1e-05
    %v2733 = vadd.f32 %v2721, 1e-05
    %v2734 = vadd.f32 %v2722, 1e-05
    %v2735 = vadd.f32 %v2723, 1e-05
    %v2736 = vadd.f32 %v2724, 1e-05
    %v2737 = vadd.f32 %v2725, 1e-05
    %v2738 = vadd.f32 %v2726, 1e-05
    %v2739 = vrsqrt.pop %v2727
    %v2740 = vmul.f32 %v2739, %v2727
    %v2741 = vmul.f32 %v2740, %v2739
    %v2742 = vmul.f32 0.5, %v2741
    %v2743 = vsub.f32 1.5, %v2742
    %v2744 = vmul.f32 %v2739, %v2743
    %vm2745 = vweird.f32 %v2727
    %vm2746 = vweird.f32 %v2739
    %vm2747 = vmor %vm2745, %vm2746
    %v2748 = vsel %vm2747, %v2739, %v2744
    %v2749 = vrsqrt.pop %v2728
    %v2750 = vmul.f32 %v2749, %v2728
    %v2751 = vmul.f32 %v2750, %v2749
    %v2752 = vmul.f32 0.5, %v2751
    %v2753 = vsub.f32 1.5, %v2752
    %v2754 = vmul.f32 %v2749, %v2753
    %vm2755 = vweird.f32 %v2728
    %vm2756 = vweird.f32 %v2749
    %vm2757 = vmor %vm2755, %vm2756
    %v2758 = vsel %vm2757, %v2749, %v2754
    %v2759 = vrsqrt.pop %v2729
    %v2760 = vmul.f32 %v2759, %v2729
    %v2761 = vmul.f32 %v2760, %v2759
    %v2762 = vmul.f32 0.5, %v2761
    %v2763 = vsub.f32 1.5, %v2762
    %v2764 = vmul.f32 %v2759, %v2763
    %vm2765 = vweird.f32 %v2729
    %vm2766 = vweird.f32 %v2759
    %vm2767 = vmor %vm2765, %vm2766
    %v2768 = vsel %vm2767, %v2759, %v2764
    %v2769 = vrsqrt.pop %v2730
    %v2770 = vmul.f32 %v2769, %v2730
    %v2771 = vmul.f32 %v2770, %v2769
    %v2772 = vmul.f32 0.5, %v2771
    %v2773 = vsub.f32 1.5, %v2772
    %v2774 = vmul.f32 %v2769, %v2773
    %vm2775 = vweird.f32 %v2730
    %vm2776 = vweird.f32 %v2769
    %vm2777 = vmor %vm2775, %vm2776
    %v2778 = vsel %vm2777, %v2769, %v2774
    %v2779 = vrsqrt.pop %v2731
    %v2780 = vmul.f32 %v2779, %v2731
    %v2781 = vmul.f32 %v2780, %v2779
    %v2782 = vmul.f32 0.5, %v2781
    %v2783 = vsub.f32 1.5, %v2782
    %v2784 = vmul.f32 %v2779, %v2783
    %vm2785 = vweird.f32 %v2731
    %vm2786 = vweird.f32 %v2779
    %vm2787 = vmor %vm2785, %vm2786
    %v2788 = vsel %vm2787, %v2779, %v2784
    %v2789 = vrsqrt.pop %v2732
    %v2790 = vmul.f32 %v2789, %v2732
    %v2791 = vmul.f32 %v2790, %v2789
    %v2792 = vmul.f32 0.5, %v2791
    %v2793 = vsub.f32 1.5, %v2792
    %v2794 = vmul.f32 %v2789, %v2793
    %vm2795 = vweird.f32 %v2732
    %vm2796 = vweird.f32 %v2789
    %vm2797 = vmor %vm2795, %vm2796
    %v2798 = vsel %vm2797, %v2789, %v2794
    %v2799 = vrsqrt.pop %v2733
    %v2800 = vmul.f32 %v2799, %v2733
    %v2801 = vmul.f32 %v2800, %v2799
    %v2802 = vmul.f32 0.5, %v2801
    %v2803 = vsub.f32 1.5, %v2802
    %v2804 = vmul.f32 %v2799, %v2803
    %vm2805 = vweird.f32 %v2733
    %vm2806 = vweird.f32 %v2799
    %vm2807 = vmor %vm2805, %vm2806
    %v2808 = vsel %vm2807, %v2799, %v2804
    %v2809 = vrsqrt.pop %v2734
    %v2810 = vmul.f32 %v2809, %v2734
    %v2811 = vmul.f32 %v2810, %v2809
    %v2812 = vmul.f32 0.5, %v2811
    %v2813 = vsub.f32 1.5, %v2812
    %v2814 = vmul.f32 %v2809, %v2813
    %vm2815 = vweird.f32 %v2734
    %vm2816 = vweird.f32 %v2809
    %vm2817 = vmor %vm2815, %vm2816
    %v2818 = vsel %vm2817, %v2809, %v2814
    %v2819 = vrsqrt.pop %v2735
    %v2820 = vmul.f32 %v2819, %v2735
    %v2821 = vmul.f32 %v2820, %v2819
    %v2822 = vmul.f32 0.5, %v2821
    %v2823 = vsub.f32 1.5, %v2822
    %v2824 = vmul.f32 %v2819, %v2823
    %vm2825 = vweird.f32 %v2735
    %vm2826 = vweird.f32 %v2819
    %vm2827 = vmor %vm2825, %vm2826
    %v2828 = vsel %vm2827, %v2819, %v2824
    %v2829 = vrsqrt.pop %v2736
    %v2830 = vmul.f32 %v2829, %v2736
    %v2831 = vmul.f32 %v2830, %v2829
    %v2832 = vmul.f32 0.5, %v2831
    %v2833 = vsub.f32 1.5, %v2832
    %v2834 = vmul.f32 %v2829, %v2833
    %vm2835 = vweird.f32 %v2736
    %vm2836 = vweird.f32 %v2829
    %vm2837 = vmor %vm2835, %vm2836
    %v2838 = vsel %vm2837, %v2829, %v2834
    %v2839 = vrsqrt.pop %v2737
    %v2840 = vmul.f32 %v2839, %v2737
    %v2841 = vmul.f32 %v2840, %v2839
    %v2842 = vmul.f32 0.5, %v2841
    %v2843 = vsub.f32 1.5, %v2842
    %v2844 = vmul.f32 %v2839, %v2843
    %vm2845 = vweird.f32 %v2737
    %vm2846 = vweird.f32 %v2839
    %vm2847 = vmor %vm2845, %vm2846
    %v2848 = vsel %vm2847, %v2839, %v2844
    %v2849 = vrsqrt.pop %v2738
    %v2850 = vmul.f32 %v2849, %v2738
    %v2851 = vmul.f32 %v2850, %v2849
    %v2852 = vmul.f32 0.5, %v2851
    %v2853 = vsub.f32 1.5, %v2852
    %v2854 = vmul.f32 %v2849, %v2853
    %vm2855 = vweird.f32 %v2738
    %vm2856 = vweird.f32 %v2849
    %vm2857 = vmor %vm2855, %vm2856
    %v2858 = vsel %vm2857, %v2849, %v2854
    %v2859 = vmul.f32 %v2667, %v2748
    %v2860 = vmul.f32 %v2668, %v2758
    %v2861 = vmul.f32 %v2669, %v2768
    %v2862 = vmul.f32 %v2670, %v2778
    %v2863 = vmul.f32 %v2671, %v2788
    %v2864 = vmul.f32 %v2672, %v2798
    %v2865 = vmul.f32 %v2673, %v2808
    %v2866 = vmul.f32 %v2674, %v2818
    %v2867 = vmul.f32 %v2675, %v2828
    %v2868 = vmul.f32 %v2676, %v2838
    %v2869 = vmul.f32 %v2677, %v2848
    %v2870 = vmul.f32 %v2678, %v2858
    %v2872 = vperm.slane %v2622, 0
    %v2874 = vmul.f32 %v2859, %v2872
    %v2875 = vmul.f32 %v2860, %v2872
    %v2876 = vmul.f32 %v2861, %v2872
    %v2877 = vmul.f32 %v2862, %v2872
    %v2878 = vmul.f32 %v2863, %v2872
    %v2879 = vmul.f32 %v2864, %v2872
    %v2880 = vmul.f32 %v2865, %v2872
    %v2881 = vmul.f32 %v2866, %v2872
    %v2882 = vmul.f32 %v2867, %v2872
    %v2883 = vmul.f32 %v2868, %v2872
    %v2884 = vmul.f32 %v2869, %v2872
    %v2885 = vmul.f32 %v2870, %v2872
    %v2887 = vperm.slane %v2623, 0
    %v2889 = vadd.f32 %v2874, %v2887
    %v2890 = vadd.f32 %v2875, %v2887
    %v2891 = vadd.f32 %v2876, %v2887
    %v2892 = vadd.f32 %v2877, %v2887
    %v2893 = vadd.f32 %v2878, %v2887
    %v2894 = vadd.f32 %v2879, %v2887
    %v2895 = vadd.f32 %v2880, %v2887
    %v2896 = vadd.f32 %v2881, %v2887
    %v2897 = vadd.f32 %v2882, %v2887
    %v2898 = vadd.f32 %v2883, %v2887
    %v2899 = vadd.f32 %v2884, %v2887
    %v2900 = vadd.f32 %v2885, %v2887
    %v2901 = vpack.c.bf16 %v2889, %v2889
    %v2902 = vpack.c.bf16 %v2890, %v2890
    %v2903 = vpack.c.bf16 %v2891, %v2891
    %v2904 = vpack.c.bf16 %v2892, %v2892
    %v2905 = vpack.c.bf16 %v2893, %v2893
    %v2906 = vpack.c.bf16 %v2894, %v2894
    %v2907 = vpack.c.bf16 %v2895, %v2895
    %v2908 = vpack.c.bf16 %v2896, %v2896
    %v2909 = vpack.c.bf16 %v2897, %v2897
    %v2910 = vpack.c.bf16 %v2898, %v2898
    %v2911 = vpack.c.bf16 %v2899, %v2899
    %v2912 = vpack.c.bf16 %v2900, %v2900
    %v2913 = vld [vmem:[#allocation10] sm:$0xff]
    %v2914 = vpack.c.bf16 %v2913, %v2913
    %v2915 = vld [vmem:[%s19] sm:$0xff]
    %2917 = vset.pattern.permute.xlu0 0
    %2918 = vperm.xlu0 %2917, %v2915
    %v2919 = vpop.permute.xlu0 %2918
    %v2923 = vunpack.c.l.b16 %v2901
    %v2924 = vunpack.c.l.b16 %v2902
    %v2925 = vpack.c.b16 %v2924, %v2923
    %vm2927 = vcmask 130048
    %v2929 = vsel %vm2927, %v2914, 0
    %2931 = vmatpush.bf16.msra.mxu0 0
    %2932 = vmatpush.bf16.msra.mxu0 0
    %2933 = vmatpush.bf16.msra.mxu0 0
    %2934 = vmatpush.bf16.msra.mxu0 0
    %2935 = vmatpush.bf16.msra.mxu0 0
    %2936 = vmatpush.bf16.msra.mxu0 0
    %2937 = vmatpush.bf16.msra.mxu0 0
    %2938 = vmatpush.bf16.msra.mxu0 %v2925
    %2939 = vmatmul.bf16.gmra.mxu0 %v2929
    %v2940 = vpop.f32.mrf.mxu0
    %v2941 = vadd.f32 %v2919, %v2940
    %v2942 = vpop.f32.mrf.mxu0
    %2943 = vdwg.mxu0
    %v2946 = vunpack.c.l.b16 %v2903
    %v2947 = vunpack.c.l.b16 %v2904
    %v2948 = vpack.c.b16 %v2947, %v2946
    %2950 = vmatpush.bf16.msra.mxu0 0
    %2951 = vmatpush.bf16.msra.mxu0 0
    %2952 = vmatpush.bf16.msra.mxu0 0
    %2953 = vmatpush.bf16.msra.mxu0 0
    %2954 = vmatpush.bf16.msra.mxu0 0
    %2955 = vmatpush.bf16.msra.mxu0 0
    %2956 = vmatpush.bf16.msra.mxu0 0
    %2957 = vmatpush.bf16.msra.mxu0 %v2948
    %2958 = vmatmul.bf16.gmra.mxu0 %v2929
    %v2959 = vpop.f32.mrf.mxu0
    %v2960 = vadd.f32 %v2919, %v2959
    %v2961 = vpop.f32.mrf.mxu0
    %2962 = vdwg.mxu0
    %v2965 = vunpack.c.l.b16 %v2905
    %v2966 = vunpack.c.l.b16 %v2906
    %v2967 = vpack.c.b16 %v2966, %v2965
    %2969 = vmatpush.bf16.msra.mxu0 0
    %2970 = vmatpush.bf16.msra.mxu0 0
    %2971 = vmatpush.bf16.msra.mxu0 0
    %2972 = vmatpush.bf16.msra.mxu0 0
    %2973 = vmatpush.bf16.msra.mxu0 0
    %2974 = vmatpush.bf16.msra.mxu0 0
    %2975 = vmatpush.bf16.msra.mxu0 0
    %2976 = vmatpush.bf16.msra.mxu0 %v2967
    %2977 = vmatmul.bf16.gmra.mxu0 %v2929
    %v2978 = vpop.f32.mrf.mxu0
    %v2979 = vadd.f32 %v2919, %v2978
    %v2980 = vpop.f32.mrf.mxu0
    %2981 = vdwg.mxu0
    %v2984 = vunpack.c.l.b16 %v2907
    %v2985 = vunpack.c.l.b16 %v2908
    %v2986 = vpack.c.b16 %v2985, %v2984
    %2988 = vmatpush.bf16.msra.mxu0 0
    %2989 = vmatpush.bf16.msra.mxu0 0
    %2990 = vmatpush.bf16.msra.mxu0 0
    %2991 = vmatpush.bf16.msra.mxu0 0
    %2992 = vmatpush.bf16.msra.mxu0 0
    %2993 = vmatpush.bf16.msra.mxu0 0
    %2994 = vmatpush.bf16.msra.mxu0 0
    %2995 = vmatpush.bf16.msra.mxu0 %v2986
    %2996 = vmatmul.bf16.gmra.mxu0 %v2929
    %v2997 = vpop.f32.mrf.mxu0
    %v2998 = vadd.f32 %v2919, %v2997
    %v2999 = vpop.f32.mrf.mxu0
    %3000 = vdwg.mxu0
    %v3003 = vunpack.c.l.b16 %v2909
    %v3004 = vunpack.c.l.b16 %v2910
    %v3005 = vpack.c.b16 %v3004, %v3003
    %3007 = vmatpush.bf16.msra.mxu0 0
    %3008 = vmatpush.bf16.msra.mxu0 0
    %3009 = vmatpush.bf16.msra.mxu0 0
    %3010 = vmatpush.bf16.msra.mxu0 0
    %3011 = vmatpush.bf16.msra.mxu0 0
    %3012 = vmatpush.bf16.msra.mxu0 0
    %3013 = vmatpush.bf16.msra.mxu0 0
    %3014 = vmatpush.bf16.msra.mxu0 %v3005
    %3015 = vmatmul.bf16.gmra.mxu0 %v2929
    %v3016 = vpop.f32.mrf.mxu0
    %v3017 = vadd.f32 %v2919, %v3016
    %v3018 = vpop.f32.mrf.mxu0
    %3019 = vdwg.mxu0
    %v3022 = vunpack.c.l.b16 %v2911
    %v3023 = vunpack.c.l.b16 %v2912
    %v3024 = vpack.c.b16 %v3023, %v3022
    %3026 = vmatpush.bf16.msra.mxu0 0
    %3027 = vmatpush.bf16.msra.mxu0 0
    %3028 = vmatpush.bf16.msra.mxu0 0
    %3029 = vmatpush.bf16.msra.mxu0 0
    %3030 = vmatpush.bf16.msra.mxu0 0
    %3031 = vmatpush.bf16.msra.mxu0 0
    %3032 = vmatpush.bf16.msra.mxu0 0
    %3033 = vmatpush.bf16.msra.mxu0 %v3024
    %3034 = vmatmul.bf16.gmra.mxu0 %v2929
    %v3035 = vpop.f32.mrf.mxu0
    %v3036 = vadd.f32 %v2919, %v3035
    %v3037 = vpop.f32.mrf.mxu0
    %3038 = vdwg.mxu0
    %v3039 = vmul.f32 %v2941, 0.5
    %v3040 = vmul.f32 %v2960, 0.5
    %v3041 = vmul.f32 %v2979, 0.5
    %v3042 = vmul.f32 %v2998, 0.5
    %v3043 = vmul.f32 %v3017, 0.5
    %v3044 = vmul.f32 %v3036, 0.5
    %v3045 = vmul.f32 %v2941, %v2941
    %v3046 = vmul.f32 %v2960, %v2960
    %v3047 = vmul.f32 %v2979, %v2979
    %v3048 = vmul.f32 %v2998, %v2998
    %v3049 = vmul.f32 %v3017, %v3017
    %v3050 = vmul.f32 %v3036, %v3036
    %v3051 = vmul.f32 %v3045, %v2941
    %v3052 = vmul.f32 %v3046, %v2960
    %v3053 = vmul.f32 %v3047, %v2979
    %v3054 = vmul.f32 %v3048, %v2998
    %v3055 = vmul.f32 %v3049, %v3017
    %v3056 = vmul.f32 %v3050, %v3036
    %v3057 = vmul.f32 %v3051, 0.044715
    %v3058 = vmul.f32 %v3052, 0.044715
    %v3059 = vmul.f32 %v3053, 0.044715
    %v3060 = vmul.f32 %v3054, 0.044715
    %v3061 = vmul.f32 %v3055, 0.044715
    %v3062 = vmul.f32 %v3056, 0.044715
    %v3063 = vadd.f32 %v2941, %v3057
    %v3064 = vadd.f32 %v2960, %v3058
    %v3065 = vadd.f32 %v2979, %v3059
    %v3066 = vadd.f32 %v2998, %v3060
    %v3067 = vadd.f32 %v3017, %v3061
    %v3068 = vadd.f32 %v3036, %v3062
    %v3069 = vmul.f32 %v3063, 0.7978846
    %v3070 = vmul.f32 %v3064, 0.7978846
    %v3071 = vmul.f32 %v3065, 0.7978846
    %v3072 = vmul.f32 %v3066, 0.7978846
    %v3073 = vmul.f32 %v3067, 0.7978846
    %v3074 = vmul.f32 %v3068, 0.7978846
    %v3075 = vtanh.pop %v3069
    %v3076 = vtanh.pop %v3070
    %v3077 = vtanh.pop %v3071
    %v3078 = vtanh.pop %v3072
    %v3079 = vtanh.pop %v3073
    %v3080 = vtanh.pop %v3074
    %v3081 = vadd.f32 %v3075, 1.0
    %v3082 = vadd.f32 %v3076, 1.0
    %v3083 = vadd.f32 %v3077, 1.0
    %v3084 = vadd.f32 %v3078, 1.0
    %v3085 = vadd.f32 %v3079, 1.0
    %v3086 = vadd.f32 %v3080, 1.0
    %v3087 = vmul.f32 %v3039, %v3081
    %v3088 = vmul.f32 %v3040, %v3082
    %v3089 = vmul.f32 %v3041, %v3083
    %v3090 = vmul.f32 %v3042, %v3084
    %v3091 = vmul.f32 %v3043, %v3085
    %v3092 = vmul.f32 %v3044, %v3086
    %v3093 = vld [vmem:[%s21] sm:$0xff]
    %v3094 = vld [vmem:[%s21 + $0x8] sm:$0xff]
    %v3095 = vpack.c.bf16 %v3093, %v3093
    %v3096 = vpack.c.bf16 %v3094, %v3094
    %v3097 = vpack.c.bf16 %v3087, %v3087
    %v3098 = vpack.c.bf16 %v3088, %v3088
    %v3099 = vpack.c.bf16 %v3089, %v3089
    %v3100 = vpack.c.bf16 %v3090, %v3090
    %v3101 = vpack.c.bf16 %v3091, %v3091
    %v3102 = vpack.c.bf16 %v3092, %v3092
    %v3103 = vld [vmem:[%s23] sm:$0xff]
    %v3104 = vld [vmem:[%s23 + $0x8] sm:$0xff]
    %3106 = vset.pattern.permute.xlu0 0
    %3107 = vperm.xlu0 %3106, %v3103
    %v3108 = vpop.permute.xlu0 %3107
    %3111 = vset.pattern.permute.xlu0 0
    %3112 = vperm.xlu0 %3111, %v3104
    %v3113 = vpop.permute.xlu0 %3112
    %v3117 = vunpack.c.l.b16 %v3095
    %v3118 = vunpack.c.l.b16 %v3096
    %v3119 = vpack.c.b16 %v3118, %v3117
    %vm3120 = vcmask 64512
    %v3122 = vsel %vm3120, %v3119, 0
    %vm3124 = vcmask 1043456
    %v3126 = vsel %vm3124, %v3097, 0
    %3128 = vmatpush.bf16.msra.mxu0 0
    %3129 = vmatpush.bf16.msra.mxu0 0
    %3130 = vmatpush.bf16.msra.mxu0 0
    %3131 = vmatpush.bf16.msra.mxu0 0
    %3132 = vmatpush.bf16.msra.mxu0 0
    %3133 = vmatpush.bf16.msra.mxu0 0
    %3134 = vmatpush.bf16.msra.mxu0 0
    %3135 = vmatpush.bf16.msra.mxu0 %v3126
    %3136 = vmatmul.bf16.gmra.mxu0 %v3122
    %v3137 = vpop.f32.mrf.mxu0
    %v3138 = vadd.f32 %v3108, %v3137
    %v3139 = vpop.f32.mrf.mxu0
    %v3140 = vadd.f32 %v3113, %v3139
    %3141 = vdwg.mxu0
    %v3143 = vsel %vm3124, %v3098, 0
    %3145 = vmatpush.bf16.msra.mxu0 0
    %3146 = vmatpush.bf16.msra.mxu0 0
    %3147 = vmatpush.bf16.msra.mxu0 0
    %3148 = vmatpush.bf16.msra.mxu0 0
    %3149 = vmatpush.bf16.msra.mxu0 0
    %3150 = vmatpush.bf16.msra.mxu0 0
    %3151 = vmatpush.bf16.msra.mxu0 0
    %3152 = vmatpush.bf16.msra.mxu0 %v3143
    %3153 = vmatmul.bf16.gmra.mxu0 %v3122
    %v3154 = vpop.f32.mrf.mxu0
    %v3155 = vadd.f32 %v3108, %v3154
    %v3156 = vpop.f32.mrf.mxu0
    %v3157 = vadd.f32 %v3113, %v3156
    %3158 = vdwg.mxu0
    %v3160 = vsel %vm3124, %v3099, 0
    %3162 = vmatpush.bf16.msra.mxu0 0
    %3163 = vmatpush.bf16.msra.mxu0 0
    %3164 = vmatpush.bf16.msra.mxu0 0
    %3165 = vmatpush.bf16.msra.mxu0 0
    %3166 = vmatpush.bf16.msra.mxu0 0
    %3167 = vmatpush.bf16.msra.mxu0 0
    %3168 = vmatpush.bf16.msra.mxu0 0
    %3169 = vmatpush.bf16.msra.mxu0 %v3160
    %3170 = vmatmul.bf16.gmra.mxu0 %v3122
    %v3171 = vpop.f32.mrf.mxu0
    %v3172 = vadd.f32 %v3108, %v3171
    %v3173 = vpop.f32.mrf.mxu0
    %v3174 = vadd.f32 %v3113, %v3173
    %3175 = vdwg.mxu0
    %v3177 = vsel %vm3124, %v3100, 0
    %3179 = vmatpush.bf16.msra.mxu0 0
    %3180 = vmatpush.bf16.msra.mxu0 0
    %3181 = vmatpush.bf16.msra.mxu0 0
    %3182 = vmatpush.bf16.msra.mxu0 0
    %3183 = vmatpush.bf16.msra.mxu0 0
    %3184 = vmatpush.bf16.msra.mxu0 0
    %3185 = vmatpush.bf16.msra.mxu0 0
    %3186 = vmatpush.bf16.msra.mxu0 %v3177
    %3187 = vmatmul.bf16.gmra.mxu0 %v3122
    %v3188 = vpop.f32.mrf.mxu0
    %v3189 = vadd.f32 %v3108, %v3188
    %v3190 = vpop.f32.mrf.mxu0
    %v3191 = vadd.f32 %v3113, %v3190
    %3192 = vdwg.mxu0
    %v3194 = vsel %vm3124, %v3101, 0
    %3196 = vmatpush.bf16.msra.mxu0 0
    %3197 = vmatpush.bf16.msra.mxu0 0
    %3198 = vmatpush.bf16.msra.mxu0 0
    %3199 = vmatpush.bf16.msra.mxu0 0
    %3200 = vmatpush.bf16.msra.mxu0 0
    %3201 = vmatpush.bf16.msra.mxu0 0
    %3202 = vmatpush.bf16.msra.mxu0 0
    %3203 = vmatpush.bf16.msra.mxu0 %v3194
    %3204 = vmatmul.bf16.gmra.mxu0 %v3122
    %v3205 = vpop.f32.mrf.mxu0
    %v3206 = vadd.f32 %v3108, %v3205
    %v3207 = vpop.f32.mrf.mxu0
    %v3208 = vadd.f32 %v3113, %v3207
    %3209 = vdwg.mxu0
    %v3211 = vsel %vm3124, %v3102, 0
    %3213 = vmatpush.bf16.msra.mxu0 0
    %3214 = vmatpush.bf16.msra.mxu0 0
    %3215 = vmatpush.bf16.msra.mxu0 0
    %3216 = vmatpush.bf16.msra.mxu0 0
    %3217 = vmatpush.bf16.msra.mxu0 0
    %3218 = vmatpush.bf16.msra.mxu0 0
    %3219 = vmatpush.bf16.msra.mxu0 0
    %3220 = vmatpush.bf16.msra.mxu0 %v3211
    %3221 = vmatmul.bf16.gmra.mxu0 %v3122
    %v3222 = vpop.f32.mrf.mxu0
    %v3223 = vadd.f32 %v3108, %v3222
    %v3224 = vpop.f32.mrf.mxu0
    %v3225 = vadd.f32 %v3113, %v3224
    %3226 = vdwg.mxu0
    %v3227 = vadd.f32 %v2610, %v3138
    %v3228 = vadd.f32 %v2611, %v3140
    %v3229 = vadd.f32 %v2612, %v3155
    %v3230 = vadd.f32 %v2613, %v3157
    %v3231 = vadd.f32 %v2614, %v3172
    %v3232 = vadd.f32 %v2615, %v3174
    %v3233 = vadd.f32 %v2616, %v3189
    %v3234 = vadd.f32 %v2617, %v3191
    %v3235 = vadd.f32 %v2618, %v3206
    %v3236 = vadd.f32 %v2619, %v3208
    %v3237 = vadd.f32 %v2620, %v3223
    %v3238 = vadd.f32 %v2621, %v3225
    %v3239 = vld [vmem:[#allocation12] sm:$0x1]
    %v3240 = vld [vmem:[#allocation13] sm:$0x1]
    %3241 = vadd.xlane.f32.xlu0 %v3227
    %v3242 = vpop.xlane.xlu0 %3241
    %3243 = vadd.xlane.f32.xlu0 %v3228
    %v3244 = vpop.xlane.xlu0 %3243
    %3245 = vadd.xlane.f32.xlu0 %v3229
    %v3246 = vpop.xlane.xlu0 %3245
    %3247 = vadd.xlane.f32.xlu0 %v3230
    %v3248 = vpop.xlane.xlu0 %3247
    %3249 = vadd.xlane.f32.xlu0 %v3231
    %v3250 = vpop.xlane.xlu0 %3249
    %3251 = vadd.xlane.f32.xlu0 %v3232
    %v3252 = vpop.xlane.xlu0 %3251
    %3253 = vadd.xlane.f32.xlu0 %v3233
    %v3254 = vpop.xlane.xlu0 %3253
    %3255 = vadd.xlane.f32.xlu0 %v3234
    %v3256 = vpop.xlane.xlu0 %3255
    %3257 = vadd.xlane.f32.xlu0 %v3235
    %v3258 = vpop.xlane.xlu0 %3257
    %3259 = vadd.xlane.f32.xlu0 %v3236
    %v3260 = vpop.xlane.xlu0 %3259
    %3261 = vadd.xlane.f32.xlu0 %v3237
    %v3262 = vpop.xlane.xlu0 %3261
    %3263 = vadd.xlane.f32.xlu0 %v3238
    %v3264 = vpop.xlane.xlu0 %3263
    %v3265 = vmul.f32 %v3242, %v2654
    %v3266 = vmul.f32 %v3244, %v2654
    %v3267 = vmul.f32 %v3246, %v2654
    %v3268 = vmul.f32 %v3248, %v2654
    %v3269 = vmul.f32 %v3250, %v2654
    %v3270 = vmul.f32 %v3252, %v2654
    %v3271 = vmul.f32 %v3254, %v2654
    %v3272 = vmul.f32 %v3256, %v2654
    %v3273 = vmul.f32 %v3258, %v2654
    %v3274 = vmul.f32 %v3260, %v2654
    %v3275 = vmul.f32 %v3262, %v2654
    %v3276 = vmul.f32 %v3264, %v2654
    %v3277 = vsub.f32 %v3227, %v3265
    %v3278 = vsub.f32 %v3228, %v3266
    %v3279 = vsub.f32 %v3229, %v3267
    %v3280 = vsub.f32 %v3230, %v3268
    %v3281 = vsub.f32 %v3231, %v3269
    %v3282 = vsub.f32 %v3232, %v3270
    %v3283 = vsub.f32 %v3233, %v3271
    %v3284 = vsub.f32 %v3234, %v3272
    %v3285 = vsub.f32 %v3235, %v3273
    %v3286 = vsub.f32 %v3236, %v3274
    %v3287 = vsub.f32 %v3237, %v3275
    %v3288 = vsub.f32 %v3238, %v3276
    %v3289 = vmul.f32 %v3277, %v3277
    %v3290 = vmul.f32 %v3278, %v3278
    %v3291 = vmul.f32 %v3279, %v3279
    %v3292 = vmul.f32 %v3280, %v3280
    %v3293 = vmul.f32 %v3281, %v3281
    %v3294 = vmul.f32 %v3282, %v3282
    %v3295 = vmul.f32 %v3283, %v3283
    %v3296 = vmul.f32 %v3284, %v3284
    %v3297 = vmul.f32 %v3285, %v3285
    %v3298 = vmul.f32 %v3286, %v3286
    %v3299 = vmul.f32 %v3287, %v3287
    %v3300 = vmul.f32 %v3288, %v3288
    %3301 = vadd.xlane.f32.xlu0 %v3289
    %v3302 = vpop.xlane.xlu0 %3301
    %3303 = vadd.xlane.f32.xlu0 %v3290
    %v3304 = vpop.xlane.xlu0 %3303
    %3305 = vadd.xlane.f32.xlu0 %v3291
    %v3306 = vpop.xlane.xlu0 %3305
    %3307 = vadd.xlane.f32.xlu0 %v3292
    %v3308 = vpop.xlane.xlu0 %3307
    %3309 = vadd.xlane.f32.xlu0 %v3293
    %v3310 = vpop.xlane.xlu0 %3309
    %3311 = vadd.xlane.f32.xlu0 %v3294
    %v3312 = vpop.xlane.xlu0 %3311
    %3313 = vadd.xlane.f32.xlu0 %v3295
    %v3314 = vpop.xlane.xlu0 %3313
    %3315 = vadd.xlane.f32.xlu0 %v3296
    %v3316 = vpop.xlane.xlu0 %3315
    %3317 = vadd.xlane.f32.xlu0 %v3297
    %v3318 = vpop.xlane.xlu0 %3317
    %3319 = vadd.xlane.f32.xlu0 %v3298
    %v3320 = vpop.xlane.xlu0 %3319
    %3321 = vadd.xlane.f32.xlu0 %v3299
    %v3322 = vpop.xlane.xlu0 %3321
    %3323 = vadd.xlane.f32.xlu0 %v3300
    %v3324 = vpop.xlane.xlu0 %3323
    %v3325 = vmul.f32 %v3302, %v2654
    %v3326 = vmul.f32 %v3304, %v2654
    %v3327 = vmul.f32 %v3306, %v2654
    %v3328 = vmul.f32 %v3308, %v2654
    %v3329 = vmul.f32 %v3310, %v2654
    %v3330 = vmul.f32 %v3312, %v2654
    %v3331 = vmul.f32 %v3314, %v2654
    %v3332 = vmul.f32 %v3316, %v2654
    %v3333 = vmul.f32 %v3318, %v2654
    %v3334 = vmul.f32 %v3320, %v2654
    %v3335 = vmul.f32 %v3322, %v2654
    %v3336 = vmul.f32 %v3324, %v2654
    %v3337 = vadd.f32 %v3325, 1e-05
    %v3338 = vadd.f32 %v3326, 1e-05
    %v3339 = vadd.f32 %v3327, 1e-05
    %v3340 = vadd.f32 %v3328, 1e-05
    %v3341 = vadd.f32 %v3329, 1e-05
    %v3342 = vadd.f32 %v3330, 1e-05
    %v3343 = vadd.f32 %v3331, 1e-05
    %v3344 = vadd.f32 %v3332, 1e-05
    %v3345 = vadd.f32 %v3333, 1e-05
    %v3346 = vadd.f32 %v3334, 1e-05
    %v3347 = vadd.f32 %v3335, 1e-05
    %v3348 = vadd.f32 %v3336, 1e-05
    %v3349 = vrsqrt.pop %v3337
    %v3350 = vmul.f32 %v3349, %v3337
    %v3351 = vmul.f32 %v3350, %v3349
    %v3352 = vmul.f32 0.5, %v3351
    %v3353 = vsub.f32 1.5, %v3352
    %v3354 = vmul.f32 %v3349, %v3353
    %vm3355 = vweird.f32 %v3337
    %vm3356 = vweird.f32 %v3349
    %vm3357 = vmor %vm3355, %vm3356
    %v3358 = vsel %vm3357, %v3349, %v3354
    %v3359 = vrsqrt.pop %v3338
    %v3360 = vmul.f32 %v3359, %v3338
    %v3361 = vmul.f32 %v3360, %v3359
    %v3362 = vmul.f32 0.5, %v3361
    %v3363 = vsub.f32 1.5, %v3362
    %v3364 = vmul.f32 %v3359, %v3363
    %vm3365 = vweird.f32 %v3338
    %vm3366 = vweird.f32 %v3359
    %vm3367 = vmor %vm3365, %vm3366
    %v3368 = vsel %vm3367, %v3359, %v3364
    %v3369 = vrsqrt.pop %v3339
    %v3370 = vmul.f32 %v3369, %v3339
    %v3371 = vmul.f32 %v3370, %v3369
    %v3372 = vmul.f32 0.5, %v3371
    %v3373 = vsub.f32 1.5, %v3372
    %v3374 = vmul.f32 %v3369, %v3373
    %vm3375 = vweird.f32 %v3339
    %vm3376 = vweird.f32 %v3369
    %vm3377 = vmor %vm3375, %vm3376
    %v3378 = vsel %vm3377, %v3369, %v3374
    %v3379 = vrsqrt.pop %v3340
    %v3380 = vmul.f32 %v3379, %v3340
    %v3381 = vmul.f32 %v3380, %v3379
    %v3382 = vmul.f32 0.5, %v3381
    %v3383 = vsub.f32 1.5, %v3382
    %v3384 = vmul.f32 %v3379, %v3383
    %vm3385 = vweird.f32 %v3340
    %vm3386 = vweird.f32 %v3379
    %vm3387 = vmor %vm3385, %vm3386
    %v3388 = vsel %vm3387, %v3379, %v3384
    %v3389 = vrsqrt.pop %v3341
    %v3390 = vmul.f32 %v3389, %v3341
    %v3391 = vmul.f32 %v3390, %v3389
    %v3392 = vmul.f32 0.5, %v3391
    %v3393 = vsub.f32 1.5, %v3392
    %v3394 = vmul.f32 %v3389, %v3393
    %vm3395 = vweird.f32 %v3341
    %vm3396 = vweird.f32 %v3389
    %vm3397 = vmor %vm3395, %vm3396
    %v3398 = vsel %vm3397, %v3389, %v3394
    %v3399 = vrsqrt.pop %v3342
    %v3400 = vmul.f32 %v3399, %v3342
    %v3401 = vmul.f32 %v3400, %v3399
    %v3402 = vmul.f32 0.5, %v3401
    %v3403 = vsub.f32 1.5, %v3402
    %v3404 = vmul.f32 %v3399, %v3403
    %vm3405 = vweird.f32 %v3342
    %vm3406 = vweird.f32 %v3399
    %vm3407 = vmor %vm3405, %vm3406
    %v3408 = vsel %vm3407, %v3399, %v3404
    %v3409 = vrsqrt.pop %v3343
    %v3410 = vmul.f32 %v3409, %v3343
    %v3411 = vmul.f32 %v3410, %v3409
    %v3412 = vmul.f32 0.5, %v3411
    %v3413 = vsub.f32 1.5, %v3412
    %v3414 = vmul.f32 %v3409, %v3413
    %vm3415 = vweird.f32 %v3343
    %vm3416 = vweird.f32 %v3409
    %vm3417 = vmor %vm3415, %vm3416
    %v3418 = vsel %vm3417, %v3409, %v3414
    %v3419 = vrsqrt.pop %v3344
    %v3420 = vmul.f32 %v3419, %v3344
    %v3421 = vmul.f32 %v3420, %v3419
    %v3422 = vmul.f32 0.5, %v3421
    %v3423 = vsub.f32 1.5, %v3422
    %v3424 = vmul.f32 %v3419, %v3423
    %vm3425 = vweird.f32 %v3344
    %vm3426 = vweird.f32 %v3419
    %vm3427 = vmor %vm3425, %vm3426
    %v3428 = vsel %vm3427, %v3419, %v3424
    %v3429 = vrsqrt.pop %v3345
    %v3430 = vmul.f32 %v3429, %v3345
    %v3431 = vmul.f32 %v3430, %v3429
    %v3432 = vmul.f32 0.5, %v3431
    %v3433 = vsub.f32 1.5, %v3432
    %v3434 = vmul.f32 %v3429, %v3433
    %vm3435 = vweird.f32 %v3345
    %vm3436 = vweird.f32 %v3429
    %vm3437 = vmor %vm3435, %vm3436
    %v3438 = vsel %vm3437, %v3429, %v3434
    %v3439 = vrsqrt.pop %v3346
    %v3440 = vmul.f32 %v3439, %v3346
    %v3441 = vmul.f32 %v3440, %v3439
    %v3442 = vmul.f32 0.5, %v3441
    %v3443 = vsub.f32 1.5, %v3442
    %v3444 = vmul.f32 %v3439, %v3443
    %vm3445 = vweird.f32 %v3346
    %vm3446 = vweird.f32 %v3439
    %vm3447 = vmor %vm3445, %vm3446
    %v3448 = vsel %vm3447, %v3439, %v3444
    %v3449 = vrsqrt.pop %v3347
    %v3450 = vmul.f32 %v3449, %v3347
    %v3451 = vmul.f32 %v3450, %v3449
    %v3452 = vmul.f32 0.5, %v3451
    %v3453 = vsub.f32 1.5, %v3452
    %v3454 = vmul.f32 %v3449, %v3453
    %vm3455 = vweird.f32 %v3347
    %vm3456 = vweird.f32 %v3449
    %vm3457 = vmor %vm3455, %vm3456
    %v3458 = vsel %vm3457, %v3449, %v3454
    %v3459 = vrsqrt.pop %v3348
    %v3460 = vmul.f32 %v3459, %v3348
    %v3461 = vmul.f32 %v3460, %v3459
    %v3462 = vmul.f32 0.5, %v3461
    %v3463 = vsub.f32 1.5, %v3462
    %v3464 = vmul.f32 %v3459, %v3463
    %vm3465 = vweird.f32 %v3348
    %vm3466 = vweird.f32 %v3459
    %vm3467 = vmor %vm3465, %vm3466
    %v3468 = vsel %vm3467, %v3459, %v3464
    %v3469 = vmul.f32 %v3277, %v3358
    %v3470 = vmul.f32 %v3278, %v3368
    %v3471 = vmul.f32 %v3279, %v3378
    %v3472 = vmul.f32 %v3280, %v3388
    %v3473 = vmul.f32 %v3281, %v3398
    %v3474 = vmul.f32 %v3282, %v3408
    %v3475 = vmul.f32 %v3283, %v3418
    %v3476 = vmul.f32 %v3284, %v3428
    %v3477 = vmul.f32 %v3285, %v3438
    %v3478 = vmul.f32 %v3286, %v3448
    %v3479 = vmul.f32 %v3287, %v3458
    %v3480 = vmul.f32 %v3288, %v3468
    %v3482 = vperm.slane %v3239, 0
    %v3484 = vmul.f32 %v3469, %v3482
    %v3485 = vmul.f32 %v3470, %v3482
    %v3486 = vmul.f32 %v3471, %v3482
    %v3487 = vmul.f32 %v3472, %v3482
    %v3488 = vmul.f32 %v3473, %v3482
    %v3489 = vmul.f32 %v3474, %v3482
    %v3490 = vmul.f32 %v3475, %v3482
    %v3491 = vmul.f32 %v3476, %v3482
    %v3492 = vmul.f32 %v3477, %v3482
    %v3493 = vmul.f32 %v3478, %v3482
    %v3494 = vmul.f32 %v3479, %v3482
    %v3495 = vmul.f32 %v3480, %v3482
    %v3497 = vperm.slane %v3240, 0
    %v3499 = vadd.f32 %v3484, %v3497
    %v3500 = vadd.f32 %v3485, %v3497
    %v3501 = vadd.f32 %v3486, %v3497
    %v3502 = vadd.f32 %v3487, %v3497
    %v3503 = vadd.f32 %v3488, %v3497
    %v3504 = vadd.f32 %v3489, %v3497
    %v3505 = vadd.f32 %v3490, %v3497
    %v3506 = vadd.f32 %v3491, %v3497
    %v3507 = vadd.f32 %v3492, %v3497
    %v3508 = vadd.f32 %v3493, %v3497
    %v3509 = vadd.f32 %v3494, %v3497
    %v3510 = vadd.f32 %v3495, %v3497
    %v3511 = vpack.c.bf16 %v3500, %v3499
    %v3512 = vpack.c.bf16 %v3502, %v3501
    %v3513 = vpack.c.bf16 %v3504, %v3503
    %v3514 = vpack.c.bf16 %v3506, %v3505
    %v3515 = vpack.c.bf16 %v3508, %v3507
    %v3516 = vpack.c.bf16 %v3510, %v3509
    %v3517 = vld [vmem:[%s29] sm:$0xff]
    %v3518 = vld [vmem:[%s29 + $0x8] sm:$0xff]
    %v3519 = vld [vmem:[%s29 + $0x10] sm:$0xff]
    %v3520 = vld [vmem:[%s29 + $0x18] sm:$0xff]
    %v3521 = vld [vmem:[%s29 + $0x20] sm:$0xff]
    %v3522 = vld [vmem:[%s29 + $0x28] sm:$0xff]
    %v3523 = vld [vmem:[%s29 + $0x30] sm:$0xff]
    %v3524 = vld [vmem:[%s29 + $0x38] sm:$0xff]
    %v3525 = vld [vmem:[%s29 + $0x40] sm:$0xff]
    %v3526 = vld [vmem:[%s29 + $0x48] sm:$0xff]
    %v3527 = vld [vmem:[%s29 + $0x50] sm:$0xff]
    %v3528 = vld [vmem:[%s29 + $0x58] sm:$0xff]
    %v3529 = vld [vmem:[%s29 + $0x60] sm:$0xff]
    %v3530 = vld [vmem:[%s29 + $0x68] sm:$0xff]
    %v3531 = vld [vmem:[%s29 + $0x70] sm:$0xff]
    %v3532 = vld [vmem:[%s29 + $0x78] sm:$0xff]
    %v3533 = vld [vmem:[%s29 + $0x80] sm:$0xff]
    %v3534 = vld [vmem:[%s29 + $0x88] sm:$0xff]
    %v3535 = vld [vmem:[%s29 + $0x90] sm:$0xff]
    %v3536 = vld [vmem:[%s29 + $0x98] sm:$0xff]
    %v3537 = vld [vmem:[%s29 + $0xa0] sm:$0xff]
    %v3538 = vld [vmem:[%s29 + $0xa8] sm:$0xff]
    %v3539 = vld [vmem:[%s29 + $0xb0] sm:$0xff]
    %v3540 = vld [vmem:[%s29 + $0xb8] sm:$0xff]
    %v3541 = vld [vmem:[%s29 + $0xc0] sm:$0xff]
    %v3542 = vld [vmem:[%s29 + $0xc8] sm:$0xff]
    %v3543 = vld [vmem:[%s29 + $0xd0] sm:$0xff]
    %v3544 = vld [vmem:[%s29 + $0xd8] sm:$0xff]
    %v3545 = vld [vmem:[%s29 + $0xe0] sm:$0xff]
    %v3546 = vld [vmem:[%s29 + $0xe8] sm:$0xff]
    %v3547 = vld [vmem:[%s29 + $0xf0] sm:$0xff]
    %v3548 = vld [vmem:[%s29 + $0xf8] sm:$0xff]
    %v3549 = vld [vmem:[#allocation15] sm:$0xf]
    %v3551 = vperm.slane %v3549, 0
    %v3552 = vperm.slane %v3549, 1
    %v3553 = vperm.slane %v3549, 2
    %v3554 = vperm.slane %v3549, 3
    %v3591 = vunpack.c.l.b16 %v3517
    %v3592 = vunpack.c.h.b16 %v3517
    %v3593 = vunpack.c.l.b16 %v3518
    %v3594 = vunpack.c.h.b16 %v3518
    %v3595 = vunpack.c.l.b16 %v3519
    %v3596 = vunpack.c.h.b16 %v3519
    %v3597 = vunpack.c.l.b16 %v3520
    %v3598 = vunpack.c.h.b16 %v3520
    %v3599 = vunpack.c.l.b16 %v3521
    %v3600 = vunpack.c.h.b16 %v3521
    %v3601 = vunpack.c.l.b16 %v3522
    %v3602 = vunpack.c.h.b16 %v3522
    %v3603 = vunpack.c.l.b16 %v3523
    %v3604 = vunpack.c.h.b16 %v3523
    %v3605 = vunpack.c.l.b16 %v3524
    %v3606 = vunpack.c.h.b16 %v3524
    %v3607 = vunpack.c.l.b16 %v3525
    %v3608 = vunpack.c.h.b16 %v3525
    %v3609 = vunpack.c.l.b16 %v3526
    %v3610 = vunpack.c.h.b16 %v3526
    %v3611 = vunpack.c.l.b16 %v3527
    %v3612 = vunpack.c.h.b16 %v3527
    %v3613 = vunpack.c.l.b16 %v3528
    %v3614 = vunpack.c.h.b16 %v3528
    %v3615 = vunpack.c.l.b16 %v3529
    %v3616 = vunpack.c.h.b16 %v3529
    %v3617 = vunpack.c.l.b16 %v3530
    %v3618 = vunpack.c.h.b16 %v3530
    %v3619 = vunpack.c.l.b16 %v3531
    %v3620 = vunpack.c.h.b16 %v3531
    %v3621 = vunpack.c.l.b16 %v3532
    %v3622 = vunpack.c.h.b16 %v3532
    %v3623 = vunpack.c.l.b16 %v3533
    %v3624 = vunpack.c.h.b16 %v3533
    %v3625 = vunpack.c.l.b16 %v3534
    %v3626 = vunpack.c.h.b16 %v3534
    %v3627 = vunpack.c.l.b16 %v3535
    %v3628 = vunpack.c.h.b16 %v3535
    %v3629 = vunpack.c.l.b16 %v3536
    %v3630 = vunpack.c.h.b16 %v3536
    %v3631 = vunpack.c.l.b16 %v3537
    %v3632 = vunpack.c.h.b16 %v3537
    %v3633 = vunpack.c.l.b16 %v3538
    %v3634 = vunpack.c.h.b16 %v3538
    %v3635 = vunpack.c.l.b16 %v3539
    %v3636 = vunpack.c.h.b16 %v3539
    %v3637 = vunpack.c.l.b16 %v3540
    %v3638 = vunpack.c.h.b16 %v3540
    %v3639 = vunpack.c.l.b16 %v3541
    %v3640 = vunpack.c.h.b16 %v3541
    %v3641 = vunpack.c.l.b16 %v3542
    %v3642 = vunpack.c.h.b16 %v3542
    %v3643 = vunpack.c.l.b16 %v3543
    %v3644 = vunpack.c.h.b16 %v3543
    %v3645 = vunpack.c.l.b16 %v3544
    %v3646 = vunpack.c.h.b16 %v3544
    %v3647 = vunpack.c.l.b16 %v3545
    %v3648 = vunpack.c.h.b16 %v3545
    %v3649 = vunpack.c.l.b16 %v3546
    %v3650 = vunpack.c.h.b16 %v3546
    %v3651 = vunpack.c.l.b16 %v3547
    %v3652 = vunpack.c.h.b16 %v3547
    %v3653 = vunpack.c.l.b16 %v3548
    %v3654 = vunpack.c.h.b16 %v3548
    %v3655 = vpack.c.b16 %v3595, %v3591
    %v3656 = vpack.c.b16 %v3596, %v3592
    %v3657 = vpack.c.b16 %v3597, %v3593
    %v3658 = vpack.c.b16 %v3598, %v3594
    %v3659 = vpack.c.b16 %v3603, %v3599
    %v3660 = vpack.c.b16 %v3604, %v3600
    %v3661 = vpack.c.b16 %v3605, %v3601
    %v3662 = vpack.c.b16 %v3606, %v3602
    %v3663 = vpack.c.b16 %v3611, %v3607
    %v3664 = vpack.c.b16 %v3612, %v3608
    %v3665 = vpack.c.b16 %v3613, %v3609
    %v3666 = vpack.c.b16 %v3614, %v3610
    %v3667 = vpack.c.b16 %v3619, %v3615
    %v3668 = vpack.c.b16 %v3620, %v3616
    %v3669 = vpack.c.b16 %v3621, %v3617
    %v3670 = vpack.c.b16 %v3622, %v3618
    %v3671 = vpack.c.b16 %v3627, %v3623
    %v3672 = vpack.c.b16 %v3628, %v3624
    %v3673 = vpack.c.b16 %v3629, %v3625
    %v3674 = vpack.c.b16 %v3630, %v3626
    %v3675 = vpack.c.b16 %v3635, %v3631
    %v3676 = vpack.c.b16 %v3636, %v3632
    %v3677 = vpack.c.b16 %v3637, %v3633
    %v3678 = vpack.c.b16 %v3638, %v3634
    %v3679 = vpack.c.b16 %v3643, %v3639
    %v3680 = vpack.c.b16 %v3644, %v3640
    %v3681 = vpack.c.b16 %v3645, %v3641
    %v3682 = vpack.c.b16 %v3646, %v3642
    %v3683 = vpack.c.b16 %v3651, %v3647
    %v3684 = vpack.c.b16 %v3652, %v3648
    %v3685 = vpack.c.b16 %v3653, %v3649
    %v3686 = vpack.c.b16 %v3654, %v3650
    %3719 = vmatpush.bf16.msra.mxu0 %v3683
    %3720 = vmatpush.bf16.msra.mxu0 %v3679
    %3721 = vmatpush.bf16.msra.mxu0 %v3675
    %3722 = vmatpush.bf16.msra.mxu0 %v3671
    %3723 = vmatpush.bf16.msra.mxu0 %v3667
    %3724 = vmatpush.bf16.msra.mxu0 %v3663
    %3725 = vmatpush.bf16.msra.mxu0 %v3659
    %3726 = vmatpush.bf16.msra.mxu0 %v3655
    %3727 = vmatmul.bf16.gmra.mxu0 %v3511
    %v3728 = vpop.f32.mrf.mxu0
    %v3729 = vadd.f32 %v3551, %v3728
    %v3730 = vpop.f32.mrf.mxu0
    %v3731 = vadd.f32 %v3551, %v3730
    %3732 = vmatmul.bf16.gmra.mxu0 %v3512
    %v3733 = vpop.f32.mrf.mxu0
    %v3734 = vadd.f32 %v3551, %v3733
    %v3735 = vpop.f32.mrf.mxu0
    %v3736 = vadd.f32 %v3551, %v3735
    %3737 = vmatmul.bf16.gmra.mxu0 %v3513
    %v3738 = vpop.f32.mrf.mxu0
    %v3739 = vadd.f32 %v3551, %v3738
    %v3740 = vpop.f32.mrf.mxu0
    %v3741 = vadd.f32 %v3551, %v3740
    %3742 = vmatmul.bf16.gmra.mxu0 %v3514
    %v3743 = vpop.f32.mrf.mxu0
    %v3744 = vadd.f32 %v3551, %v3743
    %v3745 = vpop.f32.mrf.mxu0
    %v3746 = vadd.f32 %v3551, %v3745
    %3747 = vmatmul.bf16.gmra.mxu0 %v3515
    %v3748 = vpop.f32.mrf.mxu0
    %v3749 = vadd.f32 %v3551, %v3748
    %v3750 = vpop.f32.mrf.mxu0
    %v3751 = vadd.f32 %v3551, %v3750
    %3752 = vmatmul.bf16.gmra.mxu0 %v3516
    %v3753 = vpop.f32.mrf.mxu0
    %v3754 = vadd.f32 %v3551, %v3753
    %v3755 = vpop.f32.mrf.mxu0
    %v3756 = vadd.f32 %v3551, %v3755
    %3757 = vdwg.mxu0
    %3758 = vmatpush.bf16.msra.mxu0 %v3684
    %3759 = vmatpush.bf16.msra.mxu0 %v3680
    %3760 = vmatpush.bf16.msra.mxu0 %v3676
    %3761 = vmatpush.bf16.msra.mxu0 %v3672
    %3762 = vmatpush.bf16.msra.mxu0 %v3668
    %3763 = vmatpush.bf16.msra.mxu0 %v3664
    %3764 = vmatpush.bf16.msra.mxu0 %v3660
    %3765 = vmatpush.bf16.msra.mxu0 %v3656
    %3766 = vmatmul.bf16.gmra.mxu0 %v3511
    %v3767 = vpop.f32.mrf.mxu0
    %v3768 = vadd.f32 %v3552, %v3767
    %v3769 = vpop.f32.mrf.mxu0
    %v3770 = vadd.f32 %v3552, %v3769
    %3771 = vmatmul.bf16.gmra.mxu0 %v3512
    %v3772 = vpop.f32.mrf.mxu0
    %v3773 = vadd.f32 %v3552, %v3772
    %v3774 = vpop.f32.mrf.mxu0
    %v3775 = vadd.f32 %v3552, %v3774
    %3776 = vmatmul.bf16.gmra.mxu0 %v3513
    %v3777 = vpop.f32.mrf.mxu0
    %v3778 = vadd.f32 %v3552, %v3777
    %v3779 = vpop.f32.mrf.mxu0
    %v3780 = vadd.f32 %v3552, %v3779
    %3781 = vmatmul.bf16.gmra.mxu0 %v3514
    %v3782 = vpop.f32.mrf.mxu0
    %v3783 = vadd.f32 %v3552, %v3782
    %v3784 = vpop.f32.mrf.mxu0
    %v3785 = vadd.f32 %v3552, %v3784
    %3786 = vmatmul.bf16.gmra.mxu0 %v3515
    %v3787 = vpop.f32.mrf.mxu0
    %v3788 = vadd.f32 %v3552, %v3787
    %v3789 = vpop.f32.mrf.mxu0
    %v3790 = vadd.f32 %v3552, %v3789
    %3791 = vmatmul.bf16.gmra.mxu0 %v3516
    %v3792 = vpop.f32.mrf.mxu0
    %v3793 = vadd.f32 %v3552, %v3792
    %v3794 = vpop.f32.mrf.mxu0
    %v3795 = vadd.f32 %v3552, %v3794
    %3796 = vdwg.mxu0
    %3797 = vmatpush.bf16.msra.mxu0 %v3685
    %3798 = vmatpush.bf16.msra.mxu0 %v3681
    %3799 = vmatpush.bf16.msra.mxu0 %v3677
    %3800 = vmatpush.bf16.msra.mxu0 %v3673
    %3801 = vmatpush.bf16.msra.mxu0 %v3669
    %3802 = vmatpush.bf16.msra.mxu0 %v3665
    %3803 = vmatpush.bf16.msra.mxu0 %v3661
    %3804 = vmatpush.bf16.msra.mxu0 %v3657
    %3805 = vmatmul.bf16.gmra.mxu0 %v3511
    %v3806 = vpop.f32.mrf.mxu0
    %v3807 = vadd.f32 %v3553, %v3806
    %v3808 = vpop.f32.mrf.mxu0
    %v3809 = vadd.f32 %v3553, %v3808
    %3810 = vmatmul.bf16.gmra.mxu0 %v3512
    %v3811 = vpop.f32.mrf.mxu0
    %v3812 = vadd.f32 %v3553, %v3811
    %v3813 = vpop.f32.mrf.mxu0
    %v3814 = vadd.f32 %v3553, %v3813
    %3815 = vmatmul.bf16.gmra.mxu0 %v3513
    %v3816 = vpop.f32.mrf.mxu0
    %v3817 = vadd.f32 %v3553, %v3816
    %v3818 = vpop.f32.mrf.mxu0
    %v3819 = vadd.f32 %v3553, %v3818
    %3820 = vmatmul.bf16.gmra.mxu0 %v3514
    %v3821 = vpop.f32.mrf.mxu0
    %v3822 = vadd.f32 %v3553, %v3821
    %v3823 = vpop.f32.mrf.mxu0
    %v3824 = vadd.f32 %v3553, %v3823
    %3825 = vmatmul.bf16.gmra.mxu0 %v3515
    %v3826 = vpop.f32.mrf.mxu0
    %v3827 = vadd.f32 %v3553, %v3826
    %v3828 = vpop.f32.mrf.mxu0
    %v3829 = vadd.f32 %v3553, %v3828
    %3830 = vmatmul.bf16.gmra.mxu0 %v3516
    %v3831 = vpop.f32.mrf.mxu0
    %v3832 = vadd.f32 %v3553, %v3831
    %v3833 = vpop.f32.mrf.mxu0
    %v3834 = vadd.f32 %v3553, %v3833
    %3835 = vdwg.mxu0
    %3836 = vmatpush.bf16.msra.mxu0 %v3686
    %3837 = vmatpush.bf16.msra.mxu0 %v3682
    %3838 = vmatpush.bf16.msra.mxu0 %v3678
    %3839 = vmatpush.bf16.msra.mxu0 %v3674
    %3840 = vmatpush.bf16.msra.mxu0 %v3670
    %3841 = vmatpush.bf16.msra.mxu0 %v3666
    %3842 = vmatpush.bf16.msra.mxu0 %v3662
    %3843 = vmatpush.bf16.msra.mxu0 %v3658
    %3844 = vmatmul.bf16.gmra.mxu0 %v3511
    %v3845 = vpop.f32.mrf.mxu0
    %v3846 = vadd.f32 %v3554, %v3845
    %v3847 = vpop.f32.mrf.mxu0
    %v3848 = vadd.f32 %v3554, %v3847
    %3849 = vmatmul.bf16.gmra.mxu0 %v3512
    %v3850 = vpop.f32.mrf.mxu0
    %v3851 = vadd.f32 %v3554, %v3850
    %v3852 = vpop.f32.mrf.mxu0
    %v3853 = vadd.f32 %v3554, %v3852
    %3854 = vmatmul.bf16.gmra.mxu0 %v3513
    %v3855 = vpop.f32.mrf.mxu0
    %v3856 = vadd.f32 %v3554, %v3855
    %v3857 = vpop.f32.mrf.mxu0
    %v3858 = vadd.f32 %v3554, %v3857
    %3859 = vmatmul.bf16.gmra.mxu0 %v3514
    %v3860 = vpop.f32.mrf.mxu0
    %v3861 = vadd.f32 %v3554, %v3860
    %v3862 = vpop.f32.mrf.mxu0
    %v3863 = vadd.f32 %v3554, %v3862
    %3864 = vmatmul.bf16.gmra.mxu0 %v3515
    %v3865 = vpop.f32.mrf.mxu0
    %v3866 = vadd.f32 %v3554, %v3865
    %v3867 = vpop.f32.mrf.mxu0
    %v3868 = vadd.f32 %v3554, %v3867
    %3869 = vmatmul.bf16.gmra.mxu0 %v3516
    %v3870 = vpop.f32.mrf.mxu0
    %v3871 = vadd.f32 %v3554, %v3870
    %v3872 = vpop.f32.mrf.mxu0
    %v3873 = vadd.f32 %v3554, %v3872
    %3874 = vdwg.mxu0
    %v3875 = vmul.f32 %v3729, 0.5
    %v3876 = vmul.f32 %v3768, 0.5
    %v3877 = vmul.f32 %v3807, 0.5
    %v3878 = vmul.f32 %v3846, 0.5
    %v3879 = vmul.f32 %v3731, 0.5
    %v3880 = vmul.f32 %v3770, 0.5
    %v3881 = vmul.f32 %v3809, 0.5
    %v3882 = vmul.f32 %v3848, 0.5
    %v3883 = vmul.f32 %v3734, 0.5
    %v3884 = vmul.f32 %v3773, 0.5
    %v3885 = vmul.f32 %v3812, 0.5
    %v3886 = vmul.f32 %v3851, 0.5
    %v3887 = vmul.f32 %v3736, 0.5
    %v3888 = vmul.f32 %v3775, 0.5
    %v3889 = vmul.f32 %v3814, 0.5
    %v3890 = vmul.f32 %v3853, 0.5
    %v3891 = vmul.f32 %v3739, 0.5
    %v3892 = vmul.f32 %v3778, 0.5
    %v3893 = vmul.f32 %v3817, 0.5
    %v3894 = vmul.f32 %v3856, 0.5
    %v3895 = vmul.f32 %v3741, 0.5
    %v3896 = vmul.f32 %v3780, 0.5
    %v3897 = vmul.f32 %v3819, 0.5
    %v3898 = vmul.f32 %v3858, 0.5
    %v3899 = vmul.f32 %v3744, 0.5
    %v3900 = vmul.f32 %v3783, 0.5
    %v3901 = vmul.f32 %v3822, 0.5
    %v3902 = vmul.f32 %v3861, 0.5
    %v3903 = vmul.f32 %v3746, 0.5
    %v3904 = vmul.f32 %v3785, 0.5
    %v3905 = vmul.f32 %v3824, 0.5
    %v3906 = vmul.f32 %v3863, 0.5
    %v3907 = vmul.f32 %v3749, 0.5
    %v3908 = vmul.f32 %v3788, 0.5
    %v3909 = vmul.f32 %v3827, 0.5
    %v3910 = vmul.f32 %v3866, 0.5
    %v3911 = vmul.f32 %v3751, 0.5
    %v3912 = vmul.f32 %v3790, 0.5
    %v3913 = vmul.f32 %v3829, 0.5
    %v3914 = vmul.f32 %v3868, 0.5
    %v3915 = vmul.f32 %v3754, 0.5
    %v3916 = vmul.f32 %v3793, 0.5
    %v3917 = vmul.f32 %v3832, 0.5
    %v3918 = vmul.f32 %v3871, 0.5
    %v3919 = vmul.f32 %v3756, 0.5
    %v3920 = vmul.f32 %v3795, 0.5
    %v3921 = vmul.f32 %v3834, 0.5
    %v3922 = vmul.f32 %v3873, 0.5
    %v3923 = vmul.f32 %v3729, %v3729
    %v3924 = vmul.f32 %v3768, %v3768
    %v3925 = vmul.f32 %v3807, %v3807
    %v3926 = vmul.f32 %v3846, %v3846
    %v3927 = vmul.f32 %v3731, %v3731
    %v3928 = vmul.f32 %v3770, %v3770
    %v3929 = vmul.f32 %v3809, %v3809
    %v3930 = vmul.f32 %v3848, %v3848
    %v3931 = vmul.f32 %v3734, %v3734
    %v3932 = vmul.f32 %v3773, %v3773
    %v3933 = vmul.f32 %v3812, %v3812
    %v3934 = vmul.f32 %v3851, %v3851
    %v3935 = vmul.f32 %v3736, %v3736
    %v3936 = vmul.f32 %v3775, %v3775
    %v3937 = vmul.f32 %v3814, %v3814
    %v3938 = vmul.f32 %v3853, %v3853
    %v3939 = vmul.f32 %v3739, %v3739
    %v3940 = vmul.f32 %v3778, %v3778
    %v3941 = vmul.f32 %v3817, %v3817
    %v3942 = vmul.f32 %v3856, %v3856
    %v3943 = vmul.f32 %v3741, %v3741
    %v3944 = vmul.f32 %v3780, %v3780
    %v3945 = vmul.f32 %v3819, %v3819
    %v3946 = vmul.f32 %v3858, %v3858
    %v3947 = vmul.f32 %v3744, %v3744
    %v3948 = vmul.f32 %v3783, %v3783
    %v3949 = vmul.f32 %v3822, %v3822
    %v3950 = vmul.f32 %v3861, %v3861
    %v3951 = vmul.f32 %v3746, %v3746
    %v3952 = vmul.f32 %v3785, %v3785
    %v3953 = vmul.f32 %v3824, %v3824
    %v3954 = vmul.f32 %v3863, %v3863
    %v3955 = vmul.f32 %v3749, %v3749
    %v3956 = vmul.f32 %v3788, %v3788
    %v3957 = vmul.f32 %v3827, %v3827
    %v3958 = vmul.f32 %v3866, %v3866
    %v3959 = vmul.f32 %v3751, %v3751
    %v3960 = vmul.f32 %v3790, %v3790
    %v3961 = vmul.f32 %v3829, %v3829
    %v3962 = vmul.f32 %v3868, %v3868
    %v3963 = vmul.f32 %v3754, %v3754
    %v3964 = vmul.f32 %v3793, %v3793
    %v3965 = vmul.f32 %v3832, %v3832
    %v3966 = vmul.f32 %v3871, %v3871
    %v3967 = vmul.f32 %v3756, %v3756
    %v3968 = vmul.f32 %v3795, %v3795
    %v3969 = vmul.f32 %v3834, %v3834
    %v3970 = vmul.f32 %v3873, %v3873
    %v3971 = vmul.f32 %v3923, %v3729
    %v3972 = vmul.f32 %v3924, %v3768
    %v3973 = vmul.f32 %v3925, %v3807
    %v3974 = vmul.f32 %v3926, %v3846
    %v3975 = vmul.f32 %v3927, %v3731
    %v3976 = vmul.f32 %v3928, %v3770
    %v3977 = vmul.f32 %v3929, %v3809
    %v3978 = vmul.f32 %v3930, %v3848
    %v3979 = vmul.f32 %v3931, %v3734
    %v3980 = vmul.f32 %v3932, %v3773
    %v3981 = vmul.f32 %v3933, %v3812
    %v3982 = vmul.f32 %v3934, %v3851
    %v3983 = vmul.f32 %v3935, %v3736
    %v3984 = vmul.f32 %v3936, %v3775
    %v3985 = vmul.f32 %v3937, %v3814
    %v3986 = vmul.f32 %v3938, %v3853
    %v3987 = vmul.f32 %v3939, %v3739
    %v3988 = vmul.f32 %v3940, %v3778
    %v3989 = vmul.f32 %v3941, %v3817
    %v3990 = vmul.f32 %v3942, %v3856
    %v3991 = vmul.f32 %v3943, %v3741
    %v3992 = vmul.f32 %v3944, %v3780
    %v3993 = vmul.f32 %v3945, %v3819
    %v3994 = vmul.f32 %v3946, %v3858
    %v3995 = vmul.f32 %v3947, %v3744
    %v3996 = vmul.f32 %v3948, %v3783
    %v3997 = vmul.f32 %v3949, %v3822
    %v3998 = vmul.f32 %v3950, %v3861
    %v3999 = vmul.f32 %v3951, %v3746
    %v4000 = vmul.f32 %v3952, %v3785
    %v4001 = vmul.f32 %v3953, %v3824
    %v4002 = vmul.f32 %v3954, %v3863
    %v4003 = vmul.f32 %v3955, %v3749
    %v4004 = vmul.f32 %v3956, %v3788
    %v4005 = vmul.f32 %v3957, %v3827
    %v4006 = vmul.f32 %v3958, %v3866
    %v4007 = vmul.f32 %v3959, %v3751
    %v4008 = vmul.f32 %v3960, %v3790
    %v4009 = vmul.f32 %v3961, %v3829
    %v4010 = vmul.f32 %v3962, %v3868
    %v4011 = vmul.f32 %v3963, %v3754
    %v4012 = vmul.f32 %v3964, %v3793
    %v4013 = vmul.f32 %v3965, %v3832
    %v4014 = vmul.f32 %v3966, %v3871
    %v4015 = vmul.f32 %v3967, %v3756
    %v4016 = vmul.f32 %v3968, %v3795
    %v4017 = vmul.f32 %v3969, %v3834
    %v4018 = vmul.f32 %v3970, %v3873
    %v4019 = vmul.f32 %v3971, 0.044715
    %v4020 = vmul.f32 %v3972, 0.044715
    %v4021 = vmul.f32 %v3973, 0.044715
    %v4022 = vmul.f32 %v3974, 0.044715
    %v4023 = vmul.f32 %v3975, 0.044715
    %v4024 = vmul.f32 %v3976, 0.044715
    %v4025 = vmul.f32 %v3977, 0.044715
    %v4026 = vmul.f32 %v3978, 0.044715
    %v4027 = vmul.f32 %v3979, 0.044715
    %v4028 = vmul.f32 %v3980, 0.044715
    %v4029 = vmul.f32 %v3981, 0.044715
    %v4030 = vmul.f32 %v3982, 0.044715
    %v4031 = vmul.f32 %v3983, 0.044715
    %v4032 = vmul.f32 %v3984, 0.044715
    %v4033 = vmul.f32 %v3985, 0.044715
    %v4034 = vmul.f32 %v3986, 0.044715
    %v4035 = vmul.f32 %v3987, 0.044715
    %v4036 = vmul.f32 %v3988, 0.044715
    %v4037 = vmul.f32 %v3989, 0.044715
    %v4038 = vmul.f32 %v3990, 0.044715
    %v4039 = vmul.f32 %v3991, 0.044715
    %v4040 = vmul.f32 %v3992, 0.044715
    %v4041 = vmul.f32 %v3993, 0.044715
    %v4042 = vmul.f32 %v3994, 0.044715
    %v4043 = vmul.f32 %v3995, 0.044715
    %v4044 = vmul.f32 %v3996, 0.044715
    %v4045 = vmul.f32 %v3997, 0.044715
    %v4046 = vmul.f32 %v3998, 0.044715
    %v4047 = vmul.f32 %v3999, 0.044715
    %v4048 = vmul.f32 %v4000, 0.044715
    %v4049 = vmul.f32 %v4001, 0.044715
    %v4050 = vmul.f32 %v4002, 0.044715
    %v4051 = vmul.f32 %v4003, 0.044715
    %v4052 = vmul.f32 %v4004, 0.044715
    %v4053 = vmul.f32 %v4005, 0.044715
    %v4054 = vmul.f32 %v4006, 0.044715
    %v4055 = vmul.f32 %v4007, 0.044715
    %v4056 = vmul.f32 %v4008, 0.044715
    %v4057 = vmul.f32 %v4009, 0.044715
    %v4058 = vmul.f32 %v4010, 0.044715
    %v4059 = vmul.f32 %v4011, 0.044715
    %v4060 = vmul.f32 %v4012, 0.044715
    %v4061 = vmul.f32 %v4013, 0.044715
    %v4062 = vmul.f32 %v4014, 0.044715
    %v4063 = vmul.f32 %v4015, 0.044715
    %v4064 = vmul.f32 %v4016, 0.044715
    %v4065 = vmul.f32 %v4017, 0.044715
    %v4066 = vmul.f32 %v4018, 0.044715
    %v4067 = vadd.f32 %v3729, %v4019
    %v4068 = vadd.f32 %v3768, %v4020
    %v4069 = vadd.f32 %v3807, %v4021
    %v4070 = vadd.f32 %v3846, %v4022
    %v4071 = vadd.f32 %v3731, %v4023
    %v4072 = vadd.f32 %v3770, %v4024
    %v4073 = vadd.f32 %v3809, %v4025
    %v4074 = vadd.f32 %v3848, %v4026
    %v4075 = vadd.f32 %v3734, %v4027
    %v4076 = vadd.f32 %v3773, %v4028
    %v4077 = vadd.f32 %v3812, %v4029
    %v4078 = vadd.f32 %v3851, %v4030
    %v4079 = vadd.f32 %v3736, %v4031
    %v4080 = vadd.f32 %v3775, %v4032
    %v4081 = vadd.f32 %v3814, %v4033
    %v4082 = vadd.f32 %v3853, %v4034
    %v4083 = vadd.f32 %v3739, %v4035
    %v4084 = vadd.f32 %v3778, %v4036
    %v4085 = vadd.f32 %v3817, %v4037
    %v4086 = vadd.f32 %v3856, %v4038
    %v4087 = vadd.f32 %v3741, %v4039
    %v4088 = vadd.f32 %v3780, %v4040
    %v4089 = vadd.f32 %v3819, %v4041
    %v4090 = vadd.f32 %v3858, %v4042
    %v4091 = vadd.f32 %v3744, %v4043
    %v4092 = vadd.f32 %v3783, %v4044
    %v4093 = vadd.f32 %v3822, %v4045
    %v4094 = vadd.f32 %v3861, %v4046
    %v4095 = vadd.f32 %v3746, %v4047
    %v4096 = vadd.f32 %v3785, %v4048
    %v4097 = vadd.f32 %v3824, %v4049
    %v4098 = vadd.f32 %v3863, %v4050
    %v4099 = vadd.f32 %v3749, %v4051
    %v4100 = vadd.f32 %v3788, %v4052
    %v4101 = vadd.f32 %v3827, %v4053
    %v4102 = vadd.f32 %v3866, %v4054
    %v4103 = vadd.f32 %v3751, %v4055
    %v4104 = vadd.f32 %v3790, %v4056
    %v4105 = vadd.f32 %v3829, %v4057
    %v4106 = vadd.f32 %v3868, %v4058
    %v4107 = vadd.f32 %v3754, %v4059
    %v4108 = vadd.f32 %v3793, %v4060
    %v4109 = vadd.f32 %v3832, %v4061
    %v4110 = vadd.f32 %v3871, %v4062
    %v4111 = vadd.f32 %v3756, %v4063
    %v4112 = vadd.f32 %v3795, %v4064
    %v4113 = vadd.f32 %v3834, %v4065
    %v4114 = vadd.f32 %v3873, %v4066
    %v4115 = vmul.f32 %v4067, 0.7978846
    %v4116 = vmul.f32 %v4068, 0.7978846
    %v4117 = vmul.f32 %v4069, 0.7978846
    %v4118 = vmul.f32 %v4070, 0.7978846
    %v4119 = vmul.f32 %v4071, 0.7978846
    %v4120 = vmul.f32 %v4072, 0.7978846
    %v4121 = vmul.f32 %v4073, 0.7978846
    %v4122 = vmul.f32 %v4074, 0.7978846
    %v4123 = vmul.f32 %v4075, 0.7978846
    %v4124 = vmul.f32 %v4076, 0.7978846
    %v4125 = vmul.f32 %v4077, 0.7978846
    %v4126 = vmul.f32 %v4078, 0.7978846
    %v4127 = vmul.f32 %v4079, 0.7978846
    %v4128 = vmul.f32 %v4080, 0.7978846
    %v4129 = vmul.f32 %v4081, 0.7978846
    %v4130 = vmul.f32 %v4082, 0.7978846
    %v4131 = vmul.f32 %v4083, 0.7978846
    %v4132 = vmul.f32 %v4084, 0.7978846
    %v4133 = vmul.f32 %v4085, 0.7978846
    %v4134 = vmul.f32 %v4086, 0.7978846
    %v4135 = vmul.f32 %v4087, 0.7978846
    %v4136 = vmul.f32 %v4088, 0.7978846
    %v4137 = vmul.f32 %v4089, 0.7978846
    %v4138 = vmul.f32 %v4090, 0.7978846
    %v4139 = vmul.f32 %v4091, 0.7978846
    %v4140 = vmul.f32 %v4092, 0.7978846
    %v4141 = vmul.f32 %v4093, 0.7978846
    %v4142 = vmul.f32 %v4094, 0.7978846
    %v4143 = vmul.f32 %v4095, 0.7978846
    %v4144 = vmul.f32 %v4096, 0.7978846
    %v4145 = vmul.f32 %v4097, 0.7978846
    %v4146 = vmul.f32 %v4098, 0.7978846
    %v4147 = vmul.f32 %v4099, 0.7978846
    %v4148 = vmul.f32 %v4100, 0.7978846
    %v4149 = vmul.f32 %v4101, 0.7978846
    %v4150 = vmul.f32 %v4102, 0.7978846
    %v4151 = vmul.f32 %v4103, 0.7978846
    %v4152 = vmul.f32 %v4104, 0.7978846
    %v4153 = vmul.f32 %v4105, 0.7978846
    %v4154 = vmul.f32 %v4106, 0.7978846
    %v4155 = vmul.f32 %v4107, 0.7978846
    %v4156 = vmul.f32 %v4108, 0.7978846
    %v4157 = vmul.f32 %v4109, 0.7978846
    %v4158 = vmul.f32 %v4110, 0.7978846
    %v4159 = vmul.f32 %v4111, 0.7978846
    %v4160 = vmul.f32 %v4112, 0.7978846
    %v4161 = vmul.f32 %v4113, 0.7978846
    %v4162 = vmul.f32 %v4114, 0.7978846
    %v4163 = vtanh.pop %v4115
    %v4164 = vtanh.pop %v4116
    %v4165 = vtanh.pop %v4117
    %v4166 = vtanh.pop %v4118
    %v4167 = vtanh.pop %v4119
    %v4168 = vtanh.pop %v4120
    %v4169 = vtanh.pop %v4121
    %v4170 = vtanh.pop %v4122
    %v4171 = vtanh.pop %v4123
    %v4172 = vtanh.pop %v4124
    %v4173 = vtanh.pop %v4125
    %v4174 = vtanh.pop %v4126
    %v4175 = vtanh.pop %v4127
    %v4176 = vtanh.pop %v4128
    %v4177 = vtanh.pop %v4129
    %v4178 = vtanh.pop %v4130
    %v4179 = vtanh.pop %v4131
    %v4180 = vtanh.pop %v4132
    %v4181 = vtanh.pop %v4133
    %v4182 = vtanh.pop %v4134
    %v4183 = vtanh.pop %v4135
    %v4184 = vtanh.pop %v4136
    %v4185 = vtanh.pop %v4137
    %v4186 = vtanh.pop %v4138
    %v4187 = vtanh.pop %v4139
    %v4188 = vtanh.pop %v4140
    %v4189 = vtanh.pop %v4141
    %v4190 = vtanh.pop %v4142
    %v4191 = vtanh.pop %v4143
    %v4192 = vtanh.pop %v4144
    %v4193 = vtanh.pop %v4145
    %v4194 = vtanh.pop %v4146
    %v4195 = vtanh.pop %v4147
    %v4196 = vtanh.pop %v4148
    %v4197 = vtanh.pop %v4149
    %v4198 = vtanh.pop %v4150
    %v4199 = vtanh.pop %v4151
    %v4200 = vtanh.pop %v4152
    %v4201 = vtanh.pop %v4153
    %v4202 = vtanh.pop %v4154
    %v4203 = vtanh.pop %v4155
    %v4204 = vtanh.pop %v4156
    %v4205 = vtanh.pop %v4157
    %v4206 = vtanh.pop %v4158
    %v4207 = vtanh.pop %v4159
    %v4208 = vtanh.pop %v4160
    %v4209 = vtanh.pop %v4161
    %v4210 = vtanh.pop %v4162
    %v4211 = vadd.f32 %v4163, 1.0
    %v4212 = vadd.f32 %v4164, 1.0
    %v4213 = vadd.f32 %v4165, 1.0
    %v4214 = vadd.f32 %v4166, 1.0
    %v4215 = vadd.f32 %v4167, 1.0
    %v4216 = vadd.f32 %v4168, 1.0
    %v4217 = vadd.f32 %v4169, 1.0
    %v4218 = vadd.f32 %v4170, 1.0
    %v4219 = vadd.f32 %v4171, 1.0
    %v4220 = vadd.f32 %v4172, 1.0
    %v4221 = vadd.f32 %v4173, 1.0
    %v4222 = vadd.f32 %v4174, 1.0
    %v4223 = vadd.f32 %v4175, 1.0
    %v4224 = vadd.f32 %v4176, 1.0
    %v4225 = vadd.f32 %v4177, 1.0
    %v4226 = vadd.f32 %v4178, 1.0
    %v4227 = vadd.f32 %v4179, 1.0
    %v4228 = vadd.f32 %v4180, 1.0
    %v4229 = vadd.f32 %v4181, 1.0
    %v4230 = vadd.f32 %v4182, 1.0
    %v4231 = vadd.f32 %v4183, 1.0
    %v4232 = vadd.f32 %v4184, 1.0
    %v4233 = vadd.f32 %v4185, 1.0
    %v4234 = vadd.f32 %v4186, 1.0
    %v4235 = vadd.f32 %v4187, 1.0
    %v4236 = vadd.f32 %v4188, 1.0
    %v4237 = vadd.f32 %v4189, 1.0
    %v4238 = vadd.f32 %v4190, 1.0
    %v4239 = vadd.f32 %v4191, 1.0
    %v4240 = vadd.f32 %v4192, 1.0
    %v4241 = vadd.f32 %v4193, 1.0
    %v4242 = vadd.f32 %v4194, 1.0
    %v4243 = vadd.f32 %v4195, 1.0
    %v4244 = vadd.f32 %v4196, 1.0
    %v4245 = vadd.f32 %v4197, 1.0
    %v4246 = vadd.f32 %v4198, 1.0
    %v4247 = vadd.f32 %v4199, 1.0
    %v4248 = vadd.f32 %v4200, 1.0
    %v4249 = vadd.f32 %v4201, 1.0
    %v4250 = vadd.f32 %v4202, 1.0
    %v4251 = vadd.f32 %v4203, 1.0
    %v4252 = vadd.f32 %v4204, 1.0
    %v4253 = vadd.f32 %v4205, 1.0
    %v4254 = vadd.f32 %v4206, 1.0
    %v4255 = vadd.f32 %v4207, 1.0
    %v4256 = vadd.f32 %v4208, 1.0
    %v4257 = vadd.f32 %v4209, 1.0
    %v4258 = vadd.f32 %v4210, 1.0
    %v4259 = vmul.f32 %v3875, %v4211
    %v4260 = vmul.f32 %v3876, %v4212
    %v4261 = vmul.f32 %v3877, %v4213
    %v4262 = vmul.f32 %v3878, %v4214
    %v4263 = vmul.f32 %v3879, %v4215
    %v4264 = vmul.f32 %v3880, %v4216
    %v4265 = vmul.f32 %v3881, %v4217
    %v4266 = vmul.f32 %v3882, %v4218
    %v4267 = vmul.f32 %v3883, %v4219
    %v4268 = vmul.f32 %v3884, %v4220
    %v4269 = vmul.f32 %v3885, %v4221
    %v4270 = vmul.f32 %v3886, %v4222
    %v4271 = vmul.f32 %v3887, %v4223
    %v4272 = vmul.f32 %v3888, %v4224
    %v4273 = vmul.f32 %v3889, %v4225
    %v4274 = vmul.f32 %v3890, %v4226
    %v4275 = vmul.f32 %v3891, %v4227
    %v4276 = vmul.f32 %v3892, %v4228
    %v4277 = vmul.f32 %v3893, %v4229
    %v4278 = vmul.f32 %v3894, %v4230
    %v4279 = vmul.f32 %v3895, %v4231
    %v4280 = vmul.f32 %v3896, %v4232
    %v4281 = vmul.f32 %v3897, %v4233
    %v4282 = vmul.f32 %v3898, %v4234
    %v4283 = vmul.f32 %v3899, %v4235
    %v4284 = vmul.f32 %v3900, %v4236
    %v4285 = vmul.f32 %v3901, %v4237
    %v4286 = vmul.f32 %v3902, %v4238
    %v4287 = vmul.f32 %v3903, %v4239
    %v4288 = vmul.f32 %v3904, %v4240
    %v4289 = vmul.f32 %v3905, %v4241
    %v4290 = vmul.f32 %v3906, %v4242
    %v4291 = vmul.f32 %v3907, %v4243
    %v4292 = vmul.f32 %v3908, %v4244
    %v4293 = vmul.f32 %v3909, %v4245
    %v4294 = vmul.f32 %v3910, %v4246
    %v4295 = vmul.f32 %v3911, %v4247
    %v4296 = vmul.f32 %v3912, %v4248
    %v4297 = vmul.f32 %v3913, %v4249
    %v4298 = vmul.f32 %v3914, %v4250
    %v4299 = vmul.f32 %v3915, %v4251
    %v4300 = vmul.f32 %v3916, %v4252
    %v4301 = vmul.f32 %v3917, %v4253
    %v4302 = vmul.f32 %v3918, %v4254
    %v4303 = vmul.f32 %v3919, %v4255
    %v4304 = vmul.f32 %v3920, %v4256
    %v4305 = vmul.f32 %v3921, %v4257
    %v4306 = vmul.f32 %v3922, %v4258
    %v4307 = vpack.c.bf16 %v4263, %v4259
    %v4308 = vpack.c.bf16 %v4264, %v4260
    %v4309 = vpack.c.bf16 %v4265, %v4261
    %v4310 = vpack.c.bf16 %v4266, %v4262
    %v4311 = vpack.c.bf16 %v4271, %v4267
    %v4312 = vpack.c.bf16 %v4272, %v4268
    %v4313 = vpack.c.bf16 %v4273, %v4269
    %v4314 = vpack.c.bf16 %v4274, %v4270
    %v4315 = vpack.c.bf16 %v4279, %v4275
    %v4316 = vpack.c.bf16 %v4280, %v4276
    %v4317 = vpack.c.bf16 %v4281, %v4277
    %v4318 = vpack.c.bf16 %v4282, %v4278
    %v4319 = vpack.c.bf16 %v4287, %v4283
    %v4320 = vpack.c.bf16 %v4288, %v4284
    %v4321 = vpack.c.bf16 %v4289, %v4285
    %v4322 = vpack.c.bf16 %v4290, %v4286
    %v4323 = vpack.c.bf16 %v4295, %v4291
    %v4324 = vpack.c.bf16 %v4296, %v4292
    %v4325 = vpack.c.bf16 %v4297, %v4293
    %v4326 = vpack.c.bf16 %v4298, %v4294
    %v4327 = vpack.c.bf16 %v4303, %v4299
    %v4328 = vpack.c.bf16 %v4304, %v4300
    %v4329 = vpack.c.bf16 %v4305, %v4301
    %v4330 = vpack.c.bf16 %v4306, %v4302
    %v4331 = vld [vmem:[#allocation16] sm:$0xf]
    %v4332 = vld [vmem:[#allocation16 + $0x4] sm:$0xf]
    %v4333 = vld [vmem:[#allocation16 + $0x8] sm:$0xf]
    %v4334 = vld [vmem:[#allocation16 + $0xc] sm:$0xf]
    %v4335 = vld [vmem:[#allocation16 + $0x10] sm:$0xf]
    %v4336 = vld [vmem:[#allocation16 + $0x14] sm:$0xf]
    %v4337 = vld [vmem:[#allocation16 + $0x18] sm:$0xf]
    %v4338 = vld [vmem:[#allocation16 + $0x1c] sm:$0xf]
    %v4339 = vld [vmem:[#allocation16 + $0x20] sm:$0xf]
    %v4340 = vld [vmem:[#allocation16 + $0x24] sm:$0xf]
    %v4341 = vld [vmem:[#allocation16 + $0x28] sm:$0xf]
    %v4342 = vld [vmem:[#allocation16 + $0x2c] sm:$0xf]
    %v4343 = vld [vmem:[#allocation16 + $0x30] sm:$0xf]
    %v4344 = vld [vmem:[#allocation16 + $0x34] sm:$0xf]
    %v4345 = vld [vmem:[#allocation16 + $0x38] sm:$0xf]
    %v4346 = vld [vmem:[#allocation16 + $0x3c] sm:$0xf]
    %v4347 = vld [vmem:[#allocation16 + $0x40] sm:$0xf]
    %v4348 = vld [vmem:[#allocation16 + $0x44] sm:$0xf]
    %v4349 = vld [vmem:[#allocation16 + $0x48] sm:$0xf]
    %v4350 = vld [vmem:[#allocation16 + $0x4c] sm:$0xf]
    %v4351 = vld [vmem:[#allocation16 + $0x50] sm:$0xf]
    %v4352 = vld [vmem:[#allocation16 + $0x54] sm:$0xf]
    %v4353 = vld [vmem:[#allocation16 + $0x58] sm:$0xf]
    %v4354 = vld [vmem:[#allocation16 + $0x5c] sm:$0xf]
    %v4355 = vld [vmem:[#allocation16 + $0x60] sm:$0xf]
    %v4356 = vld [vmem:[#allocation16 + $0x64] sm:$0xf]
    %v4357 = vld [vmem:[#allocation16 + $0x68] sm:$0xf]
    %v4358 = vld [vmem:[#allocation16 + $0x6c] sm:$0xf]
    %v4359 = vld [vmem:[#allocation16 + $0x70] sm:$0xf]
    %v4360 = vld [vmem:[#allocation16 + $0x74] sm:$0xf]
    %v4361 = vld [vmem:[#allocation16 + $0x78] sm:$0xf]
    %v4362 = vld [vmem:[#allocation16 + $0x7c] sm:$0xf]
    %v4363 = vld [vmem:[#allocation16 + $0x80] sm:$0xf]
    %v4364 = vld [vmem:[#allocation16 + $0x84] sm:$0xf]
    %v4365 = vld [vmem:[#allocation16 + $0x88] sm:$0xf]
    %v4366 = vld [vmem:[#allocation16 + $0x8c] sm:$0xf]
    %v4367 = vld [vmem:[#allocation16 + $0x90] sm:$0xf]
    %v4368 = vld [vmem:[#allocation16 + $0x94] sm:$0xf]
    %v4369 = vld [vmem:[#allocation16 + $0x98] sm:$0xf]
    %v4370 = vld [vmem:[#allocation16 + $0x9c] sm:$0xf]
    %v4371 = vld [vmem:[#allocation16 + $0xa0] sm:$0xf]
    %v4372 = vld [vmem:[#allocation16 + $0xa4] sm:$0xf]
    %v4373 = vld [vmem:[#allocation16 + $0xa8] sm:$0xf]
    %v4374 = vld [vmem:[#allocation16 + $0xac] sm:$0xf]
    %v4375 = vld [vmem:[#allocation16 + $0xb0] sm:$0xf]
    %v4376 = vld [vmem:[#allocation16 + $0xb4] sm:$0xf]
    %v4377 = vld [vmem:[#allocation16 + $0xb8] sm:$0xf]
    %v4378 = vld [vmem:[#allocation16 + $0xbc] sm:$0xf]
    %v4379 = vld [vmem:[#allocation16 + $0xc0] sm:$0xf]
    %v4380 = vld [vmem:[#allocation16 + $0xc4] sm:$0xf]
    %v4381 = vld [vmem:[#allocation16 + $0xc8] sm:$0xf]
    %v4382 = vld [vmem:[#allocation16 + $0xcc] sm:$0xf]
    %v4383 = vld [vmem:[#allocation16 + $0xd0] sm:$0xf]
    %v4384 = vld [vmem:[#allocation16 + $0xd4] sm:$0xf]
    %v4385 = vld [vmem:[#allocation16 + $0xd8] sm:$0xf]
    %v4386 = vld [vmem:[#allocation16 + $0xdc] sm:$0xf]
    %v4387 = vld [vmem:[#allocation16 + $0xe0] sm:$0xf]
    %v4388 = vld [vmem:[#allocation16 + $0xe4] sm:$0xf]
    %v4389 = vld [vmem:[#allocation16 + $0xe8] sm:$0xf]
    %v4390 = vld [vmem:[#allocation16 + $0xec] sm:$0xf]
    %v4391 = vld [vmem:[#allocation16 + $0xf0] sm:$0xf]
    %v4392 = vld [vmem:[#allocation16 + $0xf4] sm:$0xf]
    %v4393 = vld [vmem:[#allocation16 + $0xf8] sm:$0xf]
    %v4394 = vld [vmem:[#allocation16 + $0xfc] sm:$0xf]
    %v4395 = vld [vmem:[#allocation18] sm:$0x1]
    %v4397 = vperm.slane %v4395, 0
    %v4463 = vunpack.c.l.b16 %v4331
    %v4464 = vunpack.c.l.b16 %v4332
    %v4465 = vunpack.c.l.b16 %v4333
    %v4466 = vunpack.c.l.b16 %v4334
    %v4467 = vunpack.c.l.b16 %v4335
    %v4468 = vunpack.c.l.b16 %v4336
    %v4469 = vunpack.c.l.b16 %v4337
    %v4470 = vunpack.c.l.b16 %v4338
    %v4471 = vunpack.c.l.b16 %v4339
    %v4472 = vunpack.c.l.b16 %v4340
    %v4473 = vunpack.c.l.b16 %v4341
    %v4474 = vunpack.c.l.b16 %v4342
    %v4475 = vunpack.c.l.b16 %v4343
    %v4476 = vunpack.c.l.b16 %v4344
    %v4477 = vunpack.c.l.b16 %v4345
    %v4478 = vunpack.c.l.b16 %v4346
    %v4479 = vunpack.c.l.b16 %v4347
    %v4480 = vunpack.c.l.b16 %v4348
    %v4481 = vunpack.c.l.b16 %v4349
    %v4482 = vunpack.c.l.b16 %v4350
    %v4483 = vunpack.c.l.b16 %v4351
    %v4484 = vunpack.c.l.b16 %v4352
    %v4485 = vunpack.c.l.b16 %v4353
    %v4486 = vunpack.c.l.b16 %v4354
    %v4487 = vunpack.c.l.b16 %v4355
    %v4488 = vunpack.c.l.b16 %v4356
    %v4489 = vunpack.c.l.b16 %v4357
    %v4490 = vunpack.c.l.b16 %v4358
    %v4491 = vunpack.c.l.b16 %v4359
    %v4492 = vunpack.c.l.b16 %v4360
    %v4493 = vunpack.c.l.b16 %v4361
    %v4494 = vunpack.c.l.b16 %v4362
    %v4495 = vunpack.c.l.b16 %v4363
    %v4496 = vunpack.c.l.b16 %v4364
    %v4497 = vunpack.c.l.b16 %v4365
    %v4498 = vunpack.c.l.b16 %v4366
    %v4499 = vunpack.c.l.b16 %v4367
    %v4500 = vunpack.c.l.b16 %v4368
    %v4501 = vunpack.c.l.b16 %v4369
    %v4502 = vunpack.c.l.b16 %v4370
    %v4503 = vunpack.c.l.b16 %v4371
    %v4504 = vunpack.c.l.b16 %v4372
    %v4505 = vunpack.c.l.b16 %v4373
    %v4506 = vunpack.c.l.b16 %v4374
    %v4507 = vunpack.c.l.b16 %v4375
    %v4508 = vunpack.c.l.b16 %v4376
    %v4509 = vunpack.c.l.b16 %v4377
    %v4510 = vunpack.c.l.b16 %v4378
    %v4511 = vunpack.c.l.b16 %v4379
    %v4512 = vunpack.c.l.b16 %v4380
    %v4513 = vunpack.c.l.b16 %v4381
    %v4514 = vunpack.c.l.b16 %v4382
    %v4515 = vunpack.c.l.b16 %v4383
    %v4516 = vunpack.c.l.b16 %v4384
    %v4517 = vunpack.c.l.b16 %v4385
    %v4518 = vunpack.c.l.b16 %v4386
    %v4519 = vunpack.c.l.b16 %v4387
    %v4520 = vunpack.c.l.b16 %v4388
    %v4521 = vunpack.c.l.b16 %v4389
    %v4522 = vunpack.c.l.b16 %v4390
    %v4523 = vunpack.c.l.b16 %v4391
    %v4524 = vunpack.c.l.b16 %v4392
    %v4525 = vunpack.c.l.b16 %v4393
    %v4526 = vunpack.c.l.b16 %v4394
    %v4527 = vpack.c.b16 %v4464, %v4463
    %v4528 = vpack.c.b16 %v4466, %v4465
    %v4529 = vpack.c.b16 %v4468, %v4467
    %v4530 = vpack.c.b16 %v4470, %v4469
    %v4531 = vpack.c.b16 %v4472, %v4471
    %v4532 = vpack.c.b16 %v4474, %v4473
    %v4533 = vpack.c.b16 %v4476, %v4475
    %v4534 = vpack.c.b16 %v4478, %v4477
    %v4535 = vpack.c.b16 %v4480, %v4479
    %v4536 = vpack.c.b16 %v4482, %v4481
    %v4537 = vpack.c.b16 %v4484, %v4483
    %v4538 = vpack.c.b16 %v4486, %v4485
    %v4539 = vpack.c.b16 %v4488, %v4487
    %v4540 = vpack.c.b16 %v4490, %v4489
    %v4541 = vpack.c.b16 %v4492, %v4491
    %v4542 = vpack.c.b16 %v4494, %v4493
    %v4543 = vpack.c.b16 %v4496, %v4495
    %v4544 = vpack.c.b16 %v4498, %v4497
    %v4545 = vpack.c.b16 %v4500, %v4499
    %v4546 = vpack.c.b16 %v4502, %v4501
    %v4547 = vpack.c.b16 %v4504, %v4503
    %v4548 = vpack.c.b16 %v4506, %v4505
    %v4549 = vpack.c.b16 %v4508, %v4507
    %v4550 = vpack.c.b16 %v4510, %v4509
    %v4551 = vpack.c.b16 %v4512, %v4511
    %v4552 = vpack.c.b16 %v4514, %v4513
    %v4553 = vpack.c.b16 %v4516, %v4515
    %v4554 = vpack.c.b16 %v4518, %v4517
    %v4555 = vpack.c.b16 %v4520, %v4519
    %v4556 = vpack.c.b16 %v4522, %v4521
    %v4557 = vpack.c.b16 %v4524, %v4523
    %v4558 = vpack.c.b16 %v4526, %v4525
    %4591 = vmatpush.bf16.msra.mxu0 %v4534
    %4592 = vmatpush.bf16.msra.mxu0 %v4533
    %4593 = vmatpush.bf16.msra.mxu0 %v4532
    %4594 = vmatpush.bf16.msra.mxu0 %v4531
    %4595 = vmatpush.bf16.msra.mxu0 %v4530
    %4596 = vmatpush.bf16.msra.mxu0 %v4529
    %4597 = vmatpush.bf16.msra.mxu0 %v4528
    %4598 = vmatpush.bf16.msra.mxu0 %v4527
    %4599 = vmatmul.bf16.gmra.mxu0 %v4307
    %v4600 = vpop.f32.mrf.mxu0
    %v4601 = vadd.f32 %v4397, %v4600
    %v4602 = vpop.f32.mrf.mxu0
    %v4603 = vadd.f32 %v4397, %v4602
    %4604 = vmatmul.bf16.gmra.mxu0 %v4311
    %v4605 = vpop.f32.mrf.mxu0
    %v4606 = vadd.f32 %v4397, %v4605
    %v4607 = vpop.f32.mrf.mxu0
    %v4608 = vadd.f32 %v4397, %v4607
    %4609 = vmatmul.bf16.gmra.mxu0 %v4315
    %v4610 = vpop.f32.mrf.mxu0
    %v4611 = vadd.f32 %v4397, %v4610
    %v4612 = vpop.f32.mrf.mxu0
    %v4613 = vadd.f32 %v4397, %v4612
    %4614 = vmatmul.bf16.gmra.mxu0 %v4319
    %v4615 = vpop.f32.mrf.mxu0
    %v4616 = vadd.f32 %v4397, %v4615
    %v4617 = vpop.f32.mrf.mxu0
    %v4618 = vadd.f32 %v4397, %v4617
    %4619 = vmatmul.bf16.gmra.mxu0 %v4323
    %v4620 = vpop.f32.mrf.mxu0
    %v4621 = vadd.f32 %v4397, %v4620
    %v4622 = vpop.f32.mrf.mxu0
    %v4623 = vadd.f32 %v4397, %v4622
    %4624 = vmatmul.bf16.gmra.mxu0 %v4327
    %v4625 = vpop.f32.mrf.mxu0
    %v4626 = vadd.f32 %v4397, %v4625
    %v4627 = vpop.f32.mrf.mxu0
    %v4628 = vadd.f32 %v4397, %v4627
    %4629 = vdwg.mxu0
    %4630 = vmatpush.bf16.msra.mxu0 %v4542
    %4631 = vmatpush.bf16.msra.mxu0 %v4541
    %4632 = vmatpush.bf16.msra.mxu0 %v4540
    %4633 = vmatpush.bf16.msra.mxu0 %v4539
    %4634 = vmatpush.bf16.msra.mxu0 %v4538
    %4635 = vmatpush.bf16.msra.mxu0 %v4537
    %4636 = vmatpush.bf16.msra.mxu0 %v4536
    %4637 = vmatpush.bf16.msra.mxu0 %v4535
    %4638 = vmatmul.bf16.gmra.mxu0 %v4308
    %v4639 = vpop.f32.mrf.mxu0
    %v4640 = vadd.f32 %v4601, %v4639
    %v4641 = vpop.f32.mrf.mxu0
    %v4642 = vadd.f32 %v4603, %v4641
    %4643 = vmatmul.bf16.gmra.mxu0 %v4312
    %v4644 = vpop.f32.mrf.mxu0
    %v4645 = vadd.f32 %v4606, %v4644
    %v4646 = vpop.f32.mrf.mxu0
    %v4647 = vadd.f32 %v4608, %v4646
    %4648 = vmatmul.bf16.gmra.mxu0 %v4316
    %v4649 = vpop.f32.mrf.mxu0
    %v4650 = vadd.f32 %v4611, %v4649
    %v4651 = vpop.f32.mrf.mxu0
    %v4652 = vadd.f32 %v4613, %v4651
    %4653 = vmatmul.bf16.gmra.mxu0 %v4320
    %v4654 = vpop.f32.mrf.mxu0
    %v4655 = vadd.f32 %v4616, %v4654
    %v4656 = vpop.f32.mrf.mxu0
    %v4657 = vadd.f32 %v4618, %v4656
    %4658 = vmatmul.bf16.gmra.mxu0 %v4324
    %v4659 = vpop.f32.mrf.mxu0
    %v4660 = vadd.f32 %v4621, %v4659
    %v4661 = vpop.f32.mrf.mxu0
    %v4662 = vadd.f32 %v4623, %v4661
    %4663 = vmatmul.bf16.gmra.mxu0 %v4328
    %v4664 = vpop.f32.mrf.mxu0
    %v4665 = vadd.f32 %v4626, %v4664
    %v4666 = vpop.f32.mrf.mxu0
    %v4667 = vadd.f32 %v4628, %v4666
    %4668 = vdwg.mxu0
    %4669 = vmatpush.bf16.msra.mxu0 %v4550
    %4670 = vmatpush.bf16.msra.mxu0 %v4549
    %4671 = vmatpush.bf16.msra.mxu0 %v4548
    %4672 = vmatpush.bf16.msra.mxu0 %v4547
    %4673 = vmatpush.bf16.msra.mxu0 %v4546
    %4674 = vmatpush.bf16.msra.mxu0 %v4545
    %4675 = vmatpush.bf16.msra.mxu0 %v4544
    %4676 = vmatpush.bf16.msra.mxu0 %v4543
    %4677 = vmatmul.bf16.gmra.mxu0 %v4309
    %v4678 = vpop.f32.mrf.mxu0
    %v4679 = vadd.f32 %v4640, %v4678
    %v4680 = vpop.f32.mrf.mxu0
    %v4681 = vadd.f32 %v4642, %v4680
    %4682 = vmatmul.bf16.gmra.mxu0 %v4313
    %v4683 = vpop.f32.mrf.mxu0
    %v4684 = vadd.f32 %v4645, %v4683
    %v4685 = vpop.f32.mrf.mxu0
    %v4686 = vadd.f32 %v4647, %v4685
    %4687 = vmatmul.bf16.gmra.mxu0 %v4317
    %v4688 = vpop.f32.mrf.mxu0
    %v4689 = vadd.f32 %v4650, %v4688
    %v4690 = vpop.f32.mrf.mxu0
    %v4691 = vadd.f32 %v4652, %v4690
    %4692 = vmatmul.bf16.gmra.mxu0 %v4321
    %v4693 = vpop.f32.mrf.mxu0
    %v4694 = vadd.f32 %v4655, %v4693
    %v4695 = vpop.f32.mrf.mxu0
    %v4696 = vadd.f32 %v4657, %v4695
    %4697 = vmatmul.bf16.gmra.mxu0 %v4325
    %v4698 = vpop.f32.mrf.mxu0
    %v4699 = vadd.f32 %v4660, %v4698
    %v4700 = vpop.f32.mrf.mxu0
    %v4701 = vadd.f32 %v4662, %v4700
    %4702 = vmatmul.bf16.gmra.mxu0 %v4329
    %v4703 = vpop.f32.mrf.mxu0
    %v4704 = vadd.f32 %v4665, %v4703
    %v4705 = vpop.f32.mrf.mxu0
    %v4706 = vadd.f32 %v4667, %v4705
    %4707 = vdwg.mxu0
    %4708 = vmatpush.bf16.msra.mxu0 %v4558
    %4709 = vmatpush.bf16.msra.mxu0 %v4557
    %4710 = vmatpush.bf16.msra.mxu0 %v4556
    %4711 = vmatpush.bf16.msra.mxu0 %v4555
    %4712 = vmatpush.bf16.msra.mxu0 %v4554
    %4713 = vmatpush.bf16.msra.mxu0 %v4553
    %4714 = vmatpush.bf16.msra.mxu0 %v4552
    %4715 = vmatpush.bf16.msra.mxu0 %v4551
    %4716 = vmatmul.bf16.gmra.mxu0 %v4310
    %v4717 = vpop.f32.mrf.mxu0
    %v4718 = vadd.f32 %v4679, %v4717
    %v4719 = vpop.f32.mrf.mxu0
    %v4720 = vadd.f32 %v4681, %v4719
    %4721 = vmatmul.bf16.gmra.mxu0 %v4314
    %v4722 = vpop.f32.mrf.mxu0
    %v4723 = vadd.f32 %v4684, %v4722
    %v4724 = vpop.f32.mrf.mxu0
    %v4725 = vadd.f32 %v4686, %v4724
    %4726 = vmatmul.bf16.gmra.mxu0 %v4318
    %v4727 = vpop.f32.mrf.mxu0
    %v4728 = vadd.f32 %v4689, %v4727
    %v4729 = vpop.f32.mrf.mxu0
    %v4730 = vadd.f32 %v4691, %v4729
    %4731 = vmatmul.bf16.gmra.mxu0 %v4322
    %v4732 = vpop.f32.mrf.mxu0
    %v4733 = vadd.f32 %v4694, %v4732
    %v4734 = vpop.f32.mrf.mxu0
    %v4735 = vadd.f32 %v4696, %v4734
    %4736 = vmatmul.bf16.gmra.mxu0 %v4326
    %v4737 = vpop.f32.mrf.mxu0
    %v4738 = vadd.f32 %v4699, %v4737
    %v4739 = vpop.f32.mrf.mxu0
    %v4740 = vadd.f32 %v4701, %v4739
    %4741 = vmatmul.bf16.gmra.mxu0 %v4330
    %v4742 = vpop.f32.mrf.mxu0
    %v4743 = vadd.f32 %v4704, %v4742
    %v4744 = vpop.f32.mrf.mxu0
    %v4745 = vadd.f32 %v4706, %v4744
    %4746 = vdwg.mxu0
    %v4747 = vadd.f32 %v3227, %v4718
    %v4748 = vadd.f32 %v3228, %v4720
    %v4749 = vadd.f32 %v3229, %v4723
    %v4750 = vadd.f32 %v3230, %v4725
    %v4751 = vadd.f32 %v3231, %v4728
    %v4752 = vadd.f32 %v3232, %v4730
    %v4753 = vadd.f32 %v3233, %v4733
    %v4754 = vadd.f32 %v3234, %v4735
    %v4755 = vadd.f32 %v3235, %v4738
    %v4756 = vadd.f32 %v3236, %v4740
    %v4757 = vadd.f32 %v3237, %v4743
    %v4758 = vadd.f32 %v3238, %v4745
    %v4759 = vld [vmem:[%s37] sm:$0x1]
    %v4760 = vld [vmem:[#allocation19] sm:$0x1]
    %4761 = vadd.xlane.f32.xlu0 %v4747
    %v4762 = vpop.xlane.xlu0 %4761
    %4763 = vadd.xlane.f32.xlu0 %v4748
    %v4764 = vpop.xlane.xlu0 %4763
    %4765 = vadd.xlane.f32.xlu0 %v4749
    %v4766 = vpop.xlane.xlu0 %4765
    %4767 = vadd.xlane.f32.xlu0 %v4750
    %v4768 = vpop.xlane.xlu0 %4767
    %4769 = vadd.xlane.f32.xlu0 %v4751
    %v4770 = vpop.xlane.xlu0 %4769
    %4771 = vadd.xlane.f32.xlu0 %v4752
    %v4772 = vpop.xlane.xlu0 %4771
    %4773 = vadd.xlane.f32.xlu0 %v4753
    %v4774 = vpop.xlane.xlu0 %4773
    %4775 = vadd.xlane.f32.xlu0 %v4754
    %v4776 = vpop.xlane.xlu0 %4775
    %4777 = vadd.xlane.f32.xlu0 %v4755
    %v4778 = vpop.xlane.xlu0 %4777
    %4779 = vadd.xlane.f32.xlu0 %v4756
    %v4780 = vpop.xlane.xlu0 %4779
    %4781 = vadd.xlane.f32.xlu0 %v4757
    %v4782 = vpop.xlane.xlu0 %4781
    %4783 = vadd.xlane.f32.xlu0 %v4758
    %v4784 = vpop.xlane.xlu0 %4783
    %v4785 = vmul.f32 %v4762, %v2654
    %v4786 = vmul.f32 %v4764, %v2654
    %v4787 = vmul.f32 %v4766, %v2654
    %v4788 = vmul.f32 %v4768, %v2654
    %v4789 = vmul.f32 %v4770, %v2654
    %v4790 = vmul.f32 %v4772, %v2654
    %v4791 = vmul.f32 %v4774, %v2654
    %v4792 = vmul.f32 %v4776, %v2654
    %v4793 = vmul.f32 %v4778, %v2654
    %v4794 = vmul.f32 %v4780, %v2654
    %v4795 = vmul.f32 %v4782, %v2654
    %v4796 = vmul.f32 %v4784, %v2654
    %v4797 = vsub.f32 %v4747, %v4785
    %v4798 = vsub.f32 %v4748, %v4786
    %v4799 = vsub.f32 %v4749, %v4787
    %v4800 = vsub.f32 %v4750, %v4788
    %v4801 = vsub.f32 %v4751, %v4789
    %v4802 = vsub.f32 %v4752, %v4790
    %v4803 = vsub.f32 %v4753, %v4791
    %v4804 = vsub.f32 %v4754, %v4792
    %v4805 = vsub.f32 %v4755, %v4793
    %v4806 = vsub.f32 %v4756, %v4794
    %v4807 = vsub.f32 %v4757, %v4795
    %v4808 = vsub.f32 %v4758, %v4796
    %v4809 = vmul.f32 %v4797, %v4797
    %v4810 = vmul.f32 %v4798, %v4798
    %v4811 = vmul.f32 %v4799, %v4799
    %v4812 = vmul.f32 %v4800, %v4800
    %v4813 = vmul.f32 %v4801, %v4801
    %v4814 = vmul.f32 %v4802, %v4802
    %v4815 = vmul.f32 %v4803, %v4803
    %v4816 = vmul.f32 %v4804, %v4804
    %v4817 = vmul.f32 %v4805, %v4805
    %v4818 = vmul.f32 %v4806, %v4806
    %v4819 = vmul.f32 %v4807, %v4807
    %v4820 = vmul.f32 %v4808, %v4808
    %4821 = vadd.xlane.f32.xlu0 %v4809
    %v4822 = vpop.xlane.xlu0 %4821
    %4823 = vadd.xlane.f32.xlu0 %v4810
    %v4824 = vpop.xlane.xlu0 %4823
    %4825 = vadd.xlane.f32.xlu0 %v4811
    %v4826 = vpop.xlane.xlu0 %4825
    %4827 = vadd.xlane.f32.xlu0 %v4812
    %v4828 = vpop.xlane.xlu0 %4827
    %4829 = vadd.xlane.f32.xlu0 %v4813
    %v4830 = vpop.xlane.xlu0 %4829
    %4831 = vadd.xlane.f32.xlu0 %v4814
    %v4832 = vpop.xlane.xlu0 %4831
    %4833 = vadd.xlane.f32.xlu0 %v4815
    %v4834 = vpop.xlane.xlu0 %4833
    %4835 = vadd.xlane.f32.xlu0 %v4816
    %v4836 = vpop.xlane.xlu0 %4835
    %4837 = vadd.xlane.f32.xlu0 %v4817
    %v4838 = vpop.xlane.xlu0 %4837
    %4839 = vadd.xlane.f32.xlu0 %v4818
    %v4840 = vpop.xlane.xlu0 %4839
    %4841 = vadd.xlane.f32.xlu0 %v4819
    %v4842 = vpop.xlane.xlu0 %4841
    %4843 = vadd.xlane.f32.xlu0 %v4820
    %v4844 = vpop.xlane.xlu0 %4843
    %v4845 = vmul.f32 %v4822, %v2654
    %v4846 = vmul.f32 %v4824, %v2654
    %v4847 = vmul.f32 %v4826, %v2654
    %v4848 = vmul.f32 %v4828, %v2654
    %v4849 = vmul.f32 %v4830, %v2654
    %v4850 = vmul.f32 %v4832, %v2654
    %v4851 = vmul.f32 %v4834, %v2654
    %v4852 = vmul.f32 %v4836, %v2654
    %v4853 = vmul.f32 %v4838, %v2654
    %v4854 = vmul.f32 %v4840, %v2654
    %v4855 = vmul.f32 %v4842, %v2654
    %v4856 = vmul.f32 %v4844, %v2654
    %v4857 = vadd.f32 %v4845, 1e-05
    %v4858 = vadd.f32 %v4846, 1e-05
    %v4859 = vadd.f32 %v4847, 1e-05
    %v4860 = vadd.f32 %v4848, 1e-05
    %v4861 = vadd.f32 %v4849, 1e-05
    %v4862 = vadd.f32 %v4850, 1e-05
    %v4863 = vadd.f32 %v4851, 1e-05
    %v4864 = vadd.f32 %v4852, 1e-05
    %v4865 = vadd.f32 %v4853, 1e-05
    %v4866 = vadd.f32 %v4854, 1e-05
    %v4867 = vadd.f32 %v4855, 1e-05
    %v4868 = vadd.f32 %v4856, 1e-05
    %v4869 = vrsqrt.pop %v4857
    %v4870 = vmul.f32 %v4869, %v4857
    %v4871 = vmul.f32 %v4870, %v4869
    %v4872 = vmul.f32 0.5, %v4871
    %v4873 = vsub.f32 1.5, %v4872
    %v4874 = vmul.f32 %v4869, %v4873
    %vm4875 = vweird.f32 %v4857
    %vm4876 = vweird.f32 %v4869
    %vm4877 = vmor %vm4875, %vm4876
    %v4878 = vsel %vm4877, %v4869, %v4874
    %v4879 = vrsqrt.pop %v4858
    %v4880 = vmul.f32 %v4879, %v4858
    %v4881 = vmul.f32 %v4880, %v4879
    %v4882 = vmul.f32 0.5, %v4881
    %v4883 = vsub.f32 1.5, %v4882
    %v4884 = vmul.f32 %v4879, %v4883
    %vm4885 = vweird.f32 %v4858
    %vm4886 = vweird.f32 %v4879
    %vm4887 = vmor %vm4885, %vm4886
    %v4888 = vsel %vm4887, %v4879, %v4884
    %v4889 = vrsqrt.pop %v4859
    %v4890 = vmul.f32 %v4889, %v4859
    %v4891 = vmul.f32 %v4890, %v4889
    %v4892 = vmul.f32 0.5, %v4891
    %v4893 = vsub.f32 1.5, %v4892
    %v4894 = vmul.f32 %v4889, %v4893
    %vm4895 = vweird.f32 %v4859
    %vm4896 = vweird.f32 %v4889
    %vm4897 = vmor %vm4895, %vm4896
    %v4898 = vsel %vm4897, %v4889, %v4894
    %v4899 = vrsqrt.pop %v4860
    %v4900 = vmul.f32 %v4899, %v4860
    %v4901 = vmul.f32 %v4900, %v4899
    %v4902 = vmul.f32 0.5, %v4901
    %v4903 = vsub.f32 1.5, %v4902
    %v4904 = vmul.f32 %v4899, %v4903
    %vm4905 = vweird.f32 %v4860
    %vm4906 = vweird.f32 %v4899
    %vm4907 = vmor %vm4905, %vm4906
    %v4908 = vsel %vm4907, %v4899, %v4904
    %v4909 = vrsqrt.pop %v4861
    %v4910 = vmul.f32 %v4909, %v4861
    %v4911 = vmul.f32 %v4910, %v4909
    %v4912 = vmul.f32 0.5, %v4911
    %v4913 = vsub.f32 1.5, %v4912
    %v4914 = vmul.f32 %v4909, %v4913
    %vm4915 = vweird.f32 %v4861
    %vm4916 = vweird.f32 %v4909
    %vm4917 = vmor %vm4915, %vm4916
    %v4918 = vsel %vm4917, %v4909, %v4914
    %v4919 = vrsqrt.pop %v4862
    %v4920 = vmul.f32 %v4919, %v4862
    %v4921 = vmul.f32 %v4920, %v4919
    %v4922 = vmul.f32 0.5, %v4921
    %v4923 = vsub.f32 1.5, %v4922
    %v4924 = vmul.f32 %v4919, %v4923
    %vm4925 = vweird.f32 %v4862
    %vm4926 = vweird.f32 %v4919
    %vm4927 = vmor %vm4925, %vm4926
    %v4928 = vsel %vm4927, %v4919, %v4924
    %v4929 = vrsqrt.pop %v4863
    %v4930 = vmul.f32 %v4929, %v4863
    %v4931 = vmul.f32 %v4930, %v4929
    %v4932 = vmul.f32 0.5, %v4931
    %v4933 = vsub.f32 1.5, %v4932
    %v4934 = vmul.f32 %v4929, %v4933
    %vm4935 = vweird.f32 %v4863
    %vm4936 = vweird.f32 %v4929
    %vm4937 = vmor %vm4935, %vm4936
    %v4938 = vsel %vm4937, %v4929, %v4934
    %v4939 = vrsqrt.pop %v4864
    %v4940 = vmul.f32 %v4939, %v4864
    %v4941 = vmul.f32 %v4940, %v4939
    %v4942 = vmul.f32 0.5, %v4941
    %v4943 = vsub.f32 1.5, %v4942
    %v4944 = vmul.f32 %v4939, %v4943
    %vm4945 = vweird.f32 %v4864
    %vm4946 = vweird.f32 %v4939
    %vm4947 = vmor %vm4945, %vm4946
    %v4948 = vsel %vm4947, %v4939, %v4944
    %v4949 = vrsqrt.pop %v4865
    %v4950 = vmul.f32 %v4949, %v4865
    %v4951 = vmul.f32 %v4950, %v4949
    %v4952 = vmul.f32 0.5, %v4951
    %v4953 = vsub.f32 1.5, %v4952
    %v4954 = vmul.f32 %v4949, %v4953
    %vm4955 = vweird.f32 %v4865
    %vm4956 = vweird.f32 %v4949
    %vm4957 = vmor %vm4955, %vm4956
    %v4958 = vsel %vm4957, %v4949, %v4954
    %v4959 = vrsqrt.pop %v4866
    %v4960 = vmul.f32 %v4959, %v4866
    %v4961 = vmul.f32 %v4960, %v4959
    %v4962 = vmul.f32 0.5, %v4961
    %v4963 = vsub.f32 1.5, %v4962
    %v4964 = vmul.f32 %v4959, %v4963
    %vm4965 = vweird.f32 %v4866
    %vm4966 = vweird.f32 %v4959
    %vm4967 = vmor %vm4965, %vm4966
    %v4968 = vsel %vm4967, %v4959, %v4964
    %v4969 = vrsqrt.pop %v4867
    %v4970 = vmul.f32 %v4969, %v4867
    %v4971 = vmul.f32 %v4970, %v4969
    %v4972 = vmul.f32 0.5, %v4971
    %v4973 = vsub.f32 1.5, %v4972
    %v4974 = vmul.f32 %v4969, %v4973
    %vm4975 = vweird.f32 %v4867
    %vm4976 = vweird.f32 %v4969
    %vm4977 = vmor %vm4975, %vm4976
    %v4978 = vsel %vm4977, %v4969, %v4974
    %v4979 = vrsqrt.pop %v4868
    %v4980 = vmul.f32 %v4979, %v4868
    %v4981 = vmul.f32 %v4980, %v4979
    %v4982 = vmul.f32 0.5, %v4981
    %v4983 = vsub.f32 1.5, %v4982
    %v4984 = vmul.f32 %v4979, %v4983
    %vm4985 = vweird.f32 %v4868
    %vm4986 = vweird.f32 %v4979
    %vm4987 = vmor %vm4985, %vm4986
    %v4988 = vsel %vm4987, %v4979, %v4984
    %v4989 = vmul.f32 %v4797, %v4878
    %v4990 = vmul.f32 %v4798, %v4888
    %v4991 = vmul.f32 %v4799, %v4898
    %v4992 = vmul.f32 %v4800, %v4908
    %v4993 = vmul.f32 %v4801, %v4918
    %v4994 = vmul.f32 %v4802, %v4928
    %v4995 = vmul.f32 %v4803, %v4938
    %v4996 = vmul.f32 %v4804, %v4948
    %v4997 = vmul.f32 %v4805, %v4958
    %v4998 = vmul.f32 %v4806, %v4968
    %v4999 = vmul.f32 %v4807, %v4978
    %v5000 = vmul.f32 %v4808, %v4988
    %v5002 = vperm.slane %v4759, 0
    %v5004 = vmul.f32 %v4989, %v5002
    %v5005 = vmul.f32 %v4990, %v5002
    %v5006 = vmul.f32 %v4991, %v5002
    %v5007 = vmul.f32 %v4992, %v5002
    %v5008 = vmul.f32 %v4993, %v5002
    %v5009 = vmul.f32 %v4994, %v5002
    %v5010 = vmul.f32 %v4995, %v5002
    %v5011 = vmul.f32 %v4996, %v5002
    %v5012 = vmul.f32 %v4997, %v5002
    %v5013 = vmul.f32 %v4998, %v5002
    %v5014 = vmul.f32 %v4999, %v5002
    %v5015 = vmul.f32 %v5000, %v5002
    %v5017 = vperm.slane %v4760, 0
    %v5019 = vadd.f32 %v5004, %v5017
    %v5020 = vadd.f32 %v5005, %v5017
    %v5021 = vadd.f32 %v5006, %v5017
    %v5022 = vadd.f32 %v5007, %v5017
    %v5023 = vadd.f32 %v5008, %v5017
    %v5024 = vadd.f32 %v5009, %v5017
    %v5025 = vadd.f32 %v5010, %v5017
    %v5026 = vadd.f32 %v5011, %v5017
    %v5027 = vadd.f32 %v5012, %v5017
    %v5028 = vadd.f32 %v5013, %v5017
    %v5029 = vadd.f32 %v5014, %v5017
    %v5030 = vadd.f32 %v5015, %v5017
    %v5031 = vpack.c.bf16 %v5019, %v5019
    %v5032 = vpack.c.bf16 %v5020, %v5020
    %v5033 = vpack.c.bf16 %v5021, %v5021
    %v5034 = vpack.c.bf16 %v5022, %v5022
    %v5035 = vpack.c.bf16 %v5023, %v5023
    %v5036 = vpack.c.bf16 %v5024, %v5024
    %v5037 = vpack.c.bf16 %v5025, %v5025
    %v5038 = vpack.c.bf16 %v5026, %v5026
    %v5039 = vpack.c.bf16 %v5027, %v5027
    %v5040 = vpack.c.bf16 %v5028, %v5028
    %v5041 = vpack.c.bf16 %v5029, %v5029
    %v5042 = vpack.c.bf16 %v5030, %v5030
    %v5043 = vld [vmem:[#allocation21] sm:$0xff]
    %v5044 = vpack.c.bf16 %v5043, %v5043
    %v5045 = vld [vmem:[%s43] sm:$0xff]
    %5047 = vset.pattern.permute.xlu0 0
    %5048 = vperm.xlu0 %5047, %v5045
    %v5049 = vpop.permute.xlu0 %5048
    %v5053 = vunpack.c.l.b16 %v5031
    %v5054 = vunpack.c.l.b16 %v5032
    %v5055 = vpack.c.b16 %v5054, %v5053
    %v5058 = vsel %vm2927, %v5044, 0
    %5060 = vmatpush.bf16.msra.mxu0 0
    %5061 = vmatpush.bf16.msra.mxu0 0
    %5062 = vmatpush.bf16.msra.mxu0 0
    %5063 = vmatpush.bf16.msra.mxu0 0
    %5064 = vmatpush.bf16.msra.mxu0 0
    %5065 = vmatpush.bf16.msra.mxu0 0
    %5066 = vmatpush.bf16.msra.mxu0 0
    %5067 = vmatpush.bf16.msra.mxu0 %v5055
    %5068 = vmatmul.bf16.gmra.mxu0 %v5058
    %v5069 = vpop.f32.mrf.mxu0
    %v5070 = vadd.f32 %v5049, %v5069
    %v5071 = vpop.f32.mrf.mxu0
    %5072 = vdwg.mxu0
    %v5075 = vunpack.c.l.b16 %v5033
    %v5076 = vunpack.c.l.b16 %v5034
    %v5077 = vpack.c.b16 %v5076, %v5075
    %5079 = vmatpush.bf16.msra.mxu0 0
    %5080 = vmatpush.bf16.msra.mxu0 0
    %5081 = vmatpush.bf16.msra.mxu0 0
    %5082 = vmatpush.bf16.msra.mxu0 0
    %5083 = vmatpush.bf16.msra.mxu0 0
    %5084 = vmatpush.bf16.msra.mxu0 0
    %5085 = vmatpush.bf16.msra.mxu0 0
    %5086 = vmatpush.bf16.msra.mxu0 %v5077
    %5087 = vmatmul.bf16.gmra.mxu0 %v5058
    %v5088 = vpop.f32.mrf.mxu0
    %v5089 = vadd.f32 %v5049, %v5088
    %v5090 = vpop.f32.mrf.mxu0
    %5091 = vdwg.mxu0
    %v5094 = vunpack.c.l.b16 %v5035
    %v5095 = vunpack.c.l.b16 %v5036
    %v5096 = vpack.c.b16 %v5095, %v5094
    %5098 = vmatpush.bf16.msra.mxu0 0
    %5099 = vmatpush.bf16.msra.mxu0 0
    %5100 = vmatpush.bf16.msra.mxu0 0
    %5101 = vmatpush.bf16.msra.mxu0 0
    %5102 = vmatpush.bf16.msra.mxu0 0
    %5103 = vmatpush.bf16.msra.mxu0 0
    %5104 = vmatpush.bf16.msra.mxu0 0
    %5105 = vmatpush.bf16.msra.mxu0 %v5096
    %5106 = vmatmul.bf16.gmra.mxu0 %v5058
    %v5107 = vpop.f32.mrf.mxu0
    %v5108 = vadd.f32 %v5049, %v5107
    %v5109 = vpop.f32.mrf.mxu0
    %5110 = vdwg.mxu0
    %v5113 = vunpack.c.l.b16 %v5037
    %v5114 = vunpack.c.l.b16 %v5038
    %v5115 = vpack.c.b16 %v5114, %v5113
    %5117 = vmatpush.bf16.msra.mxu0 0
    %5118 = vmatpush.bf16.msra.mxu0 0
    %5119 = vmatpush.bf16.msra.mxu0 0
    %5120 = vmatpush.bf16.msra.mxu0 0
    %5121 = vmatpush.bf16.msra.mxu0 0
    %5122 = vmatpush.bf16.msra.mxu0 0
    %5123 = vmatpush.bf16.msra.mxu0 0
    %5124 = vmatpush.bf16.msra.mxu0 %v5115
    %5125 = vmatmul.bf16.gmra.mxu0 %v5058
    %v5126 = vpop.f32.mrf.mxu0
    %v5127 = vadd.f32 %v5049, %v5126
    %v5128 = vpop.f32.mrf.mxu0
    %5129 = vdwg.mxu0
    %v5132 = vunpack.c.l.b16 %v5039
    %v5133 = vunpack.c.l.b16 %v5040
    %v5134 = vpack.c.b16 %v5133, %v5132
    %5136 = vmatpush.bf16.msra.mxu0 0
    %5137 = vmatpush.bf16.msra.mxu0 0
    %5138 = vmatpush.bf16.msra.mxu0 0
    %5139 = vmatpush.bf16.msra.mxu0 0
    %5140 = vmatpush.bf16.msra.mxu0 0
    %5141 = vmatpush.bf16.msra.mxu0 0
    %5142 = vmatpush.bf16.msra.mxu0 0
    %5143 = vmatpush.bf16.msra.mxu0 %v5134
    %5144 = vmatmul.bf16.gmra.mxu0 %v5058
    %v5145 = vpop.f32.mrf.mxu0
    %v5146 = vadd.f32 %v5049, %v5145
    %v5147 = vpop.f32.mrf.mxu0
    %5148 = vdwg.mxu0
    %v5151 = vunpack.c.l.b16 %v5041
    %v5152 = vunpack.c.l.b16 %v5042
    %v5153 = vpack.c.b16 %v5152, %v5151
    %5155 = vmatpush.bf16.msra.mxu0 0
    %5156 = vmatpush.bf16.msra.mxu0 0
    %5157 = vmatpush.bf16.msra.mxu0 0
    %5158 = vmatpush.bf16.msra.mxu0 0
    %5159 = vmatpush.bf16.msra.mxu0 0
    %5160 = vmatpush.bf16.msra.mxu0 0
    %5161 = vmatpush.bf16.msra.mxu0 0
    %5162 = vmatpush.bf16.msra.mxu0 %v5153
    %5163 = vmatmul.bf16.gmra.mxu0 %v5058
    %v5164 = vpop.f32.mrf.mxu0
    %v5165 = vadd.f32 %v5049, %v5164
    %v5166 = vpop.f32.mrf.mxu0
    %5167 = vdwg.mxu0
    %v5168 = vmul.f32 %v5070, 0.5
    %v5169 = vmul.f32 %v5089, 0.5
    %v5170 = vmul.f32 %v5108, 0.5
    %v5171 = vmul.f32 %v5127, 0.5
    %v5172 = vmul.f32 %v5146, 0.5
    %v5173 = vmul.f32 %v5165, 0.5
    %v5174 = vmul.f32 %v5070, %v5070
    %v5175 = vmul.f32 %v5089, %v5089
    %v5176 = vmul.f32 %v5108, %v5108
    %v5177 = vmul.f32 %v5127, %v5127
    %v5178 = vmul.f32 %v5146, %v5146
    %v5179 = vmul.f32 %v5165, %v5165
    %v5180 = vmul.f32 %v5174, %v5070
    %v5181 = vmul.f32 %v5175, %v5089
    %v5182 = vmul.f32 %v5176, %v5108
    %v5183 = vmul.f32 %v5177, %v5127
    %v5184 = vmul.f32 %v5178, %v5146
    %v5185 = vmul.f32 %v5179, %v5165
    %v5186 = vmul.f32 %v5180, 0.044715
    %v5187 = vmul.f32 %v5181, 0.044715
    %v5188 = vmul.f32 %v5182, 0.044715
    %v5189 = vmul.f32 %v5183, 0.044715
    %v5190 = vmul.f32 %v5184, 0.044715
    %v5191 = vmul.f32 %v5185, 0.044715
    %v5192 = vadd.f32 %v5070, %v5186
    %v5193 = vadd.f32 %v5089, %v5187
    %v5194 = vadd.f32 %v5108, %v5188
    %v5195 = vadd.f32 %v5127, %v5189
    %v5196 = vadd.f32 %v5146, %v5190
    %v5197 = vadd.f32 %v5165, %v5191
    %v5198 = vmul.f32 %v5192, 0.7978846
    %v5199 = vmul.f32 %v5193, 0.7978846
    %v5200 = vmul.f32 %v5194, 0.7978846
    %v5201 = vmul.f32 %v5195, 0.7978846
    %v5202 = vmul.f32 %v5196, 0.7978846
    %v5203 = vmul.f32 %v5197, 0.7978846
    %v5204 = vtanh.pop %v5198
    %v5205 = vtanh.pop %v5199
    %v5206 = vtanh.pop %v5200
    %v5207 = vtanh.pop %v5201
    %v5208 = vtanh.pop %v5202
    %v5209 = vtanh.pop %v5203
    %v5210 = vadd.f32 %v5204, 1.0
    %v5211 = vadd.f32 %v5205, 1.0
    %v5212 = vadd.f32 %v5206, 1.0
    %v5213 = vadd.f32 %v5207, 1.0
    %v5214 = vadd.f32 %v5208, 1.0
    %v5215 = vadd.f32 %v5209, 1.0
    %v5216 = vmul.f32 %v5168, %v5210
    %v5217 = vmul.f32 %v5169, %v5211
    %v5218 = vmul.f32 %v5170, %v5212
    %v5219 = vmul.f32 %v5171, %v5213
    %v5220 = vmul.f32 %v5172, %v5214
    %v5221 = vmul.f32 %v5173, %v5215
    %v5222 = vld [vmem:[%s45] sm:$0xff]
    %v5223 = vld [vmem:[%s45 + $0x8] sm:$0xff]
    %v5224 = vpack.c.bf16 %v5222, %v5222
    %v5225 = vpack.c.bf16 %v5223, %v5223
    %v5226 = vpack.c.bf16 %v5216, %v5216
    %v5227 = vpack.c.bf16 %v5217, %v5217
    %v5228 = vpack.c.bf16 %v5218, %v5218
    %v5229 = vpack.c.bf16 %v5219, %v5219
    %v5230 = vpack.c.bf16 %v5220, %v5220
    %v5231 = vpack.c.bf16 %v5221, %v5221
    %v5232 = vld [vmem:[%s47] sm:$0xff]
    %v5233 = vld [vmem:[%s47 + $0x8] sm:$0xff]
    %5235 = vset.pattern.permute.xlu0 0
    %5236 = vperm.xlu0 %5235, %v5232
    %v5237 = vpop.permute.xlu0 %5236
    %5240 = vset.pattern.permute.xlu0 0
    %5241 = vperm.xlu0 %5240, %v5233
    %v5242 = vpop.permute.xlu0 %5241
    %v5246 = vunpack.c.l.b16 %v5224
    %v5247 = vunpack.c.l.b16 %v5225
    %v5248 = vpack.c.b16 %v5247, %v5246
    %v5250 = vsel %vm3120, %v5248, 0
    %v5253 = vsel %vm3124, %v5226, 0
    %5255 = vmatpush.bf16.msra.mxu0 0
    %5256 = vmatpush.bf16.msra.mxu0 0
    %5257 = vmatpush.bf16.msra.mxu0 0
    %5258 = vmatpush.bf16.msra.mxu0 0
    %5259 = vmatpush.bf16.msra.mxu0 0
    %5260 = vmatpush.bf16.msra.mxu0 0
    %5261 = vmatpush.bf16.msra.mxu0 0
    %5262 = vmatpush.bf16.msra.mxu0 %v5253
    %5263 = vmatmul.bf16.gmra.mxu0 %v5250
    %v5264 = vpop.f32.mrf.mxu0
    %v5265 = vadd.f32 %v5237, %v5264
    %v5266 = vpop.f32.mrf.mxu0
    %v5267 = vadd.f32 %v5242, %v5266
    %5268 = vdwg.mxu0
    %v5270 = vsel %vm3124, %v5227, 0
    %5272 = vmatpush.bf16.msra.mxu0 0
    %5273 = vmatpush.bf16.msra.mxu0 0
    %5274 = vmatpush.bf16.msra.mxu0 0
    %5275 = vmatpush.bf16.msra.mxu0 0
    %5276 = vmatpush.bf16.msra.mxu0 0
    %5277 = vmatpush.bf16.msra.mxu0 0
    %5278 = vmatpush.bf16.msra.mxu0 0
    %5279 = vmatpush.bf16.msra.mxu0 %v5270
    %5280 = vmatmul.bf16.gmra.mxu0 %v5250
    %v5281 = vpop.f32.mrf.mxu0
    %v5282 = vadd.f32 %v5237, %v5281
    %v5283 = vpop.f32.mrf.mxu0
    %v5284 = vadd.f32 %v5242, %v5283
    %5285 = vdwg.mxu0
    %v5287 = vsel %vm3124, %v5228, 0
    %5289 = vmatpush.bf16.msra.mxu0 0
    %5290 = vmatpush.bf16.msra.mxu0 0
    %5291 = vmatpush.bf16.msra.mxu0 0
    %5292 = vmatpush.bf16.msra.mxu0 0
    %5293 = vmatpush.bf16.msra.mxu0 0
    %5294 = vmatpush.bf16.msra.mxu0 0
    %5295 = vmatpush.bf16.msra.mxu0 0
    %5296 = vmatpush.bf16.msra.mxu0 %v5287
    %5297 = vmatmul.bf16.gmra.mxu0 %v5250
    %v5298 = vpop.f32.mrf.mxu0
    %v5299 = vadd.f32 %v5237, %v5298
    %v5300 = vpop.f32.mrf.mxu0
    %v5301 = vadd.f32 %v5242, %v5300
    %5302 = vdwg.mxu0
    %v5304 = vsel %vm3124, %v5229, 0
    %5306 = vmatpush.bf16.msra.mxu0 0
    %5307 = vmatpush.bf16.msra.mxu0 0
    %5308 = vmatpush.bf16.msra.mxu0 0
    %5309 = vmatpush.bf16.msra.mxu0 0
    %5310 = vmatpush.bf16.msra.mxu0 0
    %5311 = vmatpush.bf16.msra.mxu0 0
    %5312 = vmatpush.bf16.msra.mxu0 0
    %5313 = vmatpush.bf16.msra.mxu0 %v5304
    %5314 = vmatmul.bf16.gmra.mxu0 %v5250
    %v5315 = vpop.f32.mrf.mxu0
    %v5316 = vadd.f32 %v5237, %v5315
    %v5317 = vpop.f32.mrf.mxu0
    %v5318 = vadd.f32 %v5242, %v5317
    %5319 = vdwg.mxu0
    %v5321 = vsel %vm3124, %v5230, 0
    %5323 = vmatpush.bf16.msra.mxu0 0
    %5324 = vmatpush.bf16.msra.mxu0 0
    %5325 = vmatpush.bf16.msra.mxu0 0
    %5326 = vmatpush.bf16.msra.mxu0 0
    %5327 = vmatpush.bf16.msra.mxu0 0
    %5328 = vmatpush.bf16.msra.mxu0 0
    %5329 = vmatpush.bf16.msra.mxu0 0
    %5330 = vmatpush.bf16.msra.mxu0 %v5321
    %5331 = vmatmul.bf16.gmra.mxu0 %v5250
    %v5332 = vpop.f32.mrf.mxu0
    %v5333 = vadd.f32 %v5237, %v5332
    %v5334 = vpop.f32.mrf.mxu0
    %v5335 = vadd.f32 %v5242, %v5334
    %5336 = vdwg.mxu0
    %v5338 = vsel %vm3124, %v5231, 0
    %5340 = vmatpush.bf16.msra.mxu0 0
    %5341 = vmatpush.bf16.msra.mxu0 0
    %5342 = vmatpush.bf16.msra.mxu0 0
    %5343 = vmatpush.bf16.msra.mxu0 0
    %5344 = vmatpush.bf16.msra.mxu0 0
    %5345 = vmatpush.bf16.msra.mxu0 0
    %5346 = vmatpush.bf16.msra.mxu0 0
    %5347 = vmatpush.bf16.msra.mxu0 %v5338
    %5348 = vmatmul.bf16.gmra.mxu0 %v5250
    %v5349 = vpop.f32.mrf.mxu0
    %v5350 = vadd.f32 %v5237, %v5349
    %v5351 = vpop.f32.mrf.mxu0
    %v5352 = vadd.f32 %v5242, %v5351
    %5353 = vdwg.mxu0
    %v5354 = vadd.f32 %v4747, %v5265
    %v5355 = vadd.f32 %v4748, %v5267
    %v5356 = vadd.f32 %v4749, %v5282
    %v5357 = vadd.f32 %v4750, %v5284
    %v5358 = vadd.f32 %v4751, %v5299
    %v5359 = vadd.f32 %v4752, %v5301
    %v5360 = vadd.f32 %v4753, %v5316
    %v5361 = vadd.f32 %v4754, %v5318
    %v5362 = vadd.f32 %v4755, %v5333
    %v5363 = vadd.f32 %v4756, %v5335
    %v5364 = vadd.f32 %v4757, %v5350
    %v5365 = vadd.f32 %v4758, %v5352
    %v5366 = vld [vmem:[#allocation22] sm:$0x1]
    %v5367 = vld [vmem:[#allocation24] sm:$0x1]
    %5368 = vadd.xlane.f32.xlu0 %v5354
    %v5369 = vpop.xlane.xlu0 %5368
    %5370 = vadd.xlane.f32.xlu0 %v5355
    %v5371 = vpop.xlane.xlu0 %5370
    %5372 = vadd.xlane.f32.xlu0 %v5356
    %v5373 = vpop.xlane.xlu0 %5372
    %5374 = vadd.xlane.f32.xlu0 %v5357
    %v5375 = vpop.xlane.xlu0 %5374
    %5376 = vadd.xlane.f32.xlu0 %v5358
    %v5377 = vpop.xlane.xlu0 %5376
    %5378 = vadd.xlane.f32.xlu0 %v5359
    %v5379 = vpop.xlane.xlu0 %5378
    %5380 = vadd.xlane.f32.xlu0 %v5360
    %v5381 = vpop.xlane.xlu0 %5380
    %5382 = vadd.xlane.f32.xlu0 %v5361
    %v5383 = vpop.xlane.xlu0 %5382
    %5384 = vadd.xlane.f32.xlu0 %v5362
    %v5385 = vpop.xlane.xlu0 %5384
    %5386 = vadd.xlane.f32.xlu0 %v5363
    %v5387 = vpop.xlane.xlu0 %5386
    %5388 = vadd.xlane.f32.xlu0 %v5364
    %v5389 = vpop.xlane.xlu0 %5388
    %5390 = vadd.xlane.f32.xlu0 %v5365
    %v5391 = vpop.xlane.xlu0 %5390
    %v5392 = vmul.f32 %v5369, %v2654
    %v5393 = vmul.f32 %v5371, %v2654
    %v5394 = vmul.f32 %v5373, %v2654
    %v5395 = vmul.f32 %v5375, %v2654
    %v5396 = vmul.f32 %v5377, %v2654
    %v5397 = vmul.f32 %v5379, %v2654
    %v5398 = vmul.f32 %v5381, %v2654
    %v5399 = vmul.f32 %v5383, %v2654
    %v5400 = vmul.f32 %v5385, %v2654
    %v5401 = vmul.f32 %v5387, %v2654
    %v5402 = vmul.f32 %v5389, %v2654
    %v5403 = vmul.f32 %v5391, %v2654
    %v5404 = vsub.f32 %v5354, %v5392
    %v5405 = vsub.f32 %v5355, %v5393
    %v5406 = vsub.f32 %v5356, %v5394
    %v5407 = vsub.f32 %v5357, %v5395
    %v5408 = vsub.f32 %v5358, %v5396
    %v5409 = vsub.f32 %v5359, %v5397
    %v5410 = vsub.f32 %v5360, %v5398
    %v5411 = vsub.f32 %v5361, %v5399
    %v5412 = vsub.f32 %v5362, %v5400
    %v5413 = vsub.f32 %v5363, %v5401
    %v5414 = vsub.f32 %v5364, %v5402
    %v5415 = vsub.f32 %v5365, %v5403
    %v5416 = vmul.f32 %v5404, %v5404
    %v5417 = vmul.f32 %v5405, %v5405
    %v5418 = vmul.f32 %v5406, %v5406
    %v5419 = vmul.f32 %v5407, %v5407
    %v5420 = vmul.f32 %v5408, %v5408
    %v5421 = vmul.f32 %v5409, %v5409
    %v5422 = vmul.f32 %v5410, %v5410
    %v5423 = vmul.f32 %v5411, %v5411
    %v5424 = vmul.f32 %v5412, %v5412
    %v5425 = vmul.f32 %v5413, %v5413
    %v5426 = vmul.f32 %v5414, %v5414
    %v5427 = vmul.f32 %v5415, %v5415
    %5428 = vadd.xlane.f32.xlu0 %v5416
    %v5429 = vpop.xlane.xlu0 %5428
    %5430 = vadd.xlane.f32.xlu0 %v5417
    %v5431 = vpop.xlane.xlu0 %5430
    %5432 = vadd.xlane.f32.xlu0 %v5418
    %v5433 = vpop.xlane.xlu0 %5432
    %5434 = vadd.xlane.f32.xlu0 %v5419
    %v5435 = vpop.xlane.xlu0 %5434
    %5436 = vadd.xlane.f32.xlu0 %v5420
    %v5437 = vpop.xlane.xlu0 %5436
    %5438 = vadd.xlane.f32.xlu0 %v5421
    %v5439 = vpop.xlane.xlu0 %5438
    %5440 = vadd.xlane.f32.xlu0 %v5422
    %v5441 = vpop.xlane.xlu0 %5440
    %5442 = vadd.xlane.f32.xlu0 %v5423
    %v5443 = vpop.xlane.xlu0 %5442
    %5444 = vadd.xlane.f32.xlu0 %v5424
    %v5445 = vpop.xlane.xlu0 %5444
    %5446 = vadd.xlane.f32.xlu0 %v5425
    %v5447 = vpop.xlane.xlu0 %5446
    %5448 = vadd.xlane.f32.xlu0 %v5426
    %v5449 = vpop.xlane.xlu0 %5448
    %5450 = vadd.xlane.f32.xlu0 %v5427
    %v5451 = vpop.xlane.xlu0 %5450
    %v5452 = vmul.f32 %v5429, %v2654
    %v5453 = vmul.f32 %v5431, %v2654
    %v5454 = vmul.f32 %v5433, %v2654
    %v5455 = vmul.f32 %v5435, %v2654
    %v5456 = vmul.f32 %v5437, %v2654
    %v5457 = vmul.f32 %v5439, %v2654
    %v5458 = vmul.f32 %v5441, %v2654
    %v5459 = vmul.f32 %v5443, %v2654
    %v5460 = vmul.f32 %v5445, %v2654
    %v5461 = vmul.f32 %v5447, %v2654
    %v5462 = vmul.f32 %v5449, %v2654
    %v5463 = vmul.f32 %v5451, %v2654
    %v5464 = vadd.f32 %v5452, 1e-05
    %v5465 = vadd.f32 %v5453, 1e-05
    %v5466 = vadd.f32 %v5454, 1e-05
    %v5467 = vadd.f32 %v5455, 1e-05
    %v5468 = vadd.f32 %v5456, 1e-05
    %v5469 = vadd.f32 %v5457, 1e-05
    %v5470 = vadd.f32 %v5458, 1e-05
    %v5471 = vadd.f32 %v5459, 1e-05
    %v5472 = vadd.f32 %v5460, 1e-05
    %v5473 = vadd.f32 %v5461, 1e-05
    %v5474 = vadd.f32 %v5462, 1e-05
    %v5475 = vadd.f32 %v5463, 1e-05
    %v5476 = vrsqrt.pop %v5464
    %v5477 = vmul.f32 %v5476, %v5464
    %v5478 = vmul.f32 %v5477, %v5476
    %v5479 = vmul.f32 0.5, %v5478
    %v5480 = vsub.f32 1.5, %v5479
    %v5481 = vmul.f32 %v5476, %v5480
    %vm5482 = vweird.f32 %v5464
    %vm5483 = vweird.f32 %v5476
    %vm5484 = vmor %vm5482, %vm5483
    %v5485 = vsel %vm5484, %v5476, %v5481
    %v5486 = vrsqrt.pop %v5465
    %v5487 = vmul.f32 %v5486, %v5465
    %v5488 = vmul.f32 %v5487, %v5486
    %v5489 = vmul.f32 0.5, %v5488
    %v5490 = vsub.f32 1.5, %v5489
    %v5491 = vmul.f32 %v5486, %v5490
    %vm5492 = vweird.f32 %v5465
    %vm5493 = vweird.f32 %v5486
    %vm5494 = vmor %vm5492, %vm5493
    %v5495 = vsel %vm5494, %v5486, %v5491
    %v5496 = vrsqrt.pop %v5466
    %v5497 = vmul.f32 %v5496, %v5466
    %v5498 = vmul.f32 %v5497, %v5496
    %v5499 = vmul.f32 0.5, %v5498
    %v5500 = vsub.f32 1.5, %v5499
    %v5501 = vmul.f32 %v5496, %v5500
    %vm5502 = vweird.f32 %v5466
    %vm5503 = vweird.f32 %v5496
    %vm5504 = vmor %vm5502, %vm5503
    %v5505 = vsel %vm5504, %v5496, %v5501
    %v5506 = vrsqrt.pop %v5467
    %v5507 = vmul.f32 %v5506, %v5467
    %v5508 = vmul.f32 %v5507, %v5506
    %v5509 = vmul.f32 0.5, %v5508
    %v5510 = vsub.f32 1.5, %v5509
    %v5511 = vmul.f32 %v5506, %v5510
    %vm5512 = vweird.f32 %v5467
    %vm5513 = vweird.f32 %v5506
    %vm5514 = vmor %vm5512, %vm5513
    %v5515 = vsel %vm5514, %v5506, %v5511
    %v5516 = vrsqrt.pop %v5468
    %v5517 = vmul.f32 %v5516, %v5468
    %v5518 = vmul.f32 %v5517, %v5516
    %v5519 = vmul.f32 0.5, %v5518
    %v5520 = vsub.f32 1.5, %v5519
    %v5521 = vmul.f32 %v5516, %v5520
    %vm5522 = vweird.f32 %v5468
    %vm5523 = vweird.f32 %v5516
    %vm5524 = vmor %vm5522, %vm5523
    %v5525 = vsel %vm5524, %v5516, %v5521
    %v5526 = vrsqrt.pop %v5469
    %v5527 = vmul.f32 %v5526, %v5469
    %v5528 = vmul.f32 %v5527, %v5526
    %v5529 = vmul.f32 0.5, %v5528
    %v5530 = vsub.f32 1.5, %v5529
    %v5531 = vmul.f32 %v5526, %v5530
    %vm5532 = vweird.f32 %v5469
    %vm5533 = vweird.f32 %v5526
    %vm5534 = vmor %vm5532, %vm5533
    %v5535 = vsel %vm5534, %v5526, %v5531
    %v5536 = vrsqrt.pop %v5470
    %v5537 = vmul.f32 %v5536, %v5470
    %v5538 = vmul.f32 %v5537, %v5536
    %v5539 = vmul.f32 0.5, %v5538
    %v5540 = vsub.f32 1.5, %v5539
    %v5541 = vmul.f32 %v5536, %v5540
    %vm5542 = vweird.f32 %v5470
    %vm5543 = vweird.f32 %v5536
    %vm5544 = vmor %vm5542, %vm5543
    %v5545 = vsel %vm5544, %v5536, %v5541
    %v5546 = vrsqrt.pop %v5471
    %v5547 = vmul.f32 %v5546, %v5471
    %v5548 = vmul.f32 %v5547, %v5546
    %v5549 = vmul.f32 0.5, %v5548
    %v5550 = vsub.f32 1.5, %v5549
    %v5551 = vmul.f32 %v5546, %v5550
    %vm5552 = vweird.f32 %v5471
    %vm5553 = vweird.f32 %v5546
    %vm5554 = vmor %vm5552, %vm5553
    %v5555 = vsel %vm5554, %v5546, %v5551
    %v5556 = vrsqrt.pop %v5472
    %v5557 = vmul.f32 %v5556, %v5472
    %v5558 = vmul.f32 %v5557, %v5556
    %v5559 = vmul.f32 0.5, %v5558
    %v5560 = vsub.f32 1.5, %v5559
    %v5561 = vmul.f32 %v5556, %v5560
    %vm5562 = vweird.f32 %v5472
    %vm5563 = vweird.f32 %v5556
    %vm5564 = vmor %vm5562, %vm5563
    %v5565 = vsel %vm5564, %v5556, %v5561
    %v5566 = vrsqrt.pop %v5473
    %v5567 = vmul.f32 %v5566, %v5473
    %v5568 = vmul.f32 %v5567, %v5566
    %v5569 = vmul.f32 0.5, %v5568
    %v5570 = vsub.f32 1.5, %v5569
    %v5571 = vmul.f32 %v5566, %v5570
    %vm5572 = vweird.f32 %v5473
    %vm5573 = vweird.f32 %v5566
    %vm5574 = vmor %vm5572, %vm5573
    %v5575 = vsel %vm5574, %v5566, %v5571
    %v5576 = vrsqrt.pop %v5474
    %v5577 = vmul.f32 %v5576, %v5474
    %v5578 = vmul.f32 %v5577, %v5576
    %v5579 = vmul.f32 0.5, %v5578
    %v5580 = vsub.f32 1.5, %v5579
    %v5581 = vmul.f32 %v5576, %v5580
    %vm5582 = vweird.f32 %v5474
    %vm5583 = vweird.f32 %v5576
    %vm5584 = vmor %vm5582, %vm5583
    %v5585 = vsel %vm5584, %v5576, %v5581
    %v5586 = vrsqrt.pop %v5475
    %v5587 = vmul.f32 %v5586, %v5475
    %v5588 = vmul.f32 %v5587, %v5586
    %v5589 = vmul.f32 0.5, %v5588
    %v5590 = vsub.f32 1.5, %v5589
    %v5591 = vmul.f32 %v5586, %v5590
    %vm5592 = vweird.f32 %v5475
    %vm5593 = vweird.f32 %v5586
    %vm5594 = vmor %vm5592, %vm5593
    %v5595 = vsel %vm5594, %v5586, %v5591
    %v5596 = vmul.f32 %v5404, %v5485
    %v5597 = vmul.f32 %v5405, %v5495
    %v5598 = vmul.f32 %v5406, %v5505
    %v5599 = vmul.f32 %v5407, %v5515
    %v5600 = vmul.f32 %v5408, %v5525
    %v5601 = vmul.f32 %v5409, %v5535
    %v5602 = vmul.f32 %v5410, %v5545
    %v5603 = vmul.f32 %v5411, %v5555
    %v5604 = vmul.f32 %v5412, %v5565
    %v5605 = vmul.f32 %v5413, %v5575
    %v5606 = vmul.f32 %v5414, %v5585
    %v5607 = vmul.f32 %v5415, %v5595
    %v5609 = vperm.slane %v5366, 0
    %v5611 = vmul.f32 %v5596, %v5609
    %v5612 = vmul.f32 %v5597, %v5609
    %v5613 = vmul.f32 %v5598, %v5609
    %v5614 = vmul.f32 %v5599, %v5609
    %v5615 = vmul.f32 %v5600, %v5609
    %v5616 = vmul.f32 %v5601, %v5609
    %v5617 = vmul.f32 %v5602, %v5609
    %v5618 = vmul.f32 %v5603, %v5609
    %v5619 = vmul.f32 %v5604, %v5609
    %v5620 = vmul.f32 %v5605, %v5609
    %v5621 = vmul.f32 %v5606, %v5609
    %v5622 = vmul.f32 %v5607, %v5609
    %v5624 = vperm.slane %v5367, 0
    %v5626 = vadd.f32 %v5611, %v5624
    %v5627 = vadd.f32 %v5612, %v5624
    %v5628 = vadd.f32 %v5613, %v5624
    %v5629 = vadd.f32 %v5614, %v5624
    %v5630 = vadd.f32 %v5615, %v5624
    %v5631 = vadd.f32 %v5616, %v5624
    %v5632 = vadd.f32 %v5617, %v5624
    %v5633 = vadd.f32 %v5618, %v5624
    %v5634 = vadd.f32 %v5619, %v5624
    %v5635 = vadd.f32 %v5620, %v5624
    %v5636 = vadd.f32 %v5621, %v5624
    %v5637 = vadd.f32 %v5622, %v5624
    %v5638 = vpack.c.bf16 %v5627, %v5626
    %v5639 = vpack.c.bf16 %v5629, %v5628
    %v5640 = vpack.c.bf16 %v5631, %v5630
    %v5641 = vpack.c.bf16 %v5633, %v5632
    %v5642 = vpack.c.bf16 %v5635, %v5634
    %v5643 = vpack.c.bf16 %v5637, %v5636
    %v5644 = vld [vmem:[#allocation25] sm:$0xff]
    %v5645 = vld [vmem:[#allocation25 + $0x8] sm:$0xff]
    %v5646 = vld [vmem:[#allocation25 + $0x10] sm:$0xff]
    %v5647 = vld [vmem:[#allocation25 + $0x18] sm:$0xff]
    %v5648 = vld [vmem:[#allocation25 + $0x20] sm:$0xff]
    %v5649 = vld [vmem:[#allocation25 + $0x28] sm:$0xff]
    %v5650 = vld [vmem:[#allocation25 + $0x30] sm:$0xff]
    %v5651 = vld [vmem:[#allocation25 + $0x38] sm:$0xff]
    %v5652 = vld [vmem:[#allocation25 + $0x40] sm:$0xff]
    %v5653 = vld [vmem:[#allocation25 + $0x48] sm:$0xff]
    %v5654 = vld [vmem:[#allocation25 + $0x50] sm:$0xff]
    %v5655 = vld [vmem:[#allocation25 + $0x58] sm:$0xff]
    %v5656 = vld [vmem:[#allocation25 + $0x60] sm:$0xff]
    %v5657 = vld [vmem:[#allocation25 + $0x68] sm:$0xff]
    %v5658 = vld [vmem:[#allocation25 + $0x70] sm:$0xff]
    %v5659 = vld [vmem:[#allocation25 + $0x78] sm:$0xff]
    %v5660 = vld [vmem:[#allocation25 + $0x80] sm:$0xff]
    %v5661 = vld [vmem:[#allocation25 + $0x88] sm:$0xff]
    %v5662 = vld [vmem:[#allocation25 + $0x90] sm:$0xff]
    %v5663 = vld [vmem:[#allocation25 + $0x98] sm:$0xff]
    %v5664 = vld [vmem:[#allocation25 + $0xa0] sm:$0xff]
    %v5665 = vld [vmem:[#allocation25 + $0xa8] sm:$0xff]
    %v5666 = vld [vmem:[#allocation25 + $0xb0] sm:$0xff]
    %v5667 = vld [vmem:[#allocation25 + $0xb8] sm:$0xff]
    %v5668 = vld [vmem:[#allocation25 + $0xc0] sm:$0xff]
    %v5669 = vld [vmem:[#allocation25 + $0xc8] sm:$0xff]
    %v5670 = vld [vmem:[#allocation25 + $0xd0] sm:$0xff]
    %v5671 = vld [vmem:[#allocation25 + $0xd8] sm:$0xff]
    %v5672 = vld [vmem:[#allocation25 + $0xe0] sm:$0xff]
    %v5673 = vld [vmem:[#allocation25 + $0xe8] sm:$0xff]
    %v5674 = vld [vmem:[#allocation25 + $0xf0] sm:$0xff]
    %v5675 = vld [vmem:[#allocation25 + $0xf8] sm:$0xff]
    %v5676 = vld [vmem:[#allocation27] sm:$0xf]
    %v5678 = vperm.slane %v5676, 0
    %v5679 = vperm.slane %v5676, 1
    %v5680 = vperm.slane %v5676, 2
    %v5681 = vperm.slane %v5676, 3
    %v5718 = vunpack.c.l.b16 %v5644
    %v5719 = vunpack.c.h.b16 %v5644
    %v5720 = vunpack.c.l.b16 %v5645
    %v5721 = vunpack.c.h.b16 %v5645
    %v5722 = vunpack.c.l.b16 %v5646
    %v5723 = vunpack.c.h.b16 %v5646
    %v5724 = vunpack.c.l.b16 %v5647
    %v5725 = vunpack.c.h.b16 %v5647
    %v5726 = vunpack.c.l.b16 %v5648
    %v5727 = vunpack.c.h.b16 %v5648
    %v5728 = vunpack.c.l.b16 %v5649
    %v5729 = vunpack.c.h.b16 %v5649
    %v5730 = vunpack.c.l.b16 %v5650
    %v5731 = vunpack.c.h.b16 %v5650
    %v5732 = vunpack.c.l.b16 %v5651
    %v5733 = vunpack.c.h.b16 %v5651
    %v5734 = vunpack.c.l.b16 %v5652
    %v5735 = vunpack.c.h.b16 %v5652
    %v5736 = vunpack.c.l.b16 %v5653
    %v5737 = vunpack.c.h.b16 %v5653
    %v5738 = vunpack.c.l.b16 %v5654
    %v5739 = vunpack.c.h.b16 %v5654
    %v5740 = vunpack.c.l.b16 %v5655
    %v5741 = vunpack.c.h.b16 %v5655
    %v5742 = vunpack.c.l.b16 %v5656
    %v5743 = vunpack.c.h.b16 %v5656
    %v5744 = vunpack.c.l.b16 %v5657
    %v5745 = vunpack.c.h.b16 %v5657
    %v5746 = vunpack.c.l.b16 %v5658
    %v5747 = vunpack.c.h.b16 %v5658
    %v5748 = vunpack.c.l.b16 %v5659
    %v5749 = vunpack.c.h.b16 %v5659
    %v5750 = vunpack.c.l.b16 %v5660
    %v5751 = vunpack.c.h.b16 %v5660
    %v5752 = vunpack.c.l.b16 %v5661
    %v5753 = vunpack.c.h.b16 %v5661
    %v5754 = vunpack.c.l.b16 %v5662
    %v5755 = vunpack.c.h.b16 %v5662
    %v5756 = vunpack.c.l.b16 %v5663
    %v5757 = vunpack.c.h.b16 %v5663
    %v5758 = vunpack.c.l.b16 %v5664
    %v5759 = vunpack.c.h.b16 %v5664
    %v5760 = vunpack.c.l.b16 %v5665
    %v5761 = vunpack.c.h.b16 %v5665
    %v5762 = vunpack.c.l.b16 %v5666
    %v5763 = vunpack.c.h.b16 %v5666
    %v5764 = vunpack.c.l.b16 %v5667
    %v5765 = vunpack.c.h.b16 %v5667
    %v5766 = vunpack.c.l.b16 %v5668
    %v5767 = vunpack.c.h.b16 %v5668
    %v5768 = vunpack.c.l.b16 %v5669
    %v5769 = vunpack.c.h.b16 %v5669
    %v5770 = vunpack.c.l.b16 %v5670
    %v5771 = vunpack.c.h.b16 %v5670
    %v5772 = vunpack.c.l.b16 %v5671
    %v5773 = vunpack.c.h.b16 %v5671
    %v5774 = vunpack.c.l.b16 %v5672
    %v5775 = vunpack.c.h.b16 %v5672
    %v5776 = vunpack.c.l.b16 %v5673
    %v5777 = vunpack.c.h.b16 %v5673
    %v5778 = vunpack.c.l.b16 %v5674
    %v5779 = vunpack.c.h.b16 %v5674
    %v5780 = vunpack.c.l.b16 %v5675
    %v5781 = vunpack.c.h.b16 %v5675
    %v5782 = vpack.c.b16 %v5722, %v5718
    %v5783 = vpack.c.b16 %v5723, %v5719
    %v5784 = vpack.c.b16 %v5724, %v5720
    %v5785 = vpack.c.b16 %v5725, %v5721
    %v5786 = vpack.c.b16 %v5730, %v5726
    %v5787 = vpack.c.b16 %v5731, %v5727
    %v5788 = vpack.c.b16 %v5732, %v5728
    %v5789 = vpack.c.b16 %v5733, %v5729
    %v5790 = vpack.c.b16 %v5738, %v5734
    %v5791 = vpack.c.b16 %v5739, %v5735
    %v5792 = vpack.c.b16 %v5740, %v5736
    %v5793 = vpack.c.b16 %v5741, %v5737
    %v5794 = vpack.c.b16 %v5746, %v5742
    %v5795 = vpack.c.b16 %v5747, %v5743
    %v5796 = vpack.c.b16 %v5748, %v5744
    %v5797 = vpack.c.b16 %v5749, %v5745
    %v5798 = vpack.c.b16 %v5754, %v5750
    %v5799 = vpack.c.b16 %v5755, %v5751
    %v5800 = vpack.c.b16 %v5756, %v5752
    %v5801 = vpack.c.b16 %v5757, %v5753
    %v5802 = vpack.c.b16 %v5762, %v5758
    %v5803 = vpack.c.b16 %v5763, %v5759
    %v5804 = vpack.c.b16 %v5764, %v5760
    %v5805 = vpack.c.b16 %v5765, %v5761
    %v5806 = vpack.c.b16 %v5770, %v5766
    %v5807 = vpack.c.b16 %v5771, %v5767
    %v5808 = vpack.c.b16 %v5772, %v5768
    %v5809 = vpack.c.b16 %v5773, %v5769
    %v5810 = vpack.c.b16 %v5778, %v5774
    %v5811 = vpack.c.b16 %v5779, %v5775
    %v5812 = vpack.c.b16 %v5780, %v5776
    %v5813 = vpack.c.b16 %v5781, %v5777
    %5846 = vmatpush.bf16.msra.mxu0 %v5810
    %5847 = vmatpush.bf16.msra.mxu0 %v5806
    %5848 = vmatpush.bf16.msra.mxu0 %v5802
    %5849 = vmatpush.bf16.msra.mxu0 %v5798
    %5850 = vmatpush.bf16.msra.mxu0 %v5794
    %5851 = vmatpush.bf16.msra.mxu0 %v5790
    %5852 = vmatpush.bf16.msra.mxu0 %v5786
    %5853 = vmatpush.bf16.msra.mxu0 %v5782
    %5854 = vmatmul.bf16.gmra.mxu0 %v5638
    %v5855 = vpop.f32.mrf.mxu0
    %v5856 = vadd.f32 %v5678, %v5855
    %v5857 = vpop.f32.mrf.mxu0
    %v5858 = vadd.f32 %v5678, %v5857
    %5859 = vmatmul.bf16.gmra.mxu0 %v5639
    %v5860 = vpop.f32.mrf.mxu0
    %v5861 = vadd.f32 %v5678, %v5860
    %v5862 = vpop.f32.mrf.mxu0
    %v5863 = vadd.f32 %v5678, %v5862
    %5864 = vmatmul.bf16.gmra.mxu0 %v5640
    %v5865 = vpop.f32.mrf.mxu0
    %v5866 = vadd.f32 %v5678, %v5865
    %v5867 = vpop.f32.mrf.mxu0
    %v5868 = vadd.f32 %v5678, %v5867
    %5869 = vmatmul.bf16.gmra.mxu0 %v5641
    %v5870 = vpop.f32.mrf.mxu0
    %v5871 = vadd.f32 %v5678, %v5870
    %v5872 = vpop.f32.mrf.mxu0
    %v5873 = vadd.f32 %v5678, %v5872
    %5874 = vmatmul.bf16.gmra.mxu0 %v5642
    %v5875 = vpop.f32.mrf.mxu0
    %v5876 = vadd.f32 %v5678, %v5875
    %v5877 = vpop.f32.mrf.mxu0
    %v5878 = vadd.f32 %v5678, %v5877
    %5879 = vmatmul.bf16.gmra.mxu0 %v5643
    %v5880 = vpop.f32.mrf.mxu0
    %v5881 = vadd.f32 %v5678, %v5880
    %v5882 = vpop.f32.mrf.mxu0
    %v5883 = vadd.f32 %v5678, %v5882
    %5884 = vdwg.mxu0
    %5885 = vmatpush.bf16.msra.mxu0 %v5811
    %5886 = vmatpush.bf16.msra.mxu0 %v5807
    %5887 = vmatpush.bf16.msra.mxu0 %v5803
    %5888 = vmatpush.bf16.msra.mxu0 %v5799
    %5889 = vmatpush.bf16.msra.mxu0 %v5795
    %5890 = vmatpush.bf16.msra.mxu0 %v5791
    %5891 = vmatpush.bf16.msra.mxu0 %v5787
    %5892 = vmatpush.bf16.msra.mxu0 %v5783
    %5893 = vmatmul.bf16.gmra.mxu0 %v5638
    %v5894 = vpop.f32.mrf.mxu0
    %v5895 = vadd.f32 %v5679, %v5894
    %v5896 = vpop.f32.mrf.mxu0
    %v5897 = vadd.f32 %v5679, %v5896
    %5898 = vmatmul.bf16.gmra.mxu0 %v5639
    %v5899 = vpop.f32.mrf.mxu0
    %v5900 = vadd.f32 %v5679, %v5899
    %v5901 = vpop.f32.mrf.mxu0
    %v5902 = vadd.f32 %v5679, %v5901
    %5903 = vmatmul.bf16.gmra.mxu0 %v5640
    %v5904 = vpop.f32.mrf.mxu0
    %v5905 = vadd.f32 %v5679, %v5904
    %v5906 = vpop.f32.mrf.mxu0
    %v5907 = vadd.f32 %v5679, %v5906
    %5908 = vmatmul.bf16.gmra.mxu0 %v5641
    %v5909 = vpop.f32.mrf.mxu0
    %v5910 = vadd.f32 %v5679, %v5909
    %v5911 = vpop.f32.mrf.mxu0
    %v5912 = vadd.f32 %v5679, %v5911
    %5913 = vmatmul.bf16.gmra.mxu0 %v5642
    %v5914 = vpop.f32.mrf.mxu0
    %v5915 = vadd.f32 %v5679, %v5914
    %v5916 = vpop.f32.mrf.mxu0
    %v5917 = vadd.f32 %v5679, %v5916
    %5918 = vmatmul.bf16.gmra.mxu0 %v5643
    %v5919 = vpop.f32.mrf.mxu0
    %v5920 = vadd.f32 %v5679, %v5919
    %v5921 = vpop.f32.mrf.mxu0
    %v5922 = vadd.f32 %v5679, %v5921
    %5923 = vdwg.mxu0
    %5924 = vmatpush.bf16.msra.mxu0 %v5812
    %5925 = vmatpush.bf16.msra.mxu0 %v5808
    %5926 = vmatpush.bf16.msra.mxu0 %v5804
    %5927 = vmatpush.bf16.msra.mxu0 %v5800
    %5928 = vmatpush.bf16.msra.mxu0 %v5796
    %5929 = vmatpush.bf16.msra.mxu0 %v5792
    %5930 = vmatpush.bf16.msra.mxu0 %v5788
    %5931 = vmatpush.bf16.msra.mxu0 %v5784
    %5932 = vmatmul.bf16.gmra.mxu0 %v5638
    %v5933 = vpop.f32.mrf.mxu0
    %v5934 = vadd.f32 %v5680, %v5933
    %v5935 = vpop.f32.mrf.mxu0
    %v5936 = vadd.f32 %v5680, %v5935
    %5937 = vmatmul.bf16.gmra.mxu0 %v5639
    %v5938 = vpop.f32.mrf.mxu0
    %v5939 = vadd.f32 %v5680, %v5938
    %v5940 = vpop.f32.mrf.mxu0
    %v5941 = vadd.f32 %v5680, %v5940
    %5942 = vmatmul.bf16.gmra.mxu0 %v5640
    %v5943 = vpop.f32.mrf.mxu0
    %v5944 = vadd.f32 %v5680, %v5943
    %v5945 = vpop.f32.mrf.mxu0
    %v5946 = vadd.f32 %v5680, %v5945
    %5947 = vmatmul.bf16.gmra.mxu0 %v5641
    %v5948 = vpop.f32.mrf.mxu0
    %v5949 = vadd.f32 %v5680, %v5948
    %v5950 = vpop.f32.mrf.mxu0
    %v5951 = vadd.f32 %v5680, %v5950
    %5952 = vmatmul.bf16.gmra.mxu0 %v5642
    %v5953 = vpop.f32.mrf.mxu0
    %v5954 = vadd.f32 %v5680, %v5953
    %v5955 = vpop.f32.mrf.mxu0
    %v5956 = vadd.f32 %v5680, %v5955
    %5957 = vmatmul.bf16.gmra.mxu0 %v5643
    %v5958 = vpop.f32.mrf.mxu0
    %v5959 = vadd.f32 %v5680, %v5958
    %v5960 = vpop.f32.mrf.mxu0
    %v5961 = vadd.f32 %v5680, %v5960
    %5962 = vdwg.mxu0
    %5963 = vmatpush.bf16.msra.mxu0 %v5813
    %5964 = vmatpush.bf16.msra.mxu0 %v5809
    %5965 = vmatpush.bf16.msra.mxu0 %v5805
    %5966 = vmatpush.bf16.msra.mxu0 %v5801
    %5967 = vmatpush.bf16.msra.mxu0 %v5797
    %5968 = vmatpush.bf16.msra.mxu0 %v5793
    %5969 = vmatpush.bf16.msra.mxu0 %v5789
    %5970 = vmatpush.bf16.msra.mxu0 %v5785
    %5971 = vmatmul.bf16.gmra.mxu0 %v5638
    %v5972 = vpop.f32.mrf.mxu0
    %v5973 = vadd.f32 %v5681, %v5972
    %v5974 = vpop.f32.mrf.mxu0
    %v5975 = vadd.f32 %v5681, %v5974
    %5976 = vmatmul.bf16.gmra.mxu0 %v5639
    %v5977 = vpop.f32.mrf.mxu0
    %v5978 = vadd.f32 %v5681, %v5977
    %v5979 = vpop.f32.mrf.mxu0
    %v5980 = vadd.f32 %v5681, %v5979
    %5981 = vmatmul.bf16.gmra.mxu0 %v5640
    %v5982 = vpop.f32.mrf.mxu0
    %v5983 = vadd.f32 %v5681, %v5982
    %v5984 = vpop.f32.mrf.mxu0
    %v5985 = vadd.f32 %v5681, %v5984
    %5986 = vmatmul.bf16.gmra.mxu0 %v5641
    %v5987 = vpop.f32.mrf.mxu0
    %v5988 = vadd.f32 %v5681, %v5987
    %v5989 = vpop.f32.mrf.mxu0
    %v5990 = vadd.f32 %v5681, %v5989
    %5991 = vmatmul.bf16.gmra.mxu0 %v5642
    %v5992 = vpop.f32.mrf.mxu0
    %v5993 = vadd.f32 %v5681, %v5992
    %v5994 = vpop.f32.mrf.mxu0
    %v5995 = vadd.f32 %v5681, %v5994
    %5996 = vmatmul.bf16.gmra.mxu0 %v5643
    %v5997 = vpop.f32.mrf.mxu0
    %v5998 = vadd.f32 %v5681, %v5997
    %v5999 = vpop.f32.mrf.mxu0
    %v6000 = vadd.f32 %v5681, %v5999
    %6001 = vdwg.mxu0
    %v6002 = vmul.f32 %v5856, 0.5
    %v6003 = vmul.f32 %v5895, 0.5
    %v6004 = vmul.f32 %v5934, 0.5
    %v6005 = vmul.f32 %v5973, 0.5
    %v6006 = vmul.f32 %v5858, 0.5
    %v6007 = vmul.f32 %v5897, 0.5
    %v6008 = vmul.f32 %v5936, 0.5
    %v6009 = vmul.f32 %v5975, 0.5
    %v6010 = vmul.f32 %v5861, 0.5
    %v6011 = vmul.f32 %v5900, 0.5
    %v6012 = vmul.f32 %v5939, 0.5
    %v6013 = vmul.f32 %v5978, 0.5
    %v6014 = vmul.f32 %v5863, 0.5
    %v6015 = vmul.f32 %v5902, 0.5
    %v6016 = vmul.f32 %v5941, 0.5
    %v6017 = vmul.f32 %v5980, 0.5
    %v6018 = vmul.f32 %v5866, 0.5
    %v6019 = vmul.f32 %v5905, 0.5
    %v6020 = vmul.f32 %v5944, 0.5
    %v6021 = vmul.f32 %v5983, 0.5
    %v6022 = vmul.f32 %v5868, 0.5
    %v6023 = vmul.f32 %v5907, 0.5
    %v6024 = vmul.f32 %v5946, 0.5
    %v6025 = vmul.f32 %v5985, 0.5
    %v6026 = vmul.f32 %v5871, 0.5
    %v6027 = vmul.f32 %v5910, 0.5
    %v6028 = vmul.f32 %v5949, 0.5
    %v6029 = vmul.f32 %v5988, 0.5
    %v6030 = vmul.f32 %v5873, 0.5
    %v6031 = vmul.f32 %v5912, 0.5
    %v6032 = vmul.f32 %v5951, 0.5
    %v6033 = vmul.f32 %v5990, 0.5
    %v6034 = vmul.f32 %v5876, 0.5
    %v6035 = vmul.f32 %v5915, 0.5
    %v6036 = vmul.f32 %v5954, 0.5
    %v6037 = vmul.f32 %v5993, 0.5
    %v6038 = vmul.f32 %v5878, 0.5
    %v6039 = vmul.f32 %v5917, 0.5
    %v6040 = vmul.f32 %v5956, 0.5
    %v6041 = vmul.f32 %v5995, 0.5
    %v6042 = vmul.f32 %v5881, 0.5
    %v6043 = vmul.f32 %v5920, 0.5
    %v6044 = vmul.f32 %v5959, 0.5
    %v6045 = vmul.f32 %v5998, 0.5
    %v6046 = vmul.f32 %v5883, 0.5
    %v6047 = vmul.f32 %v5922, 0.5
    %v6048 = vmul.f32 %v5961, 0.5
    %v6049 = vmul.f32 %v6000, 0.5
    %v6050 = vmul.f32 %v5856, %v5856
    %v6051 = vmul.f32 %v5895, %v5895
    %v6052 = vmul.f32 %v5934, %v5934
    %v6053 = vmul.f32 %v5973, %v5973
    %v6054 = vmul.f32 %v5858, %v5858
    %v6055 = vmul.f32 %v5897, %v5897
    %v6056 = vmul.f32 %v5936, %v5936
    %v6057 = vmul.f32 %v5975, %v5975
    %v6058 = vmul.f32 %v5861, %v5861
    %v6059 = vmul.f32 %v5900, %v5900
    %v6060 = vmul.f32 %v5939, %v5939
    %v6061 = vmul.f32 %v5978, %v5978
    %v6062 = vmul.f32 %v5863, %v5863
    %v6063 = vmul.f32 %v5902, %v5902
    %v6064 = vmul.f32 %v5941, %v5941
    %v6065 = vmul.f32 %v5980, %v5980
    %v6066 = vmul.f32 %v5866, %v5866
    %v6067 = vmul.f32 %v5905, %v5905
    %v6068 = vmul.f32 %v5944, %v5944
    %v6069 = vmul.f32 %v5983, %v5983
    %v6070 = vmul.f32 %v5868, %v5868
    %v6071 = vmul.f32 %v5907, %v5907
    %v6072 = vmul.f32 %v5946, %v5946
    %v6073 = vmul.f32 %v5985, %v5985
    %v6074 = vmul.f32 %v5871, %v5871
    %v6075 = vmul.f32 %v5910, %v5910
    %v6076 = vmul.f32 %v5949, %v5949
    %v6077 = vmul.f32 %v5988, %v5988
    %v6078 = vmul.f32 %v5873, %v5873
    %v6079 = vmul.f32 %v5912, %v5912
    %v6080 = vmul.f32 %v5951, %v5951
    %v6081 = vmul.f32 %v5990, %v5990
    %v6082 = vmul.f32 %v5876, %v5876
    %v6083 = vmul.f32 %v5915, %v5915
    %v6084 = vmul.f32 %v5954, %v5954
    %v6085 = vmul.f32 %v5993, %v5993
    %v6086 = vmul.f32 %v5878, %v5878
    %v6087 = vmul.f32 %v5917, %v5917
    %v6088 = vmul.f32 %v5956, %v5956
    %v6089 = vmul.f32 %v5995, %v5995
    %v6090 = vmul.f32 %v5881, %v5881
    %v6091 = vmul.f32 %v5920, %v5920
    %v6092 = vmul.f32 %v5959, %v5959
    %v6093 = vmul.f32 %v5998, %v5998
    %v6094 = vmul.f32 %v5883, %v5883
    %v6095 = vmul.f32 %v5922, %v5922
    %v6096 = vmul.f32 %v5961, %v5961
    %v6097 = vmul.f32 %v6000, %v6000
    %v6098 = vmul.f32 %v6050, %v5856
    %v6099 = vmul.f32 %v6051, %v5895
    %v6100 = vmul.f32 %v6052, %v5934
    %v6101 = vmul.f32 %v6053, %v5973
    %v6102 = vmul.f32 %v6054, %v5858
    %v6103 = vmul.f32 %v6055, %v5897
    %v6104 = vmul.f32 %v6056, %v5936
    %v6105 = vmul.f32 %v6057, %v5975
    %v6106 = vmul.f32 %v6058, %v5861
    %v6107 = vmul.f32 %v6059, %v5900
    %v6108 = vmul.f32 %v6060, %v5939
    %v6109 = vmul.f32 %v6061, %v5978
    %v6110 = vmul.f32 %v6062, %v5863
    %v6111 = vmul.f32 %v6063, %v5902
    %v6112 = vmul.f32 %v6064, %v5941
    %v6113 = vmul.f32 %v6065, %v5980
    %v6114 = vmul.f32 %v6066, %v5866
    %v6115 = vmul.f32 %v6067, %v5905
    %v6116 = vmul.f32 %v6068, %v5944
    %v6117 = vmul.f32 %v6069, %v5983
    %v6118 = vmul.f32 %v6070, %v5868
    %v6119 = vmul.f32 %v6071, %v5907
    %v6120 = vmul.f32 %v6072, %v5946
    %v6121 = vmul.f32 %v6073, %v5985
    %v6122 = vmul.f32 %v6074, %v5871
    %v6123 = vmul.f32 %v6075, %v5910
    %v6124 = vmul.f32 %v6076, %v5949
    %v6125 = vmul.f32 %v6077, %v5988
    %v6126 = vmul.f32 %v6078, %v5873
    %v6127 = vmul.f32 %v6079, %v5912
    %v6128 = vmul.f32 %v6080, %v5951
    %v6129 = vmul.f32 %v6081, %v5990
    %v6130 = vmul.f32 %v6082, %v5876
    %v6131 = vmul.f32 %v6083, %v5915
    %v6132 = vmul.f32 %v6084, %v5954
    %v6133 = vmul.f32 %v6085, %v5993
    %v6134 = vmul.f32 %v6086, %v5878
    %v6135 = vmul.f32 %v6087, %v5917
    %v6136 = vmul.f32 %v6088, %v5956
    %v6137 = vmul.f32 %v6089, %v5995
    %v6138 = vmul.f32 %v6090, %v5881
    %v6139 = vmul.f32 %v6091, %v5920
    %v6140 = vmul.f32 %v6092, %v5959
    %v6141 = vmul.f32 %v6093, %v5998
    %v6142 = vmul.f32 %v6094, %v5883
    %v6143 = vmul.f32 %v6095, %v5922
    %v6144 = vmul.f32 %v6096, %v5961
    %v6145 = vmul.f32 %v6097, %v6000
    %v6146 = vmul.f32 %v6098, 0.044715
    %v6147 = vmul.f32 %v6099, 0.044715
    %v6148 = vmul.f32 %v6100, 0.044715
    %v6149 = vmul.f32 %v6101, 0.044715
    %v6150 = vmul.f32 %v6102, 0.044715
    %v6151 = vmul.f32 %v6103, 0.044715
    %v6152 = vmul.f32 %v6104, 0.044715
    %v6153 = vmul.f32 %v6105, 0.044715
    %v6154 = vmul.f32 %v6106, 0.044715
    %v6155 = vmul.f32 %v6107, 0.044715
    %v6156 = vmul.f32 %v6108, 0.044715
    %v6157 = vmul.f32 %v6109, 0.044715
    %v6158 = vmul.f32 %v6110, 0.044715
    %v6159 = vmul.f32 %v6111, 0.044715
    %v6160 = vmul.f32 %v6112, 0.044715
    %v6161 = vmul.f32 %v6113, 0.044715
    %v6162 = vmul.f32 %v6114, 0.044715
    %v6163 = vmul.f32 %v6115, 0.044715
    %v6164 = vmul.f32 %v6116, 0.044715
    %v6165 = vmul.f32 %v6117, 0.044715
    %v6166 = vmul.f32 %v6118, 0.044715
    %v6167 = vmul.f32 %v6119, 0.044715
    %v6168 = vmul.f32 %v6120, 0.044715
    %v6169 = vmul.f32 %v6121, 0.044715
    %v6170 = vmul.f32 %v6122, 0.044715
    %v6171 = vmul.f32 %v6123, 0.044715
    %v6172 = vmul.f32 %v6124, 0.044715
    %v6173 = vmul.f32 %v6125, 0.044715
    %v6174 = vmul.f32 %v6126, 0.044715
    %v6175 = vmul.f32 %v6127, 0.044715
    %v6176 = vmul.f32 %v6128, 0.044715
    %v6177 = vmul.f32 %v6129, 0.044715
    %v6178 = vmul.f32 %v6130, 0.044715
    %v6179 = vmul.f32 %v6131, 0.044715
    %v6180 = vmul.f32 %v6132, 0.044715
    %v6181 = vmul.f32 %v6133, 0.044715
    %v6182 = vmul.f32 %v6134, 0.044715
    %v6183 = vmul.f32 %v6135, 0.044715
    %v6184 = vmul.f32 %v6136, 0.044715
    %v6185 = vmul.f32 %v6137, 0.044715
    %v6186 = vmul.f32 %v6138, 0.044715
    %v6187 = vmul.f32 %v6139, 0.044715
    %v6188 = vmul.f32 %v6140, 0.044715
    %v6189 = vmul.f32 %v6141, 0.044715
    %v6190 = vmul.f32 %v6142, 0.044715
    %v6191 = vmul.f32 %v6143, 0.044715
    %v6192 = vmul.f32 %v6144, 0.044715
    %v6193 = vmul.f32 %v6145, 0.044715
    %v6194 = vadd.f32 %v5856, %v6146
    %v6195 = vadd.f32 %v5895, %v6147
    %v6196 = vadd.f32 %v5934, %v6148
    %v6197 = vadd.f32 %v5973, %v6149
    %v6198 = vadd.f32 %v5858, %v6150
    %v6199 = vadd.f32 %v5897, %v6151
    %v6200 = vadd.f32 %v5936, %v6152
    %v6201 = vadd.f32 %v5975, %v6153
    %v6202 = vadd.f32 %v5861, %v6154
    %v6203 = vadd.f32 %v5900, %v6155
    %v6204 = vadd.f32 %v5939, %v6156
    %v6205 = vadd.f32 %v5978, %v6157
    %v6206 = vadd.f32 %v5863, %v6158
    %v6207 = vadd.f32 %v5902, %v6159
    %v6208 = vadd.f32 %v5941, %v6160
    %v6209 = vadd.f32 %v5980, %v6161
    %v6210 = vadd.f32 %v5866, %v6162
    %v6211 = vadd.f32 %v5905, %v6163
    %v6212 = vadd.f32 %v5944, %v6164
    %v6213 = vadd.f32 %v5983, %v6165
    %v6214 = vadd.f32 %v5868, %v6166
    %v6215 = vadd.f32 %v5907, %v6167
    %v6216 = vadd.f32 %v5946, %v6168
    %v6217 = vadd.f32 %v5985, %v6169
    %v6218 = vadd.f32 %v5871, %v6170
    %v6219 = vadd.f32 %v5910, %v6171
    %v6220 = vadd.f32 %v5949, %v6172
    %v6221 = vadd.f32 %v5988, %v6173
    %v6222 = vadd.f32 %v5873, %v6174
    %v6223 = vadd.f32 %v5912, %v6175
    %v6224 = vadd.f32 %v5951, %v6176
    %v6225 = vadd.f32 %v5990, %v6177
    %v6226 = vadd.f32 %v5876, %v6178
    %v6227 = vadd.f32 %v5915, %v6179
    %v6228 = vadd.f32 %v5954, %v6180
    %v6229 = vadd.f32 %v5993, %v6181
    %v6230 = vadd.f32 %v5878, %v6182
    %v6231 = vadd.f32 %v5917, %v6183
    %v6232 = vadd.f32 %v5956, %v6184
    %v6233 = vadd.f32 %v5995, %v6185
    %v6234 = vadd.f32 %v5881, %v6186
    %v6235 = vadd.f32 %v5920, %v6187
    %v6236 = vadd.f32 %v5959, %v6188
    %v6237 = vadd.f32 %v5998, %v6189
    %v6238 = vadd.f32 %v5883, %v6190
    %v6239 = vadd.f32 %v5922, %v6191
    %v6240 = vadd.f32 %v5961, %v6192
    %v6241 = vadd.f32 %v6000, %v6193
    %v6242 = vmul.f32 %v6194, 0.7978846
    %v6243 = vmul.f32 %v6195, 0.7978846
    %v6244 = vmul.f32 %v6196, 0.7978846
    %v6245 = vmul.f32 %v6197, 0.7978846
    %v6246 = vmul.f32 %v6198, 0.7978846
    %v6247 = vmul.f32 %v6199, 0.7978846
    %v6248 = vmul.f32 %v6200, 0.7978846
    %v6249 = vmul.f32 %v6201, 0.7978846
    %v6250 = vmul.f32 %v6202, 0.7978846
    %v6251 = vmul.f32 %v6203, 0.7978846
    %v6252 = vmul.f32 %v6204, 0.7978846
    %v6253 = vmul.f32 %v6205, 0.7978846
    %v6254 = vmul.f32 %v6206, 0.7978846
    %v6255 = vmul.f32 %v6207, 0.7978846
    %v6256 = vmul.f32 %v6208, 0.7978846
    %v6257 = vmul.f32 %v6209, 0.7978846
    %v6258 = vmul.f32 %v6210, 0.7978846
    %v6259 = vmul.f32 %v6211, 0.7978846
    %v6260 = vmul.f32 %v6212, 0.7978846
    %v6261 = vmul.f32 %v6213, 0.7978846
    %v6262 = vmul.f32 %v6214, 0.7978846
    %v6263 = vmul.f32 %v6215, 0.7978846
    %v6264 = vmul.f32 %v6216, 0.7978846
    %v6265 = vmul.f32 %v6217, 0.7978846
    %v6266 = vmul.f32 %v6218, 0.7978846
    %v6267 = vmul.f32 %v6219, 0.7978846
    %v6268 = vmul.f32 %v6220, 0.7978846
    %v6269 = vmul.f32 %v6221, 0.7978846
    %v6270 = vmul.f32 %v6222, 0.7978846
    %v6271 = vmul.f32 %v6223, 0.7978846
    %v6272 = vmul.f32 %v6224, 0.7978846
    %v6273 = vmul.f32 %v6225, 0.7978846
    %v6274 = vmul.f32 %v6226, 0.7978846
    %v6275 = vmul.f32 %v6227, 0.7978846
    %v6276 = vmul.f32 %v6228, 0.7978846
    %v6277 = vmul.f32 %v6229, 0.7978846
    %v6278 = vmul.f32 %v6230, 0.7978846
    %v6279 = vmul.f32 %v6231, 0.7978846
    %v6280 = vmul.f32 %v6232, 0.7978846
    %v6281 = vmul.f32 %v6233, 0.7978846
    %v6282 = vmul.f32 %v6234, 0.7978846
    %v6283 = vmul.f32 %v6235, 0.7978846
    %v6284 = vmul.f32 %v6236, 0.7978846
    %v6285 = vmul.f32 %v6237, 0.7978846
    %v6286 = vmul.f32 %v6238, 0.7978846
    %v6287 = vmul.f32 %v6239, 0.7978846
    %v6288 = vmul.f32 %v6240, 0.7978846
    %v6289 = vmul.f32 %v6241, 0.7978846
    %v6290 = vtanh.pop %v6242
    %v6291 = vtanh.pop %v6243
    %v6292 = vtanh.pop %v6244
    %v6293 = vtanh.pop %v6245
    %v6294 = vtanh.pop %v6246
    %v6295 = vtanh.pop %v6247
    %v6296 = vtanh.pop %v6248
    %v6297 = vtanh.pop %v6249
    %v6298 = vtanh.pop %v6250
    %v6299 = vtanh.pop %v6251
    %v6300 = vtanh.pop %v6252
    %v6301 = vtanh.pop %v6253
    %v6302 = vtanh.pop %v6254
    %v6303 = vtanh.pop %v6255
    %v6304 = vtanh.pop %v6256
    %v6305 = vtanh.pop %v6257
    %v6306 = vtanh.pop %v6258
    %v6307 = vtanh.pop %v6259
    %v6308 = vtanh.pop %v6260
    %v6309 = vtanh.pop %v6261
    %v6310 = vtanh.pop %v6262
    %v6311 = vtanh.pop %v6263
    %v6312 = vtanh.pop %v6264
    %v6313 = vtanh.pop %v6265
    %v6314 = vtanh.pop %v6266
    %v6315 = vtanh.pop %v6267
    %v6316 = vtanh.pop %v6268
    %v6317 = vtanh.pop %v6269
    %v6318 = vtanh.pop %v6270
    %v6319 = vtanh.pop %v6271
    %v6320 = vtanh.pop %v6272
    %v6321 = vtanh.pop %v6273
    %v6322 = vtanh.pop %v6274
    %v6323 = vtanh.pop %v6275
    %v6324 = vtanh.pop %v6276
    %v6325 = vtanh.pop %v6277
    %v6326 = vtanh.pop %v6278
    %v6327 = vtanh.pop %v6279
    %v6328 = vtanh.pop %v6280
    %v6329 = vtanh.pop %v6281
    %v6330 = vtanh.pop %v6282
    %v6331 = vtanh.pop %v6283
    %v6332 = vtanh.pop %v6284
    %v6333 = vtanh.pop %v6285
    %v6334 = vtanh.pop %v6286
    %v6335 = vtanh.pop %v6287
    %v6336 = vtanh.pop %v6288
    %v6337 = vtanh.pop %v6289
    %v6338 = vadd.f32 %v6290, 1.0
    %v6339 = vadd.f32 %v6291, 1.0
    %v6340 = vadd.f32 %v6292, 1.0
    %v6341 = vadd.f32 %v6293, 1.0
    %v6342 = vadd.f32 %v6294, 1.0
    %v6343 = vadd.f32 %v6295, 1.0
    %v6344 = vadd.f32 %v6296, 1.0
    %v6345 = vadd.f32 %v6297, 1.0
    %v6346 = vadd.f32 %v6298, 1.0
    %v6347 = vadd.f32 %v6299, 1.0
    %v6348 = vadd.f32 %v6300, 1.0
    %v6349 = vadd.f32 %v6301, 1.0
    %v6350 = vadd.f32 %v6302, 1.0
    %v6351 = vadd.f32 %v6303, 1.0
    %v6352 = vadd.f32 %v6304, 1.0
    %v6353 = vadd.f32 %v6305, 1.0
    %v6354 = vadd.f32 %v6306, 1.0
    %v6355 = vadd.f32 %v6307, 1.0
    %v6356 = vadd.f32 %v6308, 1.0
    %v6357 = vadd.f32 %v6309, 1.0
    %v6358 = vadd.f32 %v6310, 1.0
    %v6359 = vadd.f32 %v6311, 1.0
    %v6360 = vadd.f32 %v6312, 1.0
    %v6361 = vadd.f32 %v6313, 1.0
    %v6362 = vadd.f32 %v6314, 1.0
    %v6363 = vadd.f32 %v6315, 1.0
    %v6364 = vadd.f32 %v6316, 1.0
    %v6365 = vadd.f32 %v6317, 1.0
    %v6366 = vadd.f32 %v6318, 1.0
    %v6367 = vadd.f32 %v6319, 1.0
    %v6368 = vadd.f32 %v6320, 1.0
    %v6369 = vadd.f32 %v6321, 1.0
    %v6370 = vadd.f32 %v6322, 1.0
    %v6371 = vadd.f32 %v6323, 1.0
    %v6372 = vadd.f32 %v6324, 1.0
    %v6373 = vadd.f32 %v6325, 1.0
    %v6374 = vadd.f32 %v6326, 1.0
    %v6375 = vadd.f32 %v6327, 1.0
    %v6376 = vadd.f32 %v6328, 1.0
    %v6377 = vadd.f32 %v6329, 1.0
    %v6378 = vadd.f32 %v6330, 1.0
    %v6379 = vadd.f32 %v6331, 1.0
    %v6380 = vadd.f32 %v6332, 1.0
    %v6381 = vadd.f32 %v6333, 1.0
    %v6382 = vadd.f32 %v6334, 1.0
    %v6383 = vadd.f32 %v6335, 1.0
    %v6384 = vadd.f32 %v6336, 1.0
    %v6385 = vadd.f32 %v6337, 1.0
    %v6386 = vmul.f32 %v6002, %v6338
    %v6387 = vmul.f32 %v6003, %v6339
    %v6388 = vmul.f32 %v6004, %v6340
    %v6389 = vmul.f32 %v6005, %v6341
    %v6390 = vmul.f32 %v6006, %v6342
    %v6391 = vmul.f32 %v6007, %v6343
    %v6392 = vmul.f32 %v6008, %v6344
    %v6393 = vmul.f32 %v6009, %v6345
    %v6394 = vmul.f32 %v6010, %v6346
    %v6395 = vmul.f32 %v6011, %v6347
    %v6396 = vmul.f32 %v6012, %v6348
    %v6397 = vmul.f32 %v6013, %v6349
    %v6398 = vmul.f32 %v6014, %v6350
    %v6399 = vmul.f32 %v6015, %v6351
    %v6400 = vmul.f32 %v6016, %v6352
    %v6401 = vmul.f32 %v6017, %v6353
    %v6402 = vmul.f32 %v6018, %v6354
    %v6403 = vmul.f32 %v6019, %v6355
    %v6404 = vmul.f32 %v6020, %v6356
    %v6405 = vmul.f32 %v6021, %v6357
    %v6406 = vmul.f32 %v6022, %v6358
    %v6407 = vmul.f32 %v6023, %v6359
    %v6408 = vmul.f32 %v6024, %v6360
    %v6409 = vmul.f32 %v6025, %v6361
    %v6410 = vmul.f32 %v6026, %v6362
    %v6411 = vmul.f32 %v6027, %v6363
    %v6412 = vmul.f32 %v6028, %v6364
    %v6413 = vmul.f32 %v6029, %v6365
    %v6414 = vmul.f32 %v6030, %v6366
    %v6415 = vmul.f32 %v6031, %v6367
    %v6416 = vmul.f32 %v6032, %v6368
    %v6417 = vmul.f32 %v6033, %v6369
    %v6418 = vmul.f32 %v6034, %v6370
    %v6419 = vmul.f32 %v6035, %v6371
    %v6420 = vmul.f32 %v6036, %v6372
    %v6421 = vmul.f32 %v6037, %v6373
    %v6422 = vmul.f32 %v6038, %v6374
    %v6423 = vmul.f32 %v6039, %v6375
    %v6424 = vmul.f32 %v6040, %v6376
    %v6425 = vmul.f32 %v6041, %v6377
    %v6426 = vmul.f32 %v6042, %v6378
    %v6427 = vmul.f32 %v6043, %v6379
    %v6428 = vmul.f32 %v6044, %v6380
    %v6429 = vmul.f32 %v6045, %v6381
    %v6430 = vmul.f32 %v6046, %v6382
    %v6431 = vmul.f32 %v6047, %v6383
    %v6432 = vmul.f32 %v6048, %v6384
    %v6433 = vmul.f32 %v6049, %v6385
    %v6434 = vpack.c.bf16 %v6390, %v6386
    %v6435 = vpack.c.bf16 %v6391, %v6387
    %v6436 = vpack.c.bf16 %v6392, %v6388
    %v6437 = vpack.c.bf16 %v6393, %v6389
    %v6438 = vpack.c.bf16 %v6398, %v6394
    %v6439 = vpack.c.bf16 %v6399, %v6395
    %v6440 = vpack.c.bf16 %v6400, %v6396
    %v6441 = vpack.c.bf16 %v6401, %v6397
    %v6442 = vpack.c.bf16 %v6406, %v6402
    %v6443 = vpack.c.bf16 %v6407, %v6403
    %v6444 = vpack.c.bf16 %v6408, %v6404
    %v6445 = vpack.c.bf16 %v6409, %v6405
    %v6446 = vpack.c.bf16 %v6414, %v6410
    %v6447 = vpack.c.bf16 %v6415, %v6411
    %v6448 = vpack.c.bf16 %v6416, %v6412
    %v6449 = vpack.c.bf16 %v6417, %v6413
    %v6450 = vpack.c.bf16 %v6422, %v6418
    %v6451 = vpack.c.bf16 %v6423, %v6419
    %v6452 = vpack.c.bf16 %v6424, %v6420
    %v6453 = vpack.c.bf16 %v6425, %v6421
    %v6454 = vpack.c.bf16 %v6430, %v6426
    %v6455 = vpack.c.bf16 %v6431, %v6427
    %v6456 = vpack.c.bf16 %v6432, %v6428
    %v6457 = vpack.c.bf16 %v6433, %v6429
    %v6458 = vld [vmem:[#allocation28] sm:$0xf]
    %v6459 = vld [vmem:[#allocation28 + $0x4] sm:$0xf]
    %v6460 = vld [vmem:[#allocation28 + $0x8] sm:$0xf]
    %v6461 = vld [vmem:[#allocation28 + $0xc] sm:$0xf]
    %v6462 = vld [vmem:[#allocation28 + $0x10] sm:$0xf]
    %v6463 = vld [vmem:[#allocation28 + $0x14] sm:$0xf]
    %v6464 = vld [vmem:[#allocation28 + $0x18] sm:$0xf]
    %v6465 = vld [vmem:[#allocation28 + $0x1c] sm:$0xf]
    %v6466 = vld [vmem:[#allocation28 + $0x20] sm:$0xf]
    %v6467 = vld [vmem:[#allocation28 + $0x24] sm:$0xf]
    %v6468 = vld [vmem:[#allocation28 + $0x28] sm:$0xf]
    %v6469 = vld [vmem:[#allocation28 + $0x2c] sm:$0xf]
    %v6470 = vld [vmem:[#allocation28 + $0x30] sm:$0xf]
    %v6471 = vld [vmem:[#allocation28 + $0x34] sm:$0xf]
    %v6472 = vld [vmem:[#allocation28 + $0x38] sm:$0xf]
    %v6473 = vld [vmem:[#allocation28 + $0x3c] sm:$0xf]
    %v6474 = vld [vmem:[#allocation28 + $0x40] sm:$0xf]
    %v6475 = vld [vmem:[#allocation28 + $0x44] sm:$0xf]
    %v6476 = vld [vmem:[#allocation28 + $0x48] sm:$0xf]
    %v6477 = vld [vmem:[#allocation28 + $0x4c] sm:$0xf]
    %v6478 = vld [vmem:[#allocation28 + $0x50] sm:$0xf]
    %v6479 = vld [vmem:[#allocation28 + $0x54] sm:$0xf]
    %v6480 = vld [vmem:[#allocation28 + $0x58] sm:$0xf]
    %v6481 = vld [vmem:[#allocation28 + $0x5c] sm:$0xf]
    %v6482 = vld [vmem:[#allocation28 + $0x60] sm:$0xf]
    %v6483 = vld [vmem:[#allocation28 + $0x64] sm:$0xf]
    %v6484 = vld [vmem:[#allocation28 + $0x68] sm:$0xf]
    %v6485 = vld [vmem:[#allocation28 + $0x6c] sm:$0xf]
    %v6486 = vld [vmem:[#allocation28 + $0x70] sm:$0xf]
    %v6487 = vld [vmem:[#allocation28 + $0x74] sm:$0xf]
    %v6488 = vld [vmem:[#allocation28 + $0x78] sm:$0xf]
    %v6489 = vld [vmem:[#allocation28 + $0x7c] sm:$0xf]
    %v6490 = vld [vmem:[#allocation28 + $0x80] sm:$0xf]
    %v6491 = vld [vmem:[#allocation28 + $0x84] sm:$0xf]
    %v6492 = vld [vmem:[#allocation28 + $0x88] sm:$0xf]
    %v6493 = vld [vmem:[#allocation28 + $0x8c] sm:$0xf]
    %v6494 = vld [vmem:[#allocation28 + $0x90] sm:$0xf]
    %v6495 = vld [vmem:[#allocation28 + $0x94] sm:$0xf]
    %v6496 = vld [vmem:[#allocation28 + $0x98] sm:$0xf]
    %v6497 = vld [vmem:[#allocation28 + $0x9c] sm:$0xf]
    %v6498 = vld [vmem:[#allocation28 + $0xa0] sm:$0xf]
    %v6499 = vld [vmem:[#allocation28 + $0xa4] sm:$0xf]
    %v6500 = vld [vmem:[#allocation28 + $0xa8] sm:$0xf]
    %v6501 = vld [vmem:[#allocation28 + $0xac] sm:$0xf]
    %v6502 = vld [vmem:[#allocation28 + $0xb0] sm:$0xf]
    %v6503 = vld [vmem:[#allocation28 + $0xb4] sm:$0xf]
    %v6504 = vld [vmem:[#allocation28 + $0xb8] sm:$0xf]
    %v6505 = vld [vmem:[#allocation28 + $0xbc] sm:$0xf]
    %v6506 = vld [vmem:[#allocation28 + $0xc0] sm:$0xf]
    %v6507 = vld [vmem:[#allocation28 + $0xc4] sm:$0xf]
    %v6508 = vld [vmem:[#allocation28 + $0xc8] sm:$0xf]
    %v6509 = vld [vmem:[#allocation28 + $0xcc] sm:$0xf]
    %v6510 = vld [vmem:[#allocation28 + $0xd0] sm:$0xf]
    %v6511 = vld [vmem:[#allocation28 + $0xd4] sm:$0xf]
    %v6512 = vld [vmem:[#allocation28 + $0xd8] sm:$0xf]
    %v6513 = vld [vmem:[#allocation28 + $0xdc] sm:$0xf]
    %v6514 = vld [vmem:[#allocation28 + $0xe0] sm:$0xf]
    %v6515 = vld [vmem:[#allocation28 + $0xe4] sm:$0xf]
    %v6516 = vld [vmem:[#allocation28 + $0xe8] sm:$0xf]
    %v6517 = vld [vmem:[#allocation28 + $0xec] sm:$0xf]
    %v6518 = vld [vmem:[#allocation28 + $0xf0] sm:$0xf]
    %v6519 = vld [vmem:[#allocation28 + $0xf4] sm:$0xf]
    %v6520 = vld [vmem:[#allocation28 + $0xf8] sm:$0xf]
    %v6521 = vld [vmem:[#allocation28 + $0xfc] sm:$0xf]
    %v6522 = vld [vmem:[#allocation30] sm:$0x1]
    %v6524 = vperm.slane %v6522, 0
    %v6590 = vunpack.c.l.b16 %v6458
    %v6591 = vunpack.c.l.b16 %v6459
    %v6592 = vunpack.c.l.b16 %v6460
    %v6593 = vunpack.c.l.b16 %v6461
    %v6594 = vunpack.c.l.b16 %v6462
    %v6595 = vunpack.c.l.b16 %v6463
    %v6596 = vunpack.c.l.b16 %v6464
    %v6597 = vunpack.c.l.b16 %v6465
    %v6598 = vunpack.c.l.b16 %v6466
    %v6599 = vunpack.c.l.b16 %v6467
    %v6600 = vunpack.c.l.b16 %v6468
    %v6601 = vunpack.c.l.b16 %v6469
    %v6602 = vunpack.c.l.b16 %v6470
    %v6603 = vunpack.c.l.b16 %v6471
    %v6604 = vunpack.c.l.b16 %v6472
    %v6605 = vunpack.c.l.b16 %v6473
    %v6606 = vunpack.c.l.b16 %v6474
    %v6607 = vunpack.c.l.b16 %v6475
    %v6608 = vunpack.c.l.b16 %v6476
    %v6609 = vunpack.c.l.b16 %v6477
    %v6610 = vunpack.c.l.b16 %v6478
    %v6611 = vunpack.c.l.b16 %v6479
    %v6612 = vunpack.c.l.b16 %v6480
    %v6613 = vunpack.c.l.b16 %v6481
    %v6614 = vunpack.c.l.b16 %v6482
    %v6615 = vunpack.c.l.b16 %v6483
    %v6616 = vunpack.c.l.b16 %v6484
    %v6617 = vunpack.c.l.b16 %v6485
    %v6618 = vunpack.c.l.b16 %v6486
    %v6619 = vunpack.c.l.b16 %v6487
    %v6620 = vunpack.c.l.b16 %v6488
    %v6621 = vunpack.c.l.b16 %v6489
    %v6622 = vunpack.c.l.b16 %v6490
    %v6623 = vunpack.c.l.b16 %v6491
    %v6624 = vunpack.c.l.b16 %v6492
    %v6625 = vunpack.c.l.b16 %v6493
    %v6626 = vunpack.c.l.b16 %v6494
    %v6627 = vunpack.c.l.b16 %v6495
    %v6628 = vunpack.c.l.b16 %v6496
    %v6629 = vunpack.c.l.b16 %v6497
    %v6630 = vunpack.c.l.b16 %v6498
    %v6631 = vunpack.c.l.b16 %v6499
    %v6632 = vunpack.c.l.b16 %v6500
    %v6633 = vunpack.c.l.b16 %v6501
    %v6634 = vunpack.c.l.b16 %v6502
    %v6635 = vunpack.c.l.b16 %v6503
    %v6636 = vunpack.c.l.b16 %v6504
    %v6637 = vunpack.c.l.b16 %v6505
    %v6638 = vunpack.c.l.b16 %v6506
    %v6639 = vunpack.c.l.b16 %v6507
    %v6640 = vunpack.c.l.b16 %v6508
    %v6641 = vunpack.c.l.b16 %v6509
    %v6642 = vunpack.c.l.b16 %v6510
    %v6643 = vunpack.c.l.b16 %v6511
    %v6644 = vunpack.c.l.b16 %v6512
    %v6645 = vunpack.c.l.b16 %v6513
    %v6646 = vunpack.c.l.b16 %v6514
    %v6647 = vunpack.c.l.b16 %v6515
    %v6648 = vunpack.c.l.b16 %v6516
    %v6649 = vunpack.c.l.b16 %v6517
    %v6650 = vunpack.c.l.b16 %v6518
    %v6651 = vunpack.c.l.b16 %v6519
    %v6652 = vunpack.c.l.b16 %v6520
    %v6653 = vunpack.c.l.b16 %v6521
    %v6654 = vpack.c.b16 %v6591, %v6590
    %v6655 = vpack.c.b16 %v6593, %v6592
    %v6656 = vpack.c.b16 %v6595, %v6594
    %v6657 = vpack.c.b16 %v6597, %v6596
    %v6658 = vpack.c.b16 %v6599, %v6598
    %v6659 = vpack.c.b16 %v6601, %v6600
    %v6660 = vpack.c.b16 %v6603, %v6602
    %v6661 = vpack.c.b16 %v6605, %v6604
    %v6662 = vpack.c.b16 %v6607, %v6606
    %v6663 = vpack.c.b16 %v6609, %v6608
    %v6664 = vpack.c.b16 %v6611, %v6610
    %v6665 = vpack.c.b16 %v6613, %v6612
    %v6666 = vpack.c.b16 %v6615, %v6614
    %v6667 = vpack.c.b16 %v6617, %v6616
    %v6668 = vpack.c.b16 %v6619, %v6618
    %v6669 = vpack.c.b16 %v6621, %v6620
    %v6670 = vpack.c.b16 %v6623, %v6622
    %v6671 = vpack.c.b16 %v6625, %v6624
    %v6672 = vpack.c.b16 %v6627, %v6626
    %v6673 = vpack.c.b16 %v6629, %v6628
    %v6674 = vpack.c.b16 %v6631, %v6630
    %v6675 = vpack.c.b16 %v6633, %v6632
    %v6676 = vpack.c.b16 %v6635, %v6634
    %v6677 = vpack.c.b16 %v6637, %v6636
    %v6678 = vpack.c.b16 %v6639, %v6638
    %v6679 = vpack.c.b16 %v6641, %v6640
    %v6680 = vpack.c.b16 %v6643, %v6642
    %v6681 = vpack.c.b16 %v6645, %v6644
    %v6682 = vpack.c.b16 %v6647, %v6646
    %v6683 = vpack.c.b16 %v6649, %v6648
    %v6684 = vpack.c.b16 %v6651, %v6650
    %v6685 = vpack.c.b16 %v6653, %v6652
    %6718 = vmatpush.bf16.msra.mxu0 %v6661
    %6719 = vmatpush.bf16.msra.mxu0 %v6660
    %6720 = vmatpush.bf16.msra.mxu0 %v6659
    %6721 = vmatpush.bf16.msra.mxu0 %v6658
    %6722 = vmatpush.bf16.msra.mxu0 %v6657
    %6723 = vmatpush.bf16.msra.mxu0 %v6656
    %6724 = vmatpush.bf16.msra.mxu0 %v6655
    %6725 = vmatpush.bf16.msra.mxu0 %v6654
    %6726 = vmatmul.bf16.gmra.mxu0 %v6434
    %v6727 = vpop.f32.mrf.mxu0
    %v6728 = vadd.f32 %v6524, %v6727
    %v6729 = vpop.f32.mrf.mxu0
    %v6730 = vadd.f32 %v6524, %v6729
    %6731 = vmatmul.bf16.gmra.mxu0 %v6438
    %v6732 = vpop.f32.mrf.mxu0
    %v6733 = vadd.f32 %v6524, %v6732
    %v6734 = vpop.f32.mrf.mxu0
    %v6735 = vadd.f32 %v6524, %v6734
    %6736 = vmatmul.bf16.gmra.mxu0 %v6442
    %v6737 = vpop.f32.mrf.mxu0
    %v6738 = vadd.f32 %v6524, %v6737
    %v6739 = vpop.f32.mrf.mxu0
    %v6740 = vadd.f32 %v6524, %v6739
    %6741 = vmatmul.bf16.gmra.mxu0 %v6446
    %v6742 = vpop.f32.mrf.mxu0
    %v6743 = vadd.f32 %v6524, %v6742
    %v6744 = vpop.f32.mrf.mxu0
    %v6745 = vadd.f32 %v6524, %v6744
    %6746 = vmatmul.bf16.gmra.mxu0 %v6450
    %v6747 = vpop.f32.mrf.mxu0
    %v6748 = vadd.f32 %v6524, %v6747
    %v6749 = vpop.f32.mrf.mxu0
    %v6750 = vadd.f32 %v6524, %v6749
    %6751 = vmatmul.bf16.gmra.mxu0 %v6454
    %v6752 = vpop.f32.mrf.mxu0
    %v6753 = vadd.f32 %v6524, %v6752
    %v6754 = vpop.f32.mrf.mxu0
    %v6755 = vadd.f32 %v6524, %v6754
    %6756 = vdwg.mxu0
    %6757 = vmatpush.bf16.msra.mxu0 %v6669
    %6758 = vmatpush.bf16.msra.mxu0 %v6668
    %6759 = vmatpush.bf16.msra.mxu0 %v6667
    %6760 = vmatpush.bf16.msra.mxu0 %v6666
    %6761 = vmatpush.bf16.msra.mxu0 %v6665
    %6762 = vmatpush.bf16.msra.mxu0 %v6664
    %6763 = vmatpush.bf16.msra.mxu0 %v6663
    %6764 = vmatpush.bf16.msra.mxu0 %v6662
    %6765 = vmatmul.bf16.gmra.mxu0 %v6435
    %v6766 = vpop.f32.mrf.mxu0
    %v6767 = vadd.f32 %v6728, %v6766
    %v6768 = vpop.f32.mrf.mxu0
    %v6769 = vadd.f32 %v6730, %v6768
    %6770 = vmatmul.bf16.gmra.mxu0 %v6439
    %v6771 = vpop.f32.mrf.mxu0
    %v6772 = vadd.f32 %v6733, %v6771
    %v6773 = vpop.f32.mrf.mxu0
    %v6774 = vadd.f32 %v6735, %v6773
    %6775 = vmatmul.bf16.gmra.mxu0 %v6443
    %v6776 = vpop.f32.mrf.mxu0
    %v6777 = vadd.f32 %v6738, %v6776
    %v6778 = vpop.f32.mrf.mxu0
    %v6779 = vadd.f32 %v6740, %v6778
    %6780 = vmatmul.bf16.gmra.mxu0 %v6447
    %v6781 = vpop.f32.mrf.mxu0
    %v6782 = vadd.f32 %v6743, %v6781
    %v6783 = vpop.f32.mrf.mxu0
    %v6784 = vadd.f32 %v6745, %v6783
    %6785 = vmatmul.bf16.gmra.mxu0 %v6451
    %v6786 = vpop.f32.mrf.mxu0
    %v6787 = vadd.f32 %v6748, %v6786
    %v6788 = vpop.f32.mrf.mxu0
    %v6789 = vadd.f32 %v6750, %v6788
    %6790 = vmatmul.bf16.gmra.mxu0 %v6455
    %v6791 = vpop.f32.mrf.mxu0
    %v6792 = vadd.f32 %v6753, %v6791
    %v6793 = vpop.f32.mrf.mxu0
    %v6794 = vadd.f32 %v6755, %v6793
    %6795 = vdwg.mxu0
    %6796 = vmatpush.bf16.msra.mxu0 %v6677
    %6797 = vmatpush.bf16.msra.mxu0 %v6676
    %6798 = vmatpush.bf16.msra.mxu0 %v6675
    %6799 = vmatpush.bf16.msra.mxu0 %v6674
    %6800 = vmatpush.bf16.msra.mxu0 %v6673
    %6801 = vmatpush.bf16.msra.mxu0 %v6672
    %6802 = vmatpush.bf16.msra.mxu0 %v6671
    %6803 = vmatpush.bf16.msra.mxu0 %v6670
    %6804 = vmatmul.bf16.gmra.mxu0 %v6436
    %v6805 = vpop.f32.mrf.mxu0
    %v6806 = vadd.f32 %v6767, %v6805
    %v6807 = vpop.f32.mrf.mxu0
    %v6808 = vadd.f32 %v6769, %v6807
    %6809 = vmatmul.bf16.gmra.mxu0 %v6440
    %v6810 = vpop.f32.mrf.mxu0
    %v6811 = vadd.f32 %v6772, %v6810
    %v6812 = vpop.f32.mrf.mxu0
    %v6813 = vadd.f32 %v6774, %v6812
    %6814 = vmatmul.bf16.gmra.mxu0 %v6444
    %v6815 = vpop.f32.mrf.mxu0
    %v6816 = vadd.f32 %v6777, %v6815
    %v6817 = vpop.f32.mrf.mxu0
    %v6818 = vadd.f32 %v6779, %v6817
    %6819 = vmatmul.bf16.gmra.mxu0 %v6448
    %v6820 = vpop.f32.mrf.mxu0
    %v6821 = vadd.f32 %v6782, %v6820
    %v6822 = vpop.f32.mrf.mxu0
    %v6823 = vadd.f32 %v6784, %v6822
    %6824 = vmatmul.bf16.gmra.mxu0 %v6452
    %v6825 = vpop.f32.mrf.mxu0
    %v6826 = vadd.f32 %v6787, %v6825
    %v6827 = vpop.f32.mrf.mxu0
    %v6828 = vadd.f32 %v6789, %v6827
    %6829 = vmatmul.bf16.gmra.mxu0 %v6456
    %v6830 = vpop.f32.mrf.mxu0
    %v6831 = vadd.f32 %v6792, %v6830
    %v6832 = vpop.f32.mrf.mxu0
    %v6833 = vadd.f32 %v6794, %v6832
    %6834 = vdwg.mxu0
    %6835 = vmatpush.bf16.msra.mxu0 %v6685
    %6836 = vmatpush.bf16.msra.mxu0 %v6684
    %6837 = vmatpush.bf16.msra.mxu0 %v6683
    %6838 = vmatpush.bf16.msra.mxu0 %v6682
    %6839 = vmatpush.bf16.msra.mxu0 %v6681
    %6840 = vmatpush.bf16.msra.mxu0 %v6680
    %6841 = vmatpush.bf16.msra.mxu0 %v6679
    %6842 = vmatpush.bf16.msra.mxu0 %v6678
    %6843 = vmatmul.bf16.gmra.mxu0 %v6437
    %v6844 = vpop.f32.mrf.mxu0
    %v6845 = vadd.f32 %v6806, %v6844
    %v6846 = vpop.f32.mrf.mxu0
    %v6847 = vadd.f32 %v6808, %v6846
    %6848 = vmatmul.bf16.gmra.mxu0 %v6441
    %v6849 = vpop.f32.mrf.mxu0
    %v6850 = vadd.f32 %v6811, %v6849
    %v6851 = vpop.f32.mrf.mxu0
    %v6852 = vadd.f32 %v6813, %v6851
    %6853 = vmatmul.bf16.gmra.mxu0 %v6445
    %v6854 = vpop.f32.mrf.mxu0
    %v6855 = vadd.f32 %v6816, %v6854
    %v6856 = vpop.f32.mrf.mxu0
    %v6857 = vadd.f32 %v6818, %v6856
    %6858 = vmatmul.bf16.gmra.mxu0 %v6449
    %v6859 = vpop.f32.mrf.mxu0
    %v6860 = vadd.f32 %v6821, %v6859
    %v6861 = vpop.f32.mrf.mxu0
    %v6862 = vadd.f32 %v6823, %v6861
    %6863 = vmatmul.bf16.gmra.mxu0 %v6453
    %v6864 = vpop.f32.mrf.mxu0
    %v6865 = vadd.f32 %v6826, %v6864
    %v6866 = vpop.f32.mrf.mxu0
    %v6867 = vadd.f32 %v6828, %v6866
    %6868 = vmatmul.bf16.gmra.mxu0 %v6457
    %v6869 = vpop.f32.mrf.mxu0
    %v6870 = vadd.f32 %v6831, %v6869
    %v6871 = vpop.f32.mrf.mxu0
    %v6872 = vadd.f32 %v6833, %v6871
    %6873 = vdwg.mxu0
    %v6874 = vadd.f32 %v5354, %v6845
    %v6875 = vadd.f32 %v5355, %v6847
    %v6876 = vadd.f32 %v5356, %v6850
    %v6877 = vadd.f32 %v5357, %v6852
    %v6878 = vadd.f32 %v5358, %v6855
    %v6879 = vadd.f32 %v5359, %v6857
    %v6880 = vadd.f32 %v5360, %v6860
    %v6881 = vadd.f32 %v5361, %v6862
    %v6882 = vadd.f32 %v5362, %v6865
    %v6883 = vadd.f32 %v5363, %v6867
    %v6884 = vadd.f32 %v5364, %v6870
    %v6885 = vadd.f32 %v5365, %v6872
    %v6886 = vld [vmem:[%s61] sm:$0x1]
    %v6887 = vld [vmem:[%s63] sm:$0x1]
    %6888 = vadd.xlane.f32.xlu0 %v6874
    %v6889 = vpop.xlane.xlu0 %6888
    %6890 = vadd.xlane.f32.xlu0 %v6875
    %v6891 = vpop.xlane.xlu0 %6890
    %6892 = vadd.xlane.f32.xlu0 %v6876
    %v6893 = vpop.xlane.xlu0 %6892
    %6894 = vadd.xlane.f32.xlu0 %v6877
    %v6895 = vpop.xlane.xlu0 %6894
    %6896 = vadd.xlane.f32.xlu0 %v6878
    %v6897 = vpop.xlane.xlu0 %6896
    %6898 = vadd.xlane.f32.xlu0 %v6879
    %v6899 = vpop.xlane.xlu0 %6898
    %6900 = vadd.xlane.f32.xlu0 %v6880
    %v6901 = vpop.xlane.xlu0 %6900
    %6902 = vadd.xlane.f32.xlu0 %v6881
    %v6903 = vpop.xlane.xlu0 %6902
    %6904 = vadd.xlane.f32.xlu0 %v6882
    %v6905 = vpop.xlane.xlu0 %6904
    %6906 = vadd.xlane.f32.xlu0 %v6883
    %v6907 = vpop.xlane.xlu0 %6906
    %6908 = vadd.xlane.f32.xlu0 %v6884
    %v6909 = vpop.xlane.xlu0 %6908
    %6910 = vadd.xlane.f32.xlu0 %v6885
    %v6911 = vpop.xlane.xlu0 %6910
    %v6912 = vmul.f32 %v6889, %v2654
    %v6913 = vmul.f32 %v6891, %v2654
    %v6914 = vmul.f32 %v6893, %v2654
    %v6915 = vmul.f32 %v6895, %v2654
    %v6916 = vmul.f32 %v6897, %v2654
    %v6917 = vmul.f32 %v6899, %v2654
    %v6918 = vmul.f32 %v6901, %v2654
    %v6919 = vmul.f32 %v6903, %v2654
    %v6920 = vmul.f32 %v6905, %v2654
    %v6921 = vmul.f32 %v6907, %v2654
    %v6922 = vmul.f32 %v6909, %v2654
    %v6923 = vmul.f32 %v6911, %v2654
    %v6924 = vsub.f32 %v6874, %v6912
    %v6925 = vsub.f32 %v6875, %v6913
    %v6926 = vsub.f32 %v6876, %v6914
    %v6927 = vsub.f32 %v6877, %v6915
    %v6928 = vsub.f32 %v6878, %v6916
    %v6929 = vsub.f32 %v6879, %v6917
    %v6930 = vsub.f32 %v6880, %v6918
    %v6931 = vsub.f32 %v6881, %v6919
    %v6932 = vsub.f32 %v6882, %v6920
    %v6933 = vsub.f32 %v6883, %v6921
    %v6934 = vsub.f32 %v6884, %v6922
    %v6935 = vsub.f32 %v6885, %v6923
    %v6936 = vmul.f32 %v6924, %v6924
    %v6937 = vmul.f32 %v6925, %v6925
    %v6938 = vmul.f32 %v6926, %v6926
    %v6939 = vmul.f32 %v6927, %v6927
    %v6940 = vmul.f32 %v6928, %v6928
    %v6941 = vmul.f32 %v6929, %v6929
    %v6942 = vmul.f32 %v6930, %v6930
    %v6943 = vmul.f32 %v6931, %v6931
    %v6944 = vmul.f32 %v6932, %v6932
    %v6945 = vmul.f32 %v6933, %v6933
    %v6946 = vmul.f32 %v6934, %v6934
    %v6947 = vmul.f32 %v6935, %v6935
    %6948 = vadd.xlane.f32.xlu0 %v6936
    %v6949 = vpop.xlane.xlu0 %6948
    %6950 = vadd.xlane.f32.xlu0 %v6937
    %v6951 = vpop.xlane.xlu0 %6950
    %6952 = vadd.xlane.f32.xlu0 %v6938
    %v6953 = vpop.xlane.xlu0 %6952
    %6954 = vadd.xlane.f32.xlu0 %v6939
    %v6955 = vpop.xlane.xlu0 %6954
    %6956 = vadd.xlane.f32.xlu0 %v6940
    %v6957 = vpop.xlane.xlu0 %6956
    %6958 = vadd.xlane.f32.xlu0 %v6941
    %v6959 = vpop.xlane.xlu0 %6958
    %6960 = vadd.xlane.f32.xlu0 %v6942
    %v6961 = vpop.xlane.xlu0 %6960
    %6962 = vadd.xlane.f32.xlu0 %v6943
    %v6963 = vpop.xlane.xlu0 %6962
    %6964 = vadd.xlane.f32.xlu0 %v6944
    %v6965 = vpop.xlane.xlu0 %6964
    %6966 = vadd.xlane.f32.xlu0 %v6945
    %v6967 = vpop.xlane.xlu0 %6966
    %6968 = vadd.xlane.f32.xlu0 %v6946
    %v6969 = vpop.xlane.xlu0 %6968
    %6970 = vadd.xlane.f32.xlu0 %v6947
    %v6971 = vpop.xlane.xlu0 %6970
    %v6972 = vmul.f32 %v6949, %v2654
    %v6973 = vmul.f32 %v6951, %v2654
    %v6974 = vmul.f32 %v6953, %v2654
    %v6975 = vmul.f32 %v6955, %v2654
    %v6976 = vmul.f32 %v6957, %v2654
    %v6977 = vmul.f32 %v6959, %v2654
    %v6978 = vmul.f32 %v6961, %v2654
    %v6979 = vmul.f32 %v6963, %v2654
    %v6980 = vmul.f32 %v6965, %v2654
    %v6981 = vmul.f32 %v6967, %v2654
    %v6982 = vmul.f32 %v6969, %v2654
    %v6983 = vmul.f32 %v6971, %v2654
    %v6984 = vadd.f32 %v6972, 1e-05
    %v6985 = vadd.f32 %v6973, 1e-05
    %v6986 = vadd.f32 %v6974, 1e-05
    %v6987 = vadd.f32 %v6975, 1e-05
    %v6988 = vadd.f32 %v6976, 1e-05
    %v6989 = vadd.f32 %v6977, 1e-05
    %v6990 = vadd.f32 %v6978, 1e-05
    %v6991 = vadd.f32 %v6979, 1e-05
    %v6992 = vadd.f32 %v6980, 1e-05
    %v6993 = vadd.f32 %v6981, 1e-05
    %v6994 = vadd.f32 %v6982, 1e-05
    %v6995 = vadd.f32 %v6983, 1e-05
    %v6996 = vrsqrt.pop %v6984
    %v6997 = vmul.f32 %v6996, %v6984
    %v6998 = vmul.f32 %v6997, %v6996
    %v6999 = vmul.f32 0.5, %v6998
    %v7000 = vsub.f32 1.5, %v6999
    %v7001 = vmul.f32 %v6996, %v7000
    %vm7002 = vweird.f32 %v6984
    %vm7003 = vweird.f32 %v6996
    %vm7004 = vmor %vm7002, %vm7003
    %v7005 = vsel %vm7004, %v6996, %v7001
    %v7006 = vrsqrt.pop %v6985
    %v7007 = vmul.f32 %v7006, %v6985
    %v7008 = vmul.f32 %v7007, %v7006
    %v7009 = vmul.f32 0.5, %v7008
    %v7010 = vsub.f32 1.5, %v7009
    %v7011 = vmul.f32 %v7006, %v7010
    %vm7012 = vweird.f32 %v6985
    %vm7013 = vweird.f32 %v7006
    %vm7014 = vmor %vm7012, %vm7013
    %v7015 = vsel %vm7014, %v7006, %v7011
    %v7016 = vrsqrt.pop %v6986
    %v7017 = vmul.f32 %v7016, %v6986
    %v7018 = vmul.f32 %v7017, %v7016
    %v7019 = vmul.f32 0.5, %v7018
    %v7020 = vsub.f32 1.5, %v7019
    %v7021 = vmul.f32 %v7016, %v7020
    %vm7022 = vweird.f32 %v6986
    %vm7023 = vweird.f32 %v7016
    %vm7024 = vmor %vm7022, %vm7023
    %v7025 = vsel %vm7024, %v7016, %v7021
    %v7026 = vrsqrt.pop %v6987
    %v7027 = vmul.f32 %v7026, %v6987
    %v7028 = vmul.f32 %v7027, %v7026
    %v7029 = vmul.f32 0.5, %v7028
    %v7030 = vsub.f32 1.5, %v7029
    %v7031 = vmul.f32 %v7026, %v7030
    %vm7032 = vweird.f32 %v6987
    %vm7033 = vweird.f32 %v7026
    %vm7034 = vmor %vm7032, %vm7033
    %v7035 = vsel %vm7034, %v7026, %v7031
    %v7036 = vrsqrt.pop %v6988
    %v7037 = vmul.f32 %v7036, %v6988
    %v7038 = vmul.f32 %v7037, %v7036
    %v7039 = vmul.f32 0.5, %v7038
    %v7040 = vsub.f32 1.5, %v7039
    %v7041 = vmul.f32 %v7036, %v7040
    %vm7042 = vweird.f32 %v6988
    %vm7043 = vweird.f32 %v7036
    %vm7044 = vmor %vm7042, %vm7043
    %v7045 = vsel %vm7044, %v7036, %v7041
    %v7046 = vrsqrt.pop %v6989
    %v7047 = vmul.f32 %v7046, %v6989
    %v7048 = vmul.f32 %v7047, %v7046
    %v7049 = vmul.f32 0.5, %v7048
    %v7050 = vsub.f32 1.5, %v7049
    %v7051 = vmul.f32 %v7046, %v7050
    %vm7052 = vweird.f32 %v6989
    %vm7053 = vweird.f32 %v7046
    %vm7054 = vmor %vm7052, %vm7053
    %v7055 = vsel %vm7054, %v7046, %v7051
    %v7056 = vrsqrt.pop %v6990
    %v7057 = vmul.f32 %v7056, %v6990
    %v7058 = vmul.f32 %v7057, %v7056
    %v7059 = vmul.f32 0.5, %v7058
    %v7060 = vsub.f32 1.5, %v7059
    %v7061 = vmul.f32 %v7056, %v7060
    %vm7062 = vweird.f32 %v6990
    %vm7063 = vweird.f32 %v7056
    %vm7064 = vmor %vm7062, %vm7063
    %v7065 = vsel %vm7064, %v7056, %v7061
    %v7066 = vrsqrt.pop %v6991
    %v7067 = vmul.f32 %v7066, %v6991
    %v7068 = vmul.f32 %v7067, %v7066
    %v7069 = vmul.f32 0.5, %v7068
    %v7070 = vsub.f32 1.5, %v7069
    %v7071 = vmul.f32 %v7066, %v7070
    %vm7072 = vweird.f32 %v6991
    %vm7073 = vweird.f32 %v7066
    %vm7074 = vmor %vm7072, %vm7073
    %v7075 = vsel %vm7074, %v7066, %v7071
    %v7076 = vrsqrt.pop %v6992
    %v7077 = vmul.f32 %v7076, %v6992
    %v7078 = vmul.f32 %v7077, %v7076
    %v7079 = vmul.f32 0.5, %v7078
    %v7080 = vsub.f32 1.5, %v7079
    %v7081 = vmul.f32 %v7076, %v7080
    %vm7082 = vweird.f32 %v6992
    %vm7083 = vweird.f32 %v7076
    %vm7084 = vmor %vm7082, %vm7083
    %v7085 = vsel %vm7084, %v7076, %v7081
    %v7086 = vrsqrt.pop %v6993
    %v7087 = vmul.f32 %v7086, %v6993
    %v7088 = vmul.f32 %v7087, %v7086
    %v7089 = vmul.f32 0.5, %v7088
    %v7090 = vsub.f32 1.5, %v7089
    %v7091 = vmul.f32 %v7086, %v7090
    %vm7092 = vweird.f32 %v6993
    %vm7093 = vweird.f32 %v7086
    %vm7094 = vmor %vm7092, %vm7093
    %v7095 = vsel %vm7094, %v7086, %v7091
    %v7096 = vrsqrt.pop %v6994
    %v7097 = vmul.f32 %v7096, %v6994
    %v7098 = vmul.f32 %v7097, %v7096
    %v7099 = vmul.f32 0.5, %v7098
    %v7100 = vsub.f32 1.5, %v7099
    %v7101 = vmul.f32 %v7096, %v7100
    %vm7102 = vweird.f32 %v6994
    %vm7103 = vweird.f32 %v7096
    %vm7104 = vmor %vm7102, %vm7103
    %v7105 = vsel %vm7104, %v7096, %v7101
    %v7106 = vrsqrt.pop %v6995
    %v7107 = vmul.f32 %v7106, %v6995
    %v7108 = vmul.f32 %v7107, %v7106
    %v7109 = vmul.f32 0.5, %v7108
    %v7110 = vsub.f32 1.5, %v7109
    %v7111 = vmul.f32 %v7106, %v7110
    %vm7112 = vweird.f32 %v6995
    %vm7113 = vweird.f32 %v7106
    %vm7114 = vmor %vm7112, %vm7113
    %v7115 = vsel %vm7114, %v7106, %v7111
    %v7116 = vmul.f32 %v6924, %v7005
    %v7117 = vmul.f32 %v6925, %v7015
    %v7118 = vmul.f32 %v6926, %v7025
    %v7119 = vmul.f32 %v6927, %v7035
    %v7120 = vmul.f32 %v6928, %v7045
    %v7121 = vmul.f32 %v6929, %v7055
    %v7122 = vmul.f32 %v6930, %v7065
    %v7123 = vmul.f32 %v6931, %v7075
    %v7124 = vmul.f32 %v6932, %v7085
    %v7125 = vmul.f32 %v6933, %v7095
    %v7126 = vmul.f32 %v6934, %v7105
    %v7127 = vmul.f32 %v6935, %v7115
    %v7129 = vperm.slane %v6886, 0
    %v7131 = vmul.f32 %v7116, %v7129
    %v7132 = vmul.f32 %v7117, %v7129
    %v7133 = vmul.f32 %v7118, %v7129
    %v7134 = vmul.f32 %v7119, %v7129
    %v7135 = vmul.f32 %v7120, %v7129
    %v7136 = vmul.f32 %v7121, %v7129
    %v7137 = vmul.f32 %v7122, %v7129
    %v7138 = vmul.f32 %v7123, %v7129
    %v7139 = vmul.f32 %v7124, %v7129
    %v7140 = vmul.f32 %v7125, %v7129
    %v7141 = vmul.f32 %v7126, %v7129
    %v7142 = vmul.f32 %v7127, %v7129
    %v7144 = vperm.slane %v6887, 0
    %v7146 = vadd.f32 %v7131, %v7144
    %v7147 = vadd.f32 %v7132, %v7144
    %v7148 = vadd.f32 %v7133, %v7144
    %v7149 = vadd.f32 %v7134, %v7144
    %v7150 = vadd.f32 %v7135, %v7144
    %v7151 = vadd.f32 %v7136, %v7144
    %v7152 = vadd.f32 %v7137, %v7144
    %v7153 = vadd.f32 %v7138, %v7144
    %v7154 = vadd.f32 %v7139, %v7144
    %v7155 = vadd.f32 %v7140, %v7144
    %v7156 = vadd.f32 %v7141, %v7144
    %v7157 = vadd.f32 %v7142, %v7144
    %v7158 = vadd.f32 %v7146, %v7147
    %v7159 = vrot.slane %v7158, 4
    %v7160 = vadd.f32 %v7158, %v7159
    %v7161 = vrot.slane %v7160, 2
    %v7162 = vadd.f32 %v7160, %v7161
    %v7163 = vrot.slane %v7162, 1
    %v7164 = vadd.f32 %v7162, %v7163
    %v7165 = vadd.f32 %v7148, %v7149
    %v7166 = vrot.slane %v7165, 4
    %v7167 = vadd.f32 %v7165, %v7166
    %v7168 = vrot.slane %v7167, 2
    %v7169 = vadd.f32 %v7167, %v7168
    %v7170 = vrot.slane %v7169, 1
    %v7171 = vadd.f32 %v7169, %v7170
    %v7172 = vadd.f32 %v7150, %v7151
    %v7173 = vrot.slane %v7172, 4
    %v7174 = vadd.f32 %v7172, %v7173
    %v7175 = vrot.slane %v7174, 2
    %v7176 = vadd.f32 %v7174, %v7175
    %v7177 = vrot.slane %v7176, 1
    %v7178 = vadd.f32 %v7176, %v7177
    %v7179 = vadd.f32 %v7152, %v7153
    %v7180 = vrot.slane %v7179, 4
    %v7181 = vadd.f32 %v7179, %v7180
    %v7182 = vrot.slane %v7181, 2
    %v7183 = vadd.f32 %v7181, %v7182
    %v7184 = vrot.slane %v7183, 1
    %v7185 = vadd.f32 %v7183, %v7184
    %v7186 = vadd.f32 %v7154, %v7155
    %v7187 = vrot.slane %v7186, 4
    %v7188 = vadd.f32 %v7186, %v7187
    %v7189 = vrot.slane %v7188, 2
    %v7190 = vadd.f32 %v7188, %v7189
    %v7191 = vrot.slane %v7190, 1
    %v7192 = vadd.f32 %v7190, %v7191
    %v7193 = vadd.f32 %v7156, %v7157
    %v7194 = vrot.slane %v7193, 4
    %v7195 = vadd.f32 %v7193, %v7194
    %v7196 = vrot.slane %v7195, 2
    %v7197 = vadd.f32 %v7195, %v7196
    %v7198 = vrot.slane %v7197, 1
    %v7199 = vadd.f32 %v7197, %v7198
    %v7200 = vrcp.pop 16.0
    %v7201 = vmul.f32 16.0, %v7200
    %v7202 = vsub.f32 1.0, %v7201
    %v7203 = vmul.f32 %v7200, %v7202
    %v7204 = vadd.f32 %v7200, %v7203
    %vm7205 = vweird.f32 %v7200
    %v7206 = vsel %vm7205, %v7200, %v7204
    %v7207 = vmul.f32 %v7164, %v7206
    %v7208 = vmul.f32 %v7171, %v7206
    %v7209 = vmul.f32 %v7178, %v7206
    %v7210 = vmul.f32 %v7185, %v7206
    %v7211 = vmul.f32 %v7192, %v7206
    %v7212 = vmul.f32 %v7199, %v7206
    %v7213 = vpack.c.bf16 %v7207, %v7207
    %v7214 = vpack.c.bf16 %v7208, %v7208
    %v7215 = vpack.c.bf16 %v7209, %v7209
    %v7216 = vpack.c.bf16 %v7210, %v7210
    %v7217 = vpack.c.bf16 %v7211, %v7211
    %v7218 = vpack.c.bf16 %v7212, %v7212
    %v7219 = vld [vmem:[#allocation31] sm:$0xf]
    %v7220 = vld [vmem:[#allocation31 + $0x4] sm:$0xf]
    %v7221 = vld [vmem:[#allocation31 + $0x8] sm:$0xf]
    %v7222 = vld [vmem:[#allocation31 + $0xc] sm:$0xf]
    %v7223 = vld [vmem:[#allocation31 + $0x10] sm:$0xf]
    %v7224 = vld [vmem:[#allocation31 + $0x14] sm:$0xf]
    %v7225 = vld [vmem:[#allocation31 + $0x18] sm:$0xf]
    %v7226 = vld [vmem:[#allocation31 + $0x1c] sm:$0xf]
    %v7227 = vld [vmem:[#allocation31 + $0x20] sm:$0xf]
    %v7228 = vld [vmem:[#allocation31 + $0x24] sm:$0xf]
    %v7229 = vld [vmem:[#allocation31 + $0x28] sm:$0xf]
    %v7230 = vld [vmem:[#allocation31 + $0x2c] sm:$0xf]
    %v7231 = vld [vmem:[#allocation31 + $0x30] sm:$0xf]
    %v7232 = vld [vmem:[#allocation31 + $0x34] sm:$0xf]
    %v7233 = vld [vmem:[#allocation31 + $0x38] sm:$0xf]
    %v7234 = vld [vmem:[#allocation31 + $0x3c] sm:$0xf]
    %v7235 = vld [vmem:[#allocation33] sm:$0x1]
    %v7237 = vperm.slane %v7235, 0
    %v7245 = vunpack.c.l.b16 %v7213
    %v7246 = vunpack.c.l.b16 %v7214
    %v7247 = vunpack.c.l.b16 %v7215
    %v7248 = vunpack.c.l.b16 %v7216
    %v7249 = vunpack.c.l.b16 %v7217
    %v7250 = vunpack.c.l.b16 %v7218
    %vm7251 = vcmask 1041409
    %v7252 = vsel %vm7251, %v7246, %v7245
    %vm7253 = vcmask 1042434
    %v7254 = vsel %vm7253, %v7247, %v7252
    %vm7255 = vcmask 1043459
    %v7256 = vsel %vm7255, %v7248, %v7254
    %vm7257 = vcmask 1044484
    %v7258 = vsel %vm7257, %v7249, %v7256
    %vm7259 = vcmask 1045509
    %v7260 = vsel %vm7259, %v7250, %v7258
    %v7261 = vpack.c.b16 %v7260, %v7260
    %v7279 = vunpack.c.l.b16 %v7219
    %v7280 = vunpack.c.l.b16 %v7220
    %v7281 = vunpack.c.l.b16 %v7221
    %v7282 = vunpack.c.l.b16 %v7222
    %v7283 = vunpack.c.l.b16 %v7223
    %v7284 = vunpack.c.l.b16 %v7224
    %v7285 = vunpack.c.l.b16 %v7225
    %v7286 = vunpack.c.l.b16 %v7226
    %v7287 = vunpack.c.l.b16 %v7227
    %v7288 = vunpack.c.l.b16 %v7228
    %v7289 = vunpack.c.l.b16 %v7229
    %v7290 = vunpack.c.l.b16 %v7230
    %v7291 = vunpack.c.l.b16 %v7231
    %v7292 = vunpack.c.l.b16 %v7232
    %v7293 = vunpack.c.l.b16 %v7233
    %v7294 = vunpack.c.l.b16 %v7234
    %v7295 = vpack.c.b16 %v7280, %v7279
    %v7296 = vpack.c.b16 %v7282, %v7281
    %v7297 = vpack.c.b16 %v7284, %v7283
    %v7298 = vpack.c.b16 %v7286, %v7285
    %v7299 = vpack.c.b16 %v7288, %v7287
    %v7300 = vpack.c.b16 %v7290, %v7289
    %v7301 = vpack.c.b16 %v7292, %v7291
    %v7302 = vpack.c.b16 %v7294, %v7293
    %7311 = vmatpush.bf16.msra.mxu0 %v7302
    %7312 = vmatpush.bf16.msra.mxu0 %v7301
    %7313 = vmatpush.bf16.msra.mxu0 %v7300
    %7314 = vmatpush.bf16.msra.mxu0 %v7299
    %7315 = vmatpush.bf16.msra.mxu0 %v7298
    %7316 = vmatpush.bf16.msra.mxu0 %v7297
    %7317 = vmatpush.bf16.msra.mxu0 %v7296
    %7318 = vmatpush.bf16.msra.mxu0 %v7295
    %7319 = vmatmul.bf16.gmra.mxu0 %v7261
    %v7320 = vpop.f32.mrf.mxu0
    %v7321 = vadd.f32 %v7237, %v7320
    %v7322 = vpop.f32.mrf.mxu0
    %7323 = vdwg.mxu0
    %7324 = vst [vmem:[%s69] sm:$0x3f] %v7321
    // Predicated region
    $region222: #{mlp_mixer_forward.1} parent=1 // pred_check
      _
    $region223: #{mlp_mixer_forward.1} parent=1 // pred_check_branch
      %7326 = sbr.rel (0) target = $region225
    $region224: #{mlp_mixer_forward.1} parent=1 // pred_region
      _
    $region225: #{mlp_mixer_forward.1} parent=1 // pred_fallthru
      _
    // Predicated region
    $region226: #{mlp_mixer_forward.1} parent=1 // pred_check
      _
    $region227: #{mlp_mixer_forward.1} parent=1 // pred_check_branch
      %7328 = sbr.rel (0) target = $region229
    $region228: #{mlp_mixer_forward.1} parent=1 // pred_region
      _
    $region229: #{mlp_mixer_forward.1} parent=1 // pred_fallthru
      _
    %7329 = vsyncpa [#allocation3], 1
    %7330 = vsyncpa [#allocation5], 1
    %7331 = vsyncpa [#allocation8], 1
    %7332 = vsyncpa [#allocation11], 1
    %7333 = vsyncpa [#allocation14], 1
    %7334 = vsyncpa [#allocation17], 1
    %7335 = vsyncpa [#allocation20], 1
    %7336 = vsyncpa [#allocation23], 1
    %7337 = vsyncpa [#allocation26], 1
    %7338 = vsyncpa [#allocation29], 1
    %7339 = vsyncpa [#allocation32], 1

</llo_original>
